<compile_context>
chip_gen: v7x
topology: tpu7x:2x2x1
jax: 0.10.0
libtpu: 0.0.40
codegen_flags: <defaults>
</compile_context>

<pallas_src>
import functools

import jax
import jax.numpy as jnp
from jax.experimental import pallas as pl
from jax.experimental.pallas import tpu as pltpu


LEAK = 0.01  # nn.LeakyReLU() default negative_slope


# ----------------------------------------------------------------------------
# Kernel 1: conv1 (im2col matmul) + 2x2/2 max-pool + bias + LeakyReLU
#   p_ref: (4, NB*200, 80)  4 pool-window quadrants, rows = (sample, pooled pos)
#   w_ref: (80, 8)          K padded 75->80, Cout padded 6->8
#   b_ref: (1, 8)
#   o_ref: (NB*200, 8)      pooled conv1 activations (rows = sample*200 + pos)
# ----------------------------------------------------------------------------
def conv1_pool_kernel(p_ref, w_ref, b_ref, o_ref):
    w = w_ref[...]
    z = jnp.dot(p_ref[0], w, preferred_element_type=jnp.float32)
    z = jnp.maximum(z, jnp.dot(p_ref[1], w, preferred_element_type=jnp.float32))
    z = jnp.maximum(z, jnp.dot(p_ref[2], w, preferred_element_type=jnp.float32))
    z = jnp.maximum(z, jnp.dot(p_ref[3], w, preferred_element_type=jnp.float32))
    z = z + b_ref[...]                      # bias + LeakyReLU hoisted after pool-max
    o_ref[...] = jnp.where(z > 0.0, z, LEAK * z)


def conv1_pool(patches, w1, b1, nb):
    _, R, K = patches.shape                 # (4, Npad*200, 80)
    Cp = w1.shape[1]
    return pl.pallas_call(
        conv1_pool_kernel,
        out_shape=jax.ShapeDtypeStruct((R, Cp), jnp.float32),
        grid=(R // (nb * 200),),
        in_specs=[
            pl.BlockSpec((4, nb * 200, K), lambda i: (0, i, 0)),
            pl.BlockSpec((K, Cp), lambda i: (0, 0)),
            pl.BlockSpec((1, Cp), lambda i: (0, 0)),
        ],
        out_specs=pl.BlockSpec((nb * 200, Cp), lambda i: (i, 0)),
        compiler_params=pltpu.CompilerParams(
            dimension_semantics=("parallel",),
            vmem_limit_bytes=32 * 1024 * 1024),
    )(patches, w1, b1)


# ----------------------------------------------------------------------------
# Kernel 2: conv2 (quadrant Toeplitz matmuls) + pool + bias + LeakyReLU
#           + Linear(400,32) + ReLU + Linear(32,out) + ReLU + masked LogSoftmax
#   h1_ref: (NB, 1176)  conv1 output, NHWC-flattened per sample
#   t2_ref: (4, 1176, 400)  conv2 weights folded into per-quadrant Toeplitz mats
#   o_ref : (NB, 128)   lane-dense padded log-probs (first out_size lanes valid)
# ----------------------------------------------------------------------------
def conv2_mlp_kernel(h1_ref, t2_ref, bc2_ref, w1_ref, b1_ref, w2_ref, b2_ref,
                     o_ref, *, out_size):
    h1 = h1_ref[...]                                               # (NB, 1176)
    z = jnp.dot(h1, t2_ref[0], preferred_element_type=jnp.float32)
    z = jnp.maximum(z, jnp.dot(h1, t2_ref[1], preferred_element_type=jnp.float32))
    z = jnp.maximum(z, jnp.dot(h1, t2_ref[2], preferred_element_type=jnp.float32))
    z = jnp.maximum(z, jnp.dot(h1, t2_ref[3], preferred_element_type=jnp.float32))
    z = z + bc2_ref[...]
    feat = jnp.where(z > 0.0, z, LEAK * z)                         # (NB, 400)

    h = jnp.dot(feat, w1_ref[...], preferred_element_type=jnp.float32) + b1_ref[...]
    h = jnp.maximum(h, 0.0)
    zz = jnp.dot(h, w2_ref[...], preferred_element_type=jnp.float32) + b2_ref[...]
    zz = jnp.maximum(zz, 0.0)                                      # (NB, 128)

    col = jax.lax.broadcasted_iota(jnp.int32, zz.shape, 1)
    valid = col < out_size                                         # mask padded lanes
    m = jnp.max(jnp.where(valid, zz, -1e30), axis=-1, keepdims=True)
    e = jnp.where(valid, jnp.exp(zz - m), 0.0)
    lse = jnp.log(jnp.sum(e, axis=-1, keepdims=True))
    o_ref[...] = jnp.where(valid, zz - m - lse, 0.0)


def conv2_mlp(h1f, t2, bc2, w1p, b1p, w2p, b2p, nb, out_size):
    npad, k2 = h1f.shape
    return pl.pallas_call(
        functools.partial(conv2_mlp_kernel, out_size=out_size),
        out_shape=jax.ShapeDtypeStruct((npad, 128), jnp.float32),
        grid=(npad // nb,),
        in_specs=[
            pl.BlockSpec((nb, k2), lambda i: (i, 0)),
            pl.BlockSpec((4, k2, 400), lambda i: (0, 0, 0)),   # loop-invariant
            pl.BlockSpec((1, 400), lambda i: (0, 0)),
            pl.BlockSpec((400, 128), lambda i: (0, 0)),
            pl.BlockSpec((1, 128), lambda i: (0, 0)),
            pl.BlockSpec((128, 128), lambda i: (0, 0)),
            pl.BlockSpec((1, 128), lambda i: (0, 0)),
        ],
        out_specs=pl.BlockSpec((nb, 128), lambda i: (i, 0)),
        compiler_params=pltpu.CompilerParams(
            dimension_semantics=("parallel",),
            vmem_limit_bytes=40 * 1024 * 1024),
    )(h1f, t2, bc2, w1p, b1p, w2p, b2p)


# ----------------------------------------------------------------------------
# Wrapper glue (pure JAX, cheap): conv1 im2col (channels-last), weight folding
# ----------------------------------------------------------------------------
def _im2col_conv1(xh, npad):
    """xh: (Npad,32,32,3) NHWC -> (4, Npad*200, 80) quadrant-grouped patches."""
    cols = jnp.stack([xh[:, kh:kh + 28, kw:kw + 28, :]
                      for kh in range(5) for kw in range(5)], axis=3)   # (N,28,28,25,3)
    p = cols.reshape(npad, 28, 28, 75)                  # K order = (kh, kw, ci)
    quads = jnp.stack([p[:, a::2, b::2, :].reshape(npad, 196, 75)
                       for a in (0, 1) for b in (0, 1)], axis=0)        # (4,N,196,75)
    quads = jnp.pad(quads, ((0, 0), (0, 0), (0, 4), (0, 5)))            # pos->200, K->80
    return quads.reshape(4, npad * 200, 80)


def _build_conv2_toeplitz(w_conv2):
    """Fold conv2 weights into (4, 1176, 400) per-pool-quadrant Toeplitz mats."""
    hi = jax.lax.Precision.HIGHEST
    a = jnp.array([0, 0, 1, 1])
    b = jnp.array([0, 1, 0, 1])
    ph, pw = jnp.meshgrid(jnp.arange(5), jnp.arange(5), indexing="ij")
    ph, pw = ph.reshape(-1), pw.reshape(-1)                 # pooled 5x5 output pos
    kh, kw = jnp.meshgrid(jnp.arange(5), jnp.arange(5), indexing="ij")
    kh, kw = kh.reshape(-1), kw.reshape(-1)                 # kernel offsets
    oh = 2 * ph[None, :, None] + a[:, None, None]           # (4,25,1) pre-pool row
    ow = 2 * pw[None, :, None] + b[:, None, None]
    s = (oh + kh[None, None, :]) * 14 + (ow + kw[None, None, :])   # (4,25,25)
    sel = jax.nn.one_hot(s, 14 * 14, dtype=jnp.float32)            # (4,25,25,196)
    w2k = jnp.transpose(w_conv2, (2, 3, 1, 0)).reshape(25, 6, 16)  # (khkw, ci, co)
    t = jnp.einsum("qpks,kio->qsipo", sel, w2k, precision=hi)      # (4,196,6,25,16)
    return t.reshape(4, 1176, 400)


@jax.jit
def neuralnet_forward(x, params):
    N = x.shape[0]
    out_size = params["w_fc2"].shape[1]
    assert out_size <= 128

    nb = min(8, N)                              # batch tile per grid step
    npad = ((N + nb - 1) // nb) * nb
    if npad != N:
        x = jnp.pad(x, ((0, npad - N), (0, 0)))

    xh = x.reshape(npad, 3, 32, 32).transpose(0, 2, 3, 1)           # NHWC

    # ---- conv1 + LeakyReLU + pool (kernel 1) ----
    patches1 = _im2col_conv1(xh, npad)                              # (4, npad*200, 80)
    w1 = jnp.pad(jnp.transpose(params["w_conv1"], (2, 3, 1, 0)).reshape(75, 6),
                 ((0, 5), (0, 2)))                                  # (80, 8)
    b1 = jnp.pad(params["b_conv1"], (0, 2)).reshape(1, 8)
    o1 = conv1_pool(patches1, w1, b1, nb)                           # (npad*200, 8)
    h1f = o1.reshape(npad, 200, 8)[:, :196, :6].reshape(npad, 1176)

    # ---- conv2 + LeakyReLU + pool + MLP + log-softmax (kernel 2) ----
    t2 = _build_conv2_toeplitz(params["w_conv2"])                   # (4, 1176, 400)
    bc2 = jnp.tile(params["b_conv2"], 25).reshape(1, 400)
    # fc1 rows permuted from torch order (c*25+s) to our (s*16+c) feature order
    w1p = jnp.pad(params["w_fc1"].reshape(16, 25, 32).transpose(1, 0, 2)
                  .reshape(400, 32), ((0, 0), (0, 96)))             # (400, 128)
    b1p = jnp.pad(params["b_fc1"], (0, 96)).reshape(1, 128)
    w2p = jnp.zeros((128, 128), jnp.float32).at[:32, :out_size].set(params["w_fc2"])
    b2p = jnp.zeros((1, 128), jnp.float32).at[0, :out_size].set(params["b_fc2"])

    out = conv2_mlp(h1f, t2, bc2, w1p, b1p, w2p, b2p, nb, out_size)  # (npad, 128)
    return out[:N, :out_size]


# ----------------------------------------------------------------------------
# Pure-JAX reference (correctness check)
# ----------------------------------------------------------------------------
def reference_forward(x, params):
    N = x.shape[0]
    hi = jax.lax.Precision.HIGHEST

    def lrelu(v):
        return jnp.where(v > 0, v, LEAK * v)

    def pool(v):
        n, c, h, w = v.shape
        return jnp.max(v.reshape(n, c, h // 2, 2, w // 2, 2), axis=(3, 5))

    h = x.reshape(N, 3, 32, 32)
    h = jax.lax.conv_general_dilated(h, params["w_conv1"], (1, 1), "VALID",
                                     dimension_numbers=("NCHW", "OIHW", "NCHW"),
                                     precision=hi)
    h = pool(lrelu(h + params["b_conv1"].reshape(1, -1, 1, 1)))
    h = jax.lax.conv_general_dilated(h, params["w_conv2"], (1, 1), "VALID",
                                     dimension_numbers=("NCHW", "OIHW", "NCHW"),
                                     precision=hi)
    h = pool(lrelu(h + params["b_conv2"].reshape(1, -1, 1, 1)))
    f = h.reshape(N, 16 * 5 * 5)
    a = jnp.maximum(jnp.dot(f, params["w_fc1"], precision=hi) + params["b_fc1"], 0.0)
    z = jnp.maximum(jnp.dot(a, params["w_fc2"], precision=hi) + params["b_fc2"], 0.0)
    return jax.nn.log_softmax(z, axis=-1)


# ----------------------------------------------------------------------------
if __name__ == "__main__":
    key = jax.random.PRNGKey(0)
    ks = jax.random.split(key, 9)

    N = 2
    out_size = 10
    in_size = 3 * 32 * 32  # forward() hard-codes the 3x32x32 view

    x = jax.random.normal(ks[0], (N, in_size), dtype=jnp.float32)

    params = {
        "w_conv1": 0.1 * jax.random.normal(ks[1], (6, 3, 5, 5), jnp.float32),
        "b_conv1": 0.1 * jax.random.normal(ks[2], (6,), jnp.float32),
        "w_conv2": 0.1 * jax.random.normal(ks[3], (16, 6, 5, 5), jnp.float32),
        "b_conv2": 0.1 * jax.random.normal(ks[4], (16,), jnp.float32),
        "w_fc1":   0.1 * jax.random.normal(ks[5], (16 * 5 * 5, 32), jnp.float32),
        "b_fc1":   0.1 * jax.random.normal(ks[6], (32,), jnp.float32),
        "w_fc2":   0.1 * jax.random.normal(ks[7], (32, out_size), jnp.float32),
        "b_fc2":   0.1 * jax.random.normal(ks[8], (out_size,), jnp.float32),
    }

    y = jax.block_until_ready(neuralnet_forward(x, params))
    y_ref = jax.block_until_ready(reference_forward(x, params))

    assert y.shape == (N, out_size), y.shape
    assert jnp.allclose(y, y_ref, atol=2e-3, rtol=2e-3), (
        "mismatch vs reference", float(jnp.max(jnp.abs(y - y_ref))))

    print("KERNEL_OK")
</pallas_src>

<mosaic_0001>
module attributes {stable_mosaic.version = 11 : i64} {
  func.func @conv1_pool_kernel(%arg0: i32, %arg1: memref<4x400x80xf32, #tpu.memory_space<vmem>>, %arg2: memref<80x8xf32, #tpu.memory_space<vmem>>, %arg3: memref<1x8xf32, #tpu.memory_space<vmem>>, %arg4: memref<400x8xf32, #tpu.memory_space<vmem>>) attributes {dimension_semantics = [#tpu.dimension_semantics<parallel>], iteration_bounds = array<i64: 1>, scalar_prefetch = 0 : i64, scratch_operands = 0 : i64, tpu.core_type = #tpu.core_type<tc>, window_params = [{transform_indices = @transform_0, window_bounds = array<i64: 4, 400, 80>}, {pipeline_mode = #tpu.pipeline_mode<synchronous>, transform_indices = @transform_1, window_bounds = array<i64: 80, 8>}, {pipeline_mode = #tpu.pipeline_mode<synchronous>, transform_indices = @transform_2, window_bounds = array<i64: 1, 8>}, {transform_indices = @transform_3, window_bounds = array<i64: 400, 8>}]} {
    %c0 = arith.constant 0 : index
    %c0_0 = arith.constant 0 : index
    %0 = vector.load %arg2[%c0, %c0_0] : memref<80x8xf32, #tpu.memory_space<vmem>>, vector<80x8xf32>
    %c0_1 = arith.constant 0 : index
    %c0_2 = arith.constant 0 : index
    %c0_3 = arith.constant 0 : index
    %1 = vector.load %arg1[%c0_1, %c0_2, %c0_3] : memref<4x400x80xf32, #tpu.memory_space<vmem>>, vector<1x400x80xf32>
    %2 = vector.shape_cast %1 : vector<1x400x80xf32> to vector<400x80xf32>
    %cst = arith.constant dense<0.000000e+00> : vector<400x8xf32>
    %3 = tpu.matmul %2, %0, %cst {dimension_numbers = #tpu.dot_dimension_numbers<[1], [0], [0], [1], [0, 0, 1, 1], [], []>} : vector<400x80xf32>, vector<80x8xf32>, vector<400x8xf32> -> vector<400x8xf32>
    %c1 = arith.constant 1 : index
    %c0_4 = arith.constant 0 : index
    %c0_5 = arith.constant 0 : index
    %4 = vector.load %arg1[%c1, %c0_4, %c0_5] : memref<4x400x80xf32, #tpu.memory_space<vmem>>, vector<1x400x80xf32>
    %5 = vector.shape_cast %4 : vector<1x400x80xf32> to vector<400x80xf32>
    %cst_6 = arith.constant dense<0.000000e+00> : vector<400x8xf32>
    %6 = tpu.matmul %5, %0, %cst_6 {dimension_numbers = #tpu.dot_dimension_numbers<[1], [0], [0], [1], [0, 0, 1, 1], [], []>} : vector<400x80xf32>, vector<80x8xf32>, vector<400x8xf32> -> vector<400x8xf32>
    %7 = arith.maximumf %3, %6 : vector<400x8xf32>
    %c2 = arith.constant 2 : index
    %c0_7 = arith.constant 0 : index
    %c0_8 = arith.constant 0 : index
    %8 = vector.load %arg1[%c2, %c0_7, %c0_8] : memref<4x400x80xf32, #tpu.memory_space<vmem>>, vector<1x400x80xf32>
    %9 = vector.shape_cast %8 : vector<1x400x80xf32> to vector<400x80xf32>
    %cst_9 = arith.constant dense<0.000000e+00> : vector<400x8xf32>
    %10 = tpu.matmul %9, %0, %cst_9 {dimension_numbers = #tpu.dot_dimension_numbers<[1], [0], [0], [1], [0, 0, 1, 1], [], []>} : vector<400x80xf32>, vector<80x8xf32>, vector<400x8xf32> -> vector<400x8xf32>
    %11 = arith.maximumf %7, %10 : vector<400x8xf32>
    %c3 = arith.constant 3 : index
    %c0_10 = arith.constant 0 : index
    %c0_11 = arith.constant 0 : index
    %12 = vector.load %arg1[%c3, %c0_10, %c0_11] : memref<4x400x80xf32, #tpu.memory_space<vmem>>, vector<1x400x80xf32>
    %13 = vector.shape_cast %12 : vector<1x400x80xf32> to vector<400x80xf32>
    %cst_12 = arith.constant dense<0.000000e+00> : vector<400x8xf32>
    %14 = tpu.matmul %13, %0, %cst_12 {dimension_numbers = #tpu.dot_dimension_numbers<[1], [0], [0], [1], [0, 0, 1, 1], [], []>} : vector<400x80xf32>, vector<80x8xf32>, vector<400x8xf32> -> vector<400x8xf32>
    %15 = arith.maximumf %11, %14 : vector<400x8xf32>
    %c0_13 = arith.constant 0 : index
    %c0_14 = arith.constant 0 : index
    %16 = vector.load %arg3[%c0_13, %c0_14] : memref<1x8xf32, #tpu.memory_space<vmem>>, vector<1x8xf32>
    %17 = vector.broadcast %16 : vector<1x8xf32> to vector<400x8xf32>
    %18 = arith.addf %15, %17 : vector<400x8xf32>
    %cst_15 = arith.constant 0.000000e+00 : f32
    %19 = vector.broadcast %cst_15 : f32 to vector<400x8xf32>
    %20 = arith.cmpf ogt, %18, %19 : vector<400x8xf32>
    %cst_16 = arith.constant 0.00999999977 : f32
    %21 = vector.broadcast %cst_16 : f32 to vector<400x8xf32>
    %22 = arith.mulf %21, %18 : vector<400x8xf32>
    %23 = arith.select %20, %18, %22 : vector<400x8xi1>, vector<400x8xf32>
    %c0_17 = arith.constant 0 : index
    %c0_18 = arith.constant 0 : index
    %24 = vector.load %arg4[%c0_17, %c0_18] : memref<400x8xf32, #tpu.memory_space<vmem>>, vector<400x8xf32>
    tpu.vector_store %arg4[%c0_17, %c0_18], %23 {strides = array<i32>} : memref<400x8xf32, #tpu.memory_space<vmem>>, vector<400x8xf32>,
    return
  }
  func.func @transform_0(%arg0: i32) -> (i32, i32, i32) {
    %c0_i32 = arith.constant 0 : i32
    %c0_i32_0 = arith.constant 0 : i32
    %c0_i32_1 = arith.constant 0 : i32
    return %c0_i32, %arg0, %c0_i32_0 : i32, i32, i32
  }
  func.func @transform_1(%arg0: i32) -> (i32, i32) {
    %c0_i32 = arith.constant 0 : i32
    %c0_i32_0 = arith.constant 0 : i32
    %c0_i32_1 = arith.constant 0 : i32
    return %c0_i32, %c0_i32_0 : i32, i32
  }
  func.func @transform_2(%arg0: i32) -> (i32, i32) {
    %c0_i32 = arith.constant 0 : i32
    %c0_i32_0 = arith.constant 0 : i32
    %c0_i32_1 = arith.constant 0 : i32
    return %c0_i32, %c0_i32_0 : i32, i32
  }
  func.func @transform_3(%arg0: i32) -> (i32, i32) {
    %c0_i32 = arith.constant 0 : i32
    %c0_i32_0 = arith.constant 0 : i32
    return %arg0, %c0_i32 : i32, i32
  }
}

module attributes {stable_mosaic.version = 11 : i64} {
  func.func @conv2_mlp_kernel(%arg0: i32, %arg1: memref<2x1176xf32, #tpu.memory_space<vmem>>, %arg2: memref<4x1176x400xf32, #tpu.memory_space<vmem>>, %arg3: memref<1x400xf32, #tpu.memory_space<vmem>>, %arg4: memref<400x128xf32, #tpu.memory_space<vmem>>, %arg5: memref<1x128xf32, #tpu.memory_space<vmem>>, %arg6: memref<128x128xf32, #tpu.memory_space<vmem>>, %arg7: memref<1x128xf32, #tpu.memory_space<vmem>>, %arg8: memref<2x128xf32, #tpu.memory_space<vmem>>) attributes {dimension_semantics = [#tpu.dimension_semantics<parallel>], iteration_bounds = array<i64: 1>, scalar_prefetch = 0 : i64, scratch_operands = 0 : i64, tpu.core_type = #tpu.core_type<tc>, window_params = [{transform_indices = @transform_0, window_bounds = array<i64: 2, 1176>}, {pipeline_mode = #tpu.pipeline_mode<synchronous>, transform_indices = @transform_1, window_bounds = array<i64: 4, 1176, 400>}, {pipeline_mode = #tpu.pipeline_mode<synchronous>, transform_indices = @transform_2, window_bounds = array<i64: 1, 400>}, {pipeline_mode = #tpu.pipeline_mode<synchronous>, transform_indices = @transform_3, window_bounds = array<i64: 400, 128>}, {pipeline_mode = #tpu.pipeline_mode<synchronous>, transform_indices = @transform_4, window_bounds = array<i64: 1, 128>}, {pipeline_mode = #tpu.pipeline_mode<synchronous>, transform_indices = @transform_5, window_bounds = array<i64: 128, 128>}, {pipeline_mode = #tpu.pipeline_mode<synchronous>, transform_indices = @transform_6, window_bounds = array<i64: 1, 128>}, {transform_indices = @transform_7, window_bounds = array<i64: 2, 128>}]} {
    %c0 = arith.constant 0 : index
    %c0_0 = arith.constant 0 : index
    %0 = vector.load %arg1[%c0, %c0_0] : memref<2x1176xf32, #tpu.memory_space<vmem>>, vector<2x1176xf32>
    %c0_1 = arith.constant 0 : index
    %c0_2 = arith.constant 0 : index
    %c0_3 = arith.constant 0 : index
    %1 = vector.load %arg2[%c0_1, %c0_2, %c0_3] : memref<4x1176x400xf32, #tpu.memory_space<vmem>>, vector<1x1176x400xf32>
    %2 = vector.shape_cast %1 : vector<1x1176x400xf32> to vector<1176x400xf32>
    %cst = arith.constant dense<0.000000e+00> : vector<2x400xf32>
    %3 = tpu.matmul %0, %2, %cst {dimension_numbers = #tpu.dot_dimension_numbers<[1], [0], [0], [1], [0, 0, 1, 1], [], []>} : vector<2x1176xf32>, vector<1176x400xf32>, vector<2x400xf32> -> vector<2x400xf32>
    %c1 = arith.constant 1 : index
    %c0_4 = arith.constant 0 : index
    %c0_5 = arith.constant 0 : index
    %4 = vector.load %arg2[%c1, %c0_4, %c0_5] : memref<4x1176x400xf32, #tpu.memory_space<vmem>>, vector<1x1176x400xf32>
    %5 = vector.shape_cast %4 : vector<1x1176x400xf32> to vector<1176x400xf32>
    %cst_6 = arith.constant dense<0.000000e+00> : vector<2x400xf32>
    %6 = tpu.matmul %0, %5, %cst_6 {dimension_numbers = #tpu.dot_dimension_numbers<[1], [0], [0], [1], [0, 0, 1, 1], [], []>} : vector<2x1176xf32>, vector<1176x400xf32>, vector<2x400xf32> -> vector<2x400xf32>
    %7 = arith.maximumf %3, %6 : vector<2x400xf32>
    %c2 = arith.constant 2 : index
    %c0_7 = arith.constant 0 : index
    %c0_8 = arith.constant 0 : index
    %8 = vector.load %arg2[%c2, %c0_7, %c0_8] : memref<4x1176x400xf32, #tpu.memory_space<vmem>>, vector<1x1176x400xf32>
    %9 = vector.shape_cast %8 : vector<1x1176x400xf32> to vector<1176x400xf32>
    %cst_9 = arith.constant dense<0.000000e+00> : vector<2x400xf32>
    %10 = tpu.matmul %0, %9, %cst_9 {dimension_numbers = #tpu.dot_dimension_numbers<[1], [0], [0], [1], [0, 0, 1, 1], [], []>} : vector<2x1176xf32>, vector<1176x400xf32>, vector<2x400xf32> -> vector<2x400xf32>
    %11 = arith.maximumf %7, %10 : vector<2x400xf32>
    %c3 = arith.constant 3 : index
    %c0_10 = arith.constant 0 : index
    %c0_11 = arith.constant 0 : index
    %12 = vector.load %arg2[%c3, %c0_10, %c0_11] : memref<4x1176x400xf32, #tpu.memory_space<vmem>>, vector<1x1176x400xf32>
    %13 = vector.shape_cast %12 : vector<1x1176x400xf32> to vector<1176x400xf32>
    %cst_12 = arith.constant dense<0.000000e+00> : vector<2x400xf32>
    %14 = tpu.matmul %0, %13, %cst_12 {dimension_numbers = #tpu.dot_dimension_numbers<[1], [0], [0], [1], [0, 0, 1, 1], [], []>} : vector<2x1176xf32>, vector<1176x400xf32>, vector<2x400xf32> -> vector<2x400xf32>
    %15 = arith.maximumf %11, %14 : vector<2x400xf32>
    %c0_13 = arith.constant 0 : index
    %c0_14 = arith.constant 0 : index
    %16 = vector.load %arg3[%c0_13, %c0_14] : memref<1x400xf32, #tpu.memory_space<vmem>>, vector<1x400xf32>
    %17 = vector.broadcast %16 : vector<1x400xf32> to vector<2x400xf32>
    %18 = arith.addf %15, %17 : vector<2x400xf32>
    %cst_15 = arith.constant 0.000000e+00 : f32
    %19 = vector.broadcast %cst_15 : f32 to vector<2x400xf32>
    %20 = arith.cmpf ogt, %18, %19 : vector<2x400xf32>
    %cst_16 = arith.constant 0.00999999977 : f32
    %21 = vector.broadcast %cst_16 : f32 to vector<2x400xf32>
    %22 = arith.mulf %21, %18 : vector<2x400xf32>
    %23 = arith.select %20, %18, %22 : vector<2x400xi1>, vector<2x400xf32>
    %c0_17 = arith.constant 0 : index
    %c0_18 = arith.constant 0 : index
    %24 = vector.load %arg4[%c0_17, %c0_18] : memref<400x128xf32, #tpu.memory_space<vmem>>, vector<400x128xf32>
    %cst_19 = arith.constant dense<0.000000e+00> : vector<2x128xf32>
    %25 = tpu.matmul %23, %24, %cst_19 {dimension_numbers = #tpu.dot_dimension_numbers<[1], [0], [0], [1], [0, 0, 1, 1], [], []>} : vector<2x400xf32>, vector<400x128xf32>, vector<2x128xf32> -> vector<2x128xf32>
    %c0_20 = arith.constant 0 : index
    %c0_21 = arith.constant 0 : index
    %26 = vector.load %arg5[%c0_20, %c0_21] : memref<1x128xf32, #tpu.memory_space<vmem>>, vector<1x128xf32>
    %27 = vector.broadcast %26 : vector<1x128xf32> to vector<2x128xf32>
    %28 = arith.addf %25, %27 : vector<2x128xf32>
    %cst_22 = arith.constant 0.000000e+00 : f32
    %29 = vector.broadcast %cst_22 : f32 to vector<2x128xf32>
    %30 = arith.maximumf %28, %29 : vector<2x128xf32>
    %c0_23 = arith.constant 0 : index
    %c0_24 = arith.constant 0 : index
    %31 = vector.load %arg6[%c0_23, %c0_24] : memref<128x128xf32, #tpu.memory_space<vmem>>, vector<128x128xf32>
    %cst_25 = arith.constant dense<0.000000e+00> : vector<2x128xf32>
    %32 = tpu.matmul %30, %31, %cst_25 {dimension_numbers = #tpu.dot_dimension_numbers<[1], [0], [0], [1], [0, 0, 1, 1], [], []>} : vector<2x128xf32>, vector<128x128xf32>, vector<2x128xf32> -> vector<2x128xf32>
    %c0_26 = arith.constant 0 : index
    %c0_27 = arith.constant 0 : index
    %33 = vector.load %arg7[%c0_26, %c0_27] : memref<1x128xf32, #tpu.memory_space<vmem>>, vector<1x128xf32>
    %34 = vector.broadcast %33 : vector<1x128xf32> to vector<2x128xf32>
    %35 = arith.addf %32, %34 : vector<2x128xf32>
    %cst_28 = arith.constant 0.000000e+00 : f32
    %36 = vector.broadcast %cst_28 : f32 to vector<2x128xf32>
    %37 = arith.maximumf %35, %36 : vector<2x128xf32>
    %38 = tpu.iota {dimensions = array<i32: 1>} : vector<2x128xi32>
    %c10_i32 = arith.constant 10 : i32
    %39 = vector.broadcast %c10_i32 : i32 to vector<2x128xi32>
    %40 = arith.cmpi slt, %38, %39 : vector<2x128xi32>
    %cst_29 = arith.constant -1.000000e+30 : f32
    %41 = vector.broadcast %cst_29 : f32 to vector<2x128xf32>
    %42 = arith.select %40, %37, %41 : vector<2x128xi1>, vector<2x128xf32>
    %cst_30 = arith.constant dense<0xFF800000> : vector<2xf32>
    %43 = vector.multi_reduction <maximumf>, %42, %cst_30 [1] : vector<2x128xf32> to vector<2xf32>
    %44 = vector.shape_cast %43 : vector<2xf32> to vector<2x1xf32>
    %45 = vector.broadcast %44 : vector<2x1xf32> to vector<2x128xf32>
    %46 = arith.subf %37, %45 : vector<2x128xf32>
    %47 = math.exp %46 : vector<2x128xf32>
    %cst_31 = arith.constant 0.000000e+00 : f32
    %48 = vector.broadcast %cst_31 : f32 to vector<2x128xf32>
    %49 = arith.select %40, %47, %48 : vector<2x128xi1>, vector<2x128xf32>
    %cst_32 = arith.constant dense<0.000000e+00> : vector<2xf32>
    %50 = vector.multi_reduction <add>, %49, %cst_32 [1] : vector<2x128xf32> to vector<2xf32>
    %51 = vector.shape_cast %50 : vector<2xf32> to vector<2x1xf32>
    %52 = math.log %51 : vector<2x1xf32>
    %53 = vector.broadcast %44 : vector<2x1xf32> to vector<2x128xf32>
    %54 = arith.subf %37, %53 : vector<2x128xf32>
    %55 = vector.broadcast %52 : vector<2x1xf32> to vector<2x128xf32>
    %56 = arith.subf %54, %55 : vector<2x128xf32>
    %cst_33 = arith.constant 0.000000e+00 : f32
    %57 = vector.broadcast %cst_33 : f32 to vector<2x128xf32>
    %58 = arith.select %40, %56, %57 : vector<2x128xi1>, vector<2x128xf32>
    %c0_34 = arith.constant 0 : index
    %c0_35 = arith.constant 0 : index
    %59 = vector.load %arg8[%c0_34, %c0_35] : memref<2x128xf32, #tpu.memory_space<vmem>>, vector<2x128xf32>
    tpu.vector_store %arg8[%c0_34, %c0_35], %58 {strides = array<i32>} : memref<2x128xf32, #tpu.memory_space<vmem>>, vector<2x128xf32>,
    return
  }
  func.func @transform_0(%arg0: i32) -> (i32, i32) {
    %c0_i32 = arith.constant 0 : i32
    %c0_i32_0 = arith.constant 0 : i32
    return %arg0, %c0_i32 : i32, i32
  }
  func.func @transform_1(%arg0: i32) -> (i32, i32, i32) {
    %c0_i32 = arith.constant 0 : i32
    %c0_i32_0 = arith.constant 0 : i32
    %c0_i32_1 = arith.constant 0 : i32
    %c0_i32_2 = arith.constant 0 : i32
    return %c0_i32, %c0_i32_0, %c0_i32_1 : i32, i32, i32
  }
  func.func @transform_2(%arg0: i32) -> (i32, i32) {
    %c0_i32 = arith.constant 0 : i32
    %c0_i32_0 = arith.constant 0 : i32
    %c0_i32_1 = arith.constant 0 : i32
    return %c0_i32, %c0_i32_0 : i32, i32
  }
  func.func @transform_3(%arg0: i32) -> (i32, i32) {
    %c0_i32 = arith.constant 0 : i32
    %c0_i32_0 = arith.constant 0 : i32
    %c0_i32_1 = arith.constant 0 : i32
    return %c0_i32, %c0_i32_0 : i32, i32
  }
  func.func @transform_4(%arg0: i32) -> (i32, i32) {
    %c0_i32 = arith.constant 0 : i32
    %c0_i32_0 = arith.constant 0 : i32
    %c0_i32_1 = arith.constant 0 : i32
    return %c0_i32, %c0_i32_0 : i32, i32
  }
  func.func @transform_5(%arg0: i32) -> (i32, i32) {
    %c0_i32 = arith.constant 0 : i32
    %c0_i32_0 = arith.constant 0 : i32
    %c0_i32_1 = arith.constant 0 : i32
    return %c0_i32, %c0_i32_0 : i32, i32
  }
  func.func @transform_6(%arg0: i32) -> (i32, i32) {
    %c0_i32 = arith.constant 0 : i32
    %c0_i32_0 = arith.constant 0 : i32
    %c0_i32_1 = arith.constant 0 : i32
    return %c0_i32, %c0_i32_0 : i32, i32
  }
  func.func @transform_7(%arg0: i32) -> (i32, i32) {
    %c0_i32 = arith.constant 0 : i32
    %c0_i32_0 = arith.constant 0 : i32
    return %arg0, %c0_i32 : i32, i32
  }
}

</mosaic_0001>

<llo_original>
// kernel: neuralnet_forward.2
$region0: #{neuralnet_forward.2}
  #allocation0 [shape = 'u32[]', space=smem, size = 0x4, offset = 0x4, fixed_abs, tag = 'smem constant byte address 0x4 - core index']
  #allocation1 [shape = 'u32[144,128]{1,0:T(1,128)}', space=vmem, size = 0x12000, scoped, tag = 'internal scratch']
  %s0 = inlined_call_operand.vmem [shape: f32[4,400,80], index: 0, kind: input, shape index: {}]
  %s1 = inlined_call_operand.vmem [shape: f32[80,8], index: 1, kind: input, shape index: {}]
  %s2 = inlined_call_operand.vmem [shape: f32[1,8], index: 2, kind: input, shape index: {}]
  %s3 = inlined_call_operand.vmem [shape: f32[400,8], index: 3, kind: output, shape index: {}]
  %s4 = sld [smem:[#allocation0]]
  $region22: #{neuralnet_forward.2} parent=0
    _
  %s6 = ssub.s32 1, %s4
  %s7 = scalar_select 0, %s6, %s4
  // Predicated region
  $region2: #{neuralnet_forward.2} parent=0 // pred_check
    _
  $region3: #{neuralnet_forward.2} parent=0 // pred_check_branch
    %9 = sbr.rel (0) target = $region5
  $region4: #{neuralnet_forward.2} parent=0 // pred_region
    _
  $region5: #{neuralnet_forward.2} parent=0 // pred_fallthru
    _
  // Predicated region
  $region6: #{neuralnet_forward.2} parent=0 // pred_check
    _
  $region7: #{neuralnet_forward.2} parent=0 // pred_check_branch
    %11 = sbr.rel (0) target = $region9
  $region8: #{neuralnet_forward.2} parent=0 // pred_region
    _
  $region9: #{neuralnet_forward.2} parent=0 // pred_fallthru
    _
  // Predicated region
  $region10: #{neuralnet_forward.2} parent=0 // pred_check
    _
  $region11: #{neuralnet_forward.2} parent=0 // pred_check_branch
    %13 = sbr.rel (0) target = $region13
  $region12: #{neuralnet_forward.2} parent=0 // pred_region
    _
  $region13: #{neuralnet_forward.2} parent=0 // pred_fallthru
    _
  %v14 = vld [vmem:[%s1] sm:$0xff]
  %v15 = vld [vmem:[%s1 + $0x8] sm:$0xff]
  %v16 = vld [vmem:[%s1 + $0x10] sm:$0xff]
  %v17 = vld [vmem:[%s1 + $0x18] sm:$0xff]
  %v18 = vld [vmem:[%s1 + $0x20] sm:$0xff]
  %v19 = vld [vmem:[%s1 + $0x28] sm:$0xff]
  %v20 = vld [vmem:[%s1 + $0x30] sm:$0xff]
  %v21 = vld [vmem:[%s1 + $0x38] sm:$0xff]
  %v22 = vld [vmem:[%s1 + $0x40] sm:$0xff]
  %v23 = vld [vmem:[%s1 + $0x48] sm:$0xff]
  %v24 = vld [vmem:[%s0] sm:$0xff]
  %v25 = vld [vmem:[%s0 + $0x8] sm:$0xff]
  %v26 = vld [vmem:[%s0 + $0x10] sm:$0xff]
  %v27 = vld [vmem:[%s0 + $0x18] sm:$0xff]
  %v28 = vld [vmem:[%s0 + $0x20] sm:$0xff]
  %v29 = vld [vmem:[%s0 + $0x28] sm:$0xff]
  %v30 = vld [vmem:[%s0 + $0x30] sm:$0xff]
  %v31 = vld [vmem:[%s0 + $0x38] sm:$0xff]
  %v32 = vld [vmem:[%s0 + $0x40] sm:$0xff]
  %v33 = vld [vmem:[%s0 + $0x48] sm:$0xff]
  %v34 = vld [vmem:[%s0 + $0x50] sm:$0xff]
  %v35 = vld [vmem:[%s0 + $0x58] sm:$0xff]
  %v36 = vld [vmem:[%s0 + $0x60] sm:$0xff]
  %v37 = vld [vmem:[%s0 + $0x68] sm:$0xff]
  %v38 = vld [vmem:[%s0 + $0x70] sm:$0xff]
  %v39 = vld [vmem:[%s0 + $0x78] sm:$0xff]
  %v40 = vld [vmem:[%s0 + $0x80] sm:$0xff]
  %v41 = vld [vmem:[%s0 + $0x88] sm:$0xff]
  %v42 = vld [vmem:[%s0 + $0x90] sm:$0xff]
  %v43 = vld [vmem:[%s0 + $0x98] sm:$0xff]
  %v44 = vld [vmem:[%s0 + $0xa0] sm:$0xff]
  %v45 = vld [vmem:[%s0 + $0xa8] sm:$0xff]
  %v46 = vld [vmem:[%s0 + $0xb0] sm:$0xff]
  %v47 = vld [vmem:[%s0 + $0xb8] sm:$0xff]
  %v48 = vld [vmem:[%s0 + $0xc0] sm:$0xff]
  %v49 = vld [vmem:[%s0 + $0xc8] sm:$0xff]
  %v50 = vld [vmem:[%s0 + $0xd0] sm:$0xff]
  %v51 = vld [vmem:[%s0 + $0xd8] sm:$0xff]
  %v52 = vld [vmem:[%s0 + $0xe0] sm:$0xff]
  %v53 = vld [vmem:[%s0 + $0xe8] sm:$0xff]
  %v54 = vld [vmem:[%s0 + $0xf0] sm:$0xff]
  %v55 = vld [vmem:[%s0 + $0xf8] sm:$0xff]
  %v56 = vld [vmem:[%s0 + $0x100] sm:$0xff]
  %v57 = vld [vmem:[%s0 + $0x108] sm:$0xff]
  %v58 = vld [vmem:[%s0 + $0x110] sm:$0xff]
  %v59 = vld [vmem:[%s0 + $0x118] sm:$0xff]
  %v60 = vld [vmem:[%s0 + $0x120] sm:$0xff]
  %v61 = vld [vmem:[%s0 + $0x128] sm:$0xff]
  %v62 = vld [vmem:[%s0 + $0x130] sm:$0xff]
  %v63 = vld [vmem:[%s0 + $0x138] sm:$0xff]
  %v64 = vld [vmem:[%s0 + $0x140] sm:$0xff]
  %v65 = vld [vmem:[%s0 + $0x148] sm:$0xff]
  %v66 = vld [vmem:[%s0 + $0x150] sm:$0xff]
  %v67 = vld [vmem:[%s0 + $0x158] sm:$0xff]
  %v68 = vld [vmem:[%s0 + $0x160] sm:$0xff]
  %v69 = vld [vmem:[%s0 + $0x168] sm:$0xff]
  %v70 = vld [vmem:[%s0 + $0x170] sm:$0xff]
  %v71 = vld [vmem:[%s0 + $0x178] sm:$0xff]
  %v72 = vld [vmem:[%s0 + $0x180] sm:$0xff]
  %v73 = vld [vmem:[%s0 + $0x188] sm:$0xff]
  %vm74 = vcmask 654336
  %v76 = vsel %vm74, %v24, 0
  %v79 = vsel %vm74, %v25, 0
  %v82 = vsel %vm74, %v26, 0
  %v85 = vsel %vm74, %v27, 0
  %v88 = vsel %vm74, %v28, 0
  %v91 = vsel %vm74, %v29, 0
  %v94 = vsel %vm74, %v30, 0
  %v97 = vsel %vm74, %v31, 0
  %v100 = vsel %vm74, %v32, 0
  %v103 = vsel %vm74, %v33, 0
  %v106 = vsel %vm74, %v34, 0
  %v109 = vsel %vm74, %v35, 0
  %v112 = vsel %vm74, %v36, 0
  %v115 = vsel %vm74, %v37, 0
  %v118 = vsel %vm74, %v38, 0
  %v121 = vsel %vm74, %v39, 0
  %v124 = vsel %vm74, %v40, 0
  %v127 = vsel %vm74, %v41, 0
  %v130 = vsel %vm74, %v42, 0
  %v133 = vsel %vm74, %v43, 0
  %v136 = vsel %vm74, %v44, 0
  %v139 = vsel %vm74, %v45, 0
  %v142 = vsel %vm74, %v46, 0
  %v145 = vsel %vm74, %v47, 0
  %v148 = vsel %vm74, %v48, 0
  %v151 = vsel %vm74, %v49, 0
  %v154 = vsel %vm74, %v50, 0
  %v157 = vsel %vm74, %v51, 0
  %v160 = vsel %vm74, %v52, 0
  %v163 = vsel %vm74, %v53, 0
  %v166 = vsel %vm74, %v54, 0
  %v169 = vsel %vm74, %v55, 0
  %v172 = vsel %vm74, %v56, 0
  %v175 = vsel %vm74, %v57, 0
  %v178 = vsel %vm74, %v58, 0
  %v181 = vsel %vm74, %v59, 0
  %v184 = vsel %vm74, %v60, 0
  %v187 = vsel %vm74, %v61, 0
  %v190 = vsel %vm74, %v62, 0
  %v193 = vsel %vm74, %v63, 0
  %v196 = vsel %vm74, %v64, 0
  %v199 = vsel %vm74, %v65, 0
  %v202 = vsel %vm74, %v66, 0
  %v205 = vsel %vm74, %v67, 0
  %v208 = vsel %vm74, %v68, 0
  %v211 = vsel %vm74, %v69, 0
  %v214 = vsel %vm74, %v70, 0
  %v217 = vsel %vm74, %v71, 0
  %v220 = vsel %vm74, %v72, 0
  %v223 = vsel %vm74, %v73, 0
  %225 = vmatprep.subr.mxu0 0.0
  %226 = vmatpush1.msra.mxu0 %v14
  %227 = vmatprep.subr.mxu0 0.0
  %228 = vmatpush1.msra.mxu0 %v15
  %229 = vmatprep.subr.mxu0 0.0
  %230 = vmatpush1.msra.mxu0 %v16
  %231 = vmatprep.subr.mxu0 0.0
  %232 = vmatpush1.msra.mxu0 %v17
  %233 = vmatprep.subr.mxu0 0.0
  %234 = vmatpush1.msra.mxu0 %v18
  %235 = vmatprep.subr.mxu0 0.0
  %236 = vmatpush1.msra.mxu0 %v19
  %237 = vmatprep.subr.mxu0 0.0
  %238 = vmatpush1.msra.mxu0 %v20
  %239 = vmatprep.subr.mxu0 0.0
  %240 = vmatpush1.msra.mxu0 %v21
  %241 = vmatprep.subr.mxu0 0.0
  %242 = vmatpush1.msra.mxu0 %v22
  %243 = vmatprep.subr.mxu0 0.0
  %244 = vmatpush1.msra.mxu0 %v23
  %245 = vmatprep.subr.mxu0 0.0
  %246 = vmatpush1.msra.mxu0 0.0
  %247 = vmatprep.subr.mxu0 0.0
  %248 = vmatpush1.msra.mxu0 0.0
  %249 = vmatprep.subr.mxu0 0.0
  %250 = vmatpush1.msra.mxu0 0.0
  %251 = vmatprep.subr.mxu0 0.0
  %252 = vmatpush1.msra.mxu0 0.0
  %253 = vmatprep.subr.mxu0 0.0
  %254 = vmatpush1.msra.mxu0 0.0
  %255 = vmatprep.subr.mxu0 0.0
  %256 = vmatpush1.msra.mxu0 0.0
  %257 = vmatprep.subr.mxu0 0.0
  %258 = vmatpush1.msra.mxu0 0.0
  %259 = vmatprep.subr.mxu0 0.0
  %260 = vmatpush1.msra.mxu0 0.0
  %261 = vmatprep.subr.mxu0 0.0
  %262 = vmatpush1.msra.mxu0 0.0
  %263 = vmatprep.subr.mxu0 0.0
  %264 = vmatpush1.msra.mxu0 0.0
  %265 = vmatprep.subr.mxu0 0.0
  %266 = vmatpush1.msra.mxu0 0.0
  %267 = vmatprep.subr.mxu0 0.0
  %268 = vmatpush1.msra.mxu0 0.0
  %269 = vmatprep.subr.mxu0 0.0
  %270 = vmatpush1.msra.mxu0 0.0
  %271 = vmatprep.subr.mxu0 0.0
  %272 = vmatpush1.msra.mxu0 0.0
  %273 = vmatprep.subr.mxu0 0.0
  %274 = vmatpush1.msra.mxu0 0.0
  %275 = vmatprep.subr.mxu0 0.0
  %276 = vmatpush1.msra.mxu0 0.0
  %277 = vmatprep.subr.mxu0 0.0
  %278 = vmatpush1.msra.mxu0 0.0
  %279 = vmatprep.subr.mxu0 0.0
  %280 = vmatpush1.msra.mxu0 0.0
  %281 = vmatprep.subr.mxu0 0.0
  %282 = vmatpush1.msra.mxu0 0.0
  %283 = vmatprep.subr.mxu0 0.0
  %284 = vmatpush1.msra.mxu0 0.0
  %285 = vmatprep.subr.mxu0 0.0
  %286 = vmatpush1.msra.mxu0 0.0
  %287 = vmatprep.subr.mxu0 0.0
  %288 = vmatpush1.msra.mxu0 0.0
  %289 = vmatprep.mubr.f32.mxu0 0.0
  %290 = vmatmul.mubr.f32.gmra.mrb[0].mxu0 %v76
  %v291 = vpop.f32.mrb[0].mxu0
  %v292 = vadd.f32 0.0, %v291
  %v293 = vpop.f32.mrb[0].mxu0
  %294 = vmatprep.mubr.f32.mxu0 0.0
  %295 = vmatmul.mubr.f32.gmra.mrb[0].mxu0 %v79
  %v296 = vpop.f32.mrb[0].mxu0
  %v297 = vadd.f32 0.0, %v296
  %v298 = vpop.f32.mrb[0].mxu0
  %299 = vmatprep.mubr.f32.mxu0 0.0
  %300 = vmatmul.mubr.f32.gmra.mrb[0].mxu0 %v82
  %v301 = vpop.f32.mrb[0].mxu0
  %v302 = vadd.f32 0.0, %v301
  %v303 = vpop.f32.mrb[0].mxu0
  %304 = vmatprep.mubr.f32.mxu0 0.0
  %305 = vmatmul.mubr.f32.gmra.mrb[0].mxu0 %v85
  %v306 = vpop.f32.mrb[0].mxu0
  %v307 = vadd.f32 0.0, %v306
  %v308 = vpop.f32.mrb[0].mxu0
  %309 = vmatprep.mubr.f32.mxu0 0.0
  %310 = vmatmul.mubr.f32.gmra.mrb[0].mxu0 %v88
  %v311 = vpop.f32.mrb[0].mxu0
  %v312 = vadd.f32 0.0, %v311
  %v313 = vpop.f32.mrb[0].mxu0
  %314 = vmatprep.mubr.f32.mxu0 0.0
  %315 = vmatmul.mubr.f32.gmra.mrb[0].mxu0 %v91
  %v316 = vpop.f32.mrb[0].mxu0
  %v317 = vadd.f32 0.0, %v316
  %v318 = vpop.f32.mrb[0].mxu0
  %319 = vmatprep.mubr.f32.mxu0 0.0
  %320 = vmatmul.mubr.f32.gmra.mrb[0].mxu0 %v94
  %v321 = vpop.f32.mrb[0].mxu0
  %v322 = vadd.f32 0.0, %v321
  %v323 = vpop.f32.mrb[0].mxu0
  %324 = vmatprep.mubr.f32.mxu0 0.0
  %325 = vmatmul.mubr.f32.gmra.mrb[0].mxu0 %v97
  %v326 = vpop.f32.mrb[0].mxu0
  %v327 = vadd.f32 0.0, %v326
  %v328 = vpop.f32.mrb[0].mxu0
  %329 = vmatprep.mubr.f32.mxu0 0.0
  %330 = vmatmul.mubr.f32.gmra.mrb[0].mxu0 %v100
  %v331 = vpop.f32.mrb[0].mxu0
  %v332 = vadd.f32 0.0, %v331
  %v333 = vpop.f32.mrb[0].mxu0
  %334 = vmatprep.mubr.f32.mxu0 0.0
  %335 = vmatmul.mubr.f32.gmra.mrb[0].mxu0 %v103
  %v336 = vpop.f32.mrb[0].mxu0
  %v337 = vadd.f32 0.0, %v336
  %v338 = vpop.f32.mrb[0].mxu0
  %339 = vmatprep.mubr.f32.mxu0 0.0
  %340 = vmatmul.mubr.f32.gmra.mrb[0].mxu0 %v106
  %v341 = vpop.f32.mrb[0].mxu0
  %v342 = vadd.f32 0.0, %v341
  %v343 = vpop.f32.mrb[0].mxu0
  %344 = vmatprep.mubr.f32.mxu0 0.0
  %345 = vmatmul.mubr.f32.gmra.mrb[0].mxu0 %v109
  %v346 = vpop.f32.mrb[0].mxu0
  %v347 = vadd.f32 0.0, %v346
  %v348 = vpop.f32.mrb[0].mxu0
  %349 = vmatprep.mubr.f32.mxu0 0.0
  %350 = vmatmul.mubr.f32.gmra.mrb[0].mxu0 %v112
  %v351 = vpop.f32.mrb[0].mxu0
  %v352 = vadd.f32 0.0, %v351
  %v353 = vpop.f32.mrb[0].mxu0
  %354 = vmatprep.mubr.f32.mxu0 0.0
  %355 = vmatmul.mubr.f32.gmra.mrb[0].mxu0 %v115
  %v356 = vpop.f32.mrb[0].mxu0
  %v357 = vadd.f32 0.0, %v356
  %v358 = vpop.f32.mrb[0].mxu0
  %359 = vmatprep.mubr.f32.mxu0 0.0
  %360 = vmatmul.mubr.f32.gmra.mrb[0].mxu0 %v118
  %v361 = vpop.f32.mrb[0].mxu0
  %v362 = vadd.f32 0.0, %v361
  %v363 = vpop.f32.mrb[0].mxu0
  %364 = vmatprep.mubr.f32.mxu0 0.0
  %365 = vmatmul.mubr.f32.gmra.mrb[0].mxu0 %v121
  %v366 = vpop.f32.mrb[0].mxu0
  %v367 = vadd.f32 0.0, %v366
  %v368 = vpop.f32.mrb[0].mxu0
  %369 = vmatprep.mubr.f32.mxu0 0.0
  %370 = vmatmul.mubr.f32.gmra.mrb[0].mxu0 %v124
  %v371 = vpop.f32.mrb[0].mxu0
  %v372 = vadd.f32 0.0, %v371
  %v373 = vpop.f32.mrb[0].mxu0
  %374 = vmatprep.mubr.f32.mxu0 0.0
  %375 = vmatmul.mubr.f32.gmra.mrb[0].mxu0 %v127
  %v376 = vpop.f32.mrb[0].mxu0
  %v377 = vadd.f32 0.0, %v376
  %v378 = vpop.f32.mrb[0].mxu0
  %379 = vmatprep.mubr.f32.mxu0 0.0
  %380 = vmatmul.mubr.f32.gmra.mrb[0].mxu0 %v130
  %v381 = vpop.f32.mrb[0].mxu0
  %v382 = vadd.f32 0.0, %v381
  %v383 = vpop.f32.mrb[0].mxu0
  %384 = vmatprep.mubr.f32.mxu0 0.0
  %385 = vmatmul.mubr.f32.gmra.mrb[0].mxu0 %v133
  %v386 = vpop.f32.mrb[0].mxu0
  %v387 = vadd.f32 0.0, %v386
  %v388 = vpop.f32.mrb[0].mxu0
  %389 = vmatprep.mubr.f32.mxu0 0.0
  %390 = vmatmul.mubr.f32.gmra.mrb[0].mxu0 %v136
  %v391 = vpop.f32.mrb[0].mxu0
  %v392 = vadd.f32 0.0, %v391
  %v393 = vpop.f32.mrb[0].mxu0
  %394 = vmatprep.mubr.f32.mxu0 0.0
  %395 = vmatmul.mubr.f32.gmra.mrb[0].mxu0 %v139
  %v396 = vpop.f32.mrb[0].mxu0
  %v397 = vadd.f32 0.0, %v396
  %v398 = vpop.f32.mrb[0].mxu0
  %399 = vmatprep.mubr.f32.mxu0 0.0
  %400 = vmatmul.mubr.f32.gmra.mrb[0].mxu0 %v142
  %v401 = vpop.f32.mrb[0].mxu0
  %v402 = vadd.f32 0.0, %v401
  %v403 = vpop.f32.mrb[0].mxu0
  %404 = vmatprep.mubr.f32.mxu0 0.0
  %405 = vmatmul.mubr.f32.gmra.mrb[0].mxu0 %v145
  %v406 = vpop.f32.mrb[0].mxu0
  %v407 = vadd.f32 0.0, %v406
  %v408 = vpop.f32.mrb[0].mxu0
  %409 = vmatprep.mubr.f32.mxu0 0.0
  %410 = vmatmul.mubr.f32.gmra.mrb[0].mxu0 %v148
  %v411 = vpop.f32.mrb[0].mxu0
  %v412 = vadd.f32 0.0, %v411
  %v413 = vpop.f32.mrb[0].mxu0
  %414 = vmatprep.mubr.f32.mxu0 0.0
  %415 = vmatmul.mubr.f32.gmra.mrb[0].mxu0 %v151
  %v416 = vpop.f32.mrb[0].mxu0
  %v417 = vadd.f32 0.0, %v416
  %v418 = vpop.f32.mrb[0].mxu0
  %419 = vmatprep.mubr.f32.mxu0 0.0
  %420 = vmatmul.mubr.f32.gmra.mrb[0].mxu0 %v154
  %v421 = vpop.f32.mrb[0].mxu0
  %v422 = vadd.f32 0.0, %v421
  %v423 = vpop.f32.mrb[0].mxu0
  %424 = vmatprep.mubr.f32.mxu0 0.0
  %425 = vmatmul.mubr.f32.gmra.mrb[0].mxu0 %v157
  %v426 = vpop.f32.mrb[0].mxu0
  %v427 = vadd.f32 0.0, %v426
  %v428 = vpop.f32.mrb[0].mxu0
  %429 = vmatprep.mubr.f32.mxu0 0.0
  %430 = vmatmul.mubr.f32.gmra.mrb[0].mxu0 %v160
  %v431 = vpop.f32.mrb[0].mxu0
  %v432 = vadd.f32 0.0, %v431
  %v433 = vpop.f32.mrb[0].mxu0
  %434 = vmatprep.mubr.f32.mxu0 0.0
  %435 = vmatmul.mubr.f32.gmra.mrb[0].mxu0 %v163
  %v436 = vpop.f32.mrb[0].mxu0
  %v437 = vadd.f32 0.0, %v436
  %v438 = vpop.f32.mrb[0].mxu0
  %439 = vmatprep.mubr.f32.mxu0 0.0
  %440 = vmatmul.mubr.f32.gmra.mrb[0].mxu0 %v166
  %v441 = vpop.f32.mrb[0].mxu0
  %v442 = vadd.f32 0.0, %v441
  %v443 = vpop.f32.mrb[0].mxu0
  %444 = vmatprep.mubr.f32.mxu0 0.0
  %445 = vmatmul.mubr.f32.gmra.mrb[0].mxu0 %v169
  %v446 = vpop.f32.mrb[0].mxu0
  %v447 = vadd.f32 0.0, %v446
  %v448 = vpop.f32.mrb[0].mxu0
  %449 = vmatprep.mubr.f32.mxu0 0.0
  %450 = vmatmul.mubr.f32.gmra.mrb[0].mxu0 %v172
  %v451 = vpop.f32.mrb[0].mxu0
  %v452 = vadd.f32 0.0, %v451
  %v453 = vpop.f32.mrb[0].mxu0
  %454 = vmatprep.mubr.f32.mxu0 0.0
  %455 = vmatmul.mubr.f32.gmra.mrb[0].mxu0 %v175
  %v456 = vpop.f32.mrb[0].mxu0
  %v457 = vadd.f32 0.0, %v456
  %v458 = vpop.f32.mrb[0].mxu0
  %459 = vmatprep.mubr.f32.mxu0 0.0
  %460 = vmatmul.mubr.f32.gmra.mrb[0].mxu0 %v178
  %v461 = vpop.f32.mrb[0].mxu0
  %v462 = vadd.f32 0.0, %v461
  %v463 = vpop.f32.mrb[0].mxu0
  %464 = vmatprep.mubr.f32.mxu0 0.0
  %465 = vmatmul.mubr.f32.gmra.mrb[0].mxu0 %v181
  %v466 = vpop.f32.mrb[0].mxu0
  %v467 = vadd.f32 0.0, %v466
  %v468 = vpop.f32.mrb[0].mxu0
  %469 = vmatprep.mubr.f32.mxu0 0.0
  %470 = vmatmul.mubr.f32.gmra.mrb[0].mxu0 %v184
  %v471 = vpop.f32.mrb[0].mxu0
  %v472 = vadd.f32 0.0, %v471
  %v473 = vpop.f32.mrb[0].mxu0
  %474 = vmatprep.mubr.f32.mxu0 0.0
  %475 = vmatmul.mubr.f32.gmra.mrb[0].mxu0 %v187
  %v476 = vpop.f32.mrb[0].mxu0
  %v477 = vadd.f32 0.0, %v476
  %v478 = vpop.f32.mrb[0].mxu0
  %479 = vmatprep.mubr.f32.mxu0 0.0
  %480 = vmatmul.mubr.f32.gmra.mrb[0].mxu0 %v190
  %v481 = vpop.f32.mrb[0].mxu0
  %v482 = vadd.f32 0.0, %v481
  %v483 = vpop.f32.mrb[0].mxu0
  %484 = vmatprep.mubr.f32.mxu0 0.0
  %485 = vmatmul.mubr.f32.gmra.mrb[0].mxu0 %v193
  %v486 = vpop.f32.mrb[0].mxu0
  %v487 = vadd.f32 0.0, %v486
  %v488 = vpop.f32.mrb[0].mxu0
  %489 = vmatprep.mubr.f32.mxu0 0.0
  %490 = vmatmul.mubr.f32.gmra.mrb[0].mxu0 %v196
  %v491 = vpop.f32.mrb[0].mxu0
  %v492 = vadd.f32 0.0, %v491
  %v493 = vpop.f32.mrb[0].mxu0
  %494 = vmatprep.mubr.f32.mxu0 0.0
  %495 = vmatmul.mubr.f32.gmra.mrb[0].mxu0 %v199
  %v496 = vpop.f32.mrb[0].mxu0
  %v497 = vadd.f32 0.0, %v496
  %v498 = vpop.f32.mrb[0].mxu0
  %499 = vmatprep.mubr.f32.mxu0 0.0
  %500 = vmatmul.mubr.f32.gmra.mrb[0].mxu0 %v202
  %v501 = vpop.f32.mrb[0].mxu0
  %v502 = vadd.f32 0.0, %v501
  %v503 = vpop.f32.mrb[0].mxu0
  %504 = vmatprep.mubr.f32.mxu0 0.0
  %505 = vmatmul.mubr.f32.gmra.mrb[0].mxu0 %v205
  %v506 = vpop.f32.mrb[0].mxu0
  %v507 = vadd.f32 0.0, %v506
  %v508 = vpop.f32.mrb[0].mxu0
  %509 = vmatprep.mubr.f32.mxu0 0.0
  %510 = vmatmul.mubr.f32.gmra.mrb[0].mxu0 %v208
  %v511 = vpop.f32.mrb[0].mxu0
  %v512 = vadd.f32 0.0, %v511
  %v513 = vpop.f32.mrb[0].mxu0
  %514 = vmatprep.mubr.f32.mxu0 0.0
  %515 = vmatmul.mubr.f32.gmra.mrb[0].mxu0 %v211
  %v516 = vpop.f32.mrb[0].mxu0
  %v517 = vadd.f32 0.0, %v516
  %v518 = vpop.f32.mrb[0].mxu0
  %519 = vmatprep.mubr.f32.mxu0 0.0
  %520 = vmatmul.mubr.f32.gmra.mrb[0].mxu0 %v214
  %v521 = vpop.f32.mrb[0].mxu0
  %v522 = vadd.f32 0.0, %v521
  %v523 = vpop.f32.mrb[0].mxu0
  %524 = vmatprep.mubr.f32.mxu0 0.0
  %525 = vmatmul.mubr.f32.gmra.mrb[0].mxu0 %v217
  %v526 = vpop.f32.mrb[0].mxu0
  %v527 = vadd.f32 0.0, %v526
  %v528 = vpop.f32.mrb[0].mxu0
  %529 = vmatprep.mubr.f32.mxu0 0.0
  %530 = vmatmul.mubr.f32.gmra.mrb[0].mxu0 %v220
  %v531 = vpop.f32.mrb[0].mxu0
  %v532 = vadd.f32 0.0, %v531
  %v533 = vpop.f32.mrb[0].mxu0
  %534 = vmatprep.mubr.f32.mxu0 0.0
  %535 = vmatmul.mubr.f32.gmra.mrb[0].mxu0 %v223
  %v536 = vpop.f32.mrb[0].mxu0
  %v537 = vadd.f32 0.0, %v536
  %v538 = vpop.f32.mrb[0].mxu0
  %539 = vdwg.mxu0
  %s540 = scalar_lea.vmem %s0, 400
  %v541 = vld [vmem:[%s540] sm:$0xff]
  %v542 = vld [vmem:[%s540 + $0x8] sm:$0xff]
  %v543 = vld [vmem:[%s540 + $0x10] sm:$0xff]
  %v544 = vld [vmem:[%s540 + $0x18] sm:$0xff]
  %v545 = vld [vmem:[%s540 + $0x20] sm:$0xff]
  %v546 = vld [vmem:[%s540 + $0x28] sm:$0xff]
  %v547 = vld [vmem:[%s540 + $0x30] sm:$0xff]
  %v548 = vld [vmem:[%s540 + $0x38] sm:$0xff]
  %v549 = vld [vmem:[%s540 + $0x40] sm:$0xff]
  %v550 = vld [vmem:[%s540 + $0x48] sm:$0xff]
  %v551 = vld [vmem:[%s540 + $0x50] sm:$0xff]
  %v552 = vld [vmem:[%s540 + $0x58] sm:$0xff]
  %v553 = vld [vmem:[%s540 + $0x60] sm:$0xff]
  %v554 = vld [vmem:[%s540 + $0x68] sm:$0xff]
  %v555 = vld [vmem:[%s540 + $0x70] sm:$0xff]
  %v556 = vld [vmem:[%s540 + $0x78] sm:$0xff]
  %v557 = vld [vmem:[%s540 + $0x80] sm:$0xff]
  %v558 = vld [vmem:[%s540 + $0x88] sm:$0xff]
  %v559 = vld [vmem:[%s540 + $0x90] sm:$0xff]
  %v560 = vld [vmem:[%s540 + $0x98] sm:$0xff]
  %v561 = vld [vmem:[%s540 + $0xa0] sm:$0xff]
  %v562 = vld [vmem:[%s540 + $0xa8] sm:$0xff]
  %v563 = vld [vmem:[%s540 + $0xb0] sm:$0xff]
  %v564 = vld [vmem:[%s540 + $0xb8] sm:$0xff]
  %v565 = vld [vmem:[%s540 + $0xc0] sm:$0xff]
  %v566 = vld [vmem:[%s540 + $0xc8] sm:$0xff]
  %v567 = vld [vmem:[%s540 + $0xd0] sm:$0xff]
  %v568 = vld [vmem:[%s540 + $0xd8] sm:$0xff]
  %v569 = vld [vmem:[%s540 + $0xe0] sm:$0xff]
  %v570 = vld [vmem:[%s540 + $0xe8] sm:$0xff]
  %v571 = vld [vmem:[%s540 + $0xf0] sm:$0xff]
  %v572 = vld [vmem:[%s540 + $0xf8] sm:$0xff]
  %v573 = vld [vmem:[%s540 + $0x100] sm:$0xff]
  %v574 = vld [vmem:[%s540 + $0x108] sm:$0xff]
  %v575 = vld [vmem:[%s540 + $0x110] sm:$0xff]
  %v576 = vld [vmem:[%s540 + $0x118] sm:$0xff]
  %v577 = vld [vmem:[%s540 + $0x120] sm:$0xff]
  %v578 = vld [vmem:[%s540 + $0x128] sm:$0xff]
  %v579 = vld [vmem:[%s540 + $0x130] sm:$0xff]
  %v580 = vld [vmem:[%s540 + $0x138] sm:$0xff]
  %v581 = vld [vmem:[%s540 + $0x140] sm:$0xff]
  %v582 = vld [vmem:[%s540 + $0x148] sm:$0xff]
  %v583 = vld [vmem:[%s540 + $0x150] sm:$0xff]
  %v584 = vld [vmem:[%s540 + $0x158] sm:$0xff]
  %v585 = vld [vmem:[%s540 + $0x160] sm:$0xff]
  %v586 = vld [vmem:[%s540 + $0x168] sm:$0xff]
  %v587 = vld [vmem:[%s540 + $0x170] sm:$0xff]
  %v588 = vld [vmem:[%s540 + $0x178] sm:$0xff]
  %v589 = vld [vmem:[%s540 + $0x180] sm:$0xff]
  %v590 = vld [vmem:[%s540 + $0x188] sm:$0xff]
  %v592 = vsel %vm74, %v541, 0
  %v595 = vsel %vm74, %v542, 0
  %v598 = vsel %vm74, %v543, 0
  %v601 = vsel %vm74, %v544, 0
  %v604 = vsel %vm74, %v545, 0
  %v607 = vsel %vm74, %v546, 0
  %v610 = vsel %vm74, %v547, 0
  %v613 = vsel %vm74, %v548, 0
  %v616 = vsel %vm74, %v549, 0
  %v619 = vsel %vm74, %v550, 0
  %v622 = vsel %vm74, %v551, 0
  %v625 = vsel %vm74, %v552, 0
  %v628 = vsel %vm74, %v553, 0
  %v631 = vsel %vm74, %v554, 0
  %v634 = vsel %vm74, %v555, 0
  %v637 = vsel %vm74, %v556, 0
  %v640 = vsel %vm74, %v557, 0
  %v643 = vsel %vm74, %v558, 0
  %v646 = vsel %vm74, %v559, 0
  %v649 = vsel %vm74, %v560, 0
  %v652 = vsel %vm74, %v561, 0
  %v655 = vsel %vm74, %v562, 0
  %v658 = vsel %vm74, %v563, 0
  %v661 = vsel %vm74, %v564, 0
  %v664 = vsel %vm74, %v565, 0
  %v667 = vsel %vm74, %v566, 0
  %v670 = vsel %vm74, %v567, 0
  %v673 = vsel %vm74, %v568, 0
  %v676 = vsel %vm74, %v569, 0
  %v679 = vsel %vm74, %v570, 0
  %v682 = vsel %vm74, %v571, 0
  %v685 = vsel %vm74, %v572, 0
  %v688 = vsel %vm74, %v573, 0
  %v691 = vsel %vm74, %v574, 0
  %v694 = vsel %vm74, %v575, 0
  %v697 = vsel %vm74, %v576, 0
  %v700 = vsel %vm74, %v577, 0
  %v703 = vsel %vm74, %v578, 0
  %v706 = vsel %vm74, %v579, 0
  %v709 = vsel %vm74, %v580, 0
  %v712 = vsel %vm74, %v581, 0
  %v715 = vsel %vm74, %v582, 0
  %v718 = vsel %vm74, %v583, 0
  %v721 = vsel %vm74, %v584, 0
  %v724 = vsel %vm74, %v585, 0
  %v727 = vsel %vm74, %v586, 0
  %v730 = vsel %vm74, %v587, 0
  %v733 = vsel %vm74, %v588, 0
  %v736 = vsel %vm74, %v589, 0
  %v739 = vsel %vm74, %v590, 0
  %741 = vmatprep.subr.mxu0 0.0
  %742 = vmatpush1.msra.mxu0 %v14
  %743 = vmatprep.subr.mxu0 0.0
  %744 = vmatpush1.msra.mxu0 %v15
  %745 = vmatprep.subr.mxu0 0.0
  %746 = vmatpush1.msra.mxu0 %v16
  %747 = vmatprep.subr.mxu0 0.0
  %748 = vmatpush1.msra.mxu0 %v17
  %749 = vmatprep.subr.mxu0 0.0
  %750 = vmatpush1.msra.mxu0 %v18
  %751 = vmatprep.subr.mxu0 0.0
  %752 = vmatpush1.msra.mxu0 %v19
  %753 = vmatprep.subr.mxu0 0.0
  %754 = vmatpush1.msra.mxu0 %v20
  %755 = vmatprep.subr.mxu0 0.0
  %756 = vmatpush1.msra.mxu0 %v21
  %757 = vmatprep.subr.mxu0 0.0
  %758 = vmatpush1.msra.mxu0 %v22
  %759 = vmatprep.subr.mxu0 0.0
  %760 = vmatpush1.msra.mxu0 %v23
  %761 = vmatprep.subr.mxu0 0.0
  %762 = vmatpush1.msra.mxu0 0.0
  %763 = vmatprep.subr.mxu0 0.0
  %764 = vmatpush1.msra.mxu0 0.0
  %765 = vmatprep.subr.mxu0 0.0
  %766 = vmatpush1.msra.mxu0 0.0
  %767 = vmatprep.subr.mxu0 0.0
  %768 = vmatpush1.msra.mxu0 0.0
  %769 = vmatprep.subr.mxu0 0.0
  %770 = vmatpush1.msra.mxu0 0.0
  %771 = vmatprep.subr.mxu0 0.0
  %772 = vmatpush1.msra.mxu0 0.0
  %773 = vmatprep.subr.mxu0 0.0
  %774 = vmatpush1.msra.mxu0 0.0
  %775 = vmatprep.subr.mxu0 0.0
  %776 = vmatpush1.msra.mxu0 0.0
  %777 = vmatprep.subr.mxu0 0.0
  %778 = vmatpush1.msra.mxu0 0.0
  %779 = vmatprep.subr.mxu0 0.0
  %780 = vmatpush1.msra.mxu0 0.0
  %781 = vmatprep.subr.mxu0 0.0
  %782 = vmatpush1.msra.mxu0 0.0
  %783 = vmatprep.subr.mxu0 0.0
  %784 = vmatpush1.msra.mxu0 0.0
  %785 = vmatprep.subr.mxu0 0.0
  %786 = vmatpush1.msra.mxu0 0.0
  %787 = vmatprep.subr.mxu0 0.0
  %788 = vmatpush1.msra.mxu0 0.0
  %789 = vmatprep.subr.mxu0 0.0
  %790 = vmatpush1.msra.mxu0 0.0
  %791 = vmatprep.subr.mxu0 0.0
  %792 = vmatpush1.msra.mxu0 0.0
  %793 = vmatprep.subr.mxu0 0.0
  %794 = vmatpush1.msra.mxu0 0.0
  %795 = vmatprep.subr.mxu0 0.0
  %796 = vmatpush1.msra.mxu0 0.0
  %797 = vmatprep.subr.mxu0 0.0
  %798 = vmatpush1.msra.mxu0 0.0
  %799 = vmatprep.subr.mxu0 0.0
  %800 = vmatpush1.msra.mxu0 0.0
  %801 = vmatprep.subr.mxu0 0.0
  %802 = vmatpush1.msra.mxu0 0.0
  %803 = vmatprep.subr.mxu0 0.0
  %804 = vmatpush1.msra.mxu0 0.0
  %805 = vmatprep.mubr.f32.mxu0 0.0
  %806 = vmatmul.mubr.f32.gmra.mrb[0].mxu0 %v592
  %v807 = vpop.f32.mrb[0].mxu0
  %v808 = vadd.f32 0.0, %v807
  %v809 = vpop.f32.mrb[0].mxu0
  %810 = vmatprep.mubr.f32.mxu0 0.0
  %811 = vmatmul.mubr.f32.gmra.mrb[0].mxu0 %v595
  %v812 = vpop.f32.mrb[0].mxu0
  %v813 = vadd.f32 0.0, %v812
  %v814 = vpop.f32.mrb[0].mxu0
  %815 = vmatprep.mubr.f32.mxu0 0.0
  %816 = vmatmul.mubr.f32.gmra.mrb[0].mxu0 %v598
  %v817 = vpop.f32.mrb[0].mxu0
  %v818 = vadd.f32 0.0, %v817
  %v819 = vpop.f32.mrb[0].mxu0
  %820 = vmatprep.mubr.f32.mxu0 0.0
  %821 = vmatmul.mubr.f32.gmra.mrb[0].mxu0 %v601
  %v822 = vpop.f32.mrb[0].mxu0
  %v823 = vadd.f32 0.0, %v822
  %v824 = vpop.f32.mrb[0].mxu0
  %825 = vmatprep.mubr.f32.mxu0 0.0
  %826 = vmatmul.mubr.f32.gmra.mrb[0].mxu0 %v604
  %v827 = vpop.f32.mrb[0].mxu0
  %v828 = vadd.f32 0.0, %v827
  %v829 = vpop.f32.mrb[0].mxu0
  %830 = vmatprep.mubr.f32.mxu0 0.0
  %831 = vmatmul.mubr.f32.gmra.mrb[0].mxu0 %v607
  %v832 = vpop.f32.mrb[0].mxu0
  %v833 = vadd.f32 0.0, %v832
  %v834 = vpop.f32.mrb[0].mxu0
  %835 = vmatprep.mubr.f32.mxu0 0.0
  %836 = vmatmul.mubr.f32.gmra.mrb[0].mxu0 %v610
  %v837 = vpop.f32.mrb[0].mxu0
  %v838 = vadd.f32 0.0, %v837
  %v839 = vpop.f32.mrb[0].mxu0
  %840 = vmatprep.mubr.f32.mxu0 0.0
  %841 = vmatmul.mubr.f32.gmra.mrb[0].mxu0 %v613
  %v842 = vpop.f32.mrb[0].mxu0
  %v843 = vadd.f32 0.0, %v842
  %v844 = vpop.f32.mrb[0].mxu0
  %845 = vmatprep.mubr.f32.mxu0 0.0
  %846 = vmatmul.mubr.f32.gmra.mrb[0].mxu0 %v616
  %v847 = vpop.f32.mrb[0].mxu0
  %v848 = vadd.f32 0.0, %v847
  %v849 = vpop.f32.mrb[0].mxu0
  %850 = vmatprep.mubr.f32.mxu0 0.0
  %851 = vmatmul.mubr.f32.gmra.mrb[0].mxu0 %v619
  %v852 = vpop.f32.mrb[0].mxu0
  %v853 = vadd.f32 0.0, %v852
  %v854 = vpop.f32.mrb[0].mxu0
  %855 = vmatprep.mubr.f32.mxu0 0.0
  %856 = vmatmul.mubr.f32.gmra.mrb[0].mxu0 %v622
  %v857 = vpop.f32.mrb[0].mxu0
  %v858 = vadd.f32 0.0, %v857
  %v859 = vpop.f32.mrb[0].mxu0
  %860 = vmatprep.mubr.f32.mxu0 0.0
  %861 = vmatmul.mubr.f32.gmra.mrb[0].mxu0 %v625
  %v862 = vpop.f32.mrb[0].mxu0
  %v863 = vadd.f32 0.0, %v862
  %v864 = vpop.f32.mrb[0].mxu0
  %865 = vmatprep.mubr.f32.mxu0 0.0
  %866 = vmatmul.mubr.f32.gmra.mrb[0].mxu0 %v628
  %v867 = vpop.f32.mrb[0].mxu0
  %v868 = vadd.f32 0.0, %v867
  %v869 = vpop.f32.mrb[0].mxu0
  %870 = vmatprep.mubr.f32.mxu0 0.0
  %871 = vmatmul.mubr.f32.gmra.mrb[0].mxu0 %v631
  %v872 = vpop.f32.mrb[0].mxu0
  %v873 = vadd.f32 0.0, %v872
  %v874 = vpop.f32.mrb[0].mxu0
  %875 = vmatprep.mubr.f32.mxu0 0.0
  %876 = vmatmul.mubr.f32.gmra.mrb[0].mxu0 %v634
  %v877 = vpop.f32.mrb[0].mxu0
  %v878 = vadd.f32 0.0, %v877
  %v879 = vpop.f32.mrb[0].mxu0
  %880 = vmatprep.mubr.f32.mxu0 0.0
  %881 = vmatmul.mubr.f32.gmra.mrb[0].mxu0 %v637
  %v882 = vpop.f32.mrb[0].mxu0
  %v883 = vadd.f32 0.0, %v882
  %v884 = vpop.f32.mrb[0].mxu0
  %885 = vmatprep.mubr.f32.mxu0 0.0
  %886 = vmatmul.mubr.f32.gmra.mrb[0].mxu0 %v640
  %v887 = vpop.f32.mrb[0].mxu0
  %v888 = vadd.f32 0.0, %v887
  %v889 = vpop.f32.mrb[0].mxu0
  %890 = vmatprep.mubr.f32.mxu0 0.0
  %891 = vmatmul.mubr.f32.gmra.mrb[0].mxu0 %v643
  %v892 = vpop.f32.mrb[0].mxu0
  %v893 = vadd.f32 0.0, %v892
  %v894 = vpop.f32.mrb[0].mxu0
  %895 = vmatprep.mubr.f32.mxu0 0.0
  %896 = vmatmul.mubr.f32.gmra.mrb[0].mxu0 %v646
  %v897 = vpop.f32.mrb[0].mxu0
  %v898 = vadd.f32 0.0, %v897
  %v899 = vpop.f32.mrb[0].mxu0
  %900 = vmatprep.mubr.f32.mxu0 0.0
  %901 = vmatmul.mubr.f32.gmra.mrb[0].mxu0 %v649
  %v902 = vpop.f32.mrb[0].mxu0
  %v903 = vadd.f32 0.0, %v902
  %v904 = vpop.f32.mrb[0].mxu0
  %905 = vmatprep.mubr.f32.mxu0 0.0
  %906 = vmatmul.mubr.f32.gmra.mrb[0].mxu0 %v652
  %v907 = vpop.f32.mrb[0].mxu0
  %v908 = vadd.f32 0.0, %v907
  %v909 = vpop.f32.mrb[0].mxu0
  %910 = vmatprep.mubr.f32.mxu0 0.0
  %911 = vmatmul.mubr.f32.gmra.mrb[0].mxu0 %v655
  %v912 = vpop.f32.mrb[0].mxu0
  %v913 = vadd.f32 0.0, %v912
  %v914 = vpop.f32.mrb[0].mxu0
  %915 = vmatprep.mubr.f32.mxu0 0.0
  %916 = vmatmul.mubr.f32.gmra.mrb[0].mxu0 %v658
  %v917 = vpop.f32.mrb[0].mxu0
  %v918 = vadd.f32 0.0, %v917
  %v919 = vpop.f32.mrb[0].mxu0
  %920 = vmatprep.mubr.f32.mxu0 0.0
  %921 = vmatmul.mubr.f32.gmra.mrb[0].mxu0 %v661
  %v922 = vpop.f32.mrb[0].mxu0
  %v923 = vadd.f32 0.0, %v922
  %v924 = vpop.f32.mrb[0].mxu0
  %925 = vmatprep.mubr.f32.mxu0 0.0
  %926 = vmatmul.mubr.f32.gmra.mrb[0].mxu0 %v664
  %v927 = vpop.f32.mrb[0].mxu0
  %v928 = vadd.f32 0.0, %v927
  %v929 = vpop.f32.mrb[0].mxu0
  %930 = vmatprep.mubr.f32.mxu0 0.0
  %931 = vmatmul.mubr.f32.gmra.mrb[0].mxu0 %v667
  %v932 = vpop.f32.mrb[0].mxu0
  %v933 = vadd.f32 0.0, %v932
  %v934 = vpop.f32.mrb[0].mxu0
  %935 = vmatprep.mubr.f32.mxu0 0.0
  %936 = vmatmul.mubr.f32.gmra.mrb[0].mxu0 %v670
  %v937 = vpop.f32.mrb[0].mxu0
  %v938 = vadd.f32 0.0, %v937
  %v939 = vpop.f32.mrb[0].mxu0
  %940 = vmatprep.mubr.f32.mxu0 0.0
  %941 = vmatmul.mubr.f32.gmra.mrb[0].mxu0 %v673
  %v942 = vpop.f32.mrb[0].mxu0
  %v943 = vadd.f32 0.0, %v942
  %v944 = vpop.f32.mrb[0].mxu0
  %945 = vmatprep.mubr.f32.mxu0 0.0
  %946 = vmatmul.mubr.f32.gmra.mrb[0].mxu0 %v676
  %v947 = vpop.f32.mrb[0].mxu0
  %v948 = vadd.f32 0.0, %v947
  %v949 = vpop.f32.mrb[0].mxu0
  %950 = vmatprep.mubr.f32.mxu0 0.0
  %951 = vmatmul.mubr.f32.gmra.mrb[0].mxu0 %v679
  %v952 = vpop.f32.mrb[0].mxu0
  %v953 = vadd.f32 0.0, %v952
  %v954 = vpop.f32.mrb[0].mxu0
  %955 = vmatprep.mubr.f32.mxu0 0.0
  %956 = vmatmul.mubr.f32.gmra.mrb[0].mxu0 %v682
  %v957 = vpop.f32.mrb[0].mxu0
  %v958 = vadd.f32 0.0, %v957
  %v959 = vpop.f32.mrb[0].mxu0
  %960 = vmatprep.mubr.f32.mxu0 0.0
  %961 = vmatmul.mubr.f32.gmra.mrb[0].mxu0 %v685
  %v962 = vpop.f32.mrb[0].mxu0
  %v963 = vadd.f32 0.0, %v962
  %v964 = vpop.f32.mrb[0].mxu0
  %965 = vmatprep.mubr.f32.mxu0 0.0
  %966 = vmatmul.mubr.f32.gmra.mrb[0].mxu0 %v688
  %v967 = vpop.f32.mrb[0].mxu0
  %v968 = vadd.f32 0.0, %v967
  %v969 = vpop.f32.mrb[0].mxu0
  %970 = vmatprep.mubr.f32.mxu0 0.0
  %971 = vmatmul.mubr.f32.gmra.mrb[0].mxu0 %v691
  %v972 = vpop.f32.mrb[0].mxu0
  %v973 = vadd.f32 0.0, %v972
  %v974 = vpop.f32.mrb[0].mxu0
  %975 = vmatprep.mubr.f32.mxu0 0.0
  %976 = vmatmul.mubr.f32.gmra.mrb[0].mxu0 %v694
  %v977 = vpop.f32.mrb[0].mxu0
  %v978 = vadd.f32 0.0, %v977
  %v979 = vpop.f32.mrb[0].mxu0
  %980 = vmatprep.mubr.f32.mxu0 0.0
  %981 = vmatmul.mubr.f32.gmra.mrb[0].mxu0 %v697
  %v982 = vpop.f32.mrb[0].mxu0
  %v983 = vadd.f32 0.0, %v982
  %v984 = vpop.f32.mrb[0].mxu0
  %985 = vmatprep.mubr.f32.mxu0 0.0
  %986 = vmatmul.mubr.f32.gmra.mrb[0].mxu0 %v700
  %v987 = vpop.f32.mrb[0].mxu0
  %v988 = vadd.f32 0.0, %v987
  %v989 = vpop.f32.mrb[0].mxu0
  %990 = vmatprep.mubr.f32.mxu0 0.0
  %991 = vmatmul.mubr.f32.gmra.mrb[0].mxu0 %v703
  %v992 = vpop.f32.mrb[0].mxu0
  %v993 = vadd.f32 0.0, %v992
  %v994 = vpop.f32.mrb[0].mxu0
  %995 = vmatprep.mubr.f32.mxu0 0.0
  %996 = vmatmul.mubr.f32.gmra.mrb[0].mxu0 %v706
  %v997 = vpop.f32.mrb[0].mxu0
  %v998 = vadd.f32 0.0, %v997
  %v999 = vpop.f32.mrb[0].mxu0
  %1000 = vmatprep.mubr.f32.mxu0 0.0
  %1001 = vmatmul.mubr.f32.gmra.mrb[0].mxu0 %v709
  %v1002 = vpop.f32.mrb[0].mxu0
  %v1003 = vadd.f32 0.0, %v1002
  %v1004 = vpop.f32.mrb[0].mxu0
  %1005 = vmatprep.mubr.f32.mxu0 0.0
  %1006 = vmatmul.mubr.f32.gmra.mrb[0].mxu0 %v712
  %v1007 = vpop.f32.mrb[0].mxu0
  %v1008 = vadd.f32 0.0, %v1007
  %v1009 = vpop.f32.mrb[0].mxu0
  %1010 = vmatprep.mubr.f32.mxu0 0.0
  %1011 = vmatmul.mubr.f32.gmra.mrb[0].mxu0 %v715
  %v1012 = vpop.f32.mrb[0].mxu0
  %v1013 = vadd.f32 0.0, %v1012
  %v1014 = vpop.f32.mrb[0].mxu0
  %1015 = vmatprep.mubr.f32.mxu0 0.0
  %1016 = vmatmul.mubr.f32.gmra.mrb[0].mxu0 %v718
  %v1017 = vpop.f32.mrb[0].mxu0
  %v1018 = vadd.f32 0.0, %v1017
  %v1019 = vpop.f32.mrb[0].mxu0
  %1020 = vmatprep.mubr.f32.mxu0 0.0
  %1021 = vmatmul.mubr.f32.gmra.mrb[0].mxu0 %v721
  %v1022 = vpop.f32.mrb[0].mxu0
  %v1023 = vadd.f32 0.0, %v1022
  %v1024 = vpop.f32.mrb[0].mxu0
  %1025 = vmatprep.mubr.f32.mxu0 0.0
  %1026 = vmatmul.mubr.f32.gmra.mrb[0].mxu0 %v724
  %v1027 = vpop.f32.mrb[0].mxu0
  %v1028 = vadd.f32 0.0, %v1027
  %v1029 = vpop.f32.mrb[0].mxu0
  %1030 = vmatprep.mubr.f32.mxu0 0.0
  %1031 = vmatmul.mubr.f32.gmra.mrb[0].mxu0 %v727
  %v1032 = vpop.f32.mrb[0].mxu0
  %v1033 = vadd.f32 0.0, %v1032
  %v1034 = vpop.f32.mrb[0].mxu0
  %1035 = vmatprep.mubr.f32.mxu0 0.0
  %1036 = vmatmul.mubr.f32.gmra.mrb[0].mxu0 %v730
  %v1037 = vpop.f32.mrb[0].mxu0
  %v1038 = vadd.f32 0.0, %v1037
  %v1039 = vpop.f32.mrb[0].mxu0
  %1040 = vmatprep.mubr.f32.mxu0 0.0
  %1041 = vmatmul.mubr.f32.gmra.mrb[0].mxu0 %v733
  %v1042 = vpop.f32.mrb[0].mxu0
  %v1043 = vadd.f32 0.0, %v1042
  %v1044 = vpop.f32.mrb[0].mxu0
  %1045 = vmatprep.mubr.f32.mxu0 0.0
  %1046 = vmatmul.mubr.f32.gmra.mrb[0].mxu0 %v736
  %v1047 = vpop.f32.mrb[0].mxu0
  %v1048 = vadd.f32 0.0, %v1047
  %v1049 = vpop.f32.mrb[0].mxu0
  %1050 = vmatprep.mubr.f32.mxu0 0.0
  %1051 = vmatmul.mubr.f32.gmra.mrb[0].mxu0 %v739
  %v1052 = vpop.f32.mrb[0].mxu0
  %v1053 = vadd.f32 0.0, %v1052
  %v1054 = vpop.f32.mrb[0].mxu0
  %1055 = vdwg.mxu0
  %v1056 = vmax.f32 %v292, %v808
  %v1057 = vmax.f32 %v297, %v813
  %v1058 = vmax.f32 %v302, %v818
  %v1059 = vmax.f32 %v307, %v823
  %v1060 = vmax.f32 %v312, %v828
  %v1061 = vmax.f32 %v317, %v833
  %v1062 = vmax.f32 %v322, %v838
  %v1063 = vmax.f32 %v327, %v843
  %v1064 = vmax.f32 %v332, %v848
  %v1065 = vmax.f32 %v337, %v853
  %v1066 = vmax.f32 %v342, %v858
  %v1067 = vmax.f32 %v347, %v863
  %v1068 = vmax.f32 %v352, %v868
  %v1069 = vmax.f32 %v357, %v873
  %v1070 = vmax.f32 %v362, %v878
  %v1071 = vmax.f32 %v367, %v883
  %v1072 = vmax.f32 %v372, %v888
  %v1073 = vmax.f32 %v377, %v893
  %v1074 = vmax.f32 %v382, %v898
  %v1075 = vmax.f32 %v387, %v903
  %v1076 = vmax.f32 %v392, %v908
  %v1077 = vmax.f32 %v397, %v913
  %v1078 = vmax.f32 %v402, %v918
  %v1079 = vmax.f32 %v407, %v923
  %v1080 = vmax.f32 %v412, %v928
  %v1081 = vmax.f32 %v417, %v933
  %v1082 = vmax.f32 %v422, %v938
  %v1083 = vmax.f32 %v427, %v943
  %v1084 = vmax.f32 %v432, %v948
  %v1085 = vmax.f32 %v437, %v953
  %v1086 = vmax.f32 %v442, %v958
  %v1087 = vmax.f32 %v447, %v963
  %v1088 = vmax.f32 %v452, %v968
  %v1089 = vmax.f32 %v457, %v973
  %v1090 = vmax.f32 %v462, %v978
  %v1091 = vmax.f32 %v467, %v983
  %v1092 = vmax.f32 %v472, %v988
  %v1093 = vmax.f32 %v477, %v993
  %v1094 = vmax.f32 %v482, %v998
  %v1095 = vmax.f32 %v487, %v1003
  %v1096 = vmax.f32 %v492, %v1008
  %v1097 = vmax.f32 %v497, %v1013
  %v1098 = vmax.f32 %v502, %v1018
  %v1099 = vmax.f32 %v507, %v1023
  %v1100 = vmax.f32 %v512, %v1028
  %v1101 = vmax.f32 %v517, %v1033
  %v1102 = vmax.f32 %v522, %v1038
  %v1103 = vmax.f32 %v527, %v1043
  %v1104 = vmax.f32 %v532, %v1048
  %v1105 = vmax.f32 %v537, %v1053
  %s1106 = scalar_lea.vmem %s0, 800
  %v1107 = vld [vmem:[%s1106] sm:$0xff]
  %v1108 = vld [vmem:[%s1106 + $0x8] sm:$0xff]
  %v1109 = vld [vmem:[%s1106 + $0x10] sm:$0xff]
  %v1110 = vld [vmem:[%s1106 + $0x18] sm:$0xff]
  %v1111 = vld [vmem:[%s1106 + $0x20] sm:$0xff]
  %v1112 = vld [vmem:[%s1106 + $0x28] sm:$0xff]
  %v1113 = vld [vmem:[%s1106 + $0x30] sm:$0xff]
  %v1114 = vld [vmem:[%s1106 + $0x38] sm:$0xff]
  %v1115 = vld [vmem:[%s1106 + $0x40] sm:$0xff]
  %v1116 = vld [vmem:[%s1106 + $0x48] sm:$0xff]
  %v1117 = vld [vmem:[%s1106 + $0x50] sm:$0xff]
  %v1118 = vld [vmem:[%s1106 + $0x58] sm:$0xff]
  %v1119 = vld [vmem:[%s1106 + $0x60] sm:$0xff]
  %v1120 = vld [vmem:[%s1106 + $0x68] sm:$0xff]
  %v1121 = vld [vmem:[%s1106 + $0x70] sm:$0xff]
  %v1122 = vld [vmem:[%s1106 + $0x78] sm:$0xff]
  %v1123 = vld [vmem:[%s1106 + $0x80] sm:$0xff]
  %v1124 = vld [vmem:[%s1106 + $0x88] sm:$0xff]
  %v1125 = vld [vmem:[%s1106 + $0x90] sm:$0xff]
  %v1126 = vld [vmem:[%s1106 + $0x98] sm:$0xff]
  %v1127 = vld [vmem:[%s1106 + $0xa0] sm:$0xff]
  %v1128 = vld [vmem:[%s1106 + $0xa8] sm:$0xff]
  %v1129 = vld [vmem:[%s1106 + $0xb0] sm:$0xff]
  %v1130 = vld [vmem:[%s1106 + $0xb8] sm:$0xff]
  %v1131 = vld [vmem:[%s1106 + $0xc0] sm:$0xff]
  %v1132 = vld [vmem:[%s1106 + $0xc8] sm:$0xff]
  %v1133 = vld [vmem:[%s1106 + $0xd0] sm:$0xff]
  %v1134 = vld [vmem:[%s1106 + $0xd8] sm:$0xff]
  %v1135 = vld [vmem:[%s1106 + $0xe0] sm:$0xff]
  %v1136 = vld [vmem:[%s1106 + $0xe8] sm:$0xff]
  %v1137 = vld [vmem:[%s1106 + $0xf0] sm:$0xff]
  %v1138 = vld [vmem:[%s1106 + $0xf8] sm:$0xff]
  %v1139 = vld [vmem:[%s1106 + $0x100] sm:$0xff]
  %v1140 = vld [vmem:[%s1106 + $0x108] sm:$0xff]
  %v1141 = vld [vmem:[%s1106 + $0x110] sm:$0xff]
  %v1142 = vld [vmem:[%s1106 + $0x118] sm:$0xff]
  %v1143 = vld [vmem:[%s1106 + $0x120] sm:$0xff]
  %v1144 = vld [vmem:[%s1106 + $0x128] sm:$0xff]
  %v1145 = vld [vmem:[%s1106 + $0x130] sm:$0xff]
  %v1146 = vld [vmem:[%s1106 + $0x138] sm:$0xff]
  %v1147 = vld [vmem:[%s1106 + $0x140] sm:$0xff]
  %v1148 = vld [vmem:[%s1106 + $0x148] sm:$0xff]
  %v1149 = vld [vmem:[%s1106 + $0x150] sm:$0xff]
  %v1150 = vld [vmem:[%s1106 + $0x158] sm:$0xff]
  %v1151 = vld [vmem:[%s1106 + $0x160] sm:$0xff]
  %v1152 = vld [vmem:[%s1106 + $0x168] sm:$0xff]
  %v1153 = vld [vmem:[%s1106 + $0x170] sm:$0xff]
  %v1154 = vld [vmem:[%s1106 + $0x178] sm:$0xff]
  %v1155 = vld [vmem:[%s1106 + $0x180] sm:$0xff]
  %v1156 = vld [vmem:[%s1106 + $0x188] sm:$0xff]
  %v1158 = vsel %vm74, %v1107, 0
  %v1161 = vsel %vm74, %v1108, 0
  %v1164 = vsel %vm74, %v1109, 0
  %v1167 = vsel %vm74, %v1110, 0
  %v1170 = vsel %vm74, %v1111, 0
  %v1173 = vsel %vm74, %v1112, 0
  %v1176 = vsel %vm74, %v1113, 0
  %v1179 = vsel %vm74, %v1114, 0
  %v1182 = vsel %vm74, %v1115, 0
  %v1185 = vsel %vm74, %v1116, 0
  %v1188 = vsel %vm74, %v1117, 0
  %v1191 = vsel %vm74, %v1118, 0
  %v1194 = vsel %vm74, %v1119, 0
  %v1197 = vsel %vm74, %v1120, 0
  %v1200 = vsel %vm74, %v1121, 0
  %v1203 = vsel %vm74, %v1122, 0
  %v1206 = vsel %vm74, %v1123, 0
  %v1209 = vsel %vm74, %v1124, 0
  %v1212 = vsel %vm74, %v1125, 0
  %v1215 = vsel %vm74, %v1126, 0
  %v1218 = vsel %vm74, %v1127, 0
  %v1221 = vsel %vm74, %v1128, 0
  %v1224 = vsel %vm74, %v1129, 0
  %v1227 = vsel %vm74, %v1130, 0
  %v1230 = vsel %vm74, %v1131, 0
  %v1233 = vsel %vm74, %v1132, 0
  %v1236 = vsel %vm74, %v1133, 0
  %v1239 = vsel %vm74, %v1134, 0
  %v1242 = vsel %vm74, %v1135, 0
  %v1245 = vsel %vm74, %v1136, 0
  %v1248 = vsel %vm74, %v1137, 0
  %v1251 = vsel %vm74, %v1138, 0
  %v1254 = vsel %vm74, %v1139, 0
  %v1257 = vsel %vm74, %v1140, 0
  %v1260 = vsel %vm74, %v1141, 0
  %v1263 = vsel %vm74, %v1142, 0
  %v1266 = vsel %vm74, %v1143, 0
  %v1269 = vsel %vm74, %v1144, 0
  %v1272 = vsel %vm74, %v1145, 0
  %v1275 = vsel %vm74, %v1146, 0
  %v1278 = vsel %vm74, %v1147, 0
  %v1281 = vsel %vm74, %v1148, 0
  %v1284 = vsel %vm74, %v1149, 0
  %v1287 = vsel %vm74, %v1150, 0
  %v1290 = vsel %vm74, %v1151, 0
  %v1293 = vsel %vm74, %v1152, 0
  %v1296 = vsel %vm74, %v1153, 0
  %v1299 = vsel %vm74, %v1154, 0
  %v1302 = vsel %vm74, %v1155, 0
  %v1305 = vsel %vm74, %v1156, 0
  %1307 = vmatprep.subr.mxu0 0.0
  %1308 = vmatpush1.msra.mxu0 %v14
  %1309 = vmatprep.subr.mxu0 0.0
  %1310 = vmatpush1.msra.mxu0 %v15
  %1311 = vmatprep.subr.mxu0 0.0
  %1312 = vmatpush1.msra.mxu0 %v16
  %1313 = vmatprep.subr.mxu0 0.0
  %1314 = vmatpush1.msra.mxu0 %v17
  %1315 = vmatprep.subr.mxu0 0.0
  %1316 = vmatpush1.msra.mxu0 %v18
  %1317 = vmatprep.subr.mxu0 0.0
  %1318 = vmatpush1.msra.mxu0 %v19
  %1319 = vmatprep.subr.mxu0 0.0
  %1320 = vmatpush1.msra.mxu0 %v20
  %1321 = vmatprep.subr.mxu0 0.0
  %1322 = vmatpush1.msra.mxu0 %v21
  %1323 = vmatprep.subr.mxu0 0.0
  %1324 = vmatpush1.msra.mxu0 %v22
  %1325 = vmatprep.subr.mxu0 0.0
  %1326 = vmatpush1.msra.mxu0 %v23
  %1327 = vmatprep.subr.mxu0 0.0
  %1328 = vmatpush1.msra.mxu0 0.0
  %1329 = vmatprep.subr.mxu0 0.0
  %1330 = vmatpush1.msra.mxu0 0.0
  %1331 = vmatprep.subr.mxu0 0.0
  %1332 = vmatpush1.msra.mxu0 0.0
  %1333 = vmatprep.subr.mxu0 0.0
  %1334 = vmatpush1.msra.mxu0 0.0
  %1335 = vmatprep.subr.mxu0 0.0
  %1336 = vmatpush1.msra.mxu0 0.0
  %1337 = vmatprep.subr.mxu0 0.0
  %1338 = vmatpush1.msra.mxu0 0.0
  %1339 = vmatprep.subr.mxu0 0.0
  %1340 = vmatpush1.msra.mxu0 0.0
  %1341 = vmatprep.subr.mxu0 0.0
  %1342 = vmatpush1.msra.mxu0 0.0
  %1343 = vmatprep.subr.mxu0 0.0
  %1344 = vmatpush1.msra.mxu0 0.0
  %1345 = vmatprep.subr.mxu0 0.0
  %1346 = vmatpush1.msra.mxu0 0.0
  %1347 = vmatprep.subr.mxu0 0.0
  %1348 = vmatpush1.msra.mxu0 0.0
  %1349 = vmatprep.subr.mxu0 0.0
  %1350 = vmatpush1.msra.mxu0 0.0
  %1351 = vmatprep.subr.mxu0 0.0
  %1352 = vmatpush1.msra.mxu0 0.0
  %1353 = vmatprep.subr.mxu0 0.0
  %1354 = vmatpush1.msra.mxu0 0.0
  %1355 = vmatprep.subr.mxu0 0.0
  %1356 = vmatpush1.msra.mxu0 0.0
  %1357 = vmatprep.subr.mxu0 0.0
  %1358 = vmatpush1.msra.mxu0 0.0
  %1359 = vmatprep.subr.mxu0 0.0
  %1360 = vmatpush1.msra.mxu0 0.0
  %1361 = vmatprep.subr.mxu0 0.0
  %1362 = vmatpush1.msra.mxu0 0.0
  %1363 = vmatprep.subr.mxu0 0.0
  %1364 = vmatpush1.msra.mxu0 0.0
  %1365 = vmatprep.subr.mxu0 0.0
  %1366 = vmatpush1.msra.mxu0 0.0
  %1367 = vmatprep.subr.mxu0 0.0
  %1368 = vmatpush1.msra.mxu0 0.0
  %1369 = vmatprep.subr.mxu0 0.0
  %1370 = vmatpush1.msra.mxu0 0.0
  %1371 = vmatprep.mubr.f32.mxu0 0.0
  %1372 = vmatmul.mubr.f32.gmra.mrb[0].mxu0 %v1158
  %v1373 = vpop.f32.mrb[0].mxu0
  %v1374 = vadd.f32 0.0, %v1373
  %v1375 = vpop.f32.mrb[0].mxu0
  %1376 = vmatprep.mubr.f32.mxu0 0.0
  %1377 = vmatmul.mubr.f32.gmra.mrb[0].mxu0 %v1161
  %v1378 = vpop.f32.mrb[0].mxu0
  %v1379 = vadd.f32 0.0, %v1378
  %v1380 = vpop.f32.mrb[0].mxu0
  %1381 = vmatprep.mubr.f32.mxu0 0.0
  %1382 = vmatmul.mubr.f32.gmra.mrb[0].mxu0 %v1164
  %v1383 = vpop.f32.mrb[0].mxu0
  %v1384 = vadd.f32 0.0, %v1383
  %v1385 = vpop.f32.mrb[0].mxu0
  %1386 = vmatprep.mubr.f32.mxu0 0.0
  %1387 = vmatmul.mubr.f32.gmra.mrb[0].mxu0 %v1167
  %v1388 = vpop.f32.mrb[0].mxu0
  %v1389 = vadd.f32 0.0, %v1388
  %v1390 = vpop.f32.mrb[0].mxu0
  %1391 = vmatprep.mubr.f32.mxu0 0.0
  %1392 = vmatmul.mubr.f32.gmra.mrb[0].mxu0 %v1170
  %v1393 = vpop.f32.mrb[0].mxu0
  %v1394 = vadd.f32 0.0, %v1393
  %v1395 = vpop.f32.mrb[0].mxu0
  %1396 = vmatprep.mubr.f32.mxu0 0.0
  %1397 = vmatmul.mubr.f32.gmra.mrb[0].mxu0 %v1173
  %v1398 = vpop.f32.mrb[0].mxu0
  %v1399 = vadd.f32 0.0, %v1398
  %v1400 = vpop.f32.mrb[0].mxu0
  %1401 = vmatprep.mubr.f32.mxu0 0.0
  %1402 = vmatmul.mubr.f32.gmra.mrb[0].mxu0 %v1176
  %v1403 = vpop.f32.mrb[0].mxu0
  %v1404 = vadd.f32 0.0, %v1403
  %v1405 = vpop.f32.mrb[0].mxu0
  %1406 = vmatprep.mubr.f32.mxu0 0.0
  %1407 = vmatmul.mubr.f32.gmra.mrb[0].mxu0 %v1179
  %v1408 = vpop.f32.mrb[0].mxu0
  %v1409 = vadd.f32 0.0, %v1408
  %v1410 = vpop.f32.mrb[0].mxu0
  %1411 = vmatprep.mubr.f32.mxu0 0.0
  %1412 = vmatmul.mubr.f32.gmra.mrb[0].mxu0 %v1182
  %v1413 = vpop.f32.mrb[0].mxu0
  %v1414 = vadd.f32 0.0, %v1413
  %v1415 = vpop.f32.mrb[0].mxu0
  %1416 = vmatprep.mubr.f32.mxu0 0.0
  %1417 = vmatmul.mubr.f32.gmra.mrb[0].mxu0 %v1185
  %v1418 = vpop.f32.mrb[0].mxu0
  %v1419 = vadd.f32 0.0, %v1418
  %v1420 = vpop.f32.mrb[0].mxu0
  %1421 = vmatprep.mubr.f32.mxu0 0.0
  %1422 = vmatmul.mubr.f32.gmra.mrb[0].mxu0 %v1188
  %v1423 = vpop.f32.mrb[0].mxu0
  %v1424 = vadd.f32 0.0, %v1423
  %v1425 = vpop.f32.mrb[0].mxu0
  %1426 = vmatprep.mubr.f32.mxu0 0.0
  %1427 = vmatmul.mubr.f32.gmra.mrb[0].mxu0 %v1191
  %v1428 = vpop.f32.mrb[0].mxu0
  %v1429 = vadd.f32 0.0, %v1428
  %v1430 = vpop.f32.mrb[0].mxu0
  %1431 = vmatprep.mubr.f32.mxu0 0.0
  %1432 = vmatmul.mubr.f32.gmra.mrb[0].mxu0 %v1194
  %v1433 = vpop.f32.mrb[0].mxu0
  %v1434 = vadd.f32 0.0, %v1433
  %v1435 = vpop.f32.mrb[0].mxu0
  %1436 = vmatprep.mubr.f32.mxu0 0.0
  %1437 = vmatmul.mubr.f32.gmra.mrb[0].mxu0 %v1197
  %v1438 = vpop.f32.mrb[0].mxu0
  %v1439 = vadd.f32 0.0, %v1438
  %v1440 = vpop.f32.mrb[0].mxu0
  %1441 = vmatprep.mubr.f32.mxu0 0.0
  %1442 = vmatmul.mubr.f32.gmra.mrb[0].mxu0 %v1200
  %v1443 = vpop.f32.mrb[0].mxu0
  %v1444 = vadd.f32 0.0, %v1443
  %v1445 = vpop.f32.mrb[0].mxu0
  %1446 = vmatprep.mubr.f32.mxu0 0.0
  %1447 = vmatmul.mubr.f32.gmra.mrb[0].mxu0 %v1203
  %v1448 = vpop.f32.mrb[0].mxu0
  %v1449 = vadd.f32 0.0, %v1448
  %v1450 = vpop.f32.mrb[0].mxu0
  %1451 = vmatprep.mubr.f32.mxu0 0.0
  %1452 = vmatmul.mubr.f32.gmra.mrb[0].mxu0 %v1206
  %v1453 = vpop.f32.mrb[0].mxu0
  %v1454 = vadd.f32 0.0, %v1453
  %v1455 = vpop.f32.mrb[0].mxu0
  %1456 = vmatprep.mubr.f32.mxu0 0.0
  %1457 = vmatmul.mubr.f32.gmra.mrb[0].mxu0 %v1209
  %v1458 = vpop.f32.mrb[0].mxu0
  %v1459 = vadd.f32 0.0, %v1458
  %v1460 = vpop.f32.mrb[0].mxu0
  %1461 = vmatprep.mubr.f32.mxu0 0.0
  %1462 = vmatmul.mubr.f32.gmra.mrb[0].mxu0 %v1212
  %v1463 = vpop.f32.mrb[0].mxu0
  %v1464 = vadd.f32 0.0, %v1463
  %v1465 = vpop.f32.mrb[0].mxu0
  %1466 = vmatprep.mubr.f32.mxu0 0.0
  %1467 = vmatmul.mubr.f32.gmra.mrb[0].mxu0 %v1215
  %v1468 = vpop.f32.mrb[0].mxu0
  %v1469 = vadd.f32 0.0, %v1468
  %v1470 = vpop.f32.mrb[0].mxu0
  %1471 = vmatprep.mubr.f32.mxu0 0.0
  %1472 = vmatmul.mubr.f32.gmra.mrb[0].mxu0 %v1218
  %v1473 = vpop.f32.mrb[0].mxu0
  %v1474 = vadd.f32 0.0, %v1473
  %v1475 = vpop.f32.mrb[0].mxu0
  %1476 = vmatprep.mubr.f32.mxu0 0.0
  %1477 = vmatmul.mubr.f32.gmra.mrb[0].mxu0 %v1221
  %v1478 = vpop.f32.mrb[0].mxu0
  %v1479 = vadd.f32 0.0, %v1478
  %v1480 = vpop.f32.mrb[0].mxu0
  %1481 = vmatprep.mubr.f32.mxu0 0.0
  %1482 = vmatmul.mubr.f32.gmra.mrb[0].mxu0 %v1224
  %v1483 = vpop.f32.mrb[0].mxu0
  %v1484 = vadd.f32 0.0, %v1483
  %v1485 = vpop.f32.mrb[0].mxu0
  %1486 = vmatprep.mubr.f32.mxu0 0.0
  %1487 = vmatmul.mubr.f32.gmra.mrb[0].mxu0 %v1227
  %v1488 = vpop.f32.mrb[0].mxu0
  %v1489 = vadd.f32 0.0, %v1488
  %v1490 = vpop.f32.mrb[0].mxu0
  %1491 = vmatprep.mubr.f32.mxu0 0.0
  %1492 = vmatmul.mubr.f32.gmra.mrb[0].mxu0 %v1230
  %v1493 = vpop.f32.mrb[0].mxu0
  %v1494 = vadd.f32 0.0, %v1493
  %v1495 = vpop.f32.mrb[0].mxu0
  %1496 = vmatprep.mubr.f32.mxu0 0.0
  %1497 = vmatmul.mubr.f32.gmra.mrb[0].mxu0 %v1233
  %v1498 = vpop.f32.mrb[0].mxu0
  %v1499 = vadd.f32 0.0, %v1498
  %v1500 = vpop.f32.mrb[0].mxu0
  %1501 = vmatprep.mubr.f32.mxu0 0.0
  %1502 = vmatmul.mubr.f32.gmra.mrb[0].mxu0 %v1236
  %v1503 = vpop.f32.mrb[0].mxu0
  %v1504 = vadd.f32 0.0, %v1503
  %v1505 = vpop.f32.mrb[0].mxu0
  %1506 = vmatprep.mubr.f32.mxu0 0.0
  %1507 = vmatmul.mubr.f32.gmra.mrb[0].mxu0 %v1239
  %v1508 = vpop.f32.mrb[0].mxu0
  %v1509 = vadd.f32 0.0, %v1508
  %v1510 = vpop.f32.mrb[0].mxu0
  %1511 = vmatprep.mubr.f32.mxu0 0.0
  %1512 = vmatmul.mubr.f32.gmra.mrb[0].mxu0 %v1242
  %v1513 = vpop.f32.mrb[0].mxu0
  %v1514 = vadd.f32 0.0, %v1513
  %v1515 = vpop.f32.mrb[0].mxu0
  %1516 = vmatprep.mubr.f32.mxu0 0.0
  %1517 = vmatmul.mubr.f32.gmra.mrb[0].mxu0 %v1245
  %v1518 = vpop.f32.mrb[0].mxu0
  %v1519 = vadd.f32 0.0, %v1518
  %v1520 = vpop.f32.mrb[0].mxu0
  %1521 = vmatprep.mubr.f32.mxu0 0.0
  %1522 = vmatmul.mubr.f32.gmra.mrb[0].mxu0 %v1248
  %v1523 = vpop.f32.mrb[0].mxu0
  %v1524 = vadd.f32 0.0, %v1523
  %v1525 = vpop.f32.mrb[0].mxu0
  %1526 = vmatprep.mubr.f32.mxu0 0.0
  %1527 = vmatmul.mubr.f32.gmra.mrb[0].mxu0 %v1251
  %v1528 = vpop.f32.mrb[0].mxu0
  %v1529 = vadd.f32 0.0, %v1528
  %v1530 = vpop.f32.mrb[0].mxu0
  %1531 = vmatprep.mubr.f32.mxu0 0.0
  %1532 = vmatmul.mubr.f32.gmra.mrb[0].mxu0 %v1254
  %v1533 = vpop.f32.mrb[0].mxu0
  %v1534 = vadd.f32 0.0, %v1533
  %v1535 = vpop.f32.mrb[0].mxu0
  %1536 = vmatprep.mubr.f32.mxu0 0.0
  %1537 = vmatmul.mubr.f32.gmra.mrb[0].mxu0 %v1257
  %v1538 = vpop.f32.mrb[0].mxu0
  %v1539 = vadd.f32 0.0, %v1538
  %v1540 = vpop.f32.mrb[0].mxu0
  %1541 = vmatprep.mubr.f32.mxu0 0.0
  %1542 = vmatmul.mubr.f32.gmra.mrb[0].mxu0 %v1260
  %v1543 = vpop.f32.mrb[0].mxu0
  %v1544 = vadd.f32 0.0, %v1543
  %v1545 = vpop.f32.mrb[0].mxu0
  %1546 = vmatprep.mubr.f32.mxu0 0.0
  %1547 = vmatmul.mubr.f32.gmra.mrb[0].mxu0 %v1263
  %v1548 = vpop.f32.mrb[0].mxu0
  %v1549 = vadd.f32 0.0, %v1548
  %v1550 = vpop.f32.mrb[0].mxu0
  %1551 = vmatprep.mubr.f32.mxu0 0.0
  %1552 = vmatmul.mubr.f32.gmra.mrb[0].mxu0 %v1266
  %v1553 = vpop.f32.mrb[0].mxu0
  %v1554 = vadd.f32 0.0, %v1553
  %v1555 = vpop.f32.mrb[0].mxu0
  %1556 = vmatprep.mubr.f32.mxu0 0.0
  %1557 = vmatmul.mubr.f32.gmra.mrb[0].mxu0 %v1269
  %v1558 = vpop.f32.mrb[0].mxu0
  %v1559 = vadd.f32 0.0, %v1558
  %v1560 = vpop.f32.mrb[0].mxu0
  %1561 = vmatprep.mubr.f32.mxu0 0.0
  %1562 = vmatmul.mubr.f32.gmra.mrb[0].mxu0 %v1272
  %v1563 = vpop.f32.mrb[0].mxu0
  %v1564 = vadd.f32 0.0, %v1563
  %v1565 = vpop.f32.mrb[0].mxu0
  %1566 = vmatprep.mubr.f32.mxu0 0.0
  %1567 = vmatmul.mubr.f32.gmra.mrb[0].mxu0 %v1275
  %v1568 = vpop.f32.mrb[0].mxu0
  %v1569 = vadd.f32 0.0, %v1568
  %v1570 = vpop.f32.mrb[0].mxu0
  %1571 = vmatprep.mubr.f32.mxu0 0.0
  %1572 = vmatmul.mubr.f32.gmra.mrb[0].mxu0 %v1278
  %v1573 = vpop.f32.mrb[0].mxu0
  %v1574 = vadd.f32 0.0, %v1573
  %v1575 = vpop.f32.mrb[0].mxu0
  %1576 = vmatprep.mubr.f32.mxu0 0.0
  %1577 = vmatmul.mubr.f32.gmra.mrb[0].mxu0 %v1281
  %v1578 = vpop.f32.mrb[0].mxu0
  %v1579 = vadd.f32 0.0, %v1578
  %v1580 = vpop.f32.mrb[0].mxu0
  %1581 = vmatprep.mubr.f32.mxu0 0.0
  %1582 = vmatmul.mubr.f32.gmra.mrb[0].mxu0 %v1284
  %v1583 = vpop.f32.mrb[0].mxu0
  %v1584 = vadd.f32 0.0, %v1583
  %v1585 = vpop.f32.mrb[0].mxu0
  %1586 = vmatprep.mubr.f32.mxu0 0.0
  %1587 = vmatmul.mubr.f32.gmra.mrb[0].mxu0 %v1287
  %v1588 = vpop.f32.mrb[0].mxu0
  %v1589 = vadd.f32 0.0, %v1588
  %v1590 = vpop.f32.mrb[0].mxu0
  %1591 = vmatprep.mubr.f32.mxu0 0.0
  %1592 = vmatmul.mubr.f32.gmra.mrb[0].mxu0 %v1290
  %v1593 = vpop.f32.mrb[0].mxu0
  %v1594 = vadd.f32 0.0, %v1593
  %v1595 = vpop.f32.mrb[0].mxu0
  %1596 = vmatprep.mubr.f32.mxu0 0.0
  %1597 = vmatmul.mubr.f32.gmra.mrb[0].mxu0 %v1293
  %v1598 = vpop.f32.mrb[0].mxu0
  %v1599 = vadd.f32 0.0, %v1598
  %v1600 = vpop.f32.mrb[0].mxu0
  %1601 = vmatprep.mubr.f32.mxu0 0.0
  %1602 = vmatmul.mubr.f32.gmra.mrb[0].mxu0 %v1296
  %v1603 = vpop.f32.mrb[0].mxu0
  %v1604 = vadd.f32 0.0, %v1603
  %v1605 = vpop.f32.mrb[0].mxu0
  %1606 = vmatprep.mubr.f32.mxu0 0.0
  %1607 = vmatmul.mubr.f32.gmra.mrb[0].mxu0 %v1299
  %v1608 = vpop.f32.mrb[0].mxu0
  %v1609 = vadd.f32 0.0, %v1608
  %v1610 = vpop.f32.mrb[0].mxu0
  %1611 = vmatprep.mubr.f32.mxu0 0.0
  %1612 = vmatmul.mubr.f32.gmra.mrb[0].mxu0 %v1302
  %v1613 = vpop.f32.mrb[0].mxu0
  %v1614 = vadd.f32 0.0, %v1613
  %v1615 = vpop.f32.mrb[0].mxu0
  %1616 = vmatprep.mubr.f32.mxu0 0.0
  %1617 = vmatmul.mubr.f32.gmra.mrb[0].mxu0 %v1305
  %v1618 = vpop.f32.mrb[0].mxu0
  %v1619 = vadd.f32 0.0, %v1618
  %v1620 = vpop.f32.mrb[0].mxu0
  %1621 = vdwg.mxu0
  %v1622 = vmax.f32 %v1056, %v1374
  %v1623 = vmax.f32 %v1057, %v1379
  %v1624 = vmax.f32 %v1058, %v1384
  %v1625 = vmax.f32 %v1059, %v1389
  %v1626 = vmax.f32 %v1060, %v1394
  %v1627 = vmax.f32 %v1061, %v1399
  %v1628 = vmax.f32 %v1062, %v1404
  %v1629 = vmax.f32 %v1063, %v1409
  %v1630 = vmax.f32 %v1064, %v1414
  %v1631 = vmax.f32 %v1065, %v1419
  %v1632 = vmax.f32 %v1066, %v1424
  %v1633 = vmax.f32 %v1067, %v1429
  %v1634 = vmax.f32 %v1068, %v1434
  %v1635 = vmax.f32 %v1069, %v1439
  %v1636 = vmax.f32 %v1070, %v1444
  %v1637 = vmax.f32 %v1071, %v1449
  %v1638 = vmax.f32 %v1072, %v1454
  %v1639 = vmax.f32 %v1073, %v1459
  %v1640 = vmax.f32 %v1074, %v1464
  %v1641 = vmax.f32 %v1075, %v1469
  %v1642 = vmax.f32 %v1076, %v1474
  %v1643 = vmax.f32 %v1077, %v1479
  %v1644 = vmax.f32 %v1078, %v1484
  %v1645 = vmax.f32 %v1079, %v1489
  %v1646 = vmax.f32 %v1080, %v1494
  %v1647 = vmax.f32 %v1081, %v1499
  %v1648 = vmax.f32 %v1082, %v1504
  %v1649 = vmax.f32 %v1083, %v1509
  %v1650 = vmax.f32 %v1084, %v1514
  %v1651 = vmax.f32 %v1085, %v1519
  %v1652 = vmax.f32 %v1086, %v1524
  %v1653 = vmax.f32 %v1087, %v1529
  %v1654 = vmax.f32 %v1088, %v1534
  %v1655 = vmax.f32 %v1089, %v1539
  %v1656 = vmax.f32 %v1090, %v1544
  %v1657 = vmax.f32 %v1091, %v1549
  %v1658 = vmax.f32 %v1092, %v1554
  %v1659 = vmax.f32 %v1093, %v1559
  %v1660 = vmax.f32 %v1094, %v1564
  %v1661 = vmax.f32 %v1095, %v1569
  %v1662 = vmax.f32 %v1096, %v1574
  %v1663 = vmax.f32 %v1097, %v1579
  %v1664 = vmax.f32 %v1098, %v1584
  %v1665 = vmax.f32 %v1099, %v1589
  %v1666 = vmax.f32 %v1100, %v1594
  %v1667 = vmax.f32 %v1101, %v1599
  %v1668 = vmax.f32 %v1102, %v1604
  %v1669 = vmax.f32 %v1103, %v1609
  %v1670 = vmax.f32 %v1104, %v1614
  %v1671 = vmax.f32 %v1105, %v1619
  %s1672 = scalar_lea.vmem %s0, 1200
  %v1673 = vld [vmem:[%s1672] sm:$0xff]
  %v1674 = vld [vmem:[%s1672 + $0x8] sm:$0xff]
  %v1675 = vld [vmem:[%s1672 + $0x10] sm:$0xff]
  %v1676 = vld [vmem:[%s1672 + $0x18] sm:$0xff]
  %v1677 = vld [vmem:[%s1672 + $0x20] sm:$0xff]
  %v1678 = vld [vmem:[%s1672 + $0x28] sm:$0xff]
  %v1679 = vld [vmem:[%s1672 + $0x30] sm:$0xff]
  %v1680 = vld [vmem:[%s1672 + $0x38] sm:$0xff]
  %v1681 = vld [vmem:[%s1672 + $0x40] sm:$0xff]
  %v1682 = vld [vmem:[%s1672 + $0x48] sm:$0xff]
  %v1683 = vld [vmem:[%s1672 + $0x50] sm:$0xff]
  %v1684 = vld [vmem:[%s1672 + $0x58] sm:$0xff]
  %v1685 = vld [vmem:[%s1672 + $0x60] sm:$0xff]
  %v1686 = vld [vmem:[%s1672 + $0x68] sm:$0xff]
  %v1687 = vld [vmem:[%s1672 + $0x70] sm:$0xff]
  %v1688 = vld [vmem:[%s1672 + $0x78] sm:$0xff]
  %v1689 = vld [vmem:[%s1672 + $0x80] sm:$0xff]
  %v1690 = vld [vmem:[%s1672 + $0x88] sm:$0xff]
  %v1691 = vld [vmem:[%s1672 + $0x90] sm:$0xff]
  %v1692 = vld [vmem:[%s1672 + $0x98] sm:$0xff]
  %v1693 = vld [vmem:[%s1672 + $0xa0] sm:$0xff]
  %v1694 = vld [vmem:[%s1672 + $0xa8] sm:$0xff]
  %v1695 = vld [vmem:[%s1672 + $0xb0] sm:$0xff]
  %v1696 = vld [vmem:[%s1672 + $0xb8] sm:$0xff]
  %v1697 = vld [vmem:[%s1672 + $0xc0] sm:$0xff]
  %v1698 = vld [vmem:[%s1672 + $0xc8] sm:$0xff]
  %v1699 = vld [vmem:[%s1672 + $0xd0] sm:$0xff]
  %v1700 = vld [vmem:[%s1672 + $0xd8] sm:$0xff]
  %v1701 = vld [vmem:[%s1672 + $0xe0] sm:$0xff]
  %v1702 = vld [vmem:[%s1672 + $0xe8] sm:$0xff]
  %v1703 = vld [vmem:[%s1672 + $0xf0] sm:$0xff]
  %v1704 = vld [vmem:[%s1672 + $0xf8] sm:$0xff]
  %v1705 = vld [vmem:[%s1672 + $0x100] sm:$0xff]
  %v1706 = vld [vmem:[%s1672 + $0x108] sm:$0xff]
  %v1707 = vld [vmem:[%s1672 + $0x110] sm:$0xff]
  %v1708 = vld [vmem:[%s1672 + $0x118] sm:$0xff]
  %v1709 = vld [vmem:[%s1672 + $0x120] sm:$0xff]
  %v1710 = vld [vmem:[%s1672 + $0x128] sm:$0xff]
  %v1711 = vld [vmem:[%s1672 + $0x130] sm:$0xff]
  %v1712 = vld [vmem:[%s1672 + $0x138] sm:$0xff]
  %v1713 = vld [vmem:[%s1672 + $0x140] sm:$0xff]
  %v1714 = vld [vmem:[%s1672 + $0x148] sm:$0xff]
  %v1715 = vld [vmem:[%s1672 + $0x150] sm:$0xff]
  %v1716 = vld [vmem:[%s1672 + $0x158] sm:$0xff]
  %v1717 = vld [vmem:[%s1672 + $0x160] sm:$0xff]
  %v1718 = vld [vmem:[%s1672 + $0x168] sm:$0xff]
  %v1719 = vld [vmem:[%s1672 + $0x170] sm:$0xff]
  %v1720 = vld [vmem:[%s1672 + $0x178] sm:$0xff]
  %v1721 = vld [vmem:[%s1672 + $0x180] sm:$0xff]
  %v1722 = vld [vmem:[%s1672 + $0x188] sm:$0xff]
  %v1724 = vsel %vm74, %v1673, 0
  %v1727 = vsel %vm74, %v1674, 0
  %v1730 = vsel %vm74, %v1675, 0
  %v1733 = vsel %vm74, %v1676, 0
  %v1736 = vsel %vm74, %v1677, 0
  %v1739 = vsel %vm74, %v1678, 0
  %v1742 = vsel %vm74, %v1679, 0
  %v1745 = vsel %vm74, %v1680, 0
  %v1748 = vsel %vm74, %v1681, 0
  %v1751 = vsel %vm74, %v1682, 0
  %v1754 = vsel %vm74, %v1683, 0
  %v1757 = vsel %vm74, %v1684, 0
  %v1760 = vsel %vm74, %v1685, 0
  %v1763 = vsel %vm74, %v1686, 0
  %v1766 = vsel %vm74, %v1687, 0
  %v1769 = vsel %vm74, %v1688, 0
  %v1772 = vsel %vm74, %v1689, 0
  %v1775 = vsel %vm74, %v1690, 0
  %v1778 = vsel %vm74, %v1691, 0
  %v1781 = vsel %vm74, %v1692, 0
  %v1784 = vsel %vm74, %v1693, 0
  %v1787 = vsel %vm74, %v1694, 0
  %v1790 = vsel %vm74, %v1695, 0
  %v1793 = vsel %vm74, %v1696, 0
  %v1796 = vsel %vm74, %v1697, 0
  %v1799 = vsel %vm74, %v1698, 0
  %v1802 = vsel %vm74, %v1699, 0
  %v1805 = vsel %vm74, %v1700, 0
  %v1808 = vsel %vm74, %v1701, 0
  %v1811 = vsel %vm74, %v1702, 0
  %v1814 = vsel %vm74, %v1703, 0
  %v1817 = vsel %vm74, %v1704, 0
  %v1820 = vsel %vm74, %v1705, 0
  %v1823 = vsel %vm74, %v1706, 0
  %v1826 = vsel %vm74, %v1707, 0
  %v1829 = vsel %vm74, %v1708, 0
  %v1832 = vsel %vm74, %v1709, 0
  %v1835 = vsel %vm74, %v1710, 0
  %v1838 = vsel %vm74, %v1711, 0
  %v1841 = vsel %vm74, %v1712, 0
  %v1844 = vsel %vm74, %v1713, 0
  %v1847 = vsel %vm74, %v1714, 0
  %v1850 = vsel %vm74, %v1715, 0
  %v1853 = vsel %vm74, %v1716, 0
  %v1856 = vsel %vm74, %v1717, 0
  %v1859 = vsel %vm74, %v1718, 0
  %v1862 = vsel %vm74, %v1719, 0
  %v1865 = vsel %vm74, %v1720, 0
  %v1868 = vsel %vm74, %v1721, 0
  %v1871 = vsel %vm74, %v1722, 0
  %1873 = vmatprep.subr.mxu0 0.0
  %1874 = vmatpush1.msra.mxu0 %v14
  %1875 = vmatprep.subr.mxu0 0.0
  %1876 = vmatpush1.msra.mxu0 %v15
  %1877 = vmatprep.subr.mxu0 0.0
  %1878 = vmatpush1.msra.mxu0 %v16
  %1879 = vmatprep.subr.mxu0 0.0
  %1880 = vmatpush1.msra.mxu0 %v17
  %1881 = vmatprep.subr.mxu0 0.0
  %1882 = vmatpush1.msra.mxu0 %v18
  %1883 = vmatprep.subr.mxu0 0.0
  %1884 = vmatpush1.msra.mxu0 %v19
  %1885 = vmatprep.subr.mxu0 0.0
  %1886 = vmatpush1.msra.mxu0 %v20
  %1887 = vmatprep.subr.mxu0 0.0
  %1888 = vmatpush1.msra.mxu0 %v21
  %1889 = vmatprep.subr.mxu0 0.0
  %1890 = vmatpush1.msra.mxu0 %v22
  %1891 = vmatprep.subr.mxu0 0.0
  %1892 = vmatpush1.msra.mxu0 %v23
  %1893 = vmatprep.subr.mxu0 0.0
  %1894 = vmatpush1.msra.mxu0 0.0
  %1895 = vmatprep.subr.mxu0 0.0
  %1896 = vmatpush1.msra.mxu0 0.0
  %1897 = vmatprep.subr.mxu0 0.0
  %1898 = vmatpush1.msra.mxu0 0.0
  %1899 = vmatprep.subr.mxu0 0.0
  %1900 = vmatpush1.msra.mxu0 0.0
  %1901 = vmatprep.subr.mxu0 0.0
  %1902 = vmatpush1.msra.mxu0 0.0
  %1903 = vmatprep.subr.mxu0 0.0
  %1904 = vmatpush1.msra.mxu0 0.0
  %1905 = vmatprep.subr.mxu0 0.0
  %1906 = vmatpush1.msra.mxu0 0.0
  %1907 = vmatprep.subr.mxu0 0.0
  %1908 = vmatpush1.msra.mxu0 0.0
  %1909 = vmatprep.subr.mxu0 0.0
  %1910 = vmatpush1.msra.mxu0 0.0
  %1911 = vmatprep.subr.mxu0 0.0
  %1912 = vmatpush1.msra.mxu0 0.0
  %1913 = vmatprep.subr.mxu0 0.0
  %1914 = vmatpush1.msra.mxu0 0.0
  %1915 = vmatprep.subr.mxu0 0.0
  %1916 = vmatpush1.msra.mxu0 0.0
  %1917 = vmatprep.subr.mxu0 0.0
  %1918 = vmatpush1.msra.mxu0 0.0
  %1919 = vmatprep.subr.mxu0 0.0
  %1920 = vmatpush1.msra.mxu0 0.0
  %1921 = vmatprep.subr.mxu0 0.0
  %1922 = vmatpush1.msra.mxu0 0.0
  %1923 = vmatprep.subr.mxu0 0.0
  %1924 = vmatpush1.msra.mxu0 0.0
  %1925 = vmatprep.subr.mxu0 0.0
  %1926 = vmatpush1.msra.mxu0 0.0
  %1927 = vmatprep.subr.mxu0 0.0
  %1928 = vmatpush1.msra.mxu0 0.0
  %1929 = vmatprep.subr.mxu0 0.0
  %1930 = vmatpush1.msra.mxu0 0.0
  %1931 = vmatprep.subr.mxu0 0.0
  %1932 = vmatpush1.msra.mxu0 0.0
  %1933 = vmatprep.subr.mxu0 0.0
  %1934 = vmatpush1.msra.mxu0 0.0
  %1935 = vmatprep.subr.mxu0 0.0
  %1936 = vmatpush1.msra.mxu0 0.0
  %1937 = vmatprep.mubr.f32.mxu0 0.0
  %1938 = vmatmul.mubr.f32.gmra.mrb[0].mxu0 %v1724
  %v1939 = vpop.f32.mrb[0].mxu0
  %v1940 = vadd.f32 0.0, %v1939
  %v1941 = vpop.f32.mrb[0].mxu0
  %1942 = vmatprep.mubr.f32.mxu0 0.0
  %1943 = vmatmul.mubr.f32.gmra.mrb[0].mxu0 %v1727
  %v1944 = vpop.f32.mrb[0].mxu0
  %v1945 = vadd.f32 0.0, %v1944
  %v1946 = vpop.f32.mrb[0].mxu0
  %1947 = vmatprep.mubr.f32.mxu0 0.0
  %1948 = vmatmul.mubr.f32.gmra.mrb[0].mxu0 %v1730
  %v1949 = vpop.f32.mrb[0].mxu0
  %v1950 = vadd.f32 0.0, %v1949
  %v1951 = vpop.f32.mrb[0].mxu0
  %1952 = vmatprep.mubr.f32.mxu0 0.0
  %1953 = vmatmul.mubr.f32.gmra.mrb[0].mxu0 %v1733
  %v1954 = vpop.f32.mrb[0].mxu0
  %v1955 = vadd.f32 0.0, %v1954
  %v1956 = vpop.f32.mrb[0].mxu0
  %1957 = vmatprep.mubr.f32.mxu0 0.0
  %1958 = vmatmul.mubr.f32.gmra.mrb[0].mxu0 %v1736
  %v1959 = vpop.f32.mrb[0].mxu0
  %v1960 = vadd.f32 0.0, %v1959
  %v1961 = vpop.f32.mrb[0].mxu0
  %1962 = vmatprep.mubr.f32.mxu0 0.0
  %1963 = vmatmul.mubr.f32.gmra.mrb[0].mxu0 %v1739
  %v1964 = vpop.f32.mrb[0].mxu0
  %v1965 = vadd.f32 0.0, %v1964
  %v1966 = vpop.f32.mrb[0].mxu0
  %1967 = vmatprep.mubr.f32.mxu0 0.0
  %1968 = vmatmul.mubr.f32.gmra.mrb[0].mxu0 %v1742
  %v1969 = vpop.f32.mrb[0].mxu0
  %v1970 = vadd.f32 0.0, %v1969
  %v1971 = vpop.f32.mrb[0].mxu0
  %1972 = vmatprep.mubr.f32.mxu0 0.0
  %1973 = vmatmul.mubr.f32.gmra.mrb[0].mxu0 %v1745
  %v1974 = vpop.f32.mrb[0].mxu0
  %v1975 = vadd.f32 0.0, %v1974
  %v1976 = vpop.f32.mrb[0].mxu0
  %1977 = vmatprep.mubr.f32.mxu0 0.0
  %1978 = vmatmul.mubr.f32.gmra.mrb[0].mxu0 %v1748
  %v1979 = vpop.f32.mrb[0].mxu0
  %v1980 = vadd.f32 0.0, %v1979
  %v1981 = vpop.f32.mrb[0].mxu0
  %1982 = vmatprep.mubr.f32.mxu0 0.0
  %1983 = vmatmul.mubr.f32.gmra.mrb[0].mxu0 %v1751
  %v1984 = vpop.f32.mrb[0].mxu0
  %v1985 = vadd.f32 0.0, %v1984
  %v1986 = vpop.f32.mrb[0].mxu0
  %1987 = vmatprep.mubr.f32.mxu0 0.0
  %1988 = vmatmul.mubr.f32.gmra.mrb[0].mxu0 %v1754
  %v1989 = vpop.f32.mrb[0].mxu0
  %v1990 = vadd.f32 0.0, %v1989
  %v1991 = vpop.f32.mrb[0].mxu0
  %1992 = vmatprep.mubr.f32.mxu0 0.0
  %1993 = vmatmul.mubr.f32.gmra.mrb[0].mxu0 %v1757
  %v1994 = vpop.f32.mrb[0].mxu0
  %v1995 = vadd.f32 0.0, %v1994
  %v1996 = vpop.f32.mrb[0].mxu0
  %1997 = vmatprep.mubr.f32.mxu0 0.0
  %1998 = vmatmul.mubr.f32.gmra.mrb[0].mxu0 %v1760
  %v1999 = vpop.f32.mrb[0].mxu0
  %v2000 = vadd.f32 0.0, %v1999
  %v2001 = vpop.f32.mrb[0].mxu0
  %2002 = vmatprep.mubr.f32.mxu0 0.0
  %2003 = vmatmul.mubr.f32.gmra.mrb[0].mxu0 %v1763
  %v2004 = vpop.f32.mrb[0].mxu0
  %v2005 = vadd.f32 0.0, %v2004
  %v2006 = vpop.f32.mrb[0].mxu0
  %2007 = vmatprep.mubr.f32.mxu0 0.0
  %2008 = vmatmul.mubr.f32.gmra.mrb[0].mxu0 %v1766
  %v2009 = vpop.f32.mrb[0].mxu0
  %v2010 = vadd.f32 0.0, %v2009
  %v2011 = vpop.f32.mrb[0].mxu0
  %2012 = vmatprep.mubr.f32.mxu0 0.0
  %2013 = vmatmul.mubr.f32.gmra.mrb[0].mxu0 %v1769
  %v2014 = vpop.f32.mrb[0].mxu0
  %v2015 = vadd.f32 0.0, %v2014
  %v2016 = vpop.f32.mrb[0].mxu0
  %2017 = vmatprep.mubr.f32.mxu0 0.0
  %2018 = vmatmul.mubr.f32.gmra.mrb[0].mxu0 %v1772
  %v2019 = vpop.f32.mrb[0].mxu0
  %v2020 = vadd.f32 0.0, %v2019
  %v2021 = vpop.f32.mrb[0].mxu0
  %2022 = vmatprep.mubr.f32.mxu0 0.0
  %2023 = vmatmul.mubr.f32.gmra.mrb[0].mxu0 %v1775
  %v2024 = vpop.f32.mrb[0].mxu0
  %v2025 = vadd.f32 0.0, %v2024
  %v2026 = vpop.f32.mrb[0].mxu0
  %2027 = vmatprep.mubr.f32.mxu0 0.0
  %2028 = vmatmul.mubr.f32.gmra.mrb[0].mxu0 %v1778
  %v2029 = vpop.f32.mrb[0].mxu0
  %v2030 = vadd.f32 0.0, %v2029
  %v2031 = vpop.f32.mrb[0].mxu0
  %2032 = vmatprep.mubr.f32.mxu0 0.0
  %2033 = vmatmul.mubr.f32.gmra.mrb[0].mxu0 %v1781
  %v2034 = vpop.f32.mrb[0].mxu0
  %v2035 = vadd.f32 0.0, %v2034
  %v2036 = vpop.f32.mrb[0].mxu0
  %2037 = vmatprep.mubr.f32.mxu0 0.0
  %2038 = vmatmul.mubr.f32.gmra.mrb[0].mxu0 %v1784
  %v2039 = vpop.f32.mrb[0].mxu0
  %v2040 = vadd.f32 0.0, %v2039
  %v2041 = vpop.f32.mrb[0].mxu0
  %2042 = vmatprep.mubr.f32.mxu0 0.0
  %2043 = vmatmul.mubr.f32.gmra.mrb[0].mxu0 %v1787
  %v2044 = vpop.f32.mrb[0].mxu0
  %v2045 = vadd.f32 0.0, %v2044
  %v2046 = vpop.f32.mrb[0].mxu0
  %2047 = vmatprep.mubr.f32.mxu0 0.0
  %2048 = vmatmul.mubr.f32.gmra.mrb[0].mxu0 %v1790
  %v2049 = vpop.f32.mrb[0].mxu0
  %v2050 = vadd.f32 0.0, %v2049
  %v2051 = vpop.f32.mrb[0].mxu0
  %2052 = vmatprep.mubr.f32.mxu0 0.0
  %2053 = vmatmul.mubr.f32.gmra.mrb[0].mxu0 %v1793
  %v2054 = vpop.f32.mrb[0].mxu0
  %v2055 = vadd.f32 0.0, %v2054
  %v2056 = vpop.f32.mrb[0].mxu0
  %2057 = vmatprep.mubr.f32.mxu0 0.0
  %2058 = vmatmul.mubr.f32.gmra.mrb[0].mxu0 %v1796
  %v2059 = vpop.f32.mrb[0].mxu0
  %v2060 = vadd.f32 0.0, %v2059
  %v2061 = vpop.f32.mrb[0].mxu0
  %2062 = vmatprep.mubr.f32.mxu0 0.0
  %2063 = vmatmul.mubr.f32.gmra.mrb[0].mxu0 %v1799
  %v2064 = vpop.f32.mrb[0].mxu0
  %v2065 = vadd.f32 0.0, %v2064
  %v2066 = vpop.f32.mrb[0].mxu0
  %2067 = vmatprep.mubr.f32.mxu0 0.0
  %2068 = vmatmul.mubr.f32.gmra.mrb[0].mxu0 %v1802
  %v2069 = vpop.f32.mrb[0].mxu0
  %v2070 = vadd.f32 0.0, %v2069
  %v2071 = vpop.f32.mrb[0].mxu0
  %2072 = vmatprep.mubr.f32.mxu0 0.0
  %2073 = vmatmul.mubr.f32.gmra.mrb[0].mxu0 %v1805
  %v2074 = vpop.f32.mrb[0].mxu0
  %v2075 = vadd.f32 0.0, %v2074
  %v2076 = vpop.f32.mrb[0].mxu0
  %2077 = vmatprep.mubr.f32.mxu0 0.0
  %2078 = vmatmul.mubr.f32.gmra.mrb[0].mxu0 %v1808
  %v2079 = vpop.f32.mrb[0].mxu0
  %v2080 = vadd.f32 0.0, %v2079
  %v2081 = vpop.f32.mrb[0].mxu0
  %2082 = vmatprep.mubr.f32.mxu0 0.0
  %2083 = vmatmul.mubr.f32.gmra.mrb[0].mxu0 %v1811
  %v2084 = vpop.f32.mrb[0].mxu0
  %v2085 = vadd.f32 0.0, %v2084
  %v2086 = vpop.f32.mrb[0].mxu0
  %2087 = vmatprep.mubr.f32.mxu0 0.0
  %2088 = vmatmul.mubr.f32.gmra.mrb[0].mxu0 %v1814
  %v2089 = vpop.f32.mrb[0].mxu0
  %v2090 = vadd.f32 0.0, %v2089
  %v2091 = vpop.f32.mrb[0].mxu0
  %2092 = vmatprep.mubr.f32.mxu0 0.0
  %2093 = vmatmul.mubr.f32.gmra.mrb[0].mxu0 %v1817
  %v2094 = vpop.f32.mrb[0].mxu0
  %v2095 = vadd.f32 0.0, %v2094
  %v2096 = vpop.f32.mrb[0].mxu0
  %2097 = vmatprep.mubr.f32.mxu0 0.0
  %2098 = vmatmul.mubr.f32.gmra.mrb[0].mxu0 %v1820
  %v2099 = vpop.f32.mrb[0].mxu0
  %v2100 = vadd.f32 0.0, %v2099
  %v2101 = vpop.f32.mrb[0].mxu0
  %2102 = vmatprep.mubr.f32.mxu0 0.0
  %2103 = vmatmul.mubr.f32.gmra.mrb[0].mxu0 %v1823
  %v2104 = vpop.f32.mrb[0].mxu0
  %v2105 = vadd.f32 0.0, %v2104
  %v2106 = vpop.f32.mrb[0].mxu0
  %2107 = vmatprep.mubr.f32.mxu0 0.0
  %2108 = vmatmul.mubr.f32.gmra.mrb[0].mxu0 %v1826
  %v2109 = vpop.f32.mrb[0].mxu0
  %v2110 = vadd.f32 0.0, %v2109
  %v2111 = vpop.f32.mrb[0].mxu0
  %2112 = vmatprep.mubr.f32.mxu0 0.0
  %2113 = vmatmul.mubr.f32.gmra.mrb[0].mxu0 %v1829
  %v2114 = vpop.f32.mrb[0].mxu0
  %v2115 = vadd.f32 0.0, %v2114
  %v2116 = vpop.f32.mrb[0].mxu0
  %2117 = vmatprep.mubr.f32.mxu0 0.0
  %2118 = vmatmul.mubr.f32.gmra.mrb[0].mxu0 %v1832
  %v2119 = vpop.f32.mrb[0].mxu0
  %v2120 = vadd.f32 0.0, %v2119
  %v2121 = vpop.f32.mrb[0].mxu0
  %2122 = vmatprep.mubr.f32.mxu0 0.0
  %2123 = vmatmul.mubr.f32.gmra.mrb[0].mxu0 %v1835
  %v2124 = vpop.f32.mrb[0].mxu0
  %v2125 = vadd.f32 0.0, %v2124
  %v2126 = vpop.f32.mrb[0].mxu0
  %2127 = vmatprep.mubr.f32.mxu0 0.0
  %2128 = vmatmul.mubr.f32.gmra.mrb[0].mxu0 %v1838
  %v2129 = vpop.f32.mrb[0].mxu0
  %v2130 = vadd.f32 0.0, %v2129
  %v2131 = vpop.f32.mrb[0].mxu0
  %2132 = vmatprep.mubr.f32.mxu0 0.0
  %2133 = vmatmul.mubr.f32.gmra.mrb[0].mxu0 %v1841
  %v2134 = vpop.f32.mrb[0].mxu0
  %v2135 = vadd.f32 0.0, %v2134
  %v2136 = vpop.f32.mrb[0].mxu0
  %2137 = vmatprep.mubr.f32.mxu0 0.0
  %2138 = vmatmul.mubr.f32.gmra.mrb[0].mxu0 %v1844
  %v2139 = vpop.f32.mrb[0].mxu0
  %v2140 = vadd.f32 0.0, %v2139
  %v2141 = vpop.f32.mrb[0].mxu0
  %2142 = vmatprep.mubr.f32.mxu0 0.0
  %2143 = vmatmul.mubr.f32.gmra.mrb[0].mxu0 %v1847
  %v2144 = vpop.f32.mrb[0].mxu0
  %v2145 = vadd.f32 0.0, %v2144
  %v2146 = vpop.f32.mrb[0].mxu0
  %2147 = vmatprep.mubr.f32.mxu0 0.0
  %2148 = vmatmul.mubr.f32.gmra.mrb[0].mxu0 %v1850
  %v2149 = vpop.f32.mrb[0].mxu0
  %v2150 = vadd.f32 0.0, %v2149
  %v2151 = vpop.f32.mrb[0].mxu0
  %2152 = vmatprep.mubr.f32.mxu0 0.0
  %2153 = vmatmul.mubr.f32.gmra.mrb[0].mxu0 %v1853
  %v2154 = vpop.f32.mrb[0].mxu0
  %v2155 = vadd.f32 0.0, %v2154
  %v2156 = vpop.f32.mrb[0].mxu0
  %2157 = vmatprep.mubr.f32.mxu0 0.0
  %2158 = vmatmul.mubr.f32.gmra.mrb[0].mxu0 %v1856
  %v2159 = vpop.f32.mrb[0].mxu0
  %v2160 = vadd.f32 0.0, %v2159
  %v2161 = vpop.f32.mrb[0].mxu0
  %2162 = vmatprep.mubr.f32.mxu0 0.0
  %2163 = vmatmul.mubr.f32.gmra.mrb[0].mxu0 %v1859
  %v2164 = vpop.f32.mrb[0].mxu0
  %v2165 = vadd.f32 0.0, %v2164
  %v2166 = vpop.f32.mrb[0].mxu0
  %2167 = vmatprep.mubr.f32.mxu0 0.0
  %2168 = vmatmul.mubr.f32.gmra.mrb[0].mxu0 %v1862
  %v2169 = vpop.f32.mrb[0].mxu0
  %v2170 = vadd.f32 0.0, %v2169
  %v2171 = vpop.f32.mrb[0].mxu0
  %2172 = vmatprep.mubr.f32.mxu0 0.0
  %2173 = vmatmul.mubr.f32.gmra.mrb[0].mxu0 %v1865
  %v2174 = vpop.f32.mrb[0].mxu0
  %v2175 = vadd.f32 0.0, %v2174
  %v2176 = vpop.f32.mrb[0].mxu0
  %2177 = vmatprep.mubr.f32.mxu0 0.0
  %2178 = vmatmul.mubr.f32.gmra.mrb[0].mxu0 %v1868
  %v2179 = vpop.f32.mrb[0].mxu0
  %v2180 = vadd.f32 0.0, %v2179
  %v2181 = vpop.f32.mrb[0].mxu0
  %2182 = vmatprep.mubr.f32.mxu0 0.0
  %2183 = vmatmul.mubr.f32.gmra.mrb[0].mxu0 %v1871
  %v2184 = vpop.f32.mrb[0].mxu0
  %v2185 = vadd.f32 0.0, %v2184
  %v2186 = vpop.f32.mrb[0].mxu0
  %2187 = vdwg.mxu0
  %v2188 = vmax.f32 %v1622, %v1940
  %v2189 = vmax.f32 %v1623, %v1945
  %v2190 = vmax.f32 %v1624, %v1950
  %v2191 = vmax.f32 %v1625, %v1955
  %v2192 = vmax.f32 %v1626, %v1960
  %v2193 = vmax.f32 %v1627, %v1965
  %v2194 = vmax.f32 %v1628, %v1970
  %v2195 = vmax.f32 %v1629, %v1975
  %v2196 = vmax.f32 %v1630, %v1980
  %v2197 = vmax.f32 %v1631, %v1985
  %v2198 = vmax.f32 %v1632, %v1990
  %v2199 = vmax.f32 %v1633, %v1995
  %v2200 = vmax.f32 %v1634, %v2000
  %v2201 = vmax.f32 %v1635, %v2005
  %v2202 = vmax.f32 %v1636, %v2010
  %v2203 = vmax.f32 %v1637, %v2015
  %v2204 = vmax.f32 %v1638, %v2020
  %v2205 = vmax.f32 %v1639, %v2025
  %v2206 = vmax.f32 %v1640, %v2030
  %v2207 = vmax.f32 %v1641, %v2035
  %v2208 = vmax.f32 %v1642, %v2040
  %v2209 = vmax.f32 %v1643, %v2045
  %v2210 = vmax.f32 %v1644, %v2050
  %v2211 = vmax.f32 %v1645, %v2055
  %v2212 = vmax.f32 %v1646, %v2060
  %v2213 = vmax.f32 %v1647, %v2065
  %v2214 = vmax.f32 %v1648, %v2070
  %v2215 = vmax.f32 %v1649, %v2075
  %v2216 = vmax.f32 %v1650, %v2080
  %v2217 = vmax.f32 %v1651, %v2085
  %v2218 = vmax.f32 %v1652, %v2090
  %v2219 = vmax.f32 %v1653, %v2095
  %v2220 = vmax.f32 %v1654, %v2100
  %v2221 = vmax.f32 %v1655, %v2105
  %v2222 = vmax.f32 %v1656, %v2110
  %v2223 = vmax.f32 %v1657, %v2115
  %v2224 = vmax.f32 %v1658, %v2120
  %v2225 = vmax.f32 %v1659, %v2125
  %v2226 = vmax.f32 %v1660, %v2130
  %v2227 = vmax.f32 %v1661, %v2135
  %v2228 = vmax.f32 %v1662, %v2140
  %v2229 = vmax.f32 %v1663, %v2145
  %v2230 = vmax.f32 %v1664, %v2150
  %v2231 = vmax.f32 %v1665, %v2155
  %v2232 = vmax.f32 %v1666, %v2160
  %v2233 = vmax.f32 %v1667, %v2165
  %v2234 = vmax.f32 %v1668, %v2170
  %v2235 = vmax.f32 %v1669, %v2175
  %v2236 = vmax.f32 %v1670, %v2180
  %v2237 = vmax.f32 %v1671, %v2185
  %v2238 = vld [vmem:[%s2] sm:$0x1]
  %v2240 = vlaneseq
  %v2241 = vshrl.u32 %v2240, 7
  %v2242 = vsub.s32 0, %v2241
  %v2243 = vrot.slane %v2238, %v2242
  %v2245 = vadd.f32 %v2188, %v2243
  %v2246 = vadd.f32 %v2189, %v2243
  %v2247 = vadd.f32 %v2190, %v2243
  %v2248 = vadd.f32 %v2191, %v2243
  %v2249 = vadd.f32 %v2192, %v2243
  %v2250 = vadd.f32 %v2193, %v2243
  %v2251 = vadd.f32 %v2194, %v2243
  %v2252 = vadd.f32 %v2195, %v2243
  %v2253 = vadd.f32 %v2196, %v2243
  %v2254 = vadd.f32 %v2197, %v2243
  %v2255 = vadd.f32 %v2198, %v2243
  %v2256 = vadd.f32 %v2199, %v2243
  %v2257 = vadd.f32 %v2200, %v2243
  %v2258 = vadd.f32 %v2201, %v2243
  %v2259 = vadd.f32 %v2202, %v2243
  %v2260 = vadd.f32 %v2203, %v2243
  %v2261 = vadd.f32 %v2204, %v2243
  %v2262 = vadd.f32 %v2205, %v2243
  %v2263 = vadd.f32 %v2206, %v2243
  %v2264 = vadd.f32 %v2207, %v2243
  %v2265 = vadd.f32 %v2208, %v2243
  %v2266 = vadd.f32 %v2209, %v2243
  %v2267 = vadd.f32 %v2210, %v2243
  %v2268 = vadd.f32 %v2211, %v2243
  %v2269 = vadd.f32 %v2212, %v2243
  %v2270 = vadd.f32 %v2213, %v2243
  %v2271 = vadd.f32 %v2214, %v2243
  %v2272 = vadd.f32 %v2215, %v2243
  %v2273 = vadd.f32 %v2216, %v2243
  %v2274 = vadd.f32 %v2217, %v2243
  %v2275 = vadd.f32 %v2218, %v2243
  %v2276 = vadd.f32 %v2219, %v2243
  %v2277 = vadd.f32 %v2220, %v2243
  %v2278 = vadd.f32 %v2221, %v2243
  %v2279 = vadd.f32 %v2222, %v2243
  %v2280 = vadd.f32 %v2223, %v2243
  %v2281 = vadd.f32 %v2224, %v2243
  %v2282 = vadd.f32 %v2225, %v2243
  %v2283 = vadd.f32 %v2226, %v2243
  %v2284 = vadd.f32 %v2227, %v2243
  %v2285 = vadd.f32 %v2228, %v2243
  %v2286 = vadd.f32 %v2229, %v2243
  %v2287 = vadd.f32 %v2230, %v2243
  %v2288 = vadd.f32 %v2231, %v2243
  %v2289 = vadd.f32 %v2232, %v2243
  %v2290 = vadd.f32 %v2233, %v2243
  %v2291 = vadd.f32 %v2234, %v2243
  %v2292 = vadd.f32 %v2235, %v2243
  %v2293 = vadd.f32 %v2236, %v2243
  %v2294 = vadd.f32 %v2237, %v2243
  %vm2295 = vcmp.gt.f32.partialorder %v2245, 0.0
  %vm2296 = vcmp.gt.f32.partialorder %v2246, 0.0
  %vm2297 = vcmp.gt.f32.partialorder %v2247, 0.0
  %vm2298 = vcmp.gt.f32.partialorder %v2248, 0.0
  %vm2299 = vcmp.gt.f32.partialorder %v2249, 0.0
  %vm2300 = vcmp.gt.f32.partialorder %v2250, 0.0
  %vm2301 = vcmp.gt.f32.partialorder %v2251, 0.0
  %vm2302 = vcmp.gt.f32.partialorder %v2252, 0.0
  %vm2303 = vcmp.gt.f32.partialorder %v2253, 0.0
  %vm2304 = vcmp.gt.f32.partialorder %v2254, 0.0
  %vm2305 = vcmp.gt.f32.partialorder %v2255, 0.0
  %vm2306 = vcmp.gt.f32.partialorder %v2256, 0.0
  %vm2307 = vcmp.gt.f32.partialorder %v2257, 0.0
  %vm2308 = vcmp.gt.f32.partialorder %v2258, 0.0
  %vm2309 = vcmp.gt.f32.partialorder %v2259, 0.0
  %vm2310 = vcmp.gt.f32.partialorder %v2260, 0.0
  %vm2311 = vcmp.gt.f32.partialorder %v2261, 0.0
  %vm2312 = vcmp.gt.f32.partialorder %v2262, 0.0
  %vm2313 = vcmp.gt.f32.partialorder %v2263, 0.0
  %vm2314 = vcmp.gt.f32.partialorder %v2264, 0.0
  %vm2315 = vcmp.gt.f32.partialorder %v2265, 0.0
  %vm2316 = vcmp.gt.f32.partialorder %v2266, 0.0
  %vm2317 = vcmp.gt.f32.partialorder %v2267, 0.0
  %vm2318 = vcmp.gt.f32.partialorder %v2268, 0.0
  %vm2319 = vcmp.gt.f32.partialorder %v2269, 0.0
  %vm2320 = vcmp.gt.f32.partialorder %v2270, 0.0
  %vm2321 = vcmp.gt.f32.partialorder %v2271, 0.0
  %vm2322 = vcmp.gt.f32.partialorder %v2272, 0.0
  %vm2323 = vcmp.gt.f32.partialorder %v2273, 0.0
  %vm2324 = vcmp.gt.f32.partialorder %v2274, 0.0
  %vm2325 = vcmp.gt.f32.partialorder %v2275, 0.0
  %vm2326 = vcmp.gt.f32.partialorder %v2276, 0.0
  %vm2327 = vcmp.gt.f32.partialorder %v2277, 0.0
  %vm2328 = vcmp.gt.f32.partialorder %v2278, 0.0
  %vm2329 = vcmp.gt.f32.partialorder %v2279, 0.0
  %vm2330 = vcmp.gt.f32.partialorder %v2280, 0.0
  %vm2331 = vcmp.gt.f32.partialorder %v2281, 0.0
  %vm2332 = vcmp.gt.f32.partialorder %v2282, 0.0
  %vm2333 = vcmp.gt.f32.partialorder %v2283, 0.0
  %vm2334 = vcmp.gt.f32.partialorder %v2284, 0.0
  %vm2335 = vcmp.gt.f32.partialorder %v2285, 0.0
  %vm2336 = vcmp.gt.f32.partialorder %v2286, 0.0
  %vm2337 = vcmp.gt.f32.partialorder %v2287, 0.0
  %vm2338 = vcmp.gt.f32.partialorder %v2288, 0.0
  %vm2339 = vcmp.gt.f32.partialorder %v2289, 0.0
  %vm2340 = vcmp.gt.f32.partialorder %v2290, 0.0
  %vm2341 = vcmp.gt.f32.partialorder %v2291, 0.0
  %vm2342 = vcmp.gt.f32.partialorder %v2292, 0.0
  %vm2343 = vcmp.gt.f32.partialorder %v2293, 0.0
  %vm2344 = vcmp.gt.f32.partialorder %v2294, 0.0
  %v2345 = vmul.f32 %v2245, 0.01
  %v2346 = vmul.f32 %v2246, 0.01
  %v2347 = vmul.f32 %v2247, 0.01
  %v2348 = vmul.f32 %v2248, 0.01
  %v2349 = vmul.f32 %v2249, 0.01
  %v2350 = vmul.f32 %v2250, 0.01
  %v2351 = vmul.f32 %v2251, 0.01
  %v2352 = vmul.f32 %v2252, 0.01
  %v2353 = vmul.f32 %v2253, 0.01
  %v2354 = vmul.f32 %v2254, 0.01
  %v2355 = vmul.f32 %v2255, 0.01
  %v2356 = vmul.f32 %v2256, 0.01
  %v2357 = vmul.f32 %v2257, 0.01
  %v2358 = vmul.f32 %v2258, 0.01
  %v2359 = vmul.f32 %v2259, 0.01
  %v2360 = vmul.f32 %v2260, 0.01
  %v2361 = vmul.f32 %v2261, 0.01
  %v2362 = vmul.f32 %v2262, 0.01
  %v2363 = vmul.f32 %v2263, 0.01
  %v2364 = vmul.f32 %v2264, 0.01
  %v2365 = vmul.f32 %v2265, 0.01
  %v2366 = vmul.f32 %v2266, 0.01
  %v2367 = vmul.f32 %v2267, 0.01
  %v2368 = vmul.f32 %v2268, 0.01
  %v2369 = vmul.f32 %v2269, 0.01
  %v2370 = vmul.f32 %v2270, 0.01
  %v2371 = vmul.f32 %v2271, 0.01
  %v2372 = vmul.f32 %v2272, 0.01
  %v2373 = vmul.f32 %v2273, 0.01
  %v2374 = vmul.f32 %v2274, 0.01
  %v2375 = vmul.f32 %v2275, 0.01
  %v2376 = vmul.f32 %v2276, 0.01
  %v2377 = vmul.f32 %v2277, 0.01
  %v2378 = vmul.f32 %v2278, 0.01
  %v2379 = vmul.f32 %v2279, 0.01
  %v2380 = vmul.f32 %v2280, 0.01
  %v2381 = vmul.f32 %v2281, 0.01
  %v2382 = vmul.f32 %v2282, 0.01
  %v2383 = vmul.f32 %v2283, 0.01
  %v2384 = vmul.f32 %v2284, 0.01
  %v2385 = vmul.f32 %v2285, 0.01
  %v2386 = vmul.f32 %v2286, 0.01
  %v2387 = vmul.f32 %v2287, 0.01
  %v2388 = vmul.f32 %v2288, 0.01
  %v2389 = vmul.f32 %v2289, 0.01
  %v2390 = vmul.f32 %v2290, 0.01
  %v2391 = vmul.f32 %v2291, 0.01
  %v2392 = vmul.f32 %v2292, 0.01
  %v2393 = vmul.f32 %v2293, 0.01
  %v2394 = vmul.f32 %v2294, 0.01
  %v2395 = vsel %vm2295, %v2245, %v2345
  %v2396 = vsel %vm2296, %v2246, %v2346
  %v2397 = vsel %vm2297, %v2247, %v2347
  %v2398 = vsel %vm2298, %v2248, %v2348
  %v2399 = vsel %vm2299, %v2249, %v2349
  %v2400 = vsel %vm2300, %v2250, %v2350
  %v2401 = vsel %vm2301, %v2251, %v2351
  %v2402 = vsel %vm2302, %v2252, %v2352
  %v2403 = vsel %vm2303, %v2253, %v2353
  %v2404 = vsel %vm2304, %v2254, %v2354
  %v2405 = vsel %vm2305, %v2255, %v2355
  %v2406 = vsel %vm2306, %v2256, %v2356
  %v2407 = vsel %vm2307, %v2257, %v2357
  %v2408 = vsel %vm2308, %v2258, %v2358
  %v2409 = vsel %vm2309, %v2259, %v2359
  %v2410 = vsel %vm2310, %v2260, %v2360
  %v2411 = vsel %vm2311, %v2261, %v2361
  %v2412 = vsel %vm2312, %v2262, %v2362
  %v2413 = vsel %vm2313, %v2263, %v2363
  %v2414 = vsel %vm2314, %v2264, %v2364
  %v2415 = vsel %vm2315, %v2265, %v2365
  %v2416 = vsel %vm2316, %v2266, %v2366
  %v2417 = vsel %vm2317, %v2267, %v2367
  %v2418 = vsel %vm2318, %v2268, %v2368
  %v2419 = vsel %vm2319, %v2269, %v2369
  %v2420 = vsel %vm2320, %v2270, %v2370
  %v2421 = vsel %vm2321, %v2271, %v2371
  %v2422 = vsel %vm2322, %v2272, %v2372
  %v2423 = vsel %vm2323, %v2273, %v2373
  %v2424 = vsel %vm2324, %v2274, %v2374
  %v2425 = vsel %vm2325, %v2275, %v2375
  %v2426 = vsel %vm2326, %v2276, %v2376
  %v2427 = vsel %vm2327, %v2277, %v2377
  %v2428 = vsel %vm2328, %v2278, %v2378
  %v2429 = vsel %vm2329, %v2279, %v2379
  %v2430 = vsel %vm2330, %v2280, %v2380
  %v2431 = vsel %vm2331, %v2281, %v2381
  %v2432 = vsel %vm2332, %v2282, %v2382
  %v2433 = vsel %vm2333, %v2283, %v2383
  %v2434 = vsel %vm2334, %v2284, %v2384
  %v2435 = vsel %vm2335, %v2285, %v2385
  %v2436 = vsel %vm2336, %v2286, %v2386
  %v2437 = vsel %vm2337, %v2287, %v2387
  %v2438 = vsel %vm2338, %v2288, %v2388
  %v2439 = vsel %vm2339, %v2289, %v2389
  %v2440 = vsel %vm2340, %v2290, %v2390
  %v2441 = vsel %vm2341, %v2291, %v2391
  %v2442 = vsel %vm2342, %v2292, %v2392
  %v2443 = vsel %vm2343, %v2293, %v2393
  %v2444 = vsel %vm2344, %v2294, %v2394
  %vm2445 = vcmask 64512
  %2446 = vst.msk [vmem:[%s3] sm:$0xff] %vm2445, %v2395
  %2447 = vst.msk [vmem:[%s3 + $0x8] sm:$0xff] %vm2445, %v2396
  %2448 = vst.msk [vmem:[%s3 + $0x10] sm:$0xff] %vm2445, %v2397
  %2449 = vst.msk [vmem:[%s3 + $0x18] sm:$0xff] %vm2445, %v2398
  %2450 = vst.msk [vmem:[%s3 + $0x20] sm:$0xff] %vm2445, %v2399
  %2451 = vst.msk [vmem:[%s3 + $0x28] sm:$0xff] %vm2445, %v2400
  %2452 = vst.msk [vmem:[%s3 + $0x30] sm:$0xff] %vm2445, %v2401
  %2453 = vst.msk [vmem:[%s3 + $0x38] sm:$0xff] %vm2445, %v2402
  %2454 = vst.msk [vmem:[%s3 + $0x40] sm:$0xff] %vm2445, %v2403
  %2455 = vst.msk [vmem:[%s3 + $0x48] sm:$0xff] %vm2445, %v2404
  %2456 = vst.msk [vmem:[%s3 + $0x50] sm:$0xff] %vm2445, %v2405
  %2457 = vst.msk [vmem:[%s3 + $0x58] sm:$0xff] %vm2445, %v2406
  %2458 = vst.msk [vmem:[%s3 + $0x60] sm:$0xff] %vm2445, %v2407
  %2459 = vst.msk [vmem:[%s3 + $0x68] sm:$0xff] %vm2445, %v2408
  %2460 = vst.msk [vmem:[%s3 + $0x70] sm:$0xff] %vm2445, %v2409
  %2461 = vst.msk [vmem:[%s3 + $0x78] sm:$0xff] %vm2445, %v2410
  %2462 = vst.msk [vmem:[%s3 + $0x80] sm:$0xff] %vm2445, %v2411
  %2463 = vst.msk [vmem:[%s3 + $0x88] sm:$0xff] %vm2445, %v2412
  %2464 = vst.msk [vmem:[%s3 + $0x90] sm:$0xff] %vm2445, %v2413
  %2465 = vst.msk [vmem:[%s3 + $0x98] sm:$0xff] %vm2445, %v2414
  %2466 = vst.msk [vmem:[%s3 + $0xa0] sm:$0xff] %vm2445, %v2415
  %2467 = vst.msk [vmem:[%s3 + $0xa8] sm:$0xff] %vm2445, %v2416
  %2468 = vst.msk [vmem:[%s3 + $0xb0] sm:$0xff] %vm2445, %v2417
  %2469 = vst.msk [vmem:[%s3 + $0xb8] sm:$0xff] %vm2445, %v2418
  %2470 = vst.msk [vmem:[%s3 + $0xc0] sm:$0xff] %vm2445, %v2419
  %2471 = vst.msk [vmem:[%s3 + $0xc8] sm:$0xff] %vm2445, %v2420
  %2472 = vst.msk [vmem:[%s3 + $0xd0] sm:$0xff] %vm2445, %v2421
  %2473 = vst.msk [vmem:[%s3 + $0xd8] sm:$0xff] %vm2445, %v2422
  %2474 = vst.msk [vmem:[%s3 + $0xe0] sm:$0xff] %vm2445, %v2423
  %2475 = vst.msk [vmem:[%s3 + $0xe8] sm:$0xff] %vm2445, %v2424
  %2476 = vst.msk [vmem:[%s3 + $0xf0] sm:$0xff] %vm2445, %v2425
  %2477 = vst.msk [vmem:[%s3 + $0xf8] sm:$0xff] %vm2445, %v2426
  %2478 = vst.msk [vmem:[%s3 + $0x100] sm:$0xff] %vm2445, %v2427
  %2479 = vst.msk [vmem:[%s3 + $0x108] sm:$0xff] %vm2445, %v2428
  %2480 = vst.msk [vmem:[%s3 + $0x110] sm:$0xff] %vm2445, %v2429
  %2481 = vst.msk [vmem:[%s3 + $0x118] sm:$0xff] %vm2445, %v2430
  %2482 = vst.msk [vmem:[%s3 + $0x120] sm:$0xff] %vm2445, %v2431
  %2483 = vst.msk [vmem:[%s3 + $0x128] sm:$0xff] %vm2445, %v2432
  %2484 = vst.msk [vmem:[%s3 + $0x130] sm:$0xff] %vm2445, %v2433
  %2485 = vst.msk [vmem:[%s3 + $0x138] sm:$0xff] %vm2445, %v2434
  %2486 = vst.msk [vmem:[%s3 + $0x140] sm:$0xff] %vm2445, %v2435
  %2487 = vst.msk [vmem:[%s3 + $0x148] sm:$0xff] %vm2445, %v2436
  %2488 = vst.msk [vmem:[%s3 + $0x150] sm:$0xff] %vm2445, %v2437
  %2489 = vst.msk [vmem:[%s3 + $0x158] sm:$0xff] %vm2445, %v2438
  %2490 = vst.msk [vmem:[%s3 + $0x160] sm:$0xff] %vm2445, %v2439
  %2491 = vst.msk [vmem:[%s3 + $0x168] sm:$0xff] %vm2445, %v2440
  %2492 = vst.msk [vmem:[%s3 + $0x170] sm:$0xff] %vm2445, %v2441
  %2493 = vst.msk [vmem:[%s3 + $0x178] sm:$0xff] %vm2445, %v2442
  %2494 = vst.msk [vmem:[%s3 + $0x180] sm:$0xff] %vm2445, %v2443
  %2495 = vst.msk [vmem:[%s3 + $0x188] sm:$0xff] %vm2445, %v2444
  // Predicated region
  $region14: #{neuralnet_forward.2} parent=0 // pred_check
    _
  $region15: #{neuralnet_forward.2} parent=0 // pred_check_branch
    %2497 = sbr.rel (0) target = $region17
  $region16: #{neuralnet_forward.2} parent=0 // pred_region
    _
  $region17: #{neuralnet_forward.2} parent=0 // pred_fallthru
    _
  // Predicated region
  $region18: #{neuralnet_forward.2} parent=0 // pred_check
    _
  $region19: #{neuralnet_forward.2} parent=0 // pred_check_branch
    %2499 = sbr.rel (0) target = $region21
  $region20: #{neuralnet_forward.2} parent=0 // pred_region
    _
  $region21: #{neuralnet_forward.2} parent=0 // pred_fallthru
    _

// kernel: tile.8
$region0: #{tile.8}
  #allocation0 [shape = 's32[1]{0}', space=sflag, size = 0x4, scoped, tag = 'scoped memory for tile.8']
  %s0 = inlined_call_operand.vmem [shape: f32[16], index: 0, kind: input, shape index: {}]
  %s1 = inlined_call_operand.vmem [shape: f32[25,16], index: 1, kind: output, shape index: {}]
  // Predicated region
  $region2: #{tile.8} parent=0 // pred_check
    _
  $region3: #{tile.8} parent=0 // pred_check_branch
    %3 = sbr.rel (0) target = $region5
  $region4: #{tile.8} parent=0 // pred_region
    _
  $region5: #{tile.8} parent=0 // pred_fallthru
    _
  %v4 = vld [vmem:[%s0] ss:$0 sm:$0xff]
  %5 = vst [vmem:[%s1] sm:$0xff] %v4
  %s6 = scalar_lea.vmem %s1, 8
  %7 = vst [vmem:[%s6] sm:$0xff] %v4
  %s8 = scalar_lea.vmem %s1, 16
  %9 = vst [vmem:[%s8] sm:$0xff] %v4
  %s10 = scalar_lea.vmem %s1, 24
  %11 = vst [vmem:[%s10] sm:$0xff] %v4

// kernel: tile.9
$region0: #{tile.9}
  %s0 = inlined_call_operand.vmem [shape: f32[25,16], index: 0, kind: input, shape index: {}]
  %s1 = inlined_call_operand.vmem [shape: f32[1,400], index: 1, kind: output, shape index: {}]
  $region1: #{tile.9} parent=0
    #allocation0 [shape = 'u8[16384]{0}', space=vmem, size = 0x4000, scoped, tag = 'scoped mem for output reshape']
    %v2 = vld [vmem:[%s0] ss:$8 sm:$0xf]
    %vm3 = vcmask 130048
    %4 = vst.msk [vmem:[#allocation0] ss:$8 sm:$0xf] %vm3, %v2
    %s5 = scalar_lea.vmem %s0, 7
    %v6 = vld [vmem:[%s5] ss:$8 sm:$0x7]
    %7 = vrot.lane.b32.xlu0 %v6, 112
    %v8 = vpop.permute.xlu0 %7
    %vm9 = vcmask 1048448
    %10 = vst.msk [vmem:[#allocation0] ss:$8 sm:$0x7] %vm9, %v8
    %s11 = scalar_lea.vmem %s0, 6
    %v12 = vld [vmem:[%s11] ss:$8 sm:$0x7]
    %13 = vrot.lane.b32.xlu0 %v12, 96
    %v14 = vpop.permute.xlu0 %13
    %vm15 = vcmask 917248
    %16 = vst.msk [vmem:[#allocation0] ss:$8 sm:$0x7] %vm15, %v14
    %s17 = scalar_lea.vmem %s0, 5
    %v18 = vld [vmem:[%s17] ss:$8 sm:$0x7]
    %19 = vrot.lane.b32.xlu0 %v18, 80
    %v20 = vpop.permute.xlu0 %19
    %vm21 = vcmask 786048
    %22 = vst.msk [vmem:[#allocation0] ss:$8 sm:$0x7] %vm21, %v20
    %s23 = scalar_lea.vmem %s0, 4
    %v24 = vld [vmem:[%s23] ss:$8 sm:$0x7]
    %25 = vrot.lane.b32.xlu0 %v24, 64
    %v26 = vpop.permute.xlu0 %25
    %vm27 = vcmask 654848
    %28 = vst.msk [vmem:[#allocation0] ss:$8 sm:$0x7] %vm27, %v26
    %s29 = scalar_lea.vmem %s0, 3
    %v30 = vld [vmem:[%s29] ss:$8 sm:$0x7]
    %31 = vrot.lane.b32.xlu0 %v30, 48
    %v32 = vpop.permute.xlu0 %31
    %vm33 = vcmask 523648
    %34 = vst.msk [vmem:[#allocation0] ss:$8 sm:$0x7] %vm33, %v32
    %s35 = scalar_lea.vmem %s0, 2
    %v36 = vld [vmem:[%s35] ss:$8 sm:$0x7]
    %37 = vrot.lane.b32.xlu0 %v36, 32
    %v38 = vpop.permute.xlu0 %37
    %vm39 = vcmask 392448
    %40 = vst.msk [vmem:[#allocation0] ss:$8 sm:$0x7] %vm39, %v38
    %s41 = scalar_lea.vmem %s0, 1
    %v42 = vld [vmem:[%s41] ss:$8 sm:$0x7]
    %43 = vrot.lane.b32.xlu0 %v42, 16
    %v44 = vpop.permute.xlu0 %43
    %vm45 = vcmask 261248
    %46 = vst.msk [vmem:[#allocation0] ss:$8 sm:$0x7] %vm45, %v44
    %s48 = sshllo.u32 0, 1
    %v50 = vld [vmem:[#allocation0] sm:%s48]
    %s51 = sshllo.u32 0, 1
    %52 = vst [vmem:[%s1] sm:%s51] %v50
    %s53 = scalar_lea.vmem [#allocation0], 8
    %v54 = vld [vmem:[%s53] sm:%s48]
    %s55 = sshllo.u32 0, 1
    %s56 = scalar_lea.vmem %s1, 1
    %57 = vst [vmem:[%s56] sm:%s55] %v54
    %s58 = scalar_lea.vmem [#allocation0], 16
    %v59 = vld [vmem:[%s58] sm:%s48]
    %s60 = sshllo.u32 0, 1
    %s61 = smul.addr 1, 2
    %s62 = scalar_lea.vmem %s1, %s61
    %63 = vst [vmem:[%s62] sm:%s60] %v59
    %s64 = scalar_lea.vmem [#allocation0], 24
    %v65 = vld [vmem:[%s64] sm:%s48]
    %s66 = sshllo.u32 0, 1
    %s67 = smul.addr 1, 3
    %s68 = scalar_lea.vmem %s1, %s67
    %69 = vst [vmem:[%s68] sm:%s66] %v65

// kernel: neuralnet_forward.3
$region0: #{neuralnet_forward.3}
  #allocation0 [shape = 'u32[]', space=smem, size = 0x4, offset = 0x4, fixed_abs, tag = 'smem constant byte address 0x4 - core index']
  #allocation1 [shape = 'u32[144,128]{1,0:T(1,128)}', space=vmem, size = 0x12000, scoped, tag = 'internal scratch']
  %s0 = inlined_call_operand.vmem [shape: f32[2,1176], index: 0, kind: input, shape index: {}]
  %s1 = inlined_call_operand.vmem [shape: f32[4,1176,400], index: 1, kind: input, shape index: {}]
  %s2 = inlined_call_operand.vmem [shape: f32[1,400], index: 2, kind: input, shape index: {}]
  %s3 = inlined_call_operand.vmem [shape: f32[400,128], index: 3, kind: input, shape index: {}]
  %s4 = inlined_call_operand.vmem [shape: f32[1,128], index: 4, kind: input, shape index: {}]
  %s5 = inlined_call_operand.vmem [shape: f32[128,128], index: 5, kind: input, shape index: {}]
  %s6 = inlined_call_operand.vmem [shape: f32[1,128], index: 6, kind: input, shape index: {}]
  %s7 = inlined_call_operand.hbm [shape: f32[2,128], index: 7, kind: output, shape index: {}]
  %s8 = sld [smem:[#allocation0]]
  $region38: #{neuralnet_forward.3} parent=0
    _
  %s10 = ssub.s32 1, %s8
  %s11 = scalar_select 0, %s10, %s8
  $region1: #{neuralnet_forward.3} parent=0
    #allocation2 [shape = 'u8[1024]{0}', space=vmem, size = 0x400, scoped, tag = 'output window, operand 0, single buffered']
    #allocation3 [shape = 's32[1]{0}', space=sflag, size = 0x4, scoped, tag = 'scoped memory for neuralnet_forward.3']
    %12 = vsyncpa [#allocation3], 0
    // Predicated region
    $region2: #{neuralnet_forward.3} parent=1 // pred_check
      _
    $region3: #{neuralnet_forward.3} parent=1 // pred_check_branch
      %14 = sbr.rel (0) target = $region5
    $region4: #{neuralnet_forward.3} parent=1 // pred_region
      _
    $region5: #{neuralnet_forward.3} parent=1 // pred_fallthru
      _
    // Predicated region
    $region6: #{neuralnet_forward.3} parent=1 // pred_check
      _
    $region7: #{neuralnet_forward.3} parent=1 // pred_check_branch
      %16 = sbr.rel (0) target = $region9
    $region8: #{neuralnet_forward.3} parent=1 // pred_region
      _
    $region9: #{neuralnet_forward.3} parent=1 // pred_fallthru
      _
    // Predicated region
    $region10: #{neuralnet_forward.3} parent=1 // pred_check
      _
    $region11: #{neuralnet_forward.3} parent=1 // pred_check_branch
      %18 = sbr.rel (0) target = $region13
    $region12: #{neuralnet_forward.3} parent=1 // pred_region
      _
    $region13: #{neuralnet_forward.3} parent=1 // pred_fallthru
      _
    // Predicated region
    $region14: #{neuralnet_forward.3} parent=1 // pred_check
      _
    $region15: #{neuralnet_forward.3} parent=1 // pred_check_branch
      %20 = sbr.rel (0) target = $region17
    $region16: #{neuralnet_forward.3} parent=1 // pred_region
      _
    $region17: #{neuralnet_forward.3} parent=1 // pred_fallthru
      _
    // Predicated region
    $region18: #{neuralnet_forward.3} parent=1 // pred_check
      _
    $region19: #{neuralnet_forward.3} parent=1 // pred_check_branch
      %22 = sbr.rel (0) target = $region21
    $region20: #{neuralnet_forward.3} parent=1 // pred_region
      _
    $region21: #{neuralnet_forward.3} parent=1 // pred_fallthru
      _
    // Predicated region
    $region22: #{neuralnet_forward.3} parent=1 // pred_check
      _
    $region23: #{neuralnet_forward.3} parent=1 // pred_check_branch
      %24 = sbr.rel (0) target = $region25
    $region24: #{neuralnet_forward.3} parent=1 // pred_region
      _
    $region25: #{neuralnet_forward.3} parent=1 // pred_fallthru
      _
    // Predicated region
    $region26: #{neuralnet_forward.3} parent=1 // pred_check
      _
    $region27: #{neuralnet_forward.3} parent=1 // pred_check_branch
      %26 = sbr.rel (0) target = $region29
    $region28: #{neuralnet_forward.3} parent=1 // pred_region
      _
    $region29: #{neuralnet_forward.3} parent=1 // pred_fallthru
      _
    %v27 = vld [vmem:[%s0] sm:$0xff]
    %v28 = vld [vmem:[%s0 + $0x8] sm:$0xff]
    %v29 = vld [vmem:[%s0 + $0x10] sm:$0xf]
    %v30 = vld [vmem:[%s1] sm:$0xff]
    %v31 = vld [vmem:[%s1 + $0x8] sm:$0xff]
    %v32 = vld [vmem:[%s1 + $0x10] sm:$0xff]
    %v33 = vld [vmem:[%s1 + $0x18] sm:$0xff]
    %v34 = vld [vmem:[%s1 + $0x20] sm:$0xff]
    %v35 = vld [vmem:[%s1 + $0x28] sm:$0xff]
    %v36 = vld [vmem:[%s1 + $0x30] sm:$0xff]
    %v37 = vld [vmem:[%s1 + $0x38] sm:$0xff]
    %v38 = vld [vmem:[%s1 + $0x40] sm:$0xff]
    %v39 = vld [vmem:[%s1 + $0x48] sm:$0xff]
    %v40 = vld [vmem:[%s1 + $0x50] sm:$0xff]
    %v41 = vld [vmem:[%s1 + $0x58] sm:$0xff]
    %v42 = vld [vmem:[%s1 + $0x60] sm:$0xff]
    %v43 = vld [vmem:[%s1 + $0x68] sm:$0xff]
    %v44 = vld [vmem:[%s1 + $0x70] sm:$0xff]
    %v45 = vld [vmem:[%s1 + $0x78] sm:$0xff]
    %v46 = vld [vmem:[%s1 + $0x80] sm:$0xff]
    %v47 = vld [vmem:[%s1 + $0x88] sm:$0xff]
    %v48 = vld [vmem:[%s1 + $0x90] sm:$0xff]
    %v49 = vld [vmem:[%s1 + $0x98] sm:$0xff]
    %v50 = vld [vmem:[%s1 + $0xa0] sm:$0xff]
    %v51 = vld [vmem:[%s1 + $0xa8] sm:$0xff]
    %v52 = vld [vmem:[%s1 + $0xb0] sm:$0xff]
    %v53 = vld [vmem:[%s1 + $0xb8] sm:$0xff]
    %v54 = vld [vmem:[%s1 + $0xc0] sm:$0xff]
    %v55 = vld [vmem:[%s1 + $0xc8] sm:$0xff]
    %v56 = vld [vmem:[%s1 + $0xd0] sm:$0xff]
    %v57 = vld [vmem:[%s1 + $0xd8] sm:$0xff]
    %v58 = vld [vmem:[%s1 + $0xe0] sm:$0xff]
    %v59 = vld [vmem:[%s1 + $0xe8] sm:$0xff]
    %v60 = vld [vmem:[%s1 + $0xf0] sm:$0xff]
    %v61 = vld [vmem:[%s1 + $0xf8] sm:$0xff]
    %v62 = vld [vmem:[%s1 + $0x100] sm:$0xff]
    %v63 = vld [vmem:[%s1 + $0x108] sm:$0xff]
    %v64 = vld [vmem:[%s1 + $0x110] sm:$0xff]
    %v65 = vld [vmem:[%s1 + $0x118] sm:$0xff]
    %v66 = vld [vmem:[%s1 + $0x120] sm:$0xff]
    %v67 = vld [vmem:[%s1 + $0x128] sm:$0xff]
    %v68 = vld [vmem:[%s1 + $0x130] sm:$0xff]
    %v69 = vld [vmem:[%s1 + $0x138] sm:$0xff]
    %v70 = vld [vmem:[%s1 + $0x140] sm:$0xff]
    %v71 = vld [vmem:[%s1 + $0x148] sm:$0xff]
    %v72 = vld [vmem:[%s1 + $0x150] sm:$0xff]
    %v73 = vld [vmem:[%s1 + $0x158] sm:$0xff]
    %v74 = vld [vmem:[%s1 + $0x160] sm:$0xff]
    %v75 = vld [vmem:[%s1 + $0x168] sm:$0xff]
    %v76 = vld [vmem:[%s1 + $0x170] sm:$0xff]
    %v77 = vld [vmem:[%s1 + $0x178] sm:$0xff]
    %v78 = vld [vmem:[%s1 + $0x180] sm:$0xff]
    %v79 = vld [vmem:[%s1 + $0x188] sm:$0xff]
    %v80 = vld [vmem:[%s1 + $0x190] sm:$0xff]
    %v81 = vld [vmem:[%s1 + $0x198] sm:$0xff]
    %v82 = vld [vmem:[%s1 + $0x1a0] sm:$0xff]
    %v83 = vld [vmem:[%s1 + $0x1a8] sm:$0xff]
    %v84 = vld [vmem:[%s1 + $0x1b0] sm:$0xff]
    %v85 = vld [vmem:[%s1 + $0x1b8] sm:$0xff]
    %v86 = vld [vmem:[%s1 + $0x1c0] sm:$0xff]
    %v87 = vld [vmem:[%s1 + $0x1c8] sm:$0xff]
    %v88 = vld [vmem:[%s1 + $0x1d0] sm:$0xff]
    %v89 = vld [vmem:[%s1 + $0x1d8] sm:$0xff]
    %v90 = vld [vmem:[%s1 + $0x1e0] sm:$0xff]
    %v91 = vld [vmem:[%s1 + $0x1e8] sm:$0xff]
    %v92 = vld [vmem:[%s1 + $0x1f0] sm:$0xff]
    %v93 = vld [vmem:[%s1 + $0x1f8] sm:$0xff]
    %v94 = vld [vmem:[%s1 + $0x200] sm:$0xff]
    %v95 = vld [vmem:[%s1 + $0x208] sm:$0xff]
    %v96 = vld [vmem:[%s1 + $0x210] sm:$0xff]
    %v97 = vld [vmem:[%s1 + $0x218] sm:$0xff]
    %v98 = vld [vmem:[%s1 + $0x220] sm:$0xff]
    %v99 = vld [vmem:[%s1 + $0x228] sm:$0xff]
    %v100 = vld [vmem:[%s1 + $0x230] sm:$0xff]
    %v101 = vld [vmem:[%s1 + $0x238] sm:$0xff]
    %v102 = vld [vmem:[%s1 + $0x240] sm:$0xff]
    %v103 = vld [vmem:[%s1 + $0x248] sm:$0xff]
    %v104 = vld [vmem:[%s1 + $0x250] sm:$0xff]
    %v105 = vld [vmem:[%s1 + $0x258] sm:$0xff]
    %v106 = vld [vmem:[%s1 + $0x260] sm:$0xff]
    %v107 = vld [vmem:[%s1 + $0x268] sm:$0xff]
    %v108 = vld [vmem:[%s1 + $0x270] sm:$0xff]
    %v109 = vld [vmem:[%s1 + $0x278] sm:$0xff]
    %v110 = vld [vmem:[%s1 + $0x280] sm:$0xff]
    %v111 = vld [vmem:[%s1 + $0x288] sm:$0xff]
    %v112 = vld [vmem:[%s1 + $0x290] sm:$0xff]
    %v113 = vld [vmem:[%s1 + $0x298] sm:$0xff]
    %v114 = vld [vmem:[%s1 + $0x2a0] sm:$0xff]
    %v115 = vld [vmem:[%s1 + $0x2a8] sm:$0xff]
    %v116 = vld [vmem:[%s1 + $0x2b0] sm:$0xff]
    %v117 = vld [vmem:[%s1 + $0x2b8] sm:$0xff]
    %v118 = vld [vmem:[%s1 + $0x2c0] sm:$0xff]
    %v119 = vld [vmem:[%s1 + $0x2c8] sm:$0xff]
    %v120 = vld [vmem:[%s1 + $0x2d0] sm:$0xff]
    %v121 = vld [vmem:[%s1 + $0x2d8] sm:$0xff]
    %v122 = vld [vmem:[%s1 + $0x2e0] sm:$0xff]
    %v123 = vld [vmem:[%s1 + $0x2e8] sm:$0xff]
    %v124 = vld [vmem:[%s1 + $0x2f0] sm:$0xff]
    %v125 = vld [vmem:[%s1 + $0x2f8] sm:$0xff]
    %v126 = vld [vmem:[%s1 + $0x300] sm:$0xff]
    %v127 = vld [vmem:[%s1 + $0x308] sm:$0xff]
    %v128 = vld [vmem:[%s1 + $0x310] sm:$0xff]
    %v129 = vld [vmem:[%s1 + $0x318] sm:$0xff]
    %v130 = vld [vmem:[%s1 + $0x320] sm:$0xff]
    %v131 = vld [vmem:[%s1 + $0x328] sm:$0xff]
    %v132 = vld [vmem:[%s1 + $0x330] sm:$0xff]
    %v133 = vld [vmem:[%s1 + $0x338] sm:$0xff]
    %v134 = vld [vmem:[%s1 + $0x340] sm:$0xff]
    %v135 = vld [vmem:[%s1 + $0x348] sm:$0xff]
    %v136 = vld [vmem:[%s1 + $0x350] sm:$0xff]
    %v137 = vld [vmem:[%s1 + $0x358] sm:$0xff]
    %v138 = vld [vmem:[%s1 + $0x360] sm:$0xff]
    %v139 = vld [vmem:[%s1 + $0x368] sm:$0xff]
    %v140 = vld [vmem:[%s1 + $0x370] sm:$0xff]
    %v141 = vld [vmem:[%s1 + $0x378] sm:$0xff]
    %v142 = vld [vmem:[%s1 + $0x380] sm:$0xff]
    %v143 = vld [vmem:[%s1 + $0x388] sm:$0xff]
    %v144 = vld [vmem:[%s1 + $0x390] sm:$0xff]
    %v145 = vld [vmem:[%s1 + $0x398] sm:$0xff]
    %v146 = vld [vmem:[%s1 + $0x3a0] sm:$0xff]
    %v147 = vld [vmem:[%s1 + $0x3a8] sm:$0xff]
    %v148 = vld [vmem:[%s1 + $0x3b0] sm:$0xff]
    %v149 = vld [vmem:[%s1 + $0x3b8] sm:$0xff]
    %v150 = vld [vmem:[%s1 + $0x3c0] sm:$0xff]
    %v151 = vld [vmem:[%s1 + $0x3c8] sm:$0xff]
    %v152 = vld [vmem:[%s1 + $0x3d0] sm:$0xff]
    %v153 = vld [vmem:[%s1 + $0x3d8] sm:$0xff]
    %v154 = vld [vmem:[%s1 + $0x3e0] sm:$0xff]
    %v155 = vld [vmem:[%s1 + $0x3e8] sm:$0xff]
    %v156 = vld [vmem:[%s1 + $0x3f0] sm:$0xff]
    %v157 = vld [vmem:[%s1 + $0x3f8] sm:$0xff]
    %v158 = vld [vmem:[%s1 + $0x400] sm:$0xff]
    %v159 = vld [vmem:[%s1 + $0x408] sm:$0xff]
    %v160 = vld [vmem:[%s1 + $0x410] sm:$0xff]
    %v161 = vld [vmem:[%s1 + $0x418] sm:$0xff]
    %v162 = vld [vmem:[%s1 + $0x420] sm:$0xff]
    %v163 = vld [vmem:[%s1 + $0x428] sm:$0xff]
    %v164 = vld [vmem:[%s1 + $0x430] sm:$0xff]
    %v165 = vld [vmem:[%s1 + $0x438] sm:$0xff]
    %v166 = vld [vmem:[%s1 + $0x440] sm:$0xff]
    %v167 = vld [vmem:[%s1 + $0x448] sm:$0xff]
    %v168 = vld [vmem:[%s1 + $0x450] sm:$0xff]
    %v169 = vld [vmem:[%s1 + $0x458] sm:$0xff]
    %v170 = vld [vmem:[%s1 + $0x460] sm:$0xff]
    %v171 = vld [vmem:[%s1 + $0x468] sm:$0xff]
    %v172 = vld [vmem:[%s1 + $0x470] sm:$0xff]
    %v173 = vld [vmem:[%s1 + $0x478] sm:$0xff]
    %v174 = vld [vmem:[%s1 + $0x480] sm:$0xff]
    %v175 = vld [vmem:[%s1 + $0x488] sm:$0xff]
    %v176 = vld [vmem:[%s1 + $0x490] sm:$0xff]
    %v177 = vld [vmem:[%s1 + $0x498] sm:$0xff]
    %v178 = vld [vmem:[%s1 + $0x4a0] sm:$0xff]
    %v179 = vld [vmem:[%s1 + $0x4a8] sm:$0xff]
    %v180 = vld [vmem:[%s1 + $0x4b0] sm:$0xff]
    %v181 = vld [vmem:[%s1 + $0x4b8] sm:$0xff]
    %v182 = vld [vmem:[%s1 + $0x4c0] sm:$0xff]
    %v183 = vld [vmem:[%s1 + $0x4c8] sm:$0xff]
    %v184 = vld [vmem:[%s1 + $0x4d0] sm:$0xff]
    %v185 = vld [vmem:[%s1 + $0x4d8] sm:$0xff]
    %v186 = vld [vmem:[%s1 + $0x4e0] sm:$0xff]
    %v187 = vld [vmem:[%s1 + $0x4e8] sm:$0xff]
    %v188 = vld [vmem:[%s1 + $0x4f0] sm:$0xff]
    %v189 = vld [vmem:[%s1 + $0x4f8] sm:$0xff]
    %v190 = vld [vmem:[%s1 + $0x500] sm:$0xff]
    %v191 = vld [vmem:[%s1 + $0x508] sm:$0xff]
    %v192 = vld [vmem:[%s1 + $0x510] sm:$0xff]
    %v193 = vld [vmem:[%s1 + $0x518] sm:$0xff]
    %v194 = vld [vmem:[%s1 + $0x520] sm:$0xff]
    %v195 = vld [vmem:[%s1 + $0x528] sm:$0xff]
    %v196 = vld [vmem:[%s1 + $0x530] sm:$0xff]
    %v197 = vld [vmem:[%s1 + $0x538] sm:$0xff]
    %v198 = vld [vmem:[%s1 + $0x540] sm:$0xff]
    %v199 = vld [vmem:[%s1 + $0x548] sm:$0xff]
    %v200 = vld [vmem:[%s1 + $0x550] sm:$0xff]
    %v201 = vld [vmem:[%s1 + $0x558] sm:$0xff]
    %v202 = vld [vmem:[%s1 + $0x560] sm:$0xff]
    %v203 = vld [vmem:[%s1 + $0x568] sm:$0xff]
    %v204 = vld [vmem:[%s1 + $0x570] sm:$0xff]
    %v205 = vld [vmem:[%s1 + $0x578] sm:$0xff]
    %v206 = vld [vmem:[%s1 + $0x580] sm:$0xff]
    %v207 = vld [vmem:[%s1 + $0x588] sm:$0xff]
    %v208 = vld [vmem:[%s1 + $0x590] sm:$0xff]
    %v209 = vld [vmem:[%s1 + $0x598] sm:$0xff]
    %v210 = vld [vmem:[%s1 + $0x5a0] sm:$0xff]
    %v211 = vld [vmem:[%s1 + $0x5a8] sm:$0xff]
    %v212 = vld [vmem:[%s1 + $0x5b0] sm:$0xff]
    %v213 = vld [vmem:[%s1 + $0x5b8] sm:$0xff]
    %v214 = vld [vmem:[%s1 + $0x5c0] sm:$0xff]
    %v215 = vld [vmem:[%s1 + $0x5c8] sm:$0xff]
    %v216 = vld [vmem:[%s1 + $0x5d0] sm:$0xff]
    %v217 = vld [vmem:[%s1 + $0x5d8] sm:$0xff]
    %v218 = vld [vmem:[%s1 + $0x5e0] sm:$0xff]
    %v219 = vld [vmem:[%s1 + $0x5e8] sm:$0xff]
    %v220 = vld [vmem:[%s1 + $0x5f0] sm:$0xff]
    %v221 = vld [vmem:[%s1 + $0x5f8] sm:$0xff]
    %v222 = vld [vmem:[%s1 + $0x600] sm:$0xff]
    %v223 = vld [vmem:[%s1 + $0x608] sm:$0xff]
    %v224 = vld [vmem:[%s1 + $0x610] sm:$0xff]
    %v225 = vld [vmem:[%s1 + $0x618] sm:$0xff]
    %v226 = vld [vmem:[%s1 + $0x620] sm:$0xff]
    %v227 = vld [vmem:[%s1 + $0x628] sm:$0xff]
    %v228 = vld [vmem:[%s1 + $0x630] sm:$0xff]
    %v229 = vld [vmem:[%s1 + $0x638] sm:$0xff]
    %v230 = vld [vmem:[%s1 + $0x640] sm:$0xff]
    %v231 = vld [vmem:[%s1 + $0x648] sm:$0xff]
    %v232 = vld [vmem:[%s1 + $0x650] sm:$0xff]
    %v233 = vld [vmem:[%s1 + $0x658] sm:$0xff]
    %v234 = vld [vmem:[%s1 + $0x660] sm:$0xff]
    %v235 = vld [vmem:[%s1 + $0x668] sm:$0xff]
    %v236 = vld [vmem:[%s1 + $0x670] sm:$0xff]
    %v237 = vld [vmem:[%s1 + $0x678] sm:$0xff]
    %v238 = vld [vmem:[%s1 + $0x680] sm:$0xff]
    %v239 = vld [vmem:[%s1 + $0x688] sm:$0xff]
    %v240 = vld [vmem:[%s1 + $0x690] sm:$0xff]
    %v241 = vld [vmem:[%s1 + $0x698] sm:$0xff]
    %v242 = vld [vmem:[%s1 + $0x6a0] sm:$0xff]
    %v243 = vld [vmem:[%s1 + $0x6a8] sm:$0xff]
    %v244 = vld [vmem:[%s1 + $0x6b0] sm:$0xff]
    %v245 = vld [vmem:[%s1 + $0x6b8] sm:$0xff]
    %v246 = vld [vmem:[%s1 + $0x6c0] sm:$0xff]
    %v247 = vld [vmem:[%s1 + $0x6c8] sm:$0xff]
    %v248 = vld [vmem:[%s1 + $0x6d0] sm:$0xff]
    %v249 = vld [vmem:[%s1 + $0x6d8] sm:$0xff]
    %v250 = vld [vmem:[%s1 + $0x6e0] sm:$0xff]
    %v251 = vld [vmem:[%s1 + $0x6e8] sm:$0xff]
    %v252 = vld [vmem:[%s1 + $0x6f0] sm:$0xff]
    %v253 = vld [vmem:[%s1 + $0x6f8] sm:$0xff]
    %v254 = vld [vmem:[%s1 + $0x700] sm:$0xff]
    %v255 = vld [vmem:[%s1 + $0x708] sm:$0xff]
    %v256 = vld [vmem:[%s1 + $0x710] sm:$0xff]
    %v257 = vld [vmem:[%s1 + $0x718] sm:$0xff]
    %v258 = vld [vmem:[%s1 + $0x720] sm:$0xff]
    %v259 = vld [vmem:[%s1 + $0x728] sm:$0xff]
    %v260 = vld [vmem:[%s1 + $0x730] sm:$0xff]
    %v261 = vld [vmem:[%s1 + $0x738] sm:$0xff]
    %v262 = vld [vmem:[%s1 + $0x740] sm:$0xff]
    %v263 = vld [vmem:[%s1 + $0x748] sm:$0xff]
    %v264 = vld [vmem:[%s1 + $0x750] sm:$0xff]
    %v265 = vld [vmem:[%s1 + $0x758] sm:$0xff]
    %v266 = vld [vmem:[%s1 + $0x760] sm:$0xff]
    %v267 = vld [vmem:[%s1 + $0x768] sm:$0xff]
    %v268 = vld [vmem:[%s1 + $0x770] sm:$0xff]
    %v269 = vld [vmem:[%s1 + $0x778] sm:$0xff]
    %v270 = vld [vmem:[%s1 + $0x780] sm:$0xff]
    %v271 = vld [vmem:[%s1 + $0x788] sm:$0xff]
    %v272 = vld [vmem:[%s1 + $0x790] sm:$0xff]
    %v273 = vld [vmem:[%s1 + $0x798] sm:$0xff]
    %v274 = vld [vmem:[%s1 + $0x7a0] sm:$0xff]
    %v275 = vld [vmem:[%s1 + $0x7a8] sm:$0xff]
    %v276 = vld [vmem:[%s1 + $0x7b0] sm:$0xff]
    %v277 = vld [vmem:[%s1 + $0x7b8] sm:$0xff]
    %v278 = vld [vmem:[%s1 + $0x7c0] sm:$0xff]
    %v279 = vld [vmem:[%s1 + $0x7c8] sm:$0xff]
    %v280 = vld [vmem:[%s1 + $0x7d0] sm:$0xff]
    %v281 = vld [vmem:[%s1 + $0x7d8] sm:$0xff]
    %v282 = vld [vmem:[%s1 + $0x7e0] sm:$0xff]
    %v283 = vld [vmem:[%s1 + $0x7e8] sm:$0xff]
    %v284 = vld [vmem:[%s1 + $0x7f0] sm:$0xff]
    %v285 = vld [vmem:[%s1 + $0x7f8] sm:$0xff]
    %v286 = vld [vmem:[%s1 + $0x800] sm:$0xff]
    %v287 = vld [vmem:[%s1 + $0x808] sm:$0xff]
    %v288 = vld [vmem:[%s1 + $0x810] sm:$0xff]
    %v289 = vld [vmem:[%s1 + $0x818] sm:$0xff]
    %v290 = vld [vmem:[%s1 + $0x820] sm:$0xff]
    %v291 = vld [vmem:[%s1 + $0x828] sm:$0xff]
    %v292 = vld [vmem:[%s1 + $0x830] sm:$0xff]
    %v293 = vld [vmem:[%s1 + $0x838] sm:$0xff]
    %v294 = vld [vmem:[%s1 + $0x840] sm:$0xff]
    %v295 = vld [vmem:[%s1 + $0x848] sm:$0xff]
    %v296 = vld [vmem:[%s1 + $0x850] sm:$0xff]
    %v297 = vld [vmem:[%s1 + $0x858] sm:$0xff]
    %v298 = vld [vmem:[%s1 + $0x860] sm:$0xff]
    %v299 = vld [vmem:[%s1 + $0x868] sm:$0xff]
    %v300 = vld [vmem:[%s1 + $0x870] sm:$0xff]
    %v301 = vld [vmem:[%s1 + $0x878] sm:$0xff]
    %v302 = vld [vmem:[%s1 + $0x880] sm:$0xff]
    %v303 = vld [vmem:[%s1 + $0x888] sm:$0xff]
    %v304 = vld [vmem:[%s1 + $0x890] sm:$0xff]
    %v305 = vld [vmem:[%s1 + $0x898] sm:$0xff]
    %v306 = vld [vmem:[%s1 + $0x8a0] sm:$0xff]
    %v307 = vld [vmem:[%s1 + $0x8a8] sm:$0xff]
    %v308 = vld [vmem:[%s1 + $0x8b0] sm:$0xff]
    %v309 = vld [vmem:[%s1 + $0x8b8] sm:$0xff]
    %v310 = vld [vmem:[%s1 + $0x8c0] sm:$0xff]
    %v311 = vld [vmem:[%s1 + $0x8c8] sm:$0xff]
    %v312 = vld [vmem:[%s1 + $0x8d0] sm:$0xff]
    %v313 = vld [vmem:[%s1 + $0x8d8] sm:$0xff]
    %v314 = vld [vmem:[%s1 + $0x8e0] sm:$0xff]
    %v315 = vld [vmem:[%s1 + $0x8e8] sm:$0xff]
    %v316 = vld [vmem:[%s1 + $0x8f0] sm:$0xff]
    %v317 = vld [vmem:[%s1 + $0x8f8] sm:$0xff]
    %v318 = vld [vmem:[%s1 + $0x900] sm:$0xff]
    %v319 = vld [vmem:[%s1 + $0x908] sm:$0xff]
    %v320 = vld [vmem:[%s1 + $0x910] sm:$0xff]
    %v321 = vld [vmem:[%s1 + $0x918] sm:$0xff]
    %v322 = vld [vmem:[%s1 + $0x920] sm:$0xff]
    %v323 = vld [vmem:[%s1 + $0x928] sm:$0xff]
    %v324 = vld [vmem:[%s1 + $0x930] sm:$0xff]
    %v325 = vld [vmem:[%s1 + $0x938] sm:$0xff]
    %v326 = vld [vmem:[%s1 + $0x940] sm:$0xff]
    %v327 = vld [vmem:[%s1 + $0x948] sm:$0xff]
    %v328 = vld [vmem:[%s1 + $0x950] sm:$0xff]
    %v329 = vld [vmem:[%s1 + $0x958] sm:$0xff]
    %v330 = vld [vmem:[%s1 + $0x960] sm:$0xff]
    %v331 = vld [vmem:[%s1 + $0x968] sm:$0xff]
    %v332 = vld [vmem:[%s1 + $0x970] sm:$0xff]
    %v333 = vld [vmem:[%s1 + $0x978] sm:$0xff]
    %v334 = vld [vmem:[%s1 + $0x980] sm:$0xff]
    %v335 = vld [vmem:[%s1 + $0x988] sm:$0xff]
    %v336 = vld [vmem:[%s1 + $0x990] sm:$0xff]
    %v337 = vld [vmem:[%s1 + $0x998] sm:$0xff]
    %v338 = vld [vmem:[%s1 + $0x9a0] sm:$0xff]
    %v339 = vld [vmem:[%s1 + $0x9a8] sm:$0xff]
    %v340 = vld [vmem:[%s1 + $0x9b0] sm:$0xff]
    %v341 = vld [vmem:[%s1 + $0x9b8] sm:$0xff]
    %v342 = vld [vmem:[%s1 + $0x9c0] sm:$0xff]
    %v343 = vld [vmem:[%s1 + $0x9c8] sm:$0xff]
    %v344 = vld [vmem:[%s1 + $0x9d0] sm:$0xff]
    %v345 = vld [vmem:[%s1 + $0x9d8] sm:$0xff]
    %v346 = vld [vmem:[%s1 + $0x9e0] sm:$0xff]
    %v347 = vld [vmem:[%s1 + $0x9e8] sm:$0xff]
    %v348 = vld [vmem:[%s1 + $0x9f0] sm:$0xff]
    %v349 = vld [vmem:[%s1 + $0x9f8] sm:$0xff]
    %v350 = vld [vmem:[%s1 + $0xa00] sm:$0xff]
    %v351 = vld [vmem:[%s1 + $0xa08] sm:$0xff]
    %v352 = vld [vmem:[%s1 + $0xa10] sm:$0xff]
    %v353 = vld [vmem:[%s1 + $0xa18] sm:$0xff]
    %v354 = vld [vmem:[%s1 + $0xa20] sm:$0xff]
    %v355 = vld [vmem:[%s1 + $0xa28] sm:$0xff]
    %v356 = vld [vmem:[%s1 + $0xa30] sm:$0xff]
    %v357 = vld [vmem:[%s1 + $0xa38] sm:$0xff]
    %v358 = vld [vmem:[%s1 + $0xa40] sm:$0xff]
    %v359 = vld [vmem:[%s1 + $0xa48] sm:$0xff]
    %v360 = vld [vmem:[%s1 + $0xa50] sm:$0xff]
    %v361 = vld [vmem:[%s1 + $0xa58] sm:$0xff]
    %v362 = vld [vmem:[%s1 + $0xa60] sm:$0xff]
    %v363 = vld [vmem:[%s1 + $0xa68] sm:$0xff]
    %v364 = vld [vmem:[%s1 + $0xa70] sm:$0xff]
    %v365 = vld [vmem:[%s1 + $0xa78] sm:$0xff]
    %v366 = vld [vmem:[%s1 + $0xa80] sm:$0xff]
    %v367 = vld [vmem:[%s1 + $0xa88] sm:$0xff]
    %v368 = vld [vmem:[%s1 + $0xa90] sm:$0xff]
    %v369 = vld [vmem:[%s1 + $0xa98] sm:$0xff]
    %v370 = vld [vmem:[%s1 + $0xaa0] sm:$0xff]
    %v371 = vld [vmem:[%s1 + $0xaa8] sm:$0xff]
    %v372 = vld [vmem:[%s1 + $0xab0] sm:$0xff]
    %v373 = vld [vmem:[%s1 + $0xab8] sm:$0xff]
    %v374 = vld [vmem:[%s1 + $0xac0] sm:$0xff]
    %v375 = vld [vmem:[%s1 + $0xac8] sm:$0xff]
    %v376 = vld [vmem:[%s1 + $0xad0] sm:$0xff]
    %v377 = vld [vmem:[%s1 + $0xad8] sm:$0xff]
    %v378 = vld [vmem:[%s1 + $0xae0] sm:$0xff]
    %v379 = vld [vmem:[%s1 + $0xae8] sm:$0xff]
    %v380 = vld [vmem:[%s1 + $0xaf0] sm:$0xff]
    %v381 = vld [vmem:[%s1 + $0xaf8] sm:$0xff]
    %v382 = vld [vmem:[%s1 + $0xb00] sm:$0xff]
    %v383 = vld [vmem:[%s1 + $0xb08] sm:$0xff]
    %v384 = vld [vmem:[%s1 + $0xb10] sm:$0xff]
    %v385 = vld [vmem:[%s1 + $0xb18] sm:$0xff]
    %v386 = vld [vmem:[%s1 + $0xb20] sm:$0xff]
    %v387 = vld [vmem:[%s1 + $0xb28] sm:$0xff]
    %v388 = vld [vmem:[%s1 + $0xb30] sm:$0xff]
    %v389 = vld [vmem:[%s1 + $0xb38] sm:$0xff]
    %v390 = vld [vmem:[%s1 + $0xb40] sm:$0xff]
    %v391 = vld [vmem:[%s1 + $0xb48] sm:$0xff]
    %v392 = vld [vmem:[%s1 + $0xb50] sm:$0xff]
    %v393 = vld [vmem:[%s1 + $0xb58] sm:$0xff]
    %v394 = vld [vmem:[%s1 + $0xb60] sm:$0xff]
    %v395 = vld [vmem:[%s1 + $0xb68] sm:$0xff]
    %v396 = vld [vmem:[%s1 + $0xb70] sm:$0xff]
    %v397 = vld [vmem:[%s1 + $0xb78] sm:$0xff]
    %v398 = vld [vmem:[%s1 + $0xb80] sm:$0xff]
    %v399 = vld [vmem:[%s1 + $0xb88] sm:$0xff]
    %v400 = vld [vmem:[%s1 + $0xb90] sm:$0xff]
    %v401 = vld [vmem:[%s1 + $0xb98] sm:$0xff]
    %v402 = vld [vmem:[%s1 + $0xba0] sm:$0xff]
    %v403 = vld [vmem:[%s1 + $0xba8] sm:$0xff]
    %v404 = vld [vmem:[%s1 + $0xbb0] sm:$0xff]
    %v405 = vld [vmem:[%s1 + $0xbb8] sm:$0xff]
    %v406 = vld [vmem:[%s1 + $0xbc0] sm:$0xff]
    %v407 = vld [vmem:[%s1 + $0xbc8] sm:$0xff]
    %v408 = vld [vmem:[%s1 + $0xbd0] sm:$0xff]
    %v409 = vld [vmem:[%s1 + $0xbd8] sm:$0xff]
    %v410 = vld [vmem:[%s1 + $0xbe0] sm:$0xff]
    %v411 = vld [vmem:[%s1 + $0xbe8] sm:$0xff]
    %v412 = vld [vmem:[%s1 + $0xbf0] sm:$0xff]
    %v413 = vld [vmem:[%s1 + $0xbf8] sm:$0xff]
    %v414 = vld [vmem:[%s1 + $0xc00] sm:$0xff]
    %v415 = vld [vmem:[%s1 + $0xc08] sm:$0xff]
    %v416 = vld [vmem:[%s1 + $0xc10] sm:$0xff]
    %v417 = vld [vmem:[%s1 + $0xc18] sm:$0xff]
    %v418 = vld [vmem:[%s1 + $0xc20] sm:$0xff]
    %v419 = vld [vmem:[%s1 + $0xc28] sm:$0xff]
    %v420 = vld [vmem:[%s1 + $0xc30] sm:$0xff]
    %v421 = vld [vmem:[%s1 + $0xc38] sm:$0xff]
    %v422 = vld [vmem:[%s1 + $0xc40] sm:$0xff]
    %v423 = vld [vmem:[%s1 + $0xc48] sm:$0xff]
    %v424 = vld [vmem:[%s1 + $0xc50] sm:$0xff]
    %v425 = vld [vmem:[%s1 + $0xc58] sm:$0xff]
    %v426 = vld [vmem:[%s1 + $0xc60] sm:$0xff]
    %v427 = vld [vmem:[%s1 + $0xc68] sm:$0xff]
    %v428 = vld [vmem:[%s1 + $0xc70] sm:$0xff]
    %v429 = vld [vmem:[%s1 + $0xc78] sm:$0xff]
    %v430 = vld [vmem:[%s1 + $0xc80] sm:$0xff]
    %v431 = vld [vmem:[%s1 + $0xc88] sm:$0xff]
    %v432 = vld [vmem:[%s1 + $0xc90] sm:$0xff]
    %v433 = vld [vmem:[%s1 + $0xc98] sm:$0xff]
    %v434 = vld [vmem:[%s1 + $0xca0] sm:$0xff]
    %v435 = vld [vmem:[%s1 + $0xca8] sm:$0xff]
    %v436 = vld [vmem:[%s1 + $0xcb0] sm:$0xff]
    %v437 = vld [vmem:[%s1 + $0xcb8] sm:$0xff]
    %v438 = vld [vmem:[%s1 + $0xcc0] sm:$0xff]
    %v439 = vld [vmem:[%s1 + $0xcc8] sm:$0xff]
    %v440 = vld [vmem:[%s1 + $0xcd0] sm:$0xff]
    %v441 = vld [vmem:[%s1 + $0xcd8] sm:$0xff]
    %v442 = vld [vmem:[%s1 + $0xce0] sm:$0xff]
    %v443 = vld [vmem:[%s1 + $0xce8] sm:$0xff]
    %v444 = vld [vmem:[%s1 + $0xcf0] sm:$0xff]
    %v445 = vld [vmem:[%s1 + $0xcf8] sm:$0xff]
    %v446 = vld [vmem:[%s1 + $0xd00] sm:$0xff]
    %v447 = vld [vmem:[%s1 + $0xd08] sm:$0xff]
    %v448 = vld [vmem:[%s1 + $0xd10] sm:$0xff]
    %v449 = vld [vmem:[%s1 + $0xd18] sm:$0xff]
    %v450 = vld [vmem:[%s1 + $0xd20] sm:$0xff]
    %v451 = vld [vmem:[%s1 + $0xd28] sm:$0xff]
    %v452 = vld [vmem:[%s1 + $0xd30] sm:$0xff]
    %v453 = vld [vmem:[%s1 + $0xd38] sm:$0xff]
    %v454 = vld [vmem:[%s1 + $0xd40] sm:$0xff]
    %v455 = vld [vmem:[%s1 + $0xd48] sm:$0xff]
    %v456 = vld [vmem:[%s1 + $0xd50] sm:$0xff]
    %v457 = vld [vmem:[%s1 + $0xd58] sm:$0xff]
    %v458 = vld [vmem:[%s1 + $0xd60] sm:$0xff]
    %v459 = vld [vmem:[%s1 + $0xd68] sm:$0xff]
    %v460 = vld [vmem:[%s1 + $0xd70] sm:$0xff]
    %v461 = vld [vmem:[%s1 + $0xd78] sm:$0xff]
    %v462 = vld [vmem:[%s1 + $0xd80] sm:$0xff]
    %v463 = vld [vmem:[%s1 + $0xd88] sm:$0xff]
    %v464 = vld [vmem:[%s1 + $0xd90] sm:$0xff]
    %v465 = vld [vmem:[%s1 + $0xd98] sm:$0xff]
    %v466 = vld [vmem:[%s1 + $0xda0] sm:$0xff]
    %v467 = vld [vmem:[%s1 + $0xda8] sm:$0xff]
    %v468 = vld [vmem:[%s1 + $0xdb0] sm:$0xff]
    %v469 = vld [vmem:[%s1 + $0xdb8] sm:$0xff]
    %v470 = vld [vmem:[%s1 + $0xdc0] sm:$0xff]
    %v471 = vld [vmem:[%s1 + $0xdc8] sm:$0xff]
    %v472 = vld [vmem:[%s1 + $0xdd0] sm:$0xff]
    %v473 = vld [vmem:[%s1 + $0xdd8] sm:$0xff]
    %v474 = vld [vmem:[%s1 + $0xde0] sm:$0xff]
    %v475 = vld [vmem:[%s1 + $0xde8] sm:$0xff]
    %v476 = vld [vmem:[%s1 + $0xdf0] sm:$0xff]
    %v477 = vld [vmem:[%s1 + $0xdf8] sm:$0xff]
    %v478 = vld [vmem:[%s1 + $0xe00] sm:$0xff]
    %v479 = vld [vmem:[%s1 + $0xe08] sm:$0xff]
    %v480 = vld [vmem:[%s1 + $0xe10] sm:$0xff]
    %v481 = vld [vmem:[%s1 + $0xe18] sm:$0xff]
    %v482 = vld [vmem:[%s1 + $0xe20] sm:$0xff]
    %v483 = vld [vmem:[%s1 + $0xe28] sm:$0xff]
    %v484 = vld [vmem:[%s1 + $0xe30] sm:$0xff]
    %v485 = vld [vmem:[%s1 + $0xe38] sm:$0xff]
    %v486 = vld [vmem:[%s1 + $0xe40] sm:$0xff]
    %v487 = vld [vmem:[%s1 + $0xe48] sm:$0xff]
    %v488 = vld [vmem:[%s1 + $0xe50] sm:$0xff]
    %v489 = vld [vmem:[%s1 + $0xe58] sm:$0xff]
    %v490 = vld [vmem:[%s1 + $0xe60] sm:$0xff]
    %v491 = vld [vmem:[%s1 + $0xe68] sm:$0xff]
    %v492 = vld [vmem:[%s1 + $0xe70] sm:$0xff]
    %v493 = vld [vmem:[%s1 + $0xe78] sm:$0xff]
    %v494 = vld [vmem:[%s1 + $0xe80] sm:$0xff]
    %v495 = vld [vmem:[%s1 + $0xe88] sm:$0xff]
    %v496 = vld [vmem:[%s1 + $0xe90] sm:$0xff]
    %v497 = vld [vmem:[%s1 + $0xe98] sm:$0xff]
    %v498 = vld [vmem:[%s1 + $0xea0] sm:$0xff]
    %v499 = vld [vmem:[%s1 + $0xea8] sm:$0xff]
    %v500 = vld [vmem:[%s1 + $0xeb0] sm:$0xff]
    %v501 = vld [vmem:[%s1 + $0xeb8] sm:$0xff]
    %v502 = vld [vmem:[%s1 + $0xec0] sm:$0xff]
    %v503 = vld [vmem:[%s1 + $0xec8] sm:$0xff]
    %v504 = vld [vmem:[%s1 + $0xed0] sm:$0xff]
    %v505 = vld [vmem:[%s1 + $0xed8] sm:$0xff]
    %v506 = vld [vmem:[%s1 + $0xee0] sm:$0xff]
    %v507 = vld [vmem:[%s1 + $0xee8] sm:$0xff]
    %v508 = vld [vmem:[%s1 + $0xef0] sm:$0xff]
    %v509 = vld [vmem:[%s1 + $0xef8] sm:$0xff]
    %v510 = vld [vmem:[%s1 + $0xf00] sm:$0xff]
    %v511 = vld [vmem:[%s1 + $0xf08] sm:$0xff]
    %v512 = vld [vmem:[%s1 + $0xf10] sm:$0xff]
    %v513 = vld [vmem:[%s1 + $0xf18] sm:$0xff]
    %v514 = vld [vmem:[%s1 + $0xf20] sm:$0xff]
    %v515 = vld [vmem:[%s1 + $0xf28] sm:$0xff]
    %v516 = vld [vmem:[%s1 + $0xf30] sm:$0xff]
    %v517 = vld [vmem:[%s1 + $0xf38] sm:$0xff]
    %v518 = vld [vmem:[%s1 + $0xf40] sm:$0xff]
    %v519 = vld [vmem:[%s1 + $0xf48] sm:$0xff]
    %v520 = vld [vmem:[%s1 + $0xf50] sm:$0xff]
    %v521 = vld [vmem:[%s1 + $0xf58] sm:$0xff]
    %v522 = vld [vmem:[%s1 + $0xf60] sm:$0xff]
    %v523 = vld [vmem:[%s1 + $0xf68] sm:$0xff]
    %v524 = vld [vmem:[%s1 + $0xf70] sm:$0xff]
    %v525 = vld [vmem:[%s1 + $0xf78] sm:$0xff]
    %v526 = vld [vmem:[%s1 + $0xf80] sm:$0xff]
    %v527 = vld [vmem:[%s1 + $0xf88] sm:$0xff]
    %v528 = vld [vmem:[%s1 + $0xf90] sm:$0xff]
    %v529 = vld [vmem:[%s1 + $0xf98] sm:$0xff]
    %v530 = vld [vmem:[%s1 + $0xfa0] sm:$0xff]
    %v531 = vld [vmem:[%s1 + $0xfa8] sm:$0xff]
    %v532 = vld [vmem:[%s1 + $0xfb0] sm:$0xff]
    %v533 = vld [vmem:[%s1 + $0xfb8] sm:$0xff]
    %v534 = vld [vmem:[%s1 + $0xfc0] sm:$0xff]
    %v535 = vld [vmem:[%s1 + $0xfc8] sm:$0xff]
    %v536 = vld [vmem:[%s1 + $0xfd0] sm:$0xff]
    %v537 = vld [vmem:[%s1 + $0xfd8] sm:$0xff]
    %v538 = vld [vmem:[%s1 + $0xfe0] sm:$0xff]
    %v539 = vld [vmem:[%s1 + $0xfe8] sm:$0xff]
    %v540 = vld [vmem:[%s1 + $0xff0] sm:$0xff]
    %v541 = vld [vmem:[%s1 + $0xff8] sm:$0xff]
    %v542 = vld [vmem:[%s1 + $0x1000] sm:$0xff]
    %v543 = vld [vmem:[%s1 + $0x1008] sm:$0xff]
    %v544 = vld [vmem:[%s1 + $0x1010] sm:$0xff]
    %v545 = vld [vmem:[%s1 + $0x1018] sm:$0xff]
    %v546 = vld [vmem:[%s1 + $0x1020] sm:$0xff]
    %v547 = vld [vmem:[%s1 + $0x1028] sm:$0xff]
    %v548 = vld [vmem:[%s1 + $0x1030] sm:$0xff]
    %v549 = vld [vmem:[%s1 + $0x1038] sm:$0xff]
    %v550 = vld [vmem:[%s1 + $0x1040] sm:$0xff]
    %v551 = vld [vmem:[%s1 + $0x1048] sm:$0xff]
    %v552 = vld [vmem:[%s1 + $0x1050] sm:$0xff]
    %v553 = vld [vmem:[%s1 + $0x1058] sm:$0xff]
    %v554 = vld [vmem:[%s1 + $0x1060] sm:$0xff]
    %v555 = vld [vmem:[%s1 + $0x1068] sm:$0xff]
    %v556 = vld [vmem:[%s1 + $0x1070] sm:$0xff]
    %v557 = vld [vmem:[%s1 + $0x1078] sm:$0xff]
    %v558 = vld [vmem:[%s1 + $0x1080] sm:$0xff]
    %v559 = vld [vmem:[%s1 + $0x1088] sm:$0xff]
    %v560 = vld [vmem:[%s1 + $0x1090] sm:$0xff]
    %v561 = vld [vmem:[%s1 + $0x1098] sm:$0xff]
    %v562 = vld [vmem:[%s1 + $0x10a0] sm:$0xff]
    %v563 = vld [vmem:[%s1 + $0x10a8] sm:$0xff]
    %v564 = vld [vmem:[%s1 + $0x10b0] sm:$0xff]
    %v565 = vld [vmem:[%s1 + $0x10b8] sm:$0xff]
    %v566 = vld [vmem:[%s1 + $0x10c0] sm:$0xff]
    %v567 = vld [vmem:[%s1 + $0x10c8] sm:$0xff]
    %v568 = vld [vmem:[%s1 + $0x10d0] sm:$0xff]
    %v569 = vld [vmem:[%s1 + $0x10d8] sm:$0xff]
    %v570 = vld [vmem:[%s1 + $0x10e0] sm:$0xff]
    %v571 = vld [vmem:[%s1 + $0x10e8] sm:$0xff]
    %v572 = vld [vmem:[%s1 + $0x10f0] sm:$0xff]
    %v573 = vld [vmem:[%s1 + $0x10f8] sm:$0xff]
    %v574 = vld [vmem:[%s1 + $0x1100] sm:$0xff]
    %v575 = vld [vmem:[%s1 + $0x1108] sm:$0xff]
    %v576 = vld [vmem:[%s1 + $0x1110] sm:$0xff]
    %v577 = vld [vmem:[%s1 + $0x1118] sm:$0xff]
    %v578 = vld [vmem:[%s1 + $0x1120] sm:$0xff]
    %v579 = vld [vmem:[%s1 + $0x1128] sm:$0xff]
    %v580 = vld [vmem:[%s1 + $0x1130] sm:$0xff]
    %v581 = vld [vmem:[%s1 + $0x1138] sm:$0xff]
    %v582 = vld [vmem:[%s1 + $0x1140] sm:$0xff]
    %v583 = vld [vmem:[%s1 + $0x1148] sm:$0xff]
    %v584 = vld [vmem:[%s1 + $0x1150] sm:$0xff]
    %v585 = vld [vmem:[%s1 + $0x1158] sm:$0xff]
    %v586 = vld [vmem:[%s1 + $0x1160] sm:$0xff]
    %v587 = vld [vmem:[%s1 + $0x1168] sm:$0xff]
    %v588 = vld [vmem:[%s1 + $0x1170] sm:$0xff]
    %v589 = vld [vmem:[%s1 + $0x1178] sm:$0xff]
    %v590 = vld [vmem:[%s1 + $0x1180] sm:$0xff]
    %v591 = vld [vmem:[%s1 + $0x1188] sm:$0xff]
    %v592 = vld [vmem:[%s1 + $0x1190] sm:$0xff]
    %v593 = vld [vmem:[%s1 + $0x1198] sm:$0xff]
    %v594 = vld [vmem:[%s1 + $0x11a0] sm:$0xff]
    %v595 = vld [vmem:[%s1 + $0x11a8] sm:$0xff]
    %v596 = vld [vmem:[%s1 + $0x11b0] sm:$0xff]
    %v597 = vld [vmem:[%s1 + $0x11b8] sm:$0xff]
    %v598 = vld [vmem:[%s1 + $0x11c0] sm:$0xff]
    %v599 = vld [vmem:[%s1 + $0x11c8] sm:$0xff]
    %v600 = vld [vmem:[%s1 + $0x11d0] sm:$0xff]
    %v601 = vld [vmem:[%s1 + $0x11d8] sm:$0xff]
    %v602 = vld [vmem:[%s1 + $0x11e0] sm:$0xff]
    %v603 = vld [vmem:[%s1 + $0x11e8] sm:$0xff]
    %v604 = vld [vmem:[%s1 + $0x11f0] sm:$0xff]
    %v605 = vld [vmem:[%s1 + $0x11f8] sm:$0xff]
    %v606 = vld [vmem:[%s1 + $0x1200] sm:$0xff]
    %v607 = vld [vmem:[%s1 + $0x1208] sm:$0xff]
    %v608 = vld [vmem:[%s1 + $0x1210] sm:$0xff]
    %v609 = vld [vmem:[%s1 + $0x1218] sm:$0xff]
    %v610 = vld [vmem:[%s1 + $0x1220] sm:$0xff]
    %v611 = vld [vmem:[%s1 + $0x1228] sm:$0xff]
    %v612 = vld [vmem:[%s1 + $0x1230] sm:$0xff]
    %v613 = vld [vmem:[%s1 + $0x1238] sm:$0xff]
    %v614 = vld [vmem:[%s1 + $0x1240] sm:$0xff]
    %v615 = vld [vmem:[%s1 + $0x1248] sm:$0xff]
    %v616 = vld [vmem:[%s1 + $0x1250] sm:$0xff]
    %v617 = vld [vmem:[%s1 + $0x1258] sm:$0xff]
    %v621 = vcombine.high %v27, %v27
    %v623 = vunpack.c.l.s4 1983009808
    %v624 = vunpack.c.0.s8 %v623
    %v625 = vlaneseq
    %v626 = vshrl.u32 %v625, 7
    %v627 = vsub.s32 %v624, %v626
    %v628 = vrot.slane %v27, %v627
    %v630 = vunpack.c.l.s4 1983009808
    %v631 = vunpack.c.0.s8 %v630
    %v632 = vlaneseq
    %v633 = vshrl.u32 %v632, 7
    %v634 = vsub.s32 %v631, %v633
    %v635 = vrot.slane %v621, %v634
    %v636 = vcombine.high %v628, %v628
    %v637 = vcombine.high %v635, %v635
    %v638 = vcombine.high %v28, %v28
    %v640 = vunpack.c.l.s4 1983009808
    %v641 = vunpack.c.0.s8 %v640
    %v642 = vlaneseq
    %v643 = vshrl.u32 %v642, 7
    %v644 = vsub.s32 %v641, %v643
    %v645 = vrot.slane %v28, %v644
    %v647 = vunpack.c.l.s4 1983009808
    %v648 = vunpack.c.0.s8 %v647
    %v649 = vlaneseq
    %v650 = vshrl.u32 %v649, 7
    %v651 = vsub.s32 %v648, %v650
    %v652 = vrot.slane %v638, %v651
    %v653 = vcombine.high %v645, %v645
    %v654 = vcombine.high %v652, %v652
    %v656 = vunpack.c.l.s4 1983009808
    %v657 = vunpack.c.0.s8 %v656
    %v658 = vlaneseq
    %v659 = vshrl.u32 %v658, 7
    %v660 = vsub.s32 %v657, %v659
    %v661 = vrot.slane %v29, %v660
    %v662 = vcombine.high %v661, %v661
    %vm672 = vcmask 195584
    %v673 = vsel %vm672, %v662, 0
    %675 = vmatprep.subr.mxu0 %v31
    %676 = vmatpush1.msra.mxu0 %v30
    %677 = vmatprep.subr.mxu0 %v35
    %678 = vmatpush1.msra.mxu0 %v34
    %679 = vmatprep.subr.mxu0 %v39
    %680 = vmatpush1.msra.mxu0 %v38
    %681 = vmatprep.subr.mxu0 %v43
    %682 = vmatpush1.msra.mxu0 %v42
    %683 = vmatprep.subr.mxu0 %v47
    %684 = vmatpush1.msra.mxu0 %v46
    %685 = vmatprep.subr.mxu0 %v51
    %686 = vmatpush1.msra.mxu0 %v50
    %687 = vmatprep.subr.mxu0 %v55
    %688 = vmatpush1.msra.mxu0 %v54
    %689 = vmatprep.subr.mxu0 %v59
    %690 = vmatpush1.msra.mxu0 %v58
    %691 = vmatprep.subr.mxu0 %v63
    %692 = vmatpush1.msra.mxu0 %v62
    %693 = vmatprep.subr.mxu0 %v67
    %694 = vmatpush1.msra.mxu0 %v66
    %695 = vmatprep.subr.mxu0 %v71
    %696 = vmatpush1.msra.mxu0 %v70
    %697 = vmatprep.subr.mxu0 %v75
    %698 = vmatpush1.msra.mxu0 %v74
    %699 = vmatprep.subr.mxu0 %v79
    %700 = vmatpush1.msra.mxu0 %v78
    %701 = vmatprep.subr.mxu0 %v83
    %702 = vmatpush1.msra.mxu0 %v82
    %703 = vmatprep.subr.mxu0 %v87
    %704 = vmatpush1.msra.mxu0 %v86
    %705 = vmatprep.subr.mxu0 %v91
    %706 = vmatpush1.msra.mxu0 %v90
    %707 = vmatprep.subr.mxu0 %v95
    %708 = vmatpush1.msra.mxu0 %v94
    %709 = vmatprep.subr.mxu0 %v99
    %710 = vmatpush1.msra.mxu0 %v98
    %711 = vmatprep.subr.mxu0 %v103
    %712 = vmatpush1.msra.mxu0 %v102
    %713 = vmatprep.subr.mxu0 %v107
    %714 = vmatpush1.msra.mxu0 %v106
    %715 = vmatprep.subr.mxu0 %v111
    %716 = vmatpush1.msra.mxu0 %v110
    %717 = vmatprep.subr.mxu0 %v115
    %718 = vmatpush1.msra.mxu0 %v114
    %719 = vmatprep.subr.mxu0 %v119
    %720 = vmatpush1.msra.mxu0 %v118
    %721 = vmatprep.subr.mxu0 %v123
    %722 = vmatpush1.msra.mxu0 %v122
    %723 = vmatprep.subr.mxu0 %v127
    %724 = vmatpush1.msra.mxu0 %v126
    %725 = vmatprep.subr.mxu0 %v131
    %726 = vmatpush1.msra.mxu0 %v130
    %727 = vmatprep.subr.mxu0 %v135
    %728 = vmatpush1.msra.mxu0 %v134
    %729 = vmatprep.subr.mxu0 %v139
    %730 = vmatpush1.msra.mxu0 %v138
    %731 = vmatprep.subr.mxu0 %v143
    %732 = vmatpush1.msra.mxu0 %v142
    %733 = vmatprep.subr.mxu0 %v147
    %734 = vmatpush1.msra.mxu0 %v146
    %735 = vmatprep.subr.mxu0 %v151
    %736 = vmatpush1.msra.mxu0 %v150
    %737 = vmatprep.subr.mxu0 %v155
    %738 = vmatpush1.msra.mxu0 %v154
    %739 = vmatprep.mubr.f32.mxu0 %v636
    %740 = vmatmul.mubr.f32.gmra.mrb[0].mxu0 %v628
    %v741 = vpop.f32.mrb[0].mxu0
    %v742 = vadd.f32 0.0, %v741
    %v743 = vpop.f32.mrb[0].mxu0
    %v744 = vadd.f32 0.0, %v743
    %745 = vdwg.mxu0
    %746 = vmatprep.subr.mxu0 %v159
    %747 = vmatpush1.msra.mxu0 %v158
    %748 = vmatprep.subr.mxu0 %v163
    %749 = vmatpush1.msra.mxu0 %v162
    %750 = vmatprep.subr.mxu0 %v167
    %751 = vmatpush1.msra.mxu0 %v166
    %752 = vmatprep.subr.mxu0 %v171
    %753 = vmatpush1.msra.mxu0 %v170
    %754 = vmatprep.subr.mxu0 %v175
    %755 = vmatpush1.msra.mxu0 %v174
    %756 = vmatprep.subr.mxu0 %v179
    %757 = vmatpush1.msra.mxu0 %v178
    %758 = vmatprep.subr.mxu0 %v183
    %759 = vmatpush1.msra.mxu0 %v182
    %760 = vmatprep.subr.mxu0 %v187
    %761 = vmatpush1.msra.mxu0 %v186
    %762 = vmatprep.subr.mxu0 %v191
    %763 = vmatpush1.msra.mxu0 %v190
    %764 = vmatprep.subr.mxu0 %v195
    %765 = vmatpush1.msra.mxu0 %v194
    %766 = vmatprep.subr.mxu0 %v199
    %767 = vmatpush1.msra.mxu0 %v198
    %768 = vmatprep.subr.mxu0 %v203
    %769 = vmatpush1.msra.mxu0 %v202
    %770 = vmatprep.subr.mxu0 %v207
    %771 = vmatpush1.msra.mxu0 %v206
    %772 = vmatprep.subr.mxu0 %v211
    %773 = vmatpush1.msra.mxu0 %v210
    %774 = vmatprep.subr.mxu0 %v215
    %775 = vmatpush1.msra.mxu0 %v214
    %776 = vmatprep.subr.mxu0 %v219
    %777 = vmatpush1.msra.mxu0 %v218
    %778 = vmatprep.subr.mxu0 %v223
    %779 = vmatpush1.msra.mxu0 %v222
    %780 = vmatprep.subr.mxu0 %v227
    %781 = vmatpush1.msra.mxu0 %v226
    %782 = vmatprep.subr.mxu0 %v231
    %783 = vmatpush1.msra.mxu0 %v230
    %784 = vmatprep.subr.mxu0 %v235
    %785 = vmatpush1.msra.mxu0 %v234
    %786 = vmatprep.subr.mxu0 %v239
    %787 = vmatpush1.msra.mxu0 %v238
    %788 = vmatprep.subr.mxu0 %v243
    %789 = vmatpush1.msra.mxu0 %v242
    %790 = vmatprep.subr.mxu0 %v247
    %791 = vmatpush1.msra.mxu0 %v246
    %792 = vmatprep.subr.mxu0 %v251
    %793 = vmatpush1.msra.mxu0 %v250
    %794 = vmatprep.subr.mxu0 %v255
    %795 = vmatpush1.msra.mxu0 %v254
    %796 = vmatprep.subr.mxu0 %v259
    %797 = vmatpush1.msra.mxu0 %v258
    %798 = vmatprep.subr.mxu0 %v263
    %799 = vmatpush1.msra.mxu0 %v262
    %800 = vmatprep.subr.mxu0 %v267
    %801 = vmatpush1.msra.mxu0 %v266
    %802 = vmatprep.subr.mxu0 %v271
    %803 = vmatpush1.msra.mxu0 %v270
    %804 = vmatprep.subr.mxu0 %v275
    %805 = vmatpush1.msra.mxu0 %v274
    %806 = vmatprep.subr.mxu0 %v279
    %807 = vmatpush1.msra.mxu0 %v278
    %808 = vmatprep.subr.mxu0 %v283
    %809 = vmatpush1.msra.mxu0 %v282
    %810 = vmatprep.mubr.f32.mxu0 %v637
    %811 = vmatmul.mubr.f32.gmra.mrb[0].mxu0 %v635
    %v812 = vpop.f32.mrb[0].mxu0
    %v813 = vadd.f32 %v742, %v812
    %v814 = vpop.f32.mrb[0].mxu0
    %v815 = vadd.f32 %v744, %v814
    %816 = vdwg.mxu0
    %817 = vmatprep.subr.mxu0 %v287
    %818 = vmatpush1.msra.mxu0 %v286
    %819 = vmatprep.subr.mxu0 %v291
    %820 = vmatpush1.msra.mxu0 %v290
    %821 = vmatprep.subr.mxu0 %v295
    %822 = vmatpush1.msra.mxu0 %v294
    %823 = vmatprep.subr.mxu0 %v299
    %824 = vmatpush1.msra.mxu0 %v298
    %825 = vmatprep.subr.mxu0 %v303
    %826 = vmatpush1.msra.mxu0 %v302
    %827 = vmatprep.subr.mxu0 %v307
    %828 = vmatpush1.msra.mxu0 %v306
    %829 = vmatprep.subr.mxu0 %v311
    %830 = vmatpush1.msra.mxu0 %v310
    %831 = vmatprep.subr.mxu0 %v315
    %832 = vmatpush1.msra.mxu0 %v314
    %833 = vmatprep.subr.mxu0 %v319
    %834 = vmatpush1.msra.mxu0 %v318
    %835 = vmatprep.subr.mxu0 %v323
    %836 = vmatpush1.msra.mxu0 %v322
    %837 = vmatprep.subr.mxu0 %v327
    %838 = vmatpush1.msra.mxu0 %v326
    %839 = vmatprep.subr.mxu0 %v331
    %840 = vmatpush1.msra.mxu0 %v330
    %841 = vmatprep.subr.mxu0 %v335
    %842 = vmatpush1.msra.mxu0 %v334
    %843 = vmatprep.subr.mxu0 %v339
    %844 = vmatpush1.msra.mxu0 %v338
    %845 = vmatprep.subr.mxu0 %v343
    %846 = vmatpush1.msra.mxu0 %v342
    %847 = vmatprep.subr.mxu0 %v347
    %848 = vmatpush1.msra.mxu0 %v346
    %849 = vmatprep.subr.mxu0 %v351
    %850 = vmatpush1.msra.mxu0 %v350
    %851 = vmatprep.subr.mxu0 %v355
    %852 = vmatpush1.msra.mxu0 %v354
    %853 = vmatprep.subr.mxu0 %v359
    %854 = vmatpush1.msra.mxu0 %v358
    %855 = vmatprep.subr.mxu0 %v363
    %856 = vmatpush1.msra.mxu0 %v362
    %857 = vmatprep.subr.mxu0 %v367
    %858 = vmatpush1.msra.mxu0 %v366
    %859 = vmatprep.subr.mxu0 %v371
    %860 = vmatpush1.msra.mxu0 %v370
    %861 = vmatprep.subr.mxu0 %v375
    %862 = vmatpush1.msra.mxu0 %v374
    %863 = vmatprep.subr.mxu0 %v379
    %864 = vmatpush1.msra.mxu0 %v378
    %865 = vmatprep.subr.mxu0 %v383
    %866 = vmatpush1.msra.mxu0 %v382
    %867 = vmatprep.subr.mxu0 %v387
    %868 = vmatpush1.msra.mxu0 %v386
    %869 = vmatprep.subr.mxu0 %v391
    %870 = vmatpush1.msra.mxu0 %v390
    %871 = vmatprep.subr.mxu0 %v395
    %872 = vmatpush1.msra.mxu0 %v394
    %873 = vmatprep.subr.mxu0 %v399
    %874 = vmatpush1.msra.mxu0 %v398
    %875 = vmatprep.subr.mxu0 %v403
    %876 = vmatpush1.msra.mxu0 %v402
    %877 = vmatprep.subr.mxu0 %v407
    %878 = vmatpush1.msra.mxu0 %v406
    %879 = vmatprep.subr.mxu0 %v411
    %880 = vmatpush1.msra.mxu0 %v410
    %881 = vmatprep.mubr.f32.mxu0 %v653
    %882 = vmatmul.mubr.f32.gmra.mrb[0].mxu0 %v645
    %v883 = vpop.f32.mrb[0].mxu0
    %v884 = vadd.f32 %v813, %v883
    %v885 = vpop.f32.mrb[0].mxu0
    %v886 = vadd.f32 %v815, %v885
    %887 = vdwg.mxu0
    %888 = vmatprep.subr.mxu0 %v415
    %889 = vmatpush1.msra.mxu0 %v414
    %890 = vmatprep.subr.mxu0 %v419
    %891 = vmatpush1.msra.mxu0 %v418
    %892 = vmatprep.subr.mxu0 %v423
    %893 = vmatpush1.msra.mxu0 %v422
    %894 = vmatprep.subr.mxu0 %v427
    %895 = vmatpush1.msra.mxu0 %v426
    %896 = vmatprep.subr.mxu0 %v431
    %897 = vmatpush1.msra.mxu0 %v430
    %898 = vmatprep.subr.mxu0 %v435
    %899 = vmatpush1.msra.mxu0 %v434
    %900 = vmatprep.subr.mxu0 %v439
    %901 = vmatpush1.msra.mxu0 %v438
    %902 = vmatprep.subr.mxu0 %v443
    %903 = vmatpush1.msra.mxu0 %v442
    %904 = vmatprep.subr.mxu0 %v447
    %905 = vmatpush1.msra.mxu0 %v446
    %906 = vmatprep.subr.mxu0 %v451
    %907 = vmatpush1.msra.mxu0 %v450
    %908 = vmatprep.subr.mxu0 %v455
    %909 = vmatpush1.msra.mxu0 %v454
    %910 = vmatprep.subr.mxu0 %v459
    %911 = vmatpush1.msra.mxu0 %v458
    %912 = vmatprep.subr.mxu0 %v463
    %913 = vmatpush1.msra.mxu0 %v462
    %914 = vmatprep.subr.mxu0 %v467
    %915 = vmatpush1.msra.mxu0 %v466
    %916 = vmatprep.subr.mxu0 %v471
    %917 = vmatpush1.msra.mxu0 %v470
    %918 = vmatprep.subr.mxu0 %v475
    %919 = vmatpush1.msra.mxu0 %v474
    %920 = vmatprep.subr.mxu0 %v479
    %921 = vmatpush1.msra.mxu0 %v478
    %922 = vmatprep.subr.mxu0 %v483
    %923 = vmatpush1.msra.mxu0 %v482
    %924 = vmatprep.subr.mxu0 %v487
    %925 = vmatpush1.msra.mxu0 %v486
    %926 = vmatprep.subr.mxu0 %v491
    %927 = vmatpush1.msra.mxu0 %v490
    %928 = vmatprep.subr.mxu0 %v495
    %929 = vmatpush1.msra.mxu0 %v494
    %930 = vmatprep.subr.mxu0 %v499
    %931 = vmatpush1.msra.mxu0 %v498
    %932 = vmatprep.subr.mxu0 %v503
    %933 = vmatpush1.msra.mxu0 %v502
    %934 = vmatprep.subr.mxu0 %v507
    %935 = vmatpush1.msra.mxu0 %v506
    %936 = vmatprep.subr.mxu0 %v511
    %937 = vmatpush1.msra.mxu0 %v510
    %938 = vmatprep.subr.mxu0 %v515
    %939 = vmatpush1.msra.mxu0 %v514
    %940 = vmatprep.subr.mxu0 %v519
    %941 = vmatpush1.msra.mxu0 %v518
    %942 = vmatprep.subr.mxu0 %v523
    %943 = vmatpush1.msra.mxu0 %v522
    %944 = vmatprep.subr.mxu0 %v527
    %945 = vmatpush1.msra.mxu0 %v526
    %946 = vmatprep.subr.mxu0 %v531
    %947 = vmatpush1.msra.mxu0 %v530
    %948 = vmatprep.subr.mxu0 %v535
    %949 = vmatpush1.msra.mxu0 %v534
    %950 = vmatprep.subr.mxu0 %v539
    %951 = vmatpush1.msra.mxu0 %v538
    %952 = vmatprep.mubr.f32.mxu0 %v654
    %953 = vmatmul.mubr.f32.gmra.mrb[0].mxu0 %v652
    %v954 = vpop.f32.mrb[0].mxu0
    %v955 = vadd.f32 %v884, %v954
    %v956 = vpop.f32.mrb[0].mxu0
    %v957 = vadd.f32 %v886, %v956
    %958 = vdwg.mxu0
    %959 = vmatprep.subr.mxu0 %v543
    %960 = vmatpush1.msra.mxu0 %v542
    %961 = vmatprep.subr.mxu0 %v547
    %962 = vmatpush1.msra.mxu0 %v546
    %963 = vmatprep.subr.mxu0 %v551
    %964 = vmatpush1.msra.mxu0 %v550
    %965 = vmatprep.subr.mxu0 %v555
    %966 = vmatpush1.msra.mxu0 %v554
    %967 = vmatprep.subr.mxu0 %v559
    %968 = vmatpush1.msra.mxu0 %v558
    %969 = vmatprep.subr.mxu0 %v563
    %970 = vmatpush1.msra.mxu0 %v562
    %971 = vmatprep.subr.mxu0 %v567
    %972 = vmatpush1.msra.mxu0 %v566
    %973 = vmatprep.subr.mxu0 %v571
    %974 = vmatpush1.msra.mxu0 %v570
    %975 = vmatprep.subr.mxu0 %v575
    %976 = vmatpush1.msra.mxu0 %v574
    %977 = vmatprep.subr.mxu0 %v579
    %978 = vmatpush1.msra.mxu0 %v578
    %979 = vmatprep.subr.mxu0 %v583
    %980 = vmatpush1.msra.mxu0 %v582
    %981 = vmatprep.subr.mxu0 %v587
    %982 = vmatpush1.msra.mxu0 %v586
    %983 = vmatprep.subr.mxu0 %v591
    %984 = vmatpush1.msra.mxu0 %v590
    %985 = vmatprep.subr.mxu0 %v595
    %986 = vmatpush1.msra.mxu0 %v594
    %987 = vmatprep.subr.mxu0 %v599
    %988 = vmatpush1.msra.mxu0 %v598
    %989 = vmatprep.subr.mxu0 %v603
    %990 = vmatpush1.msra.mxu0 %v602
    %991 = vmatprep.subr.mxu0 %v607
    %992 = vmatpush1.msra.mxu0 %v606
    %993 = vmatprep.subr.mxu0 %v611
    %994 = vmatpush1.msra.mxu0 %v610
    %995 = vmatprep.subr.mxu0 %v615
    %996 = vmatpush1.msra.mxu0 %v614
    %997 = vmatprep.subr.mxu0 0.0
    %998 = vmatpush1.msra.mxu0 0.0
    %999 = vmatprep.subr.mxu0 0.0
    %1000 = vmatpush1.msra.mxu0 0.0
    %1001 = vmatprep.subr.mxu0 0.0
    %1002 = vmatpush1.msra.mxu0 0.0
    %1003 = vmatprep.subr.mxu0 0.0
    %1004 = vmatpush1.msra.mxu0 0.0
    %1005 = vmatprep.subr.mxu0 0.0
    %1006 = vmatpush1.msra.mxu0 0.0
    %1007 = vmatprep.subr.mxu0 0.0
    %1008 = vmatpush1.msra.mxu0 0.0
    %1009 = vmatprep.subr.mxu0 0.0
    %1010 = vmatpush1.msra.mxu0 0.0
    %1011 = vmatprep.subr.mxu0 0.0
    %1012 = vmatpush1.msra.mxu0 0.0
    %1013 = vmatprep.subr.mxu0 0.0
    %1014 = vmatpush1.msra.mxu0 0.0
    %1015 = vmatprep.subr.mxu0 0.0
    %1016 = vmatpush1.msra.mxu0 0.0
    %1017 = vmatprep.subr.mxu0 0.0
    %1018 = vmatpush1.msra.mxu0 0.0
    %1019 = vmatprep.subr.mxu0 0.0
    %1020 = vmatpush1.msra.mxu0 0.0
    %1021 = vmatprep.subr.mxu0 0.0
    %1022 = vmatpush1.msra.mxu0 0.0
    %1023 = vmatprep.mubr.f32.mxu0 %v673
    %1024 = vmatmul.mubr.f32.gmra.mrb[0].mxu0 %v661
    %v1025 = vpop.f32.mrb[0].mxu0
    %v1026 = vadd.f32 %v955, %v1025
    %v1027 = vpop.f32.mrb[0].mxu0
    %v1028 = vadd.f32 %v957, %v1027
    %1029 = vdwg.mxu0
    %1030 = vmatprep.subr.mxu0 %v33
    %1031 = vmatpush1.msra.mxu0 %v32
    %1032 = vmatprep.subr.mxu0 %v37
    %1033 = vmatpush1.msra.mxu0 %v36
    %1034 = vmatprep.subr.mxu0 %v41
    %1035 = vmatpush1.msra.mxu0 %v40
    %1036 = vmatprep.subr.mxu0 %v45
    %1037 = vmatpush1.msra.mxu0 %v44
    %1038 = vmatprep.subr.mxu0 %v49
    %1039 = vmatpush1.msra.mxu0 %v48
    %1040 = vmatprep.subr.mxu0 %v53
    %1041 = vmatpush1.msra.mxu0 %v52
    %1042 = vmatprep.subr.mxu0 %v57
    %1043 = vmatpush1.msra.mxu0 %v56
    %1044 = vmatprep.subr.mxu0 %v61
    %1045 = vmatpush1.msra.mxu0 %v60
    %1046 = vmatprep.subr.mxu0 %v65
    %1047 = vmatpush1.msra.mxu0 %v64
    %1048 = vmatprep.subr.mxu0 %v69
    %1049 = vmatpush1.msra.mxu0 %v68
    %1050 = vmatprep.subr.mxu0 %v73
    %1051 = vmatpush1.msra.mxu0 %v72
    %1052 = vmatprep.subr.mxu0 %v77
    %1053 = vmatpush1.msra.mxu0 %v76
    %1054 = vmatprep.subr.mxu0 %v81
    %1055 = vmatpush1.msra.mxu0 %v80
    %1056 = vmatprep.subr.mxu0 %v85
    %1057 = vmatpush1.msra.mxu0 %v84
    %1058 = vmatprep.subr.mxu0 %v89
    %1059 = vmatpush1.msra.mxu0 %v88
    %1060 = vmatprep.subr.mxu0 %v93
    %1061 = vmatpush1.msra.mxu0 %v92
    %1062 = vmatprep.subr.mxu0 %v97
    %1063 = vmatpush1.msra.mxu0 %v96
    %1064 = vmatprep.subr.mxu0 %v101
    %1065 = vmatpush1.msra.mxu0 %v100
    %1066 = vmatprep.subr.mxu0 %v105
    %1067 = vmatpush1.msra.mxu0 %v104
    %1068 = vmatprep.subr.mxu0 %v109
    %1069 = vmatpush1.msra.mxu0 %v108
    %1070 = vmatprep.subr.mxu0 %v113
    %1071 = vmatpush1.msra.mxu0 %v112
    %1072 = vmatprep.subr.mxu0 %v117
    %1073 = vmatpush1.msra.mxu0 %v116
    %1074 = vmatprep.subr.mxu0 %v121
    %1075 = vmatpush1.msra.mxu0 %v120
    %1076 = vmatprep.subr.mxu0 %v125
    %1077 = vmatpush1.msra.mxu0 %v124
    %1078 = vmatprep.subr.mxu0 %v129
    %1079 = vmatpush1.msra.mxu0 %v128
    %1080 = vmatprep.subr.mxu0 %v133
    %1081 = vmatpush1.msra.mxu0 %v132
    %1082 = vmatprep.subr.mxu0 %v137
    %1083 = vmatpush1.msra.mxu0 %v136
    %1084 = vmatprep.subr.mxu0 %v141
    %1085 = vmatpush1.msra.mxu0 %v140
    %1086 = vmatprep.subr.mxu0 %v145
    %1087 = vmatpush1.msra.mxu0 %v144
    %1088 = vmatprep.subr.mxu0 %v149
    %1089 = vmatpush1.msra.mxu0 %v148
    %1090 = vmatprep.subr.mxu0 %v153
    %1091 = vmatpush1.msra.mxu0 %v152
    %1092 = vmatprep.subr.mxu0 %v157
    %1093 = vmatpush1.msra.mxu0 %v156
    %1094 = vmatprep.mubr.f32.mxu0 %v636
    %1095 = vmatmul.mubr.f32.gmra.mrb[0].mxu0 %v628
    %v1096 = vpop.f32.mrb[0].mxu0
    %v1097 = vadd.f32 0.0, %v1096
    %v1098 = vpop.f32.mrb[0].mxu0
    %v1099 = vadd.f32 0.0, %v1098
    %1100 = vdwg.mxu0
    %1101 = vmatprep.subr.mxu0 %v161
    %1102 = vmatpush1.msra.mxu0 %v160
    %1103 = vmatprep.subr.mxu0 %v165
    %1104 = vmatpush1.msra.mxu0 %v164
    %1105 = vmatprep.subr.mxu0 %v169
    %1106 = vmatpush1.msra.mxu0 %v168
    %1107 = vmatprep.subr.mxu0 %v173
    %1108 = vmatpush1.msra.mxu0 %v172
    %1109 = vmatprep.subr.mxu0 %v177
    %1110 = vmatpush1.msra.mxu0 %v176
    %1111 = vmatprep.subr.mxu0 %v181
    %1112 = vmatpush1.msra.mxu0 %v180
    %1113 = vmatprep.subr.mxu0 %v185
    %1114 = vmatpush1.msra.mxu0 %v184
    %1115 = vmatprep.subr.mxu0 %v189
    %1116 = vmatpush1.msra.mxu0 %v188
    %1117 = vmatprep.subr.mxu0 %v193
    %1118 = vmatpush1.msra.mxu0 %v192
    %1119 = vmatprep.subr.mxu0 %v197
    %1120 = vmatpush1.msra.mxu0 %v196
    %1121 = vmatprep.subr.mxu0 %v201
    %1122 = vmatpush1.msra.mxu0 %v200
    %1123 = vmatprep.subr.mxu0 %v205
    %1124 = vmatpush1.msra.mxu0 %v204
    %1125 = vmatprep.subr.mxu0 %v209
    %1126 = vmatpush1.msra.mxu0 %v208
    %1127 = vmatprep.subr.mxu0 %v213
    %1128 = vmatpush1.msra.mxu0 %v212
    %1129 = vmatprep.subr.mxu0 %v217
    %1130 = vmatpush1.msra.mxu0 %v216
    %1131 = vmatprep.subr.mxu0 %v221
    %1132 = vmatpush1.msra.mxu0 %v220
    %1133 = vmatprep.subr.mxu0 %v225
    %1134 = vmatpush1.msra.mxu0 %v224
    %1135 = vmatprep.subr.mxu0 %v229
    %1136 = vmatpush1.msra.mxu0 %v228
    %1137 = vmatprep.subr.mxu0 %v233
    %1138 = vmatpush1.msra.mxu0 %v232
    %1139 = vmatprep.subr.mxu0 %v237
    %1140 = vmatpush1.msra.mxu0 %v236
    %1141 = vmatprep.subr.mxu0 %v241
    %1142 = vmatpush1.msra.mxu0 %v240
    %1143 = vmatprep.subr.mxu0 %v245
    %1144 = vmatpush1.msra.mxu0 %v244
    %1145 = vmatprep.subr.mxu0 %v249
    %1146 = vmatpush1.msra.mxu0 %v248
    %1147 = vmatprep.subr.mxu0 %v253
    %1148 = vmatpush1.msra.mxu0 %v252
    %1149 = vmatprep.subr.mxu0 %v257
    %1150 = vmatpush1.msra.mxu0 %v256
    %1151 = vmatprep.subr.mxu0 %v261
    %1152 = vmatpush1.msra.mxu0 %v260
    %1153 = vmatprep.subr.mxu0 %v265
    %1154 = vmatpush1.msra.mxu0 %v264
    %1155 = vmatprep.subr.mxu0 %v269
    %1156 = vmatpush1.msra.mxu0 %v268
    %1157 = vmatprep.subr.mxu0 %v273
    %1158 = vmatpush1.msra.mxu0 %v272
    %1159 = vmatprep.subr.mxu0 %v277
    %1160 = vmatpush1.msra.mxu0 %v276
    %1161 = vmatprep.subr.mxu0 %v281
    %1162 = vmatpush1.msra.mxu0 %v280
    %1163 = vmatprep.subr.mxu0 %v285
    %1164 = vmatpush1.msra.mxu0 %v284
    %1165 = vmatprep.mubr.f32.mxu0 %v637
    %1166 = vmatmul.mubr.f32.gmra.mrb[0].mxu0 %v635
    %v1167 = vpop.f32.mrb[0].mxu0
    %v1168 = vadd.f32 %v1097, %v1167
    %v1169 = vpop.f32.mrb[0].mxu0
    %v1170 = vadd.f32 %v1099, %v1169
    %1171 = vdwg.mxu0
    %1172 = vmatprep.subr.mxu0 %v289
    %1173 = vmatpush1.msra.mxu0 %v288
    %1174 = vmatprep.subr.mxu0 %v293
    %1175 = vmatpush1.msra.mxu0 %v292
    %1176 = vmatprep.subr.mxu0 %v297
    %1177 = vmatpush1.msra.mxu0 %v296
    %1178 = vmatprep.subr.mxu0 %v301
    %1179 = vmatpush1.msra.mxu0 %v300
    %1180 = vmatprep.subr.mxu0 %v305
    %1181 = vmatpush1.msra.mxu0 %v304
    %1182 = vmatprep.subr.mxu0 %v309
    %1183 = vmatpush1.msra.mxu0 %v308
    %1184 = vmatprep.subr.mxu0 %v313
    %1185 = vmatpush1.msra.mxu0 %v312
    %1186 = vmatprep.subr.mxu0 %v317
    %1187 = vmatpush1.msra.mxu0 %v316
    %1188 = vmatprep.subr.mxu0 %v321
    %1189 = vmatpush1.msra.mxu0 %v320
    %1190 = vmatprep.subr.mxu0 %v325
    %1191 = vmatpush1.msra.mxu0 %v324
    %1192 = vmatprep.subr.mxu0 %v329
    %1193 = vmatpush1.msra.mxu0 %v328
    %1194 = vmatprep.subr.mxu0 %v333
    %1195 = vmatpush1.msra.mxu0 %v332
    %1196 = vmatprep.subr.mxu0 %v337
    %1197 = vmatpush1.msra.mxu0 %v336
    %1198 = vmatprep.subr.mxu0 %v341
    %1199 = vmatpush1.msra.mxu0 %v340
    %1200 = vmatprep.subr.mxu0 %v345
    %1201 = vmatpush1.msra.mxu0 %v344
    %1202 = vmatprep.subr.mxu0 %v349
    %1203 = vmatpush1.msra.mxu0 %v348
    %1204 = vmatprep.subr.mxu0 %v353
    %1205 = vmatpush1.msra.mxu0 %v352
    %1206 = vmatprep.subr.mxu0 %v357
    %1207 = vmatpush1.msra.mxu0 %v356
    %1208 = vmatprep.subr.mxu0 %v361
    %1209 = vmatpush1.msra.mxu0 %v360
    %1210 = vmatprep.subr.mxu0 %v365
    %1211 = vmatpush1.msra.mxu0 %v364
    %1212 = vmatprep.subr.mxu0 %v369
    %1213 = vmatpush1.msra.mxu0 %v368
    %1214 = vmatprep.subr.mxu0 %v373
    %1215 = vmatpush1.msra.mxu0 %v372
    %1216 = vmatprep.subr.mxu0 %v377
    %1217 = vmatpush1.msra.mxu0 %v376
    %1218 = vmatprep.subr.mxu0 %v381
    %1219 = vmatpush1.msra.mxu0 %v380
    %1220 = vmatprep.subr.mxu0 %v385
    %1221 = vmatpush1.msra.mxu0 %v384
    %1222 = vmatprep.subr.mxu0 %v389
    %1223 = vmatpush1.msra.mxu0 %v388
    %1224 = vmatprep.subr.mxu0 %v393
    %1225 = vmatpush1.msra.mxu0 %v392
    %1226 = vmatprep.subr.mxu0 %v397
    %1227 = vmatpush1.msra.mxu0 %v396
    %1228 = vmatprep.subr.mxu0 %v401
    %1229 = vmatpush1.msra.mxu0 %v400
    %1230 = vmatprep.subr.mxu0 %v405
    %1231 = vmatpush1.msra.mxu0 %v404
    %1232 = vmatprep.subr.mxu0 %v409
    %1233 = vmatpush1.msra.mxu0 %v408
    %1234 = vmatprep.subr.mxu0 %v413
    %1235 = vmatpush1.msra.mxu0 %v412
    %1236 = vmatprep.mubr.f32.mxu0 %v653
    %1237 = vmatmul.mubr.f32.gmra.mrb[0].mxu0 %v645
    %v1238 = vpop.f32.mrb[0].mxu0
    %v1239 = vadd.f32 %v1168, %v1238
    %v1240 = vpop.f32.mrb[0].mxu0
    %v1241 = vadd.f32 %v1170, %v1240
    %1242 = vdwg.mxu0
    %1243 = vmatprep.subr.mxu0 %v417
    %1244 = vmatpush1.msra.mxu0 %v416
    %1245 = vmatprep.subr.mxu0 %v421
    %1246 = vmatpush1.msra.mxu0 %v420
    %1247 = vmatprep.subr.mxu0 %v425
    %1248 = vmatpush1.msra.mxu0 %v424
    %1249 = vmatprep.subr.mxu0 %v429
    %1250 = vmatpush1.msra.mxu0 %v428
    %1251 = vmatprep.subr.mxu0 %v433
    %1252 = vmatpush1.msra.mxu0 %v432
    %1253 = vmatprep.subr.mxu0 %v437
    %1254 = vmatpush1.msra.mxu0 %v436
    %1255 = vmatprep.subr.mxu0 %v441
    %1256 = vmatpush1.msra.mxu0 %v440
    %1257 = vmatprep.subr.mxu0 %v445
    %1258 = vmatpush1.msra.mxu0 %v444
    %1259 = vmatprep.subr.mxu0 %v449
    %1260 = vmatpush1.msra.mxu0 %v448
    %1261 = vmatprep.subr.mxu0 %v453
    %1262 = vmatpush1.msra.mxu0 %v452
    %1263 = vmatprep.subr.mxu0 %v457
    %1264 = vmatpush1.msra.mxu0 %v456
    %1265 = vmatprep.subr.mxu0 %v461
    %1266 = vmatpush1.msra.mxu0 %v460
    %1267 = vmatprep.subr.mxu0 %v465
    %1268 = vmatpush1.msra.mxu0 %v464
    %1269 = vmatprep.subr.mxu0 %v469
    %1270 = vmatpush1.msra.mxu0 %v468
    %1271 = vmatprep.subr.mxu0 %v473
    %1272 = vmatpush1.msra.mxu0 %v472
    %1273 = vmatprep.subr.mxu0 %v477
    %1274 = vmatpush1.msra.mxu0 %v476
    %1275 = vmatprep.subr.mxu0 %v481
    %1276 = vmatpush1.msra.mxu0 %v480
    %1277 = vmatprep.subr.mxu0 %v485
    %1278 = vmatpush1.msra.mxu0 %v484
    %1279 = vmatprep.subr.mxu0 %v489
    %1280 = vmatpush1.msra.mxu0 %v488
    %1281 = vmatprep.subr.mxu0 %v493
    %1282 = vmatpush1.msra.mxu0 %v492
    %1283 = vmatprep.subr.mxu0 %v497
    %1284 = vmatpush1.msra.mxu0 %v496
    %1285 = vmatprep.subr.mxu0 %v501
    %1286 = vmatpush1.msra.mxu0 %v500
    %1287 = vmatprep.subr.mxu0 %v505
    %1288 = vmatpush1.msra.mxu0 %v504
    %1289 = vmatprep.subr.mxu0 %v509
    %1290 = vmatpush1.msra.mxu0 %v508
    %1291 = vmatprep.subr.mxu0 %v513
    %1292 = vmatpush1.msra.mxu0 %v512
    %1293 = vmatprep.subr.mxu0 %v517
    %1294 = vmatpush1.msra.mxu0 %v516
    %1295 = vmatprep.subr.mxu0 %v521
    %1296 = vmatpush1.msra.mxu0 %v520
    %1297 = vmatprep.subr.mxu0 %v525
    %1298 = vmatpush1.msra.mxu0 %v524
    %1299 = vmatprep.subr.mxu0 %v529
    %1300 = vmatpush1.msra.mxu0 %v528
    %1301 = vmatprep.subr.mxu0 %v533
    %1302 = vmatpush1.msra.mxu0 %v532
    %1303 = vmatprep.subr.mxu0 %v537
    %1304 = vmatpush1.msra.mxu0 %v536
    %1305 = vmatprep.subr.mxu0 %v541
    %1306 = vmatpush1.msra.mxu0 %v540
    %1307 = vmatprep.mubr.f32.mxu0 %v654
    %1308 = vmatmul.mubr.f32.gmra.mrb[0].mxu0 %v652
    %v1309 = vpop.f32.mrb[0].mxu0
    %v1310 = vadd.f32 %v1239, %v1309
    %v1311 = vpop.f32.mrb[0].mxu0
    %v1312 = vadd.f32 %v1241, %v1311
    %1313 = vdwg.mxu0
    %1314 = vmatprep.subr.mxu0 %v545
    %1315 = vmatpush1.msra.mxu0 %v544
    %1316 = vmatprep.subr.mxu0 %v549
    %1317 = vmatpush1.msra.mxu0 %v548
    %1318 = vmatprep.subr.mxu0 %v553
    %1319 = vmatpush1.msra.mxu0 %v552
    %1320 = vmatprep.subr.mxu0 %v557
    %1321 = vmatpush1.msra.mxu0 %v556
    %1322 = vmatprep.subr.mxu0 %v561
    %1323 = vmatpush1.msra.mxu0 %v560
    %1324 = vmatprep.subr.mxu0 %v565
    %1325 = vmatpush1.msra.mxu0 %v564
    %1326 = vmatprep.subr.mxu0 %v569
    %1327 = vmatpush1.msra.mxu0 %v568
    %1328 = vmatprep.subr.mxu0 %v573
    %1329 = vmatpush1.msra.mxu0 %v572
    %1330 = vmatprep.subr.mxu0 %v577
    %1331 = vmatpush1.msra.mxu0 %v576
    %1332 = vmatprep.subr.mxu0 %v581
    %1333 = vmatpush1.msra.mxu0 %v580
    %1334 = vmatprep.subr.mxu0 %v585
    %1335 = vmatpush1.msra.mxu0 %v584
    %1336 = vmatprep.subr.mxu0 %v589
    %1337 = vmatpush1.msra.mxu0 %v588
    %1338 = vmatprep.subr.mxu0 %v593
    %1339 = vmatpush1.msra.mxu0 %v592
    %1340 = vmatprep.subr.mxu0 %v597
    %1341 = vmatpush1.msra.mxu0 %v596
    %1342 = vmatprep.subr.mxu0 %v601
    %1343 = vmatpush1.msra.mxu0 %v600
    %1344 = vmatprep.subr.mxu0 %v605
    %1345 = vmatpush1.msra.mxu0 %v604
    %1346 = vmatprep.subr.mxu0 %v609
    %1347 = vmatpush1.msra.mxu0 %v608
    %1348 = vmatprep.subr.mxu0 %v613
    %1349 = vmatpush1.msra.mxu0 %v612
    %1350 = vmatprep.subr.mxu0 %v617
    %1351 = vmatpush1.msra.mxu0 %v616
    %1352 = vmatprep.subr.mxu0 0.0
    %1353 = vmatpush1.msra.mxu0 0.0
    %1354 = vmatprep.subr.mxu0 0.0
    %1355 = vmatpush1.msra.mxu0 0.0
    %1356 = vmatprep.subr.mxu0 0.0
    %1357 = vmatpush1.msra.mxu0 0.0
    %1358 = vmatprep.subr.mxu0 0.0
    %1359 = vmatpush1.msra.mxu0 0.0
    %1360 = vmatprep.subr.mxu0 0.0
    %1361 = vmatpush1.msra.mxu0 0.0
    %1362 = vmatprep.subr.mxu0 0.0
    %1363 = vmatpush1.msra.mxu0 0.0
    %1364 = vmatprep.subr.mxu0 0.0
    %1365 = vmatpush1.msra.mxu0 0.0
    %1366 = vmatprep.subr.mxu0 0.0
    %1367 = vmatpush1.msra.mxu0 0.0
    %1368 = vmatprep.subr.mxu0 0.0
    %1369 = vmatpush1.msra.mxu0 0.0
    %1370 = vmatprep.subr.mxu0 0.0
    %1371 = vmatpush1.msra.mxu0 0.0
    %1372 = vmatprep.subr.mxu0 0.0
    %1373 = vmatpush1.msra.mxu0 0.0
    %1374 = vmatprep.subr.mxu0 0.0
    %1375 = vmatpush1.msra.mxu0 0.0
    %1376 = vmatprep.subr.mxu0 0.0
    %1377 = vmatpush1.msra.mxu0 0.0
    %1378 = vmatprep.mubr.f32.mxu0 %v673
    %1379 = vmatmul.mubr.f32.gmra.mrb[0].mxu0 %v661
    %v1380 = vpop.f32.mrb[0].mxu0
    %v1381 = vadd.f32 %v1310, %v1380
    %v1382 = vpop.f32.mrb[0].mxu0
    %v1383 = vadd.f32 %v1312, %v1382
    %1384 = vdwg.mxu0
    %s1385 = scalar_lea.vmem %s1, 4704
    %v1386 = vld [vmem:[%s1385] sm:$0xff]
    %v1387 = vld [vmem:[%s1385 + $0x8] sm:$0xff]
    %v1388 = vld [vmem:[%s1385 + $0x10] sm:$0xff]
    %v1389 = vld [vmem:[%s1385 + $0x18] sm:$0xff]
    %v1390 = vld [vmem:[%s1385 + $0x20] sm:$0xff]
    %v1391 = vld [vmem:[%s1385 + $0x28] sm:$0xff]
    %v1392 = vld [vmem:[%s1385 + $0x30] sm:$0xff]
    %v1393 = vld [vmem:[%s1385 + $0x38] sm:$0xff]
    %v1394 = vld [vmem:[%s1385 + $0x40] sm:$0xff]
    %v1395 = vld [vmem:[%s1385 + $0x48] sm:$0xff]
    %v1396 = vld [vmem:[%s1385 + $0x50] sm:$0xff]
    %v1397 = vld [vmem:[%s1385 + $0x58] sm:$0xff]
    %v1398 = vld [vmem:[%s1385 + $0x60] sm:$0xff]
    %v1399 = vld [vmem:[%s1385 + $0x68] sm:$0xff]
    %v1400 = vld [vmem:[%s1385 + $0x70] sm:$0xff]
    %v1401 = vld [vmem:[%s1385 + $0x78] sm:$0xff]
    %v1402 = vld [vmem:[%s1385 + $0x80] sm:$0xff]
    %v1403 = vld [vmem:[%s1385 + $0x88] sm:$0xff]
    %v1404 = vld [vmem:[%s1385 + $0x90] sm:$0xff]
    %v1405 = vld [vmem:[%s1385 + $0x98] sm:$0xff]
    %v1406 = vld [vmem:[%s1385 + $0xa0] sm:$0xff]
    %v1407 = vld [vmem:[%s1385 + $0xa8] sm:$0xff]
    %v1408 = vld [vmem:[%s1385 + $0xb0] sm:$0xff]
    %v1409 = vld [vmem:[%s1385 + $0xb8] sm:$0xff]
    %v1410 = vld [vmem:[%s1385 + $0xc0] sm:$0xff]
    %v1411 = vld [vmem:[%s1385 + $0xc8] sm:$0xff]
    %v1412 = vld [vmem:[%s1385 + $0xd0] sm:$0xff]
    %v1413 = vld [vmem:[%s1385 + $0xd8] sm:$0xff]
    %v1414 = vld [vmem:[%s1385 + $0xe0] sm:$0xff]
    %v1415 = vld [vmem:[%s1385 + $0xe8] sm:$0xff]
    %v1416 = vld [vmem:[%s1385 + $0xf0] sm:$0xff]
    %v1417 = vld [vmem:[%s1385 + $0xf8] sm:$0xff]
    %v1418 = vld [vmem:[%s1385 + $0x100] sm:$0xff]
    %v1419 = vld [vmem:[%s1385 + $0x108] sm:$0xff]
    %v1420 = vld [vmem:[%s1385 + $0x110] sm:$0xff]
    %v1421 = vld [vmem:[%s1385 + $0x118] sm:$0xff]
    %v1422 = vld [vmem:[%s1385 + $0x120] sm:$0xff]
    %v1423 = vld [vmem:[%s1385 + $0x128] sm:$0xff]
    %v1424 = vld [vmem:[%s1385 + $0x130] sm:$0xff]
    %v1425 = vld [vmem:[%s1385 + $0x138] sm:$0xff]
    %v1426 = vld [vmem:[%s1385 + $0x140] sm:$0xff]
    %v1427 = vld [vmem:[%s1385 + $0x148] sm:$0xff]
    %v1428 = vld [vmem:[%s1385 + $0x150] sm:$0xff]
    %v1429 = vld [vmem:[%s1385 + $0x158] sm:$0xff]
    %v1430 = vld [vmem:[%s1385 + $0x160] sm:$0xff]
    %v1431 = vld [vmem:[%s1385 + $0x168] sm:$0xff]
    %v1432 = vld [vmem:[%s1385 + $0x170] sm:$0xff]
    %v1433 = vld [vmem:[%s1385 + $0x178] sm:$0xff]
    %v1434 = vld [vmem:[%s1385 + $0x180] sm:$0xff]
    %v1435 = vld [vmem:[%s1385 + $0x188] sm:$0xff]
    %v1436 = vld [vmem:[%s1385 + $0x190] sm:$0xff]
    %v1437 = vld [vmem:[%s1385 + $0x198] sm:$0xff]
    %v1438 = vld [vmem:[%s1385 + $0x1a0] sm:$0xff]
    %v1439 = vld [vmem:[%s1385 + $0x1a8] sm:$0xff]
    %v1440 = vld [vmem:[%s1385 + $0x1b0] sm:$0xff]
    %v1441 = vld [vmem:[%s1385 + $0x1b8] sm:$0xff]
    %v1442 = vld [vmem:[%s1385 + $0x1c0] sm:$0xff]
    %v1443 = vld [vmem:[%s1385 + $0x1c8] sm:$0xff]
    %v1444 = vld [vmem:[%s1385 + $0x1d0] sm:$0xff]
    %v1445 = vld [vmem:[%s1385 + $0x1d8] sm:$0xff]
    %v1446 = vld [vmem:[%s1385 + $0x1e0] sm:$0xff]
    %v1447 = vld [vmem:[%s1385 + $0x1e8] sm:$0xff]
    %v1448 = vld [vmem:[%s1385 + $0x1f0] sm:$0xff]
    %v1449 = vld [vmem:[%s1385 + $0x1f8] sm:$0xff]
    %v1450 = vld [vmem:[%s1385 + $0x200] sm:$0xff]
    %v1451 = vld [vmem:[%s1385 + $0x208] sm:$0xff]
    %v1452 = vld [vmem:[%s1385 + $0x210] sm:$0xff]
    %v1453 = vld [vmem:[%s1385 + $0x218] sm:$0xff]
    %v1454 = vld [vmem:[%s1385 + $0x220] sm:$0xff]
    %v1455 = vld [vmem:[%s1385 + $0x228] sm:$0xff]
    %v1456 = vld [vmem:[%s1385 + $0x230] sm:$0xff]
    %v1457 = vld [vmem:[%s1385 + $0x238] sm:$0xff]
    %v1458 = vld [vmem:[%s1385 + $0x240] sm:$0xff]
    %v1459 = vld [vmem:[%s1385 + $0x248] sm:$0xff]
    %v1460 = vld [vmem:[%s1385 + $0x250] sm:$0xff]
    %v1461 = vld [vmem:[%s1385 + $0x258] sm:$0xff]
    %v1462 = vld [vmem:[%s1385 + $0x260] sm:$0xff]
    %v1463 = vld [vmem:[%s1385 + $0x268] sm:$0xff]
    %v1464 = vld [vmem:[%s1385 + $0x270] sm:$0xff]
    %v1465 = vld [vmem:[%s1385 + $0x278] sm:$0xff]
    %v1466 = vld [vmem:[%s1385 + $0x280] sm:$0xff]
    %v1467 = vld [vmem:[%s1385 + $0x288] sm:$0xff]
    %v1468 = vld [vmem:[%s1385 + $0x290] sm:$0xff]
    %v1469 = vld [vmem:[%s1385 + $0x298] sm:$0xff]
    %v1470 = vld [vmem:[%s1385 + $0x2a0] sm:$0xff]
    %v1471 = vld [vmem:[%s1385 + $0x2a8] sm:$0xff]
    %v1472 = vld [vmem:[%s1385 + $0x2b0] sm:$0xff]
    %v1473 = vld [vmem:[%s1385 + $0x2b8] sm:$0xff]
    %v1474 = vld [vmem:[%s1385 + $0x2c0] sm:$0xff]
    %v1475 = vld [vmem:[%s1385 + $0x2c8] sm:$0xff]
    %v1476 = vld [vmem:[%s1385 + $0x2d0] sm:$0xff]
    %v1477 = vld [vmem:[%s1385 + $0x2d8] sm:$0xff]
    %v1478 = vld [vmem:[%s1385 + $0x2e0] sm:$0xff]
    %v1479 = vld [vmem:[%s1385 + $0x2e8] sm:$0xff]
    %v1480 = vld [vmem:[%s1385 + $0x2f0] sm:$0xff]
    %v1481 = vld [vmem:[%s1385 + $0x2f8] sm:$0xff]
    %v1482 = vld [vmem:[%s1385 + $0x300] sm:$0xff]
    %v1483 = vld [vmem:[%s1385 + $0x308] sm:$0xff]
    %v1484 = vld [vmem:[%s1385 + $0x310] sm:$0xff]
    %v1485 = vld [vmem:[%s1385 + $0x318] sm:$0xff]
    %v1486 = vld [vmem:[%s1385 + $0x320] sm:$0xff]
    %v1487 = vld [vmem:[%s1385 + $0x328] sm:$0xff]
    %v1488 = vld [vmem:[%s1385 + $0x330] sm:$0xff]
    %v1489 = vld [vmem:[%s1385 + $0x338] sm:$0xff]
    %v1490 = vld [vmem:[%s1385 + $0x340] sm:$0xff]
    %v1491 = vld [vmem:[%s1385 + $0x348] sm:$0xff]
    %v1492 = vld [vmem:[%s1385 + $0x350] sm:$0xff]
    %v1493 = vld [vmem:[%s1385 + $0x358] sm:$0xff]
    %v1494 = vld [vmem:[%s1385 + $0x360] sm:$0xff]
    %v1495 = vld [vmem:[%s1385 + $0x368] sm:$0xff]
    %v1496 = vld [vmem:[%s1385 + $0x370] sm:$0xff]
    %v1497 = vld [vmem:[%s1385 + $0x378] sm:$0xff]
    %v1498 = vld [vmem:[%s1385 + $0x380] sm:$0xff]
    %v1499 = vld [vmem:[%s1385 + $0x388] sm:$0xff]
    %v1500 = vld [vmem:[%s1385 + $0x390] sm:$0xff]
    %v1501 = vld [vmem:[%s1385 + $0x398] sm:$0xff]
    %v1502 = vld [vmem:[%s1385 + $0x3a0] sm:$0xff]
    %v1503 = vld [vmem:[%s1385 + $0x3a8] sm:$0xff]
    %v1504 = vld [vmem:[%s1385 + $0x3b0] sm:$0xff]
    %v1505 = vld [vmem:[%s1385 + $0x3b8] sm:$0xff]
    %v1506 = vld [vmem:[%s1385 + $0x3c0] sm:$0xff]
    %v1507 = vld [vmem:[%s1385 + $0x3c8] sm:$0xff]
    %v1508 = vld [vmem:[%s1385 + $0x3d0] sm:$0xff]
    %v1509 = vld [vmem:[%s1385 + $0x3d8] sm:$0xff]
    %v1510 = vld [vmem:[%s1385 + $0x3e0] sm:$0xff]
    %v1511 = vld [vmem:[%s1385 + $0x3e8] sm:$0xff]
    %v1512 = vld [vmem:[%s1385 + $0x3f0] sm:$0xff]
    %v1513 = vld [vmem:[%s1385 + $0x3f8] sm:$0xff]
    %v1514 = vld [vmem:[%s1385 + $0x400] sm:$0xff]
    %v1515 = vld [vmem:[%s1385 + $0x408] sm:$0xff]
    %v1516 = vld [vmem:[%s1385 + $0x410] sm:$0xff]
    %v1517 = vld [vmem:[%s1385 + $0x418] sm:$0xff]
    %v1518 = vld [vmem:[%s1385 + $0x420] sm:$0xff]
    %v1519 = vld [vmem:[%s1385 + $0x428] sm:$0xff]
    %v1520 = vld [vmem:[%s1385 + $0x430] sm:$0xff]
    %v1521 = vld [vmem:[%s1385 + $0x438] sm:$0xff]
    %v1522 = vld [vmem:[%s1385 + $0x440] sm:$0xff]
    %v1523 = vld [vmem:[%s1385 + $0x448] sm:$0xff]
    %v1524 = vld [vmem:[%s1385 + $0x450] sm:$0xff]
    %v1525 = vld [vmem:[%s1385 + $0x458] sm:$0xff]
    %v1526 = vld [vmem:[%s1385 + $0x460] sm:$0xff]
    %v1527 = vld [vmem:[%s1385 + $0x468] sm:$0xff]
    %v1528 = vld [vmem:[%s1385 + $0x470] sm:$0xff]
    %v1529 = vld [vmem:[%s1385 + $0x478] sm:$0xff]
    %v1530 = vld [vmem:[%s1385 + $0x480] sm:$0xff]
    %v1531 = vld [vmem:[%s1385 + $0x488] sm:$0xff]
    %v1532 = vld [vmem:[%s1385 + $0x490] sm:$0xff]
    %v1533 = vld [vmem:[%s1385 + $0x498] sm:$0xff]
    %v1534 = vld [vmem:[%s1385 + $0x4a0] sm:$0xff]
    %v1535 = vld [vmem:[%s1385 + $0x4a8] sm:$0xff]
    %v1536 = vld [vmem:[%s1385 + $0x4b0] sm:$0xff]
    %v1537 = vld [vmem:[%s1385 + $0x4b8] sm:$0xff]
    %v1538 = vld [vmem:[%s1385 + $0x4c0] sm:$0xff]
    %v1539 = vld [vmem:[%s1385 + $0x4c8] sm:$0xff]
    %v1540 = vld [vmem:[%s1385 + $0x4d0] sm:$0xff]
    %v1541 = vld [vmem:[%s1385 + $0x4d8] sm:$0xff]
    %v1542 = vld [vmem:[%s1385 + $0x4e0] sm:$0xff]
    %v1543 = vld [vmem:[%s1385 + $0x4e8] sm:$0xff]
    %v1544 = vld [vmem:[%s1385 + $0x4f0] sm:$0xff]
    %v1545 = vld [vmem:[%s1385 + $0x4f8] sm:$0xff]
    %v1546 = vld [vmem:[%s1385 + $0x500] sm:$0xff]
    %v1547 = vld [vmem:[%s1385 + $0x508] sm:$0xff]
    %v1548 = vld [vmem:[%s1385 + $0x510] sm:$0xff]
    %v1549 = vld [vmem:[%s1385 + $0x518] sm:$0xff]
    %v1550 = vld [vmem:[%s1385 + $0x520] sm:$0xff]
    %v1551 = vld [vmem:[%s1385 + $0x528] sm:$0xff]
    %v1552 = vld [vmem:[%s1385 + $0x530] sm:$0xff]
    %v1553 = vld [vmem:[%s1385 + $0x538] sm:$0xff]
    %v1554 = vld [vmem:[%s1385 + $0x540] sm:$0xff]
    %v1555 = vld [vmem:[%s1385 + $0x548] sm:$0xff]
    %v1556 = vld [vmem:[%s1385 + $0x550] sm:$0xff]
    %v1557 = vld [vmem:[%s1385 + $0x558] sm:$0xff]
    %v1558 = vld [vmem:[%s1385 + $0x560] sm:$0xff]
    %v1559 = vld [vmem:[%s1385 + $0x568] sm:$0xff]
    %v1560 = vld [vmem:[%s1385 + $0x570] sm:$0xff]
    %v1561 = vld [vmem:[%s1385 + $0x578] sm:$0xff]
    %v1562 = vld [vmem:[%s1385 + $0x580] sm:$0xff]
    %v1563 = vld [vmem:[%s1385 + $0x588] sm:$0xff]
    %v1564 = vld [vmem:[%s1385 + $0x590] sm:$0xff]
    %v1565 = vld [vmem:[%s1385 + $0x598] sm:$0xff]
    %v1566 = vld [vmem:[%s1385 + $0x5a0] sm:$0xff]
    %v1567 = vld [vmem:[%s1385 + $0x5a8] sm:$0xff]
    %v1568 = vld [vmem:[%s1385 + $0x5b0] sm:$0xff]
    %v1569 = vld [vmem:[%s1385 + $0x5b8] sm:$0xff]
    %v1570 = vld [vmem:[%s1385 + $0x5c0] sm:$0xff]
    %v1571 = vld [vmem:[%s1385 + $0x5c8] sm:$0xff]
    %v1572 = vld [vmem:[%s1385 + $0x5d0] sm:$0xff]
    %v1573 = vld [vmem:[%s1385 + $0x5d8] sm:$0xff]
    %v1574 = vld [vmem:[%s1385 + $0x5e0] sm:$0xff]
    %v1575 = vld [vmem:[%s1385 + $0x5e8] sm:$0xff]
    %v1576 = vld [vmem:[%s1385 + $0x5f0] sm:$0xff]
    %v1577 = vld [vmem:[%s1385 + $0x5f8] sm:$0xff]
    %v1578 = vld [vmem:[%s1385 + $0x600] sm:$0xff]
    %v1579 = vld [vmem:[%s1385 + $0x608] sm:$0xff]
    %v1580 = vld [vmem:[%s1385 + $0x610] sm:$0xff]
    %v1581 = vld [vmem:[%s1385 + $0x618] sm:$0xff]
    %v1582 = vld [vmem:[%s1385 + $0x620] sm:$0xff]
    %v1583 = vld [vmem:[%s1385 + $0x628] sm:$0xff]
    %v1584 = vld [vmem:[%s1385 + $0x630] sm:$0xff]
    %v1585 = vld [vmem:[%s1385 + $0x638] sm:$0xff]
    %v1586 = vld [vmem:[%s1385 + $0x640] sm:$0xff]
    %v1587 = vld [vmem:[%s1385 + $0x648] sm:$0xff]
    %v1588 = vld [vmem:[%s1385 + $0x650] sm:$0xff]
    %v1589 = vld [vmem:[%s1385 + $0x658] sm:$0xff]
    %v1590 = vld [vmem:[%s1385 + $0x660] sm:$0xff]
    %v1591 = vld [vmem:[%s1385 + $0x668] sm:$0xff]
    %v1592 = vld [vmem:[%s1385 + $0x670] sm:$0xff]
    %v1593 = vld [vmem:[%s1385 + $0x678] sm:$0xff]
    %v1594 = vld [vmem:[%s1385 + $0x680] sm:$0xff]
    %v1595 = vld [vmem:[%s1385 + $0x688] sm:$0xff]
    %v1596 = vld [vmem:[%s1385 + $0x690] sm:$0xff]
    %v1597 = vld [vmem:[%s1385 + $0x698] sm:$0xff]
    %v1598 = vld [vmem:[%s1385 + $0x6a0] sm:$0xff]
    %v1599 = vld [vmem:[%s1385 + $0x6a8] sm:$0xff]
    %v1600 = vld [vmem:[%s1385 + $0x6b0] sm:$0xff]
    %v1601 = vld [vmem:[%s1385 + $0x6b8] sm:$0xff]
    %v1602 = vld [vmem:[%s1385 + $0x6c0] sm:$0xff]
    %v1603 = vld [vmem:[%s1385 + $0x6c8] sm:$0xff]
    %v1604 = vld [vmem:[%s1385 + $0x6d0] sm:$0xff]
    %v1605 = vld [vmem:[%s1385 + $0x6d8] sm:$0xff]
    %v1606 = vld [vmem:[%s1385 + $0x6e0] sm:$0xff]
    %v1607 = vld [vmem:[%s1385 + $0x6e8] sm:$0xff]
    %v1608 = vld [vmem:[%s1385 + $0x6f0] sm:$0xff]
    %v1609 = vld [vmem:[%s1385 + $0x6f8] sm:$0xff]
    %v1610 = vld [vmem:[%s1385 + $0x700] sm:$0xff]
    %v1611 = vld [vmem:[%s1385 + $0x708] sm:$0xff]
    %v1612 = vld [vmem:[%s1385 + $0x710] sm:$0xff]
    %v1613 = vld [vmem:[%s1385 + $0x718] sm:$0xff]
    %v1614 = vld [vmem:[%s1385 + $0x720] sm:$0xff]
    %v1615 = vld [vmem:[%s1385 + $0x728] sm:$0xff]
    %v1616 = vld [vmem:[%s1385 + $0x730] sm:$0xff]
    %v1617 = vld [vmem:[%s1385 + $0x738] sm:$0xff]
    %v1618 = vld [vmem:[%s1385 + $0x740] sm:$0xff]
    %v1619 = vld [vmem:[%s1385 + $0x748] sm:$0xff]
    %v1620 = vld [vmem:[%s1385 + $0x750] sm:$0xff]
    %v1621 = vld [vmem:[%s1385 + $0x758] sm:$0xff]
    %v1622 = vld [vmem:[%s1385 + $0x760] sm:$0xff]
    %v1623 = vld [vmem:[%s1385 + $0x768] sm:$0xff]
    %v1624 = vld [vmem:[%s1385 + $0x770] sm:$0xff]
    %v1625 = vld [vmem:[%s1385 + $0x778] sm:$0xff]
    %v1626 = vld [vmem:[%s1385 + $0x780] sm:$0xff]
    %v1627 = vld [vmem:[%s1385 + $0x788] sm:$0xff]
    %v1628 = vld [vmem:[%s1385 + $0x790] sm:$0xff]
    %v1629 = vld [vmem:[%s1385 + $0x798] sm:$0xff]
    %v1630 = vld [vmem:[%s1385 + $0x7a0] sm:$0xff]
    %v1631 = vld [vmem:[%s1385 + $0x7a8] sm:$0xff]
    %v1632 = vld [vmem:[%s1385 + $0x7b0] sm:$0xff]
    %v1633 = vld [vmem:[%s1385 + $0x7b8] sm:$0xff]
    %v1634 = vld [vmem:[%s1385 + $0x7c0] sm:$0xff]
    %v1635 = vld [vmem:[%s1385 + $0x7c8] sm:$0xff]
    %v1636 = vld [vmem:[%s1385 + $0x7d0] sm:$0xff]
    %v1637 = vld [vmem:[%s1385 + $0x7d8] sm:$0xff]
    %v1638 = vld [vmem:[%s1385 + $0x7e0] sm:$0xff]
    %v1639 = vld [vmem:[%s1385 + $0x7e8] sm:$0xff]
    %v1640 = vld [vmem:[%s1385 + $0x7f0] sm:$0xff]
    %v1641 = vld [vmem:[%s1385 + $0x7f8] sm:$0xff]
    %v1642 = vld [vmem:[%s1385 + $0x800] sm:$0xff]
    %v1643 = vld [vmem:[%s1385 + $0x808] sm:$0xff]
    %v1644 = vld [vmem:[%s1385 + $0x810] sm:$0xff]
    %v1645 = vld [vmem:[%s1385 + $0x818] sm:$0xff]
    %v1646 = vld [vmem:[%s1385 + $0x820] sm:$0xff]
    %v1647 = vld [vmem:[%s1385 + $0x828] sm:$0xff]
    %v1648 = vld [vmem:[%s1385 + $0x830] sm:$0xff]
    %v1649 = vld [vmem:[%s1385 + $0x838] sm:$0xff]
    %v1650 = vld [vmem:[%s1385 + $0x840] sm:$0xff]
    %v1651 = vld [vmem:[%s1385 + $0x848] sm:$0xff]
    %v1652 = vld [vmem:[%s1385 + $0x850] sm:$0xff]
    %v1653 = vld [vmem:[%s1385 + $0x858] sm:$0xff]
    %v1654 = vld [vmem:[%s1385 + $0x860] sm:$0xff]
    %v1655 = vld [vmem:[%s1385 + $0x868] sm:$0xff]
    %v1656 = vld [vmem:[%s1385 + $0x870] sm:$0xff]
    %v1657 = vld [vmem:[%s1385 + $0x878] sm:$0xff]
    %v1658 = vld [vmem:[%s1385 + $0x880] sm:$0xff]
    %v1659 = vld [vmem:[%s1385 + $0x888] sm:$0xff]
    %v1660 = vld [vmem:[%s1385 + $0x890] sm:$0xff]
    %v1661 = vld [vmem:[%s1385 + $0x898] sm:$0xff]
    %v1662 = vld [vmem:[%s1385 + $0x8a0] sm:$0xff]
    %v1663 = vld [vmem:[%s1385 + $0x8a8] sm:$0xff]
    %v1664 = vld [vmem:[%s1385 + $0x8b0] sm:$0xff]
    %v1665 = vld [vmem:[%s1385 + $0x8b8] sm:$0xff]
    %v1666 = vld [vmem:[%s1385 + $0x8c0] sm:$0xff]
    %v1667 = vld [vmem:[%s1385 + $0x8c8] sm:$0xff]
    %v1668 = vld [vmem:[%s1385 + $0x8d0] sm:$0xff]
    %v1669 = vld [vmem:[%s1385 + $0x8d8] sm:$0xff]
    %v1670 = vld [vmem:[%s1385 + $0x8e0] sm:$0xff]
    %v1671 = vld [vmem:[%s1385 + $0x8e8] sm:$0xff]
    %v1672 = vld [vmem:[%s1385 + $0x8f0] sm:$0xff]
    %v1673 = vld [vmem:[%s1385 + $0x8f8] sm:$0xff]
    %v1674 = vld [vmem:[%s1385 + $0x900] sm:$0xff]
    %v1675 = vld [vmem:[%s1385 + $0x908] sm:$0xff]
    %v1676 = vld [vmem:[%s1385 + $0x910] sm:$0xff]
    %v1677 = vld [vmem:[%s1385 + $0x918] sm:$0xff]
    %v1678 = vld [vmem:[%s1385 + $0x920] sm:$0xff]
    %v1679 = vld [vmem:[%s1385 + $0x928] sm:$0xff]
    %v1680 = vld [vmem:[%s1385 + $0x930] sm:$0xff]
    %v1681 = vld [vmem:[%s1385 + $0x938] sm:$0xff]
    %v1682 = vld [vmem:[%s1385 + $0x940] sm:$0xff]
    %v1683 = vld [vmem:[%s1385 + $0x948] sm:$0xff]
    %v1684 = vld [vmem:[%s1385 + $0x950] sm:$0xff]
    %v1685 = vld [vmem:[%s1385 + $0x958] sm:$0xff]
    %v1686 = vld [vmem:[%s1385 + $0x960] sm:$0xff]
    %v1687 = vld [vmem:[%s1385 + $0x968] sm:$0xff]
    %v1688 = vld [vmem:[%s1385 + $0x970] sm:$0xff]
    %v1689 = vld [vmem:[%s1385 + $0x978] sm:$0xff]
    %v1690 = vld [vmem:[%s1385 + $0x980] sm:$0xff]
    %v1691 = vld [vmem:[%s1385 + $0x988] sm:$0xff]
    %v1692 = vld [vmem:[%s1385 + $0x990] sm:$0xff]
    %v1693 = vld [vmem:[%s1385 + $0x998] sm:$0xff]
    %v1694 = vld [vmem:[%s1385 + $0x9a0] sm:$0xff]
    %v1695 = vld [vmem:[%s1385 + $0x9a8] sm:$0xff]
    %v1696 = vld [vmem:[%s1385 + $0x9b0] sm:$0xff]
    %v1697 = vld [vmem:[%s1385 + $0x9b8] sm:$0xff]
    %v1698 = vld [vmem:[%s1385 + $0x9c0] sm:$0xff]
    %v1699 = vld [vmem:[%s1385 + $0x9c8] sm:$0xff]
    %v1700 = vld [vmem:[%s1385 + $0x9d0] sm:$0xff]
    %v1701 = vld [vmem:[%s1385 + $0x9d8] sm:$0xff]
    %v1702 = vld [vmem:[%s1385 + $0x9e0] sm:$0xff]
    %v1703 = vld [vmem:[%s1385 + $0x9e8] sm:$0xff]
    %v1704 = vld [vmem:[%s1385 + $0x9f0] sm:$0xff]
    %v1705 = vld [vmem:[%s1385 + $0x9f8] sm:$0xff]
    %v1706 = vld [vmem:[%s1385 + $0xa00] sm:$0xff]
    %v1707 = vld [vmem:[%s1385 + $0xa08] sm:$0xff]
    %v1708 = vld [vmem:[%s1385 + $0xa10] sm:$0xff]
    %v1709 = vld [vmem:[%s1385 + $0xa18] sm:$0xff]
    %v1710 = vld [vmem:[%s1385 + $0xa20] sm:$0xff]
    %v1711 = vld [vmem:[%s1385 + $0xa28] sm:$0xff]
    %v1712 = vld [vmem:[%s1385 + $0xa30] sm:$0xff]
    %v1713 = vld [vmem:[%s1385 + $0xa38] sm:$0xff]
    %v1714 = vld [vmem:[%s1385 + $0xa40] sm:$0xff]
    %v1715 = vld [vmem:[%s1385 + $0xa48] sm:$0xff]
    %v1716 = vld [vmem:[%s1385 + $0xa50] sm:$0xff]
    %v1717 = vld [vmem:[%s1385 + $0xa58] sm:$0xff]
    %v1718 = vld [vmem:[%s1385 + $0xa60] sm:$0xff]
    %v1719 = vld [vmem:[%s1385 + $0xa68] sm:$0xff]
    %v1720 = vld [vmem:[%s1385 + $0xa70] sm:$0xff]
    %v1721 = vld [vmem:[%s1385 + $0xa78] sm:$0xff]
    %v1722 = vld [vmem:[%s1385 + $0xa80] sm:$0xff]
    %v1723 = vld [vmem:[%s1385 + $0xa88] sm:$0xff]
    %v1724 = vld [vmem:[%s1385 + $0xa90] sm:$0xff]
    %v1725 = vld [vmem:[%s1385 + $0xa98] sm:$0xff]
    %v1726 = vld [vmem:[%s1385 + $0xaa0] sm:$0xff]
    %v1727 = vld [vmem:[%s1385 + $0xaa8] sm:$0xff]
    %v1728 = vld [vmem:[%s1385 + $0xab0] sm:$0xff]
    %v1729 = vld [vmem:[%s1385 + $0xab8] sm:$0xff]
    %v1730 = vld [vmem:[%s1385 + $0xac0] sm:$0xff]
    %v1731 = vld [vmem:[%s1385 + $0xac8] sm:$0xff]
    %v1732 = vld [vmem:[%s1385 + $0xad0] sm:$0xff]
    %v1733 = vld [vmem:[%s1385 + $0xad8] sm:$0xff]
    %v1734 = vld [vmem:[%s1385 + $0xae0] sm:$0xff]
    %v1735 = vld [vmem:[%s1385 + $0xae8] sm:$0xff]
    %v1736 = vld [vmem:[%s1385 + $0xaf0] sm:$0xff]
    %v1737 = vld [vmem:[%s1385 + $0xaf8] sm:$0xff]
    %v1738 = vld [vmem:[%s1385 + $0xb00] sm:$0xff]
    %v1739 = vld [vmem:[%s1385 + $0xb08] sm:$0xff]
    %v1740 = vld [vmem:[%s1385 + $0xb10] sm:$0xff]
    %v1741 = vld [vmem:[%s1385 + $0xb18] sm:$0xff]
    %v1742 = vld [vmem:[%s1385 + $0xb20] sm:$0xff]
    %v1743 = vld [vmem:[%s1385 + $0xb28] sm:$0xff]
    %v1744 = vld [vmem:[%s1385 + $0xb30] sm:$0xff]
    %v1745 = vld [vmem:[%s1385 + $0xb38] sm:$0xff]
    %v1746 = vld [vmem:[%s1385 + $0xb40] sm:$0xff]
    %v1747 = vld [vmem:[%s1385 + $0xb48] sm:$0xff]
    %v1748 = vld [vmem:[%s1385 + $0xb50] sm:$0xff]
    %v1749 = vld [vmem:[%s1385 + $0xb58] sm:$0xff]
    %v1750 = vld [vmem:[%s1385 + $0xb60] sm:$0xff]
    %v1751 = vld [vmem:[%s1385 + $0xb68] sm:$0xff]
    %v1752 = vld [vmem:[%s1385 + $0xb70] sm:$0xff]
    %v1753 = vld [vmem:[%s1385 + $0xb78] sm:$0xff]
    %v1754 = vld [vmem:[%s1385 + $0xb80] sm:$0xff]
    %v1755 = vld [vmem:[%s1385 + $0xb88] sm:$0xff]
    %v1756 = vld [vmem:[%s1385 + $0xb90] sm:$0xff]
    %v1757 = vld [vmem:[%s1385 + $0xb98] sm:$0xff]
    %v1758 = vld [vmem:[%s1385 + $0xba0] sm:$0xff]
    %v1759 = vld [vmem:[%s1385 + $0xba8] sm:$0xff]
    %v1760 = vld [vmem:[%s1385 + $0xbb0] sm:$0xff]
    %v1761 = vld [vmem:[%s1385 + $0xbb8] sm:$0xff]
    %v1762 = vld [vmem:[%s1385 + $0xbc0] sm:$0xff]
    %v1763 = vld [vmem:[%s1385 + $0xbc8] sm:$0xff]
    %v1764 = vld [vmem:[%s1385 + $0xbd0] sm:$0xff]
    %v1765 = vld [vmem:[%s1385 + $0xbd8] sm:$0xff]
    %v1766 = vld [vmem:[%s1385 + $0xbe0] sm:$0xff]
    %v1767 = vld [vmem:[%s1385 + $0xbe8] sm:$0xff]
    %v1768 = vld [vmem:[%s1385 + $0xbf0] sm:$0xff]
    %v1769 = vld [vmem:[%s1385 + $0xbf8] sm:$0xff]
    %v1770 = vld [vmem:[%s1385 + $0xc00] sm:$0xff]
    %v1771 = vld [vmem:[%s1385 + $0xc08] sm:$0xff]
    %v1772 = vld [vmem:[%s1385 + $0xc10] sm:$0xff]
    %v1773 = vld [vmem:[%s1385 + $0xc18] sm:$0xff]
    %v1774 = vld [vmem:[%s1385 + $0xc20] sm:$0xff]
    %v1775 = vld [vmem:[%s1385 + $0xc28] sm:$0xff]
    %v1776 = vld [vmem:[%s1385 + $0xc30] sm:$0xff]
    %v1777 = vld [vmem:[%s1385 + $0xc38] sm:$0xff]
    %v1778 = vld [vmem:[%s1385 + $0xc40] sm:$0xff]
    %v1779 = vld [vmem:[%s1385 + $0xc48] sm:$0xff]
    %v1780 = vld [vmem:[%s1385 + $0xc50] sm:$0xff]
    %v1781 = vld [vmem:[%s1385 + $0xc58] sm:$0xff]
    %v1782 = vld [vmem:[%s1385 + $0xc60] sm:$0xff]
    %v1783 = vld [vmem:[%s1385 + $0xc68] sm:$0xff]
    %v1784 = vld [vmem:[%s1385 + $0xc70] sm:$0xff]
    %v1785 = vld [vmem:[%s1385 + $0xc78] sm:$0xff]
    %v1786 = vld [vmem:[%s1385 + $0xc80] sm:$0xff]
    %v1787 = vld [vmem:[%s1385 + $0xc88] sm:$0xff]
    %v1788 = vld [vmem:[%s1385 + $0xc90] sm:$0xff]
    %v1789 = vld [vmem:[%s1385 + $0xc98] sm:$0xff]
    %v1790 = vld [vmem:[%s1385 + $0xca0] sm:$0xff]
    %v1791 = vld [vmem:[%s1385 + $0xca8] sm:$0xff]
    %v1792 = vld [vmem:[%s1385 + $0xcb0] sm:$0xff]
    %v1793 = vld [vmem:[%s1385 + $0xcb8] sm:$0xff]
    %v1794 = vld [vmem:[%s1385 + $0xcc0] sm:$0xff]
    %v1795 = vld [vmem:[%s1385 + $0xcc8] sm:$0xff]
    %v1796 = vld [vmem:[%s1385 + $0xcd0] sm:$0xff]
    %v1797 = vld [vmem:[%s1385 + $0xcd8] sm:$0xff]
    %v1798 = vld [vmem:[%s1385 + $0xce0] sm:$0xff]
    %v1799 = vld [vmem:[%s1385 + $0xce8] sm:$0xff]
    %v1800 = vld [vmem:[%s1385 + $0xcf0] sm:$0xff]
    %v1801 = vld [vmem:[%s1385 + $0xcf8] sm:$0xff]
    %v1802 = vld [vmem:[%s1385 + $0xd00] sm:$0xff]
    %v1803 = vld [vmem:[%s1385 + $0xd08] sm:$0xff]
    %v1804 = vld [vmem:[%s1385 + $0xd10] sm:$0xff]
    %v1805 = vld [vmem:[%s1385 + $0xd18] sm:$0xff]
    %v1806 = vld [vmem:[%s1385 + $0xd20] sm:$0xff]
    %v1807 = vld [vmem:[%s1385 + $0xd28] sm:$0xff]
    %v1808 = vld [vmem:[%s1385 + $0xd30] sm:$0xff]
    %v1809 = vld [vmem:[%s1385 + $0xd38] sm:$0xff]
    %v1810 = vld [vmem:[%s1385 + $0xd40] sm:$0xff]
    %v1811 = vld [vmem:[%s1385 + $0xd48] sm:$0xff]
    %v1812 = vld [vmem:[%s1385 + $0xd50] sm:$0xff]
    %v1813 = vld [vmem:[%s1385 + $0xd58] sm:$0xff]
    %v1814 = vld [vmem:[%s1385 + $0xd60] sm:$0xff]
    %v1815 = vld [vmem:[%s1385 + $0xd68] sm:$0xff]
    %v1816 = vld [vmem:[%s1385 + $0xd70] sm:$0xff]
    %v1817 = vld [vmem:[%s1385 + $0xd78] sm:$0xff]
    %v1818 = vld [vmem:[%s1385 + $0xd80] sm:$0xff]
    %v1819 = vld [vmem:[%s1385 + $0xd88] sm:$0xff]
    %v1820 = vld [vmem:[%s1385 + $0xd90] sm:$0xff]
    %v1821 = vld [vmem:[%s1385 + $0xd98] sm:$0xff]
    %v1822 = vld [vmem:[%s1385 + $0xda0] sm:$0xff]
    %v1823 = vld [vmem:[%s1385 + $0xda8] sm:$0xff]
    %v1824 = vld [vmem:[%s1385 + $0xdb0] sm:$0xff]
    %v1825 = vld [vmem:[%s1385 + $0xdb8] sm:$0xff]
    %v1826 = vld [vmem:[%s1385 + $0xdc0] sm:$0xff]
    %v1827 = vld [vmem:[%s1385 + $0xdc8] sm:$0xff]
    %v1828 = vld [vmem:[%s1385 + $0xdd0] sm:$0xff]
    %v1829 = vld [vmem:[%s1385 + $0xdd8] sm:$0xff]
    %v1830 = vld [vmem:[%s1385 + $0xde0] sm:$0xff]
    %v1831 = vld [vmem:[%s1385 + $0xde8] sm:$0xff]
    %v1832 = vld [vmem:[%s1385 + $0xdf0] sm:$0xff]
    %v1833 = vld [vmem:[%s1385 + $0xdf8] sm:$0xff]
    %v1834 = vld [vmem:[%s1385 + $0xe00] sm:$0xff]
    %v1835 = vld [vmem:[%s1385 + $0xe08] sm:$0xff]
    %v1836 = vld [vmem:[%s1385 + $0xe10] sm:$0xff]
    %v1837 = vld [vmem:[%s1385 + $0xe18] sm:$0xff]
    %v1838 = vld [vmem:[%s1385 + $0xe20] sm:$0xff]
    %v1839 = vld [vmem:[%s1385 + $0xe28] sm:$0xff]
    %v1840 = vld [vmem:[%s1385 + $0xe30] sm:$0xff]
    %v1841 = vld [vmem:[%s1385 + $0xe38] sm:$0xff]
    %v1842 = vld [vmem:[%s1385 + $0xe40] sm:$0xff]
    %v1843 = vld [vmem:[%s1385 + $0xe48] sm:$0xff]
    %v1844 = vld [vmem:[%s1385 + $0xe50] sm:$0xff]
    %v1845 = vld [vmem:[%s1385 + $0xe58] sm:$0xff]
    %v1846 = vld [vmem:[%s1385 + $0xe60] sm:$0xff]
    %v1847 = vld [vmem:[%s1385 + $0xe68] sm:$0xff]
    %v1848 = vld [vmem:[%s1385 + $0xe70] sm:$0xff]
    %v1849 = vld [vmem:[%s1385 + $0xe78] sm:$0xff]
    %v1850 = vld [vmem:[%s1385 + $0xe80] sm:$0xff]
    %v1851 = vld [vmem:[%s1385 + $0xe88] sm:$0xff]
    %v1852 = vld [vmem:[%s1385 + $0xe90] sm:$0xff]
    %v1853 = vld [vmem:[%s1385 + $0xe98] sm:$0xff]
    %v1854 = vld [vmem:[%s1385 + $0xea0] sm:$0xff]
    %v1855 = vld [vmem:[%s1385 + $0xea8] sm:$0xff]
    %v1856 = vld [vmem:[%s1385 + $0xeb0] sm:$0xff]
    %v1857 = vld [vmem:[%s1385 + $0xeb8] sm:$0xff]
    %v1858 = vld [vmem:[%s1385 + $0xec0] sm:$0xff]
    %v1859 = vld [vmem:[%s1385 + $0xec8] sm:$0xff]
    %v1860 = vld [vmem:[%s1385 + $0xed0] sm:$0xff]
    %v1861 = vld [vmem:[%s1385 + $0xed8] sm:$0xff]
    %v1862 = vld [vmem:[%s1385 + $0xee0] sm:$0xff]
    %v1863 = vld [vmem:[%s1385 + $0xee8] sm:$0xff]
    %v1864 = vld [vmem:[%s1385 + $0xef0] sm:$0xff]
    %v1865 = vld [vmem:[%s1385 + $0xef8] sm:$0xff]
    %v1866 = vld [vmem:[%s1385 + $0xf00] sm:$0xff]
    %v1867 = vld [vmem:[%s1385 + $0xf08] sm:$0xff]
    %v1868 = vld [vmem:[%s1385 + $0xf10] sm:$0xff]
    %v1869 = vld [vmem:[%s1385 + $0xf18] sm:$0xff]
    %v1870 = vld [vmem:[%s1385 + $0xf20] sm:$0xff]
    %v1871 = vld [vmem:[%s1385 + $0xf28] sm:$0xff]
    %v1872 = vld [vmem:[%s1385 + $0xf30] sm:$0xff]
    %v1873 = vld [vmem:[%s1385 + $0xf38] sm:$0xff]
    %v1874 = vld [vmem:[%s1385 + $0xf40] sm:$0xff]
    %v1875 = vld [vmem:[%s1385 + $0xf48] sm:$0xff]
    %v1876 = vld [vmem:[%s1385 + $0xf50] sm:$0xff]
    %v1877 = vld [vmem:[%s1385 + $0xf58] sm:$0xff]
    %v1878 = vld [vmem:[%s1385 + $0xf60] sm:$0xff]
    %v1879 = vld [vmem:[%s1385 + $0xf68] sm:$0xff]
    %v1880 = vld [vmem:[%s1385 + $0xf70] sm:$0xff]
    %v1881 = vld [vmem:[%s1385 + $0xf78] sm:$0xff]
    %v1882 = vld [vmem:[%s1385 + $0xf80] sm:$0xff]
    %v1883 = vld [vmem:[%s1385 + $0xf88] sm:$0xff]
    %v1884 = vld [vmem:[%s1385 + $0xf90] sm:$0xff]
    %v1885 = vld [vmem:[%s1385 + $0xf98] sm:$0xff]
    %v1886 = vld [vmem:[%s1385 + $0xfa0] sm:$0xff]
    %v1887 = vld [vmem:[%s1385 + $0xfa8] sm:$0xff]
    %v1888 = vld [vmem:[%s1385 + $0xfb0] sm:$0xff]
    %v1889 = vld [vmem:[%s1385 + $0xfb8] sm:$0xff]
    %v1890 = vld [vmem:[%s1385 + $0xfc0] sm:$0xff]
    %v1891 = vld [vmem:[%s1385 + $0xfc8] sm:$0xff]
    %v1892 = vld [vmem:[%s1385 + $0xfd0] sm:$0xff]
    %v1893 = vld [vmem:[%s1385 + $0xfd8] sm:$0xff]
    %v1894 = vld [vmem:[%s1385 + $0xfe0] sm:$0xff]
    %v1895 = vld [vmem:[%s1385 + $0xfe8] sm:$0xff]
    %v1896 = vld [vmem:[%s1385 + $0xff0] sm:$0xff]
    %v1897 = vld [vmem:[%s1385 + $0xff8] sm:$0xff]
    %v1898 = vld [vmem:[%s1385 + $0x1000] sm:$0xff]
    %v1899 = vld [vmem:[%s1385 + $0x1008] sm:$0xff]
    %v1900 = vld [vmem:[%s1385 + $0x1010] sm:$0xff]
    %v1901 = vld [vmem:[%s1385 + $0x1018] sm:$0xff]
    %v1902 = vld [vmem:[%s1385 + $0x1020] sm:$0xff]
    %v1903 = vld [vmem:[%s1385 + $0x1028] sm:$0xff]
    %v1904 = vld [vmem:[%s1385 + $0x1030] sm:$0xff]
    %v1905 = vld [vmem:[%s1385 + $0x1038] sm:$0xff]
    %v1906 = vld [vmem:[%s1385 + $0x1040] sm:$0xff]
    %v1907 = vld [vmem:[%s1385 + $0x1048] sm:$0xff]
    %v1908 = vld [vmem:[%s1385 + $0x1050] sm:$0xff]
    %v1909 = vld [vmem:[%s1385 + $0x1058] sm:$0xff]
    %v1910 = vld [vmem:[%s1385 + $0x1060] sm:$0xff]
    %v1911 = vld [vmem:[%s1385 + $0x1068] sm:$0xff]
    %v1912 = vld [vmem:[%s1385 + $0x1070] sm:$0xff]
    %v1913 = vld [vmem:[%s1385 + $0x1078] sm:$0xff]
    %v1914 = vld [vmem:[%s1385 + $0x1080] sm:$0xff]
    %v1915 = vld [vmem:[%s1385 + $0x1088] sm:$0xff]
    %v1916 = vld [vmem:[%s1385 + $0x1090] sm:$0xff]
    %v1917 = vld [vmem:[%s1385 + $0x1098] sm:$0xff]
    %v1918 = vld [vmem:[%s1385 + $0x10a0] sm:$0xff]
    %v1919 = vld [vmem:[%s1385 + $0x10a8] sm:$0xff]
    %v1920 = vld [vmem:[%s1385 + $0x10b0] sm:$0xff]
    %v1921 = vld [vmem:[%s1385 + $0x10b8] sm:$0xff]
    %v1922 = vld [vmem:[%s1385 + $0x10c0] sm:$0xff]
    %v1923 = vld [vmem:[%s1385 + $0x10c8] sm:$0xff]
    %v1924 = vld [vmem:[%s1385 + $0x10d0] sm:$0xff]
    %v1925 = vld [vmem:[%s1385 + $0x10d8] sm:$0xff]
    %v1926 = vld [vmem:[%s1385 + $0x10e0] sm:$0xff]
    %v1927 = vld [vmem:[%s1385 + $0x10e8] sm:$0xff]
    %v1928 = vld [vmem:[%s1385 + $0x10f0] sm:$0xff]
    %v1929 = vld [vmem:[%s1385 + $0x10f8] sm:$0xff]
    %v1930 = vld [vmem:[%s1385 + $0x1100] sm:$0xff]
    %v1931 = vld [vmem:[%s1385 + $0x1108] sm:$0xff]
    %v1932 = vld [vmem:[%s1385 + $0x1110] sm:$0xff]
    %v1933 = vld [vmem:[%s1385 + $0x1118] sm:$0xff]
    %v1934 = vld [vmem:[%s1385 + $0x1120] sm:$0xff]
    %v1935 = vld [vmem:[%s1385 + $0x1128] sm:$0xff]
    %v1936 = vld [vmem:[%s1385 + $0x1130] sm:$0xff]
    %v1937 = vld [vmem:[%s1385 + $0x1138] sm:$0xff]
    %v1938 = vld [vmem:[%s1385 + $0x1140] sm:$0xff]
    %v1939 = vld [vmem:[%s1385 + $0x1148] sm:$0xff]
    %v1940 = vld [vmem:[%s1385 + $0x1150] sm:$0xff]
    %v1941 = vld [vmem:[%s1385 + $0x1158] sm:$0xff]
    %v1942 = vld [vmem:[%s1385 + $0x1160] sm:$0xff]
    %v1943 = vld [vmem:[%s1385 + $0x1168] sm:$0xff]
    %v1944 = vld [vmem:[%s1385 + $0x1170] sm:$0xff]
    %v1945 = vld [vmem:[%s1385 + $0x1178] sm:$0xff]
    %v1946 = vld [vmem:[%s1385 + $0x1180] sm:$0xff]
    %v1947 = vld [vmem:[%s1385 + $0x1188] sm:$0xff]
    %v1948 = vld [vmem:[%s1385 + $0x1190] sm:$0xff]
    %v1949 = vld [vmem:[%s1385 + $0x1198] sm:$0xff]
    %v1950 = vld [vmem:[%s1385 + $0x11a0] sm:$0xff]
    %v1951 = vld [vmem:[%s1385 + $0x11a8] sm:$0xff]
    %v1952 = vld [vmem:[%s1385 + $0x11b0] sm:$0xff]
    %v1953 = vld [vmem:[%s1385 + $0x11b8] sm:$0xff]
    %v1954 = vld [vmem:[%s1385 + $0x11c0] sm:$0xff]
    %v1955 = vld [vmem:[%s1385 + $0x11c8] sm:$0xff]
    %v1956 = vld [vmem:[%s1385 + $0x11d0] sm:$0xff]
    %v1957 = vld [vmem:[%s1385 + $0x11d8] sm:$0xff]
    %v1958 = vld [vmem:[%s1385 + $0x11e0] sm:$0xff]
    %v1959 = vld [vmem:[%s1385 + $0x11e8] sm:$0xff]
    %v1960 = vld [vmem:[%s1385 + $0x11f0] sm:$0xff]
    %v1961 = vld [vmem:[%s1385 + $0x11f8] sm:$0xff]
    %v1962 = vld [vmem:[%s1385 + $0x1200] sm:$0xff]
    %v1963 = vld [vmem:[%s1385 + $0x1208] sm:$0xff]
    %v1964 = vld [vmem:[%s1385 + $0x1210] sm:$0xff]
    %v1965 = vld [vmem:[%s1385 + $0x1218] sm:$0xff]
    %v1966 = vld [vmem:[%s1385 + $0x1220] sm:$0xff]
    %v1967 = vld [vmem:[%s1385 + $0x1228] sm:$0xff]
    %v1968 = vld [vmem:[%s1385 + $0x1230] sm:$0xff]
    %v1969 = vld [vmem:[%s1385 + $0x1238] sm:$0xff]
    %v1970 = vld [vmem:[%s1385 + $0x1240] sm:$0xff]
    %v1971 = vld [vmem:[%s1385 + $0x1248] sm:$0xff]
    %v1972 = vld [vmem:[%s1385 + $0x1250] sm:$0xff]
    %v1973 = vld [vmem:[%s1385 + $0x1258] sm:$0xff]
    %1974 = vmatprep.subr.mxu0 %v1387
    %1975 = vmatpush1.msra.mxu0 %v1386
    %1976 = vmatprep.subr.mxu0 %v1391
    %1977 = vmatpush1.msra.mxu0 %v1390
    %1978 = vmatprep.subr.mxu0 %v1395
    %1979 = vmatpush1.msra.mxu0 %v1394
    %1980 = vmatprep.subr.mxu0 %v1399
    %1981 = vmatpush1.msra.mxu0 %v1398
    %1982 = vmatprep.subr.mxu0 %v1403
    %1983 = vmatpush1.msra.mxu0 %v1402
    %1984 = vmatprep.subr.mxu0 %v1407
    %1985 = vmatpush1.msra.mxu0 %v1406
    %1986 = vmatprep.subr.mxu0 %v1411
    %1987 = vmatpush1.msra.mxu0 %v1410
    %1988 = vmatprep.subr.mxu0 %v1415
    %1989 = vmatpush1.msra.mxu0 %v1414
    %1990 = vmatprep.subr.mxu0 %v1419
    %1991 = vmatpush1.msra.mxu0 %v1418
    %1992 = vmatprep.subr.mxu0 %v1423
    %1993 = vmatpush1.msra.mxu0 %v1422
    %1994 = vmatprep.subr.mxu0 %v1427
    %1995 = vmatpush1.msra.mxu0 %v1426
    %1996 = vmatprep.subr.mxu0 %v1431
    %1997 = vmatpush1.msra.mxu0 %v1430
    %1998 = vmatprep.subr.mxu0 %v1435
    %1999 = vmatpush1.msra.mxu0 %v1434
    %2000 = vmatprep.subr.mxu0 %v1439
    %2001 = vmatpush1.msra.mxu0 %v1438
    %2002 = vmatprep.subr.mxu0 %v1443
    %2003 = vmatpush1.msra.mxu0 %v1442
    %2004 = vmatprep.subr.mxu0 %v1447
    %2005 = vmatpush1.msra.mxu0 %v1446
    %2006 = vmatprep.subr.mxu0 %v1451
    %2007 = vmatpush1.msra.mxu0 %v1450
    %2008 = vmatprep.subr.mxu0 %v1455
    %2009 = vmatpush1.msra.mxu0 %v1454
    %2010 = vmatprep.subr.mxu0 %v1459
    %2011 = vmatpush1.msra.mxu0 %v1458
    %2012 = vmatprep.subr.mxu0 %v1463
    %2013 = vmatpush1.msra.mxu0 %v1462
    %2014 = vmatprep.subr.mxu0 %v1467
    %2015 = vmatpush1.msra.mxu0 %v1466
    %2016 = vmatprep.subr.mxu0 %v1471
    %2017 = vmatpush1.msra.mxu0 %v1470
    %2018 = vmatprep.subr.mxu0 %v1475
    %2019 = vmatpush1.msra.mxu0 %v1474
    %2020 = vmatprep.subr.mxu0 %v1479
    %2021 = vmatpush1.msra.mxu0 %v1478
    %2022 = vmatprep.subr.mxu0 %v1483
    %2023 = vmatpush1.msra.mxu0 %v1482
    %2024 = vmatprep.subr.mxu0 %v1487
    %2025 = vmatpush1.msra.mxu0 %v1486
    %2026 = vmatprep.subr.mxu0 %v1491
    %2027 = vmatpush1.msra.mxu0 %v1490
    %2028 = vmatprep.subr.mxu0 %v1495
    %2029 = vmatpush1.msra.mxu0 %v1494
    %2030 = vmatprep.subr.mxu0 %v1499
    %2031 = vmatpush1.msra.mxu0 %v1498
    %2032 = vmatprep.subr.mxu0 %v1503
    %2033 = vmatpush1.msra.mxu0 %v1502
    %2034 = vmatprep.subr.mxu0 %v1507
    %2035 = vmatpush1.msra.mxu0 %v1506
    %2036 = vmatprep.subr.mxu0 %v1511
    %2037 = vmatpush1.msra.mxu0 %v1510
    %2038 = vmatprep.mubr.f32.mxu0 %v636
    %2039 = vmatmul.mubr.f32.gmra.mrb[0].mxu0 %v628
    %v2040 = vpop.f32.mrb[0].mxu0
    %v2041 = vadd.f32 0.0, %v2040
    %v2042 = vpop.f32.mrb[0].mxu0
    %v2043 = vadd.f32 0.0, %v2042
    %2044 = vdwg.mxu0
    %2045 = vmatprep.subr.mxu0 %v1515
    %2046 = vmatpush1.msra.mxu0 %v1514
    %2047 = vmatprep.subr.mxu0 %v1519
    %2048 = vmatpush1.msra.mxu0 %v1518
    %2049 = vmatprep.subr.mxu0 %v1523
    %2050 = vmatpush1.msra.mxu0 %v1522
    %2051 = vmatprep.subr.mxu0 %v1527
    %2052 = vmatpush1.msra.mxu0 %v1526
    %2053 = vmatprep.subr.mxu0 %v1531
    %2054 = vmatpush1.msra.mxu0 %v1530
    %2055 = vmatprep.subr.mxu0 %v1535
    %2056 = vmatpush1.msra.mxu0 %v1534
    %2057 = vmatprep.subr.mxu0 %v1539
    %2058 = vmatpush1.msra.mxu0 %v1538
    %2059 = vmatprep.subr.mxu0 %v1543
    %2060 = vmatpush1.msra.mxu0 %v1542
    %2061 = vmatprep.subr.mxu0 %v1547
    %2062 = vmatpush1.msra.mxu0 %v1546
    %2063 = vmatprep.subr.mxu0 %v1551
    %2064 = vmatpush1.msra.mxu0 %v1550
    %2065 = vmatprep.subr.mxu0 %v1555
    %2066 = vmatpush1.msra.mxu0 %v1554
    %2067 = vmatprep.subr.mxu0 %v1559
    %2068 = vmatpush1.msra.mxu0 %v1558
    %2069 = vmatprep.subr.mxu0 %v1563
    %2070 = vmatpush1.msra.mxu0 %v1562
    %2071 = vmatprep.subr.mxu0 %v1567
    %2072 = vmatpush1.msra.mxu0 %v1566
    %2073 = vmatprep.subr.mxu0 %v1571
    %2074 = vmatpush1.msra.mxu0 %v1570
    %2075 = vmatprep.subr.mxu0 %v1575
    %2076 = vmatpush1.msra.mxu0 %v1574
    %2077 = vmatprep.subr.mxu0 %v1579
    %2078 = vmatpush1.msra.mxu0 %v1578
    %2079 = vmatprep.subr.mxu0 %v1583
    %2080 = vmatpush1.msra.mxu0 %v1582
    %2081 = vmatprep.subr.mxu0 %v1587
    %2082 = vmatpush1.msra.mxu0 %v1586
    %2083 = vmatprep.subr.mxu0 %v1591
    %2084 = vmatpush1.msra.mxu0 %v1590
    %2085 = vmatprep.subr.mxu0 %v1595
    %2086 = vmatpush1.msra.mxu0 %v1594
    %2087 = vmatprep.subr.mxu0 %v1599
    %2088 = vmatpush1.msra.mxu0 %v1598
    %2089 = vmatprep.subr.mxu0 %v1603
    %2090 = vmatpush1.msra.mxu0 %v1602
    %2091 = vmatprep.subr.mxu0 %v1607
    %2092 = vmatpush1.msra.mxu0 %v1606
    %2093 = vmatprep.subr.mxu0 %v1611
    %2094 = vmatpush1.msra.mxu0 %v1610
    %2095 = vmatprep.subr.mxu0 %v1615
    %2096 = vmatpush1.msra.mxu0 %v1614
    %2097 = vmatprep.subr.mxu0 %v1619
    %2098 = vmatpush1.msra.mxu0 %v1618
    %2099 = vmatprep.subr.mxu0 %v1623
    %2100 = vmatpush1.msra.mxu0 %v1622
    %2101 = vmatprep.subr.mxu0 %v1627
    %2102 = vmatpush1.msra.mxu0 %v1626
    %2103 = vmatprep.subr.mxu0 %v1631
    %2104 = vmatpush1.msra.mxu0 %v1630
    %2105 = vmatprep.subr.mxu0 %v1635
    %2106 = vmatpush1.msra.mxu0 %v1634
    %2107 = vmatprep.subr.mxu0 %v1639
    %2108 = vmatpush1.msra.mxu0 %v1638
    %2109 = vmatprep.mubr.f32.mxu0 %v637
    %2110 = vmatmul.mubr.f32.gmra.mrb[0].mxu0 %v635
    %v2111 = vpop.f32.mrb[0].mxu0
    %v2112 = vadd.f32 %v2041, %v2111
    %v2113 = vpop.f32.mrb[0].mxu0
    %v2114 = vadd.f32 %v2043, %v2113
    %2115 = vdwg.mxu0
    %2116 = vmatprep.subr.mxu0 %v1643
    %2117 = vmatpush1.msra.mxu0 %v1642
    %2118 = vmatprep.subr.mxu0 %v1647
    %2119 = vmatpush1.msra.mxu0 %v1646
    %2120 = vmatprep.subr.mxu0 %v1651
    %2121 = vmatpush1.msra.mxu0 %v1650
    %2122 = vmatprep.subr.mxu0 %v1655
    %2123 = vmatpush1.msra.mxu0 %v1654
    %2124 = vmatprep.subr.mxu0 %v1659
    %2125 = vmatpush1.msra.mxu0 %v1658
    %2126 = vmatprep.subr.mxu0 %v1663
    %2127 = vmatpush1.msra.mxu0 %v1662
    %2128 = vmatprep.subr.mxu0 %v1667
    %2129 = vmatpush1.msra.mxu0 %v1666
    %2130 = vmatprep.subr.mxu0 %v1671
    %2131 = vmatpush1.msra.mxu0 %v1670
    %2132 = vmatprep.subr.mxu0 %v1675
    %2133 = vmatpush1.msra.mxu0 %v1674
    %2134 = vmatprep.subr.mxu0 %v1679
    %2135 = vmatpush1.msra.mxu0 %v1678
    %2136 = vmatprep.subr.mxu0 %v1683
    %2137 = vmatpush1.msra.mxu0 %v1682
    %2138 = vmatprep.subr.mxu0 %v1687
    %2139 = vmatpush1.msra.mxu0 %v1686
    %2140 = vmatprep.subr.mxu0 %v1691
    %2141 = vmatpush1.msra.mxu0 %v1690
    %2142 = vmatprep.subr.mxu0 %v1695
    %2143 = vmatpush1.msra.mxu0 %v1694
    %2144 = vmatprep.subr.mxu0 %v1699
    %2145 = vmatpush1.msra.mxu0 %v1698
    %2146 = vmatprep.subr.mxu0 %v1703
    %2147 = vmatpush1.msra.mxu0 %v1702
    %2148 = vmatprep.subr.mxu0 %v1707
    %2149 = vmatpush1.msra.mxu0 %v1706
    %2150 = vmatprep.subr.mxu0 %v1711
    %2151 = vmatpush1.msra.mxu0 %v1710
    %2152 = vmatprep.subr.mxu0 %v1715
    %2153 = vmatpush1.msra.mxu0 %v1714
    %2154 = vmatprep.subr.mxu0 %v1719
    %2155 = vmatpush1.msra.mxu0 %v1718
    %2156 = vmatprep.subr.mxu0 %v1723
    %2157 = vmatpush1.msra.mxu0 %v1722
    %2158 = vmatprep.subr.mxu0 %v1727
    %2159 = vmatpush1.msra.mxu0 %v1726
    %2160 = vmatprep.subr.mxu0 %v1731
    %2161 = vmatpush1.msra.mxu0 %v1730
    %2162 = vmatprep.subr.mxu0 %v1735
    %2163 = vmatpush1.msra.mxu0 %v1734
    %2164 = vmatprep.subr.mxu0 %v1739
    %2165 = vmatpush1.msra.mxu0 %v1738
    %2166 = vmatprep.subr.mxu0 %v1743
    %2167 = vmatpush1.msra.mxu0 %v1742
    %2168 = vmatprep.subr.mxu0 %v1747
    %2169 = vmatpush1.msra.mxu0 %v1746
    %2170 = vmatprep.subr.mxu0 %v1751
    %2171 = vmatpush1.msra.mxu0 %v1750
    %2172 = vmatprep.subr.mxu0 %v1755
    %2173 = vmatpush1.msra.mxu0 %v1754
    %2174 = vmatprep.subr.mxu0 %v1759
    %2175 = vmatpush1.msra.mxu0 %v1758
    %2176 = vmatprep.subr.mxu0 %v1763
    %2177 = vmatpush1.msra.mxu0 %v1762
    %2178 = vmatprep.subr.mxu0 %v1767
    %2179 = vmatpush1.msra.mxu0 %v1766
    %2180 = vmatprep.mubr.f32.mxu0 %v653
    %2181 = vmatmul.mubr.f32.gmra.mrb[0].mxu0 %v645
    %v2182 = vpop.f32.mrb[0].mxu0
    %v2183 = vadd.f32 %v2112, %v2182
    %v2184 = vpop.f32.mrb[0].mxu0
    %v2185 = vadd.f32 %v2114, %v2184
    %2186 = vdwg.mxu0
    %2187 = vmatprep.subr.mxu0 %v1771
    %2188 = vmatpush1.msra.mxu0 %v1770
    %2189 = vmatprep.subr.mxu0 %v1775
    %2190 = vmatpush1.msra.mxu0 %v1774
    %2191 = vmatprep.subr.mxu0 %v1779
    %2192 = vmatpush1.msra.mxu0 %v1778
    %2193 = vmatprep.subr.mxu0 %v1783
    %2194 = vmatpush1.msra.mxu0 %v1782
    %2195 = vmatprep.subr.mxu0 %v1787
    %2196 = vmatpush1.msra.mxu0 %v1786
    %2197 = vmatprep.subr.mxu0 %v1791
    %2198 = vmatpush1.msra.mxu0 %v1790
    %2199 = vmatprep.subr.mxu0 %v1795
    %2200 = vmatpush1.msra.mxu0 %v1794
    %2201 = vmatprep.subr.mxu0 %v1799
    %2202 = vmatpush1.msra.mxu0 %v1798
    %2203 = vmatprep.subr.mxu0 %v1803
    %2204 = vmatpush1.msra.mxu0 %v1802
    %2205 = vmatprep.subr.mxu0 %v1807
    %2206 = vmatpush1.msra.mxu0 %v1806
    %2207 = vmatprep.subr.mxu0 %v1811
    %2208 = vmatpush1.msra.mxu0 %v1810
    %2209 = vmatprep.subr.mxu0 %v1815
    %2210 = vmatpush1.msra.mxu0 %v1814
    %2211 = vmatprep.subr.mxu0 %v1819
    %2212 = vmatpush1.msra.mxu0 %v1818
    %2213 = vmatprep.subr.mxu0 %v1823
    %2214 = vmatpush1.msra.mxu0 %v1822
    %2215 = vmatprep.subr.mxu0 %v1827
    %2216 = vmatpush1.msra.mxu0 %v1826
    %2217 = vmatprep.subr.mxu0 %v1831
    %2218 = vmatpush1.msra.mxu0 %v1830
    %2219 = vmatprep.subr.mxu0 %v1835
    %2220 = vmatpush1.msra.mxu0 %v1834
    %2221 = vmatprep.subr.mxu0 %v1839
    %2222 = vmatpush1.msra.mxu0 %v1838
    %2223 = vmatprep.subr.mxu0 %v1843
    %2224 = vmatpush1.msra.mxu0 %v1842
    %2225 = vmatprep.subr.mxu0 %v1847
    %2226 = vmatpush1.msra.mxu0 %v1846
    %2227 = vmatprep.subr.mxu0 %v1851
    %2228 = vmatpush1.msra.mxu0 %v1850
    %2229 = vmatprep.subr.mxu0 %v1855
    %2230 = vmatpush1.msra.mxu0 %v1854
    %2231 = vmatprep.subr.mxu0 %v1859
    %2232 = vmatpush1.msra.mxu0 %v1858
    %2233 = vmatprep.subr.mxu0 %v1863
    %2234 = vmatpush1.msra.mxu0 %v1862
    %2235 = vmatprep.subr.mxu0 %v1867
    %2236 = vmatpush1.msra.mxu0 %v1866
    %2237 = vmatprep.subr.mxu0 %v1871
    %2238 = vmatpush1.msra.mxu0 %v1870
    %2239 = vmatprep.subr.mxu0 %v1875
    %2240 = vmatpush1.msra.mxu0 %v1874
    %2241 = vmatprep.subr.mxu0 %v1879
    %2242 = vmatpush1.msra.mxu0 %v1878
    %2243 = vmatprep.subr.mxu0 %v1883
    %2244 = vmatpush1.msra.mxu0 %v1882
    %2245 = vmatprep.subr.mxu0 %v1887
    %2246 = vmatpush1.msra.mxu0 %v1886
    %2247 = vmatprep.subr.mxu0 %v1891
    %2248 = vmatpush1.msra.mxu0 %v1890
    %2249 = vmatprep.subr.mxu0 %v1895
    %2250 = vmatpush1.msra.mxu0 %v1894
    %2251 = vmatprep.mubr.f32.mxu0 %v654
    %2252 = vmatmul.mubr.f32.gmra.mrb[0].mxu0 %v652
    %v2253 = vpop.f32.mrb[0].mxu0
    %v2254 = vadd.f32 %v2183, %v2253
    %v2255 = vpop.f32.mrb[0].mxu0
    %v2256 = vadd.f32 %v2185, %v2255
    %2257 = vdwg.mxu0
    %2258 = vmatprep.subr.mxu0 %v1899
    %2259 = vmatpush1.msra.mxu0 %v1898
    %2260 = vmatprep.subr.mxu0 %v1903
    %2261 = vmatpush1.msra.mxu0 %v1902
    %2262 = vmatprep.subr.mxu0 %v1907
    %2263 = vmatpush1.msra.mxu0 %v1906
    %2264 = vmatprep.subr.mxu0 %v1911
    %2265 = vmatpush1.msra.mxu0 %v1910
    %2266 = vmatprep.subr.mxu0 %v1915
    %2267 = vmatpush1.msra.mxu0 %v1914
    %2268 = vmatprep.subr.mxu0 %v1919
    %2269 = vmatpush1.msra.mxu0 %v1918
    %2270 = vmatprep.subr.mxu0 %v1923
    %2271 = vmatpush1.msra.mxu0 %v1922
    %2272 = vmatprep.subr.mxu0 %v1927
    %2273 = vmatpush1.msra.mxu0 %v1926
    %2274 = vmatprep.subr.mxu0 %v1931
    %2275 = vmatpush1.msra.mxu0 %v1930
    %2276 = vmatprep.subr.mxu0 %v1935
    %2277 = vmatpush1.msra.mxu0 %v1934
    %2278 = vmatprep.subr.mxu0 %v1939
    %2279 = vmatpush1.msra.mxu0 %v1938
    %2280 = vmatprep.subr.mxu0 %v1943
    %2281 = vmatpush1.msra.mxu0 %v1942
    %2282 = vmatprep.subr.mxu0 %v1947
    %2283 = vmatpush1.msra.mxu0 %v1946
    %2284 = vmatprep.subr.mxu0 %v1951
    %2285 = vmatpush1.msra.mxu0 %v1950
    %2286 = vmatprep.subr.mxu0 %v1955
    %2287 = vmatpush1.msra.mxu0 %v1954
    %2288 = vmatprep.subr.mxu0 %v1959
    %2289 = vmatpush1.msra.mxu0 %v1958
    %2290 = vmatprep.subr.mxu0 %v1963
    %2291 = vmatpush1.msra.mxu0 %v1962
    %2292 = vmatprep.subr.mxu0 %v1967
    %2293 = vmatpush1.msra.mxu0 %v1966
    %2294 = vmatprep.subr.mxu0 %v1971
    %2295 = vmatpush1.msra.mxu0 %v1970
    %2296 = vmatprep.subr.mxu0 0.0
    %2297 = vmatpush1.msra.mxu0 0.0
    %2298 = vmatprep.subr.mxu0 0.0
    %2299 = vmatpush1.msra.mxu0 0.0
    %2300 = vmatprep.subr.mxu0 0.0
    %2301 = vmatpush1.msra.mxu0 0.0
    %2302 = vmatprep.subr.mxu0 0.0
    %2303 = vmatpush1.msra.mxu0 0.0
    %2304 = vmatprep.subr.mxu0 0.0
    %2305 = vmatpush1.msra.mxu0 0.0
    %2306 = vmatprep.subr.mxu0 0.0
    %2307 = vmatpush1.msra.mxu0 0.0
    %2308 = vmatprep.subr.mxu0 0.0
    %2309 = vmatpush1.msra.mxu0 0.0
    %2310 = vmatprep.subr.mxu0 0.0
    %2311 = vmatpush1.msra.mxu0 0.0
    %2312 = vmatprep.subr.mxu0 0.0
    %2313 = vmatpush1.msra.mxu0 0.0
    %2314 = vmatprep.subr.mxu0 0.0
    %2315 = vmatpush1.msra.mxu0 0.0
    %2316 = vmatprep.subr.mxu0 0.0
    %2317 = vmatpush1.msra.mxu0 0.0
    %2318 = vmatprep.subr.mxu0 0.0
    %2319 = vmatpush1.msra.mxu0 0.0
    %2320 = vmatprep.subr.mxu0 0.0
    %2321 = vmatpush1.msra.mxu0 0.0
    %2322 = vmatprep.mubr.f32.mxu0 %v673
    %2323 = vmatmul.mubr.f32.gmra.mrb[0].mxu0 %v661
    %v2324 = vpop.f32.mrb[0].mxu0
    %v2325 = vadd.f32 %v2254, %v2324
    %v2326 = vpop.f32.mrb[0].mxu0
    %v2327 = vadd.f32 %v2256, %v2326
    %2328 = vdwg.mxu0
    %2329 = vmatprep.subr.mxu0 %v1389
    %2330 = vmatpush1.msra.mxu0 %v1388
    %2331 = vmatprep.subr.mxu0 %v1393
    %2332 = vmatpush1.msra.mxu0 %v1392
    %2333 = vmatprep.subr.mxu0 %v1397
    %2334 = vmatpush1.msra.mxu0 %v1396
    %2335 = vmatprep.subr.mxu0 %v1401
    %2336 = vmatpush1.msra.mxu0 %v1400
    %2337 = vmatprep.subr.mxu0 %v1405
    %2338 = vmatpush1.msra.mxu0 %v1404
    %2339 = vmatprep.subr.mxu0 %v1409
    %2340 = vmatpush1.msra.mxu0 %v1408
    %2341 = vmatprep.subr.mxu0 %v1413
    %2342 = vmatpush1.msra.mxu0 %v1412
    %2343 = vmatprep.subr.mxu0 %v1417
    %2344 = vmatpush1.msra.mxu0 %v1416
    %2345 = vmatprep.subr.mxu0 %v1421
    %2346 = vmatpush1.msra.mxu0 %v1420
    %2347 = vmatprep.subr.mxu0 %v1425
    %2348 = vmatpush1.msra.mxu0 %v1424
    %2349 = vmatprep.subr.mxu0 %v1429
    %2350 = vmatpush1.msra.mxu0 %v1428
    %2351 = vmatprep.subr.mxu0 %v1433
    %2352 = vmatpush1.msra.mxu0 %v1432
    %2353 = vmatprep.subr.mxu0 %v1437
    %2354 = vmatpush1.msra.mxu0 %v1436
    %2355 = vmatprep.subr.mxu0 %v1441
    %2356 = vmatpush1.msra.mxu0 %v1440
    %2357 = vmatprep.subr.mxu0 %v1445
    %2358 = vmatpush1.msra.mxu0 %v1444
    %2359 = vmatprep.subr.mxu0 %v1449
    %2360 = vmatpush1.msra.mxu0 %v1448
    %2361 = vmatprep.subr.mxu0 %v1453
    %2362 = vmatpush1.msra.mxu0 %v1452
    %2363 = vmatprep.subr.mxu0 %v1457
    %2364 = vmatpush1.msra.mxu0 %v1456
    %2365 = vmatprep.subr.mxu0 %v1461
    %2366 = vmatpush1.msra.mxu0 %v1460
    %2367 = vmatprep.subr.mxu0 %v1465
    %2368 = vmatpush1.msra.mxu0 %v1464
    %2369 = vmatprep.subr.mxu0 %v1469
    %2370 = vmatpush1.msra.mxu0 %v1468
    %2371 = vmatprep.subr.mxu0 %v1473
    %2372 = vmatpush1.msra.mxu0 %v1472
    %2373 = vmatprep.subr.mxu0 %v1477
    %2374 = vmatpush1.msra.mxu0 %v1476
    %2375 = vmatprep.subr.mxu0 %v1481
    %2376 = vmatpush1.msra.mxu0 %v1480
    %2377 = vmatprep.subr.mxu0 %v1485
    %2378 = vmatpush1.msra.mxu0 %v1484
    %2379 = vmatprep.subr.mxu0 %v1489
    %2380 = vmatpush1.msra.mxu0 %v1488
    %2381 = vmatprep.subr.mxu0 %v1493
    %2382 = vmatpush1.msra.mxu0 %v1492
    %2383 = vmatprep.subr.mxu0 %v1497
    %2384 = vmatpush1.msra.mxu0 %v1496
    %2385 = vmatprep.subr.mxu0 %v1501
    %2386 = vmatpush1.msra.mxu0 %v1500
    %2387 = vmatprep.subr.mxu0 %v1505
    %2388 = vmatpush1.msra.mxu0 %v1504
    %2389 = vmatprep.subr.mxu0 %v1509
    %2390 = vmatpush1.msra.mxu0 %v1508
    %2391 = vmatprep.subr.mxu0 %v1513
    %2392 = vmatpush1.msra.mxu0 %v1512
    %2393 = vmatprep.mubr.f32.mxu0 %v636
    %2394 = vmatmul.mubr.f32.gmra.mrb[0].mxu0 %v628
    %v2395 = vpop.f32.mrb[0].mxu0
    %v2396 = vadd.f32 0.0, %v2395
    %v2397 = vpop.f32.mrb[0].mxu0
    %v2398 = vadd.f32 0.0, %v2397
    %2399 = vdwg.mxu0
    %2400 = vmatprep.subr.mxu0 %v1517
    %2401 = vmatpush1.msra.mxu0 %v1516
    %2402 = vmatprep.subr.mxu0 %v1521
    %2403 = vmatpush1.msra.mxu0 %v1520
    %2404 = vmatprep.subr.mxu0 %v1525
    %2405 = vmatpush1.msra.mxu0 %v1524
    %2406 = vmatprep.subr.mxu0 %v1529
    %2407 = vmatpush1.msra.mxu0 %v1528
    %2408 = vmatprep.subr.mxu0 %v1533
    %2409 = vmatpush1.msra.mxu0 %v1532
    %2410 = vmatprep.subr.mxu0 %v1537
    %2411 = vmatpush1.msra.mxu0 %v1536
    %2412 = vmatprep.subr.mxu0 %v1541
    %2413 = vmatpush1.msra.mxu0 %v1540
    %2414 = vmatprep.subr.mxu0 %v1545
    %2415 = vmatpush1.msra.mxu0 %v1544
    %2416 = vmatprep.subr.mxu0 %v1549
    %2417 = vmatpush1.msra.mxu0 %v1548
    %2418 = vmatprep.subr.mxu0 %v1553
    %2419 = vmatpush1.msra.mxu0 %v1552
    %2420 = vmatprep.subr.mxu0 %v1557
    %2421 = vmatpush1.msra.mxu0 %v1556
    %2422 = vmatprep.subr.mxu0 %v1561
    %2423 = vmatpush1.msra.mxu0 %v1560
    %2424 = vmatprep.subr.mxu0 %v1565
    %2425 = vmatpush1.msra.mxu0 %v1564
    %2426 = vmatprep.subr.mxu0 %v1569
    %2427 = vmatpush1.msra.mxu0 %v1568
    %2428 = vmatprep.subr.mxu0 %v1573
    %2429 = vmatpush1.msra.mxu0 %v1572
    %2430 = vmatprep.subr.mxu0 %v1577
    %2431 = vmatpush1.msra.mxu0 %v1576
    %2432 = vmatprep.subr.mxu0 %v1581
    %2433 = vmatpush1.msra.mxu0 %v1580
    %2434 = vmatprep.subr.mxu0 %v1585
    %2435 = vmatpush1.msra.mxu0 %v1584
    %2436 = vmatprep.subr.mxu0 %v1589
    %2437 = vmatpush1.msra.mxu0 %v1588
    %2438 = vmatprep.subr.mxu0 %v1593
    %2439 = vmatpush1.msra.mxu0 %v1592
    %2440 = vmatprep.subr.mxu0 %v1597
    %2441 = vmatpush1.msra.mxu0 %v1596
    %2442 = vmatprep.subr.mxu0 %v1601
    %2443 = vmatpush1.msra.mxu0 %v1600
    %2444 = vmatprep.subr.mxu0 %v1605
    %2445 = vmatpush1.msra.mxu0 %v1604
    %2446 = vmatprep.subr.mxu0 %v1609
    %2447 = vmatpush1.msra.mxu0 %v1608
    %2448 = vmatprep.subr.mxu0 %v1613
    %2449 = vmatpush1.msra.mxu0 %v1612
    %2450 = vmatprep.subr.mxu0 %v1617
    %2451 = vmatpush1.msra.mxu0 %v1616
    %2452 = vmatprep.subr.mxu0 %v1621
    %2453 = vmatpush1.msra.mxu0 %v1620
    %2454 = vmatprep.subr.mxu0 %v1625
    %2455 = vmatpush1.msra.mxu0 %v1624
    %2456 = vmatprep.subr.mxu0 %v1629
    %2457 = vmatpush1.msra.mxu0 %v1628
    %2458 = vmatprep.subr.mxu0 %v1633
    %2459 = vmatpush1.msra.mxu0 %v1632
    %2460 = vmatprep.subr.mxu0 %v1637
    %2461 = vmatpush1.msra.mxu0 %v1636
    %2462 = vmatprep.subr.mxu0 %v1641
    %2463 = vmatpush1.msra.mxu0 %v1640
    %2464 = vmatprep.mubr.f32.mxu0 %v637
    %2465 = vmatmul.mubr.f32.gmra.mrb[0].mxu0 %v635
    %v2466 = vpop.f32.mrb[0].mxu0
    %v2467 = vadd.f32 %v2396, %v2466
    %v2468 = vpop.f32.mrb[0].mxu0
    %v2469 = vadd.f32 %v2398, %v2468
    %2470 = vdwg.mxu0
    %2471 = vmatprep.subr.mxu0 %v1645
    %2472 = vmatpush1.msra.mxu0 %v1644
    %2473 = vmatprep.subr.mxu0 %v1649
    %2474 = vmatpush1.msra.mxu0 %v1648
    %2475 = vmatprep.subr.mxu0 %v1653
    %2476 = vmatpush1.msra.mxu0 %v1652
    %2477 = vmatprep.subr.mxu0 %v1657
    %2478 = vmatpush1.msra.mxu0 %v1656
    %2479 = vmatprep.subr.mxu0 %v1661
    %2480 = vmatpush1.msra.mxu0 %v1660
    %2481 = vmatprep.subr.mxu0 %v1665
    %2482 = vmatpush1.msra.mxu0 %v1664
    %2483 = vmatprep.subr.mxu0 %v1669
    %2484 = vmatpush1.msra.mxu0 %v1668
    %2485 = vmatprep.subr.mxu0 %v1673
    %2486 = vmatpush1.msra.mxu0 %v1672
    %2487 = vmatprep.subr.mxu0 %v1677
    %2488 = vmatpush1.msra.mxu0 %v1676
    %2489 = vmatprep.subr.mxu0 %v1681
    %2490 = vmatpush1.msra.mxu0 %v1680
    %2491 = vmatprep.subr.mxu0 %v1685
    %2492 = vmatpush1.msra.mxu0 %v1684
    %2493 = vmatprep.subr.mxu0 %v1689
    %2494 = vmatpush1.msra.mxu0 %v1688
    %2495 = vmatprep.subr.mxu0 %v1693
    %2496 = vmatpush1.msra.mxu0 %v1692
    %2497 = vmatprep.subr.mxu0 %v1697
    %2498 = vmatpush1.msra.mxu0 %v1696
    %2499 = vmatprep.subr.mxu0 %v1701
    %2500 = vmatpush1.msra.mxu0 %v1700
    %2501 = vmatprep.subr.mxu0 %v1705
    %2502 = vmatpush1.msra.mxu0 %v1704
    %2503 = vmatprep.subr.mxu0 %v1709
    %2504 = vmatpush1.msra.mxu0 %v1708
    %2505 = vmatprep.subr.mxu0 %v1713
    %2506 = vmatpush1.msra.mxu0 %v1712
    %2507 = vmatprep.subr.mxu0 %v1717
    %2508 = vmatpush1.msra.mxu0 %v1716
    %2509 = vmatprep.subr.mxu0 %v1721
    %2510 = vmatpush1.msra.mxu0 %v1720
    %2511 = vmatprep.subr.mxu0 %v1725
    %2512 = vmatpush1.msra.mxu0 %v1724
    %2513 = vmatprep.subr.mxu0 %v1729
    %2514 = vmatpush1.msra.mxu0 %v1728
    %2515 = vmatprep.subr.mxu0 %v1733
    %2516 = vmatpush1.msra.mxu0 %v1732
    %2517 = vmatprep.subr.mxu0 %v1737
    %2518 = vmatpush1.msra.mxu0 %v1736
    %2519 = vmatprep.subr.mxu0 %v1741
    %2520 = vmatpush1.msra.mxu0 %v1740
    %2521 = vmatprep.subr.mxu0 %v1745
    %2522 = vmatpush1.msra.mxu0 %v1744
    %2523 = vmatprep.subr.mxu0 %v1749
    %2524 = vmatpush1.msra.mxu0 %v1748
    %2525 = vmatprep.subr.mxu0 %v1753
    %2526 = vmatpush1.msra.mxu0 %v1752
    %2527 = vmatprep.subr.mxu0 %v1757
    %2528 = vmatpush1.msra.mxu0 %v1756
    %2529 = vmatprep.subr.mxu0 %v1761
    %2530 = vmatpush1.msra.mxu0 %v1760
    %2531 = vmatprep.subr.mxu0 %v1765
    %2532 = vmatpush1.msra.mxu0 %v1764
    %2533 = vmatprep.subr.mxu0 %v1769
    %2534 = vmatpush1.msra.mxu0 %v1768
    %2535 = vmatprep.mubr.f32.mxu0 %v653
    %2536 = vmatmul.mubr.f32.gmra.mrb[0].mxu0 %v645
    %v2537 = vpop.f32.mrb[0].mxu0
    %v2538 = vadd.f32 %v2467, %v2537
    %v2539 = vpop.f32.mrb[0].mxu0
    %v2540 = vadd.f32 %v2469, %v2539
    %2541 = vdwg.mxu0
    %2542 = vmatprep.subr.mxu0 %v1773
    %2543 = vmatpush1.msra.mxu0 %v1772
    %2544 = vmatprep.subr.mxu0 %v1777
    %2545 = vmatpush1.msra.mxu0 %v1776
    %2546 = vmatprep.subr.mxu0 %v1781
    %2547 = vmatpush1.msra.mxu0 %v1780
    %2548 = vmatprep.subr.mxu0 %v1785
    %2549 = vmatpush1.msra.mxu0 %v1784
    %2550 = vmatprep.subr.mxu0 %v1789
    %2551 = vmatpush1.msra.mxu0 %v1788
    %2552 = vmatprep.subr.mxu0 %v1793
    %2553 = vmatpush1.msra.mxu0 %v1792
    %2554 = vmatprep.subr.mxu0 %v1797
    %2555 = vmatpush1.msra.mxu0 %v1796
    %2556 = vmatprep.subr.mxu0 %v1801
    %2557 = vmatpush1.msra.mxu0 %v1800
    %2558 = vmatprep.subr.mxu0 %v1805
    %2559 = vmatpush1.msra.mxu0 %v1804
    %2560 = vmatprep.subr.mxu0 %v1809
    %2561 = vmatpush1.msra.mxu0 %v1808
    %2562 = vmatprep.subr.mxu0 %v1813
    %2563 = vmatpush1.msra.mxu0 %v1812
    %2564 = vmatprep.subr.mxu0 %v1817
    %2565 = vmatpush1.msra.mxu0 %v1816
    %2566 = vmatprep.subr.mxu0 %v1821
    %2567 = vmatpush1.msra.mxu0 %v1820
    %2568 = vmatprep.subr.mxu0 %v1825
    %2569 = vmatpush1.msra.mxu0 %v1824
    %2570 = vmatprep.subr.mxu0 %v1829
    %2571 = vmatpush1.msra.mxu0 %v1828
    %2572 = vmatprep.subr.mxu0 %v1833
    %2573 = vmatpush1.msra.mxu0 %v1832
    %2574 = vmatprep.subr.mxu0 %v1837
    %2575 = vmatpush1.msra.mxu0 %v1836
    %2576 = vmatprep.subr.mxu0 %v1841
    %2577 = vmatpush1.msra.mxu0 %v1840
    %2578 = vmatprep.subr.mxu0 %v1845
    %2579 = vmatpush1.msra.mxu0 %v1844
    %2580 = vmatprep.subr.mxu0 %v1849
    %2581 = vmatpush1.msra.mxu0 %v1848
    %2582 = vmatprep.subr.mxu0 %v1853
    %2583 = vmatpush1.msra.mxu0 %v1852
    %2584 = vmatprep.subr.mxu0 %v1857
    %2585 = vmatpush1.msra.mxu0 %v1856
    %2586 = vmatprep.subr.mxu0 %v1861
    %2587 = vmatpush1.msra.mxu0 %v1860
    %2588 = vmatprep.subr.mxu0 %v1865
    %2589 = vmatpush1.msra.mxu0 %v1864
    %2590 = vmatprep.subr.mxu0 %v1869
    %2591 = vmatpush1.msra.mxu0 %v1868
    %2592 = vmatprep.subr.mxu0 %v1873
    %2593 = vmatpush1.msra.mxu0 %v1872
    %2594 = vmatprep.subr.mxu0 %v1877
    %2595 = vmatpush1.msra.mxu0 %v1876
    %2596 = vmatprep.subr.mxu0 %v1881
    %2597 = vmatpush1.msra.mxu0 %v1880
    %2598 = vmatprep.subr.mxu0 %v1885
    %2599 = vmatpush1.msra.mxu0 %v1884
    %2600 = vmatprep.subr.mxu0 %v1889
    %2601 = vmatpush1.msra.mxu0 %v1888
    %2602 = vmatprep.subr.mxu0 %v1893
    %2603 = vmatpush1.msra.mxu0 %v1892
    %2604 = vmatprep.subr.mxu0 %v1897
    %2605 = vmatpush1.msra.mxu0 %v1896
    %2606 = vmatprep.mubr.f32.mxu0 %v654
    %2607 = vmatmul.mubr.f32.gmra.mrb[0].mxu0 %v652
    %v2608 = vpop.f32.mrb[0].mxu0
    %v2609 = vadd.f32 %v2538, %v2608
    %v2610 = vpop.f32.mrb[0].mxu0
    %v2611 = vadd.f32 %v2540, %v2610
    %2612 = vdwg.mxu0
    %2613 = vmatprep.subr.mxu0 %v1901
    %2614 = vmatpush1.msra.mxu0 %v1900
    %2615 = vmatprep.subr.mxu0 %v1905
    %2616 = vmatpush1.msra.mxu0 %v1904
    %2617 = vmatprep.subr.mxu0 %v1909
    %2618 = vmatpush1.msra.mxu0 %v1908
    %2619 = vmatprep.subr.mxu0 %v1913
    %2620 = vmatpush1.msra.mxu0 %v1912
    %2621 = vmatprep.subr.mxu0 %v1917
    %2622 = vmatpush1.msra.mxu0 %v1916
    %2623 = vmatprep.subr.mxu0 %v1921
    %2624 = vmatpush1.msra.mxu0 %v1920
    %2625 = vmatprep.subr.mxu0 %v1925
    %2626 = vmatpush1.msra.mxu0 %v1924
    %2627 = vmatprep.subr.mxu0 %v1929
    %2628 = vmatpush1.msra.mxu0 %v1928
    %2629 = vmatprep.subr.mxu0 %v1933
    %2630 = vmatpush1.msra.mxu0 %v1932
    %2631 = vmatprep.subr.mxu0 %v1937
    %2632 = vmatpush1.msra.mxu0 %v1936
    %2633 = vmatprep.subr.mxu0 %v1941
    %2634 = vmatpush1.msra.mxu0 %v1940
    %2635 = vmatprep.subr.mxu0 %v1945
    %2636 = vmatpush1.msra.mxu0 %v1944
    %2637 = vmatprep.subr.mxu0 %v1949
    %2638 = vmatpush1.msra.mxu0 %v1948
    %2639 = vmatprep.subr.mxu0 %v1953
    %2640 = vmatpush1.msra.mxu0 %v1952
    %2641 = vmatprep.subr.mxu0 %v1957
    %2642 = vmatpush1.msra.mxu0 %v1956
    %2643 = vmatprep.subr.mxu0 %v1961
    %2644 = vmatpush1.msra.mxu0 %v1960
    %2645 = vmatprep.subr.mxu0 %v1965
    %2646 = vmatpush1.msra.mxu0 %v1964
    %2647 = vmatprep.subr.mxu0 %v1969
    %2648 = vmatpush1.msra.mxu0 %v1968
    %2649 = vmatprep.subr.mxu0 %v1973
    %2650 = vmatpush1.msra.mxu0 %v1972
    %2651 = vmatprep.subr.mxu0 0.0
    %2652 = vmatpush1.msra.mxu0 0.0
    %2653 = vmatprep.subr.mxu0 0.0
    %2654 = vmatpush1.msra.mxu0 0.0
    %2655 = vmatprep.subr.mxu0 0.0
    %2656 = vmatpush1.msra.mxu0 0.0
    %2657 = vmatprep.subr.mxu0 0.0
    %2658 = vmatpush1.msra.mxu0 0.0
    %2659 = vmatprep.subr.mxu0 0.0
    %2660 = vmatpush1.msra.mxu0 0.0
    %2661 = vmatprep.subr.mxu0 0.0
    %2662 = vmatpush1.msra.mxu0 0.0
    %2663 = vmatprep.subr.mxu0 0.0
    %2664 = vmatpush1.msra.mxu0 0.0
    %2665 = vmatprep.subr.mxu0 0.0
    %2666 = vmatpush1.msra.mxu0 0.0
    %2667 = vmatprep.subr.mxu0 0.0
    %2668 = vmatpush1.msra.mxu0 0.0
    %2669 = vmatprep.subr.mxu0 0.0
    %2670 = vmatpush1.msra.mxu0 0.0
    %2671 = vmatprep.subr.mxu0 0.0
    %2672 = vmatpush1.msra.mxu0 0.0
    %2673 = vmatprep.subr.mxu0 0.0
    %2674 = vmatpush1.msra.mxu0 0.0
    %2675 = vmatprep.subr.mxu0 0.0
    %2676 = vmatpush1.msra.mxu0 0.0
    %2677 = vmatprep.mubr.f32.mxu0 %v673
    %2678 = vmatmul.mubr.f32.gmra.mrb[0].mxu0 %v661
    %v2679 = vpop.f32.mrb[0].mxu0
    %v2680 = vadd.f32 %v2609, %v2679
    %v2681 = vpop.f32.mrb[0].mxu0
    %v2682 = vadd.f32 %v2611, %v2681
    %2683 = vdwg.mxu0
    %v2684 = vmax.f32 %v1026, %v2325
    %v2685 = vmax.f32 %v1028, %v2327
    %v2686 = vmax.f32 %v1381, %v2680
    %v2687 = vmax.f32 %v1383, %v2682
    %s2688 = scalar_lea.vmem %s1, 9408
    %v2689 = vld [vmem:[%s2688] sm:$0xff]
    %v2690 = vld [vmem:[%s2688 + $0x8] sm:$0xff]
    %v2691 = vld [vmem:[%s2688 + $0x10] sm:$0xff]
    %v2692 = vld [vmem:[%s2688 + $0x18] sm:$0xff]
    %v2693 = vld [vmem:[%s2688 + $0x20] sm:$0xff]
    %v2694 = vld [vmem:[%s2688 + $0x28] sm:$0xff]
    %v2695 = vld [vmem:[%s2688 + $0x30] sm:$0xff]
    %v2696 = vld [vmem:[%s2688 + $0x38] sm:$0xff]
    %v2697 = vld [vmem:[%s2688 + $0x40] sm:$0xff]
    %v2698 = vld [vmem:[%s2688 + $0x48] sm:$0xff]
    %v2699 = vld [vmem:[%s2688 + $0x50] sm:$0xff]
    %v2700 = vld [vmem:[%s2688 + $0x58] sm:$0xff]
    %v2701 = vld [vmem:[%s2688 + $0x60] sm:$0xff]
    %v2702 = vld [vmem:[%s2688 + $0x68] sm:$0xff]
    %v2703 = vld [vmem:[%s2688 + $0x70] sm:$0xff]
    %v2704 = vld [vmem:[%s2688 + $0x78] sm:$0xff]
    %v2705 = vld [vmem:[%s2688 + $0x80] sm:$0xff]
    %v2706 = vld [vmem:[%s2688 + $0x88] sm:$0xff]
    %v2707 = vld [vmem:[%s2688 + $0x90] sm:$0xff]
    %v2708 = vld [vmem:[%s2688 + $0x98] sm:$0xff]
    %v2709 = vld [vmem:[%s2688 + $0xa0] sm:$0xff]
    %v2710 = vld [vmem:[%s2688 + $0xa8] sm:$0xff]
    %v2711 = vld [vmem:[%s2688 + $0xb0] sm:$0xff]
    %v2712 = vld [vmem:[%s2688 + $0xb8] sm:$0xff]
    %v2713 = vld [vmem:[%s2688 + $0xc0] sm:$0xff]
    %v2714 = vld [vmem:[%s2688 + $0xc8] sm:$0xff]
    %v2715 = vld [vmem:[%s2688 + $0xd0] sm:$0xff]
    %v2716 = vld [vmem:[%s2688 + $0xd8] sm:$0xff]
    %v2717 = vld [vmem:[%s2688 + $0xe0] sm:$0xff]
    %v2718 = vld [vmem:[%s2688 + $0xe8] sm:$0xff]
    %v2719 = vld [vmem:[%s2688 + $0xf0] sm:$0xff]
    %v2720 = vld [vmem:[%s2688 + $0xf8] sm:$0xff]
    %v2721 = vld [vmem:[%s2688 + $0x100] sm:$0xff]
    %v2722 = vld [vmem:[%s2688 + $0x108] sm:$0xff]
    %v2723 = vld [vmem:[%s2688 + $0x110] sm:$0xff]
    %v2724 = vld [vmem:[%s2688 + $0x118] sm:$0xff]
    %v2725 = vld [vmem:[%s2688 + $0x120] sm:$0xff]
    %v2726 = vld [vmem:[%s2688 + $0x128] sm:$0xff]
    %v2727 = vld [vmem:[%s2688 + $0x130] sm:$0xff]
    %v2728 = vld [vmem:[%s2688 + $0x138] sm:$0xff]
    %v2729 = vld [vmem:[%s2688 + $0x140] sm:$0xff]
    %v2730 = vld [vmem:[%s2688 + $0x148] sm:$0xff]
    %v2731 = vld [vmem:[%s2688 + $0x150] sm:$0xff]
    %v2732 = vld [vmem:[%s2688 + $0x158] sm:$0xff]
    %v2733 = vld [vmem:[%s2688 + $0x160] sm:$0xff]
    %v2734 = vld [vmem:[%s2688 + $0x168] sm:$0xff]
    %v2735 = vld [vmem:[%s2688 + $0x170] sm:$0xff]
    %v2736 = vld [vmem:[%s2688 + $0x178] sm:$0xff]
    %v2737 = vld [vmem:[%s2688 + $0x180] sm:$0xff]
    %v2738 = vld [vmem:[%s2688 + $0x188] sm:$0xff]
    %v2739 = vld [vmem:[%s2688 + $0x190] sm:$0xff]
    %v2740 = vld [vmem:[%s2688 + $0x198] sm:$0xff]
    %v2741 = vld [vmem:[%s2688 + $0x1a0] sm:$0xff]
    %v2742 = vld [vmem:[%s2688 + $0x1a8] sm:$0xff]
    %v2743 = vld [vmem:[%s2688 + $0x1b0] sm:$0xff]
    %v2744 = vld [vmem:[%s2688 + $0x1b8] sm:$0xff]
    %v2745 = vld [vmem:[%s2688 + $0x1c0] sm:$0xff]
    %v2746 = vld [vmem:[%s2688 + $0x1c8] sm:$0xff]
    %v2747 = vld [vmem:[%s2688 + $0x1d0] sm:$0xff]
    %v2748 = vld [vmem:[%s2688 + $0x1d8] sm:$0xff]
    %v2749 = vld [vmem:[%s2688 + $0x1e0] sm:$0xff]
    %v2750 = vld [vmem:[%s2688 + $0x1e8] sm:$0xff]
    %v2751 = vld [vmem:[%s2688 + $0x1f0] sm:$0xff]
    %v2752 = vld [vmem:[%s2688 + $0x1f8] sm:$0xff]
    %v2753 = vld [vmem:[%s2688 + $0x200] sm:$0xff]
    %v2754 = vld [vmem:[%s2688 + $0x208] sm:$0xff]
    %v2755 = vld [vmem:[%s2688 + $0x210] sm:$0xff]
    %v2756 = vld [vmem:[%s2688 + $0x218] sm:$0xff]
    %v2757 = vld [vmem:[%s2688 + $0x220] sm:$0xff]
    %v2758 = vld [vmem:[%s2688 + $0x228] sm:$0xff]
    %v2759 = vld [vmem:[%s2688 + $0x230] sm:$0xff]
    %v2760 = vld [vmem:[%s2688 + $0x238] sm:$0xff]
    %v2761 = vld [vmem:[%s2688 + $0x240] sm:$0xff]
    %v2762 = vld [vmem:[%s2688 + $0x248] sm:$0xff]
    %v2763 = vld [vmem:[%s2688 + $0x250] sm:$0xff]
    %v2764 = vld [vmem:[%s2688 + $0x258] sm:$0xff]
    %v2765 = vld [vmem:[%s2688 + $0x260] sm:$0xff]
    %v2766 = vld [vmem:[%s2688 + $0x268] sm:$0xff]
    %v2767 = vld [vmem:[%s2688 + $0x270] sm:$0xff]
    %v2768 = vld [vmem:[%s2688 + $0x278] sm:$0xff]
    %v2769 = vld [vmem:[%s2688 + $0x280] sm:$0xff]
    %v2770 = vld [vmem:[%s2688 + $0x288] sm:$0xff]
    %v2771 = vld [vmem:[%s2688 + $0x290] sm:$0xff]
    %v2772 = vld [vmem:[%s2688 + $0x298] sm:$0xff]
    %v2773 = vld [vmem:[%s2688 + $0x2a0] sm:$0xff]
    %v2774 = vld [vmem:[%s2688 + $0x2a8] sm:$0xff]
    %v2775 = vld [vmem:[%s2688 + $0x2b0] sm:$0xff]
    %v2776 = vld [vmem:[%s2688 + $0x2b8] sm:$0xff]
    %v2777 = vld [vmem:[%s2688 + $0x2c0] sm:$0xff]
    %v2778 = vld [vmem:[%s2688 + $0x2c8] sm:$0xff]
    %v2779 = vld [vmem:[%s2688 + $0x2d0] sm:$0xff]
    %v2780 = vld [vmem:[%s2688 + $0x2d8] sm:$0xff]
    %v2781 = vld [vmem:[%s2688 + $0x2e0] sm:$0xff]
    %v2782 = vld [vmem:[%s2688 + $0x2e8] sm:$0xff]
    %v2783 = vld [vmem:[%s2688 + $0x2f0] sm:$0xff]
    %v2784 = vld [vmem:[%s2688 + $0x2f8] sm:$0xff]
    %v2785 = vld [vmem:[%s2688 + $0x300] sm:$0xff]
    %v2786 = vld [vmem:[%s2688 + $0x308] sm:$0xff]
    %v2787 = vld [vmem:[%s2688 + $0x310] sm:$0xff]
    %v2788 = vld [vmem:[%s2688 + $0x318] sm:$0xff]
    %v2789 = vld [vmem:[%s2688 + $0x320] sm:$0xff]
    %v2790 = vld [vmem:[%s2688 + $0x328] sm:$0xff]
    %v2791 = vld [vmem:[%s2688 + $0x330] sm:$0xff]
    %v2792 = vld [vmem:[%s2688 + $0x338] sm:$0xff]
    %v2793 = vld [vmem:[%s2688 + $0x340] sm:$0xff]
    %v2794 = vld [vmem:[%s2688 + $0x348] sm:$0xff]
    %v2795 = vld [vmem:[%s2688 + $0x350] sm:$0xff]
    %v2796 = vld [vmem:[%s2688 + $0x358] sm:$0xff]
    %v2797 = vld [vmem:[%s2688 + $0x360] sm:$0xff]
    %v2798 = vld [vmem:[%s2688 + $0x368] sm:$0xff]
    %v2799 = vld [vmem:[%s2688 + $0x370] sm:$0xff]
    %v2800 = vld [vmem:[%s2688 + $0x378] sm:$0xff]
    %v2801 = vld [vmem:[%s2688 + $0x380] sm:$0xff]
    %v2802 = vld [vmem:[%s2688 + $0x388] sm:$0xff]
    %v2803 = vld [vmem:[%s2688 + $0x390] sm:$0xff]
    %v2804 = vld [vmem:[%s2688 + $0x398] sm:$0xff]
    %v2805 = vld [vmem:[%s2688 + $0x3a0] sm:$0xff]
    %v2806 = vld [vmem:[%s2688 + $0x3a8] sm:$0xff]
    %v2807 = vld [vmem:[%s2688 + $0x3b0] sm:$0xff]
    %v2808 = vld [vmem:[%s2688 + $0x3b8] sm:$0xff]
    %v2809 = vld [vmem:[%s2688 + $0x3c0] sm:$0xff]
    %v2810 = vld [vmem:[%s2688 + $0x3c8] sm:$0xff]
    %v2811 = vld [vmem:[%s2688 + $0x3d0] sm:$0xff]
    %v2812 = vld [vmem:[%s2688 + $0x3d8] sm:$0xff]
    %v2813 = vld [vmem:[%s2688 + $0x3e0] sm:$0xff]
    %v2814 = vld [vmem:[%s2688 + $0x3e8] sm:$0xff]
    %v2815 = vld [vmem:[%s2688 + $0x3f0] sm:$0xff]
    %v2816 = vld [vmem:[%s2688 + $0x3f8] sm:$0xff]
    %v2817 = vld [vmem:[%s2688 + $0x400] sm:$0xff]
    %v2818 = vld [vmem:[%s2688 + $0x408] sm:$0xff]
    %v2819 = vld [vmem:[%s2688 + $0x410] sm:$0xff]
    %v2820 = vld [vmem:[%s2688 + $0x418] sm:$0xff]
    %v2821 = vld [vmem:[%s2688 + $0x420] sm:$0xff]
    %v2822 = vld [vmem:[%s2688 + $0x428] sm:$0xff]
    %v2823 = vld [vmem:[%s2688 + $0x430] sm:$0xff]
    %v2824 = vld [vmem:[%s2688 + $0x438] sm:$0xff]
    %v2825 = vld [vmem:[%s2688 + $0x440] sm:$0xff]
    %v2826 = vld [vmem:[%s2688 + $0x448] sm:$0xff]
    %v2827 = vld [vmem:[%s2688 + $0x450] sm:$0xff]
    %v2828 = vld [vmem:[%s2688 + $0x458] sm:$0xff]
    %v2829 = vld [vmem:[%s2688 + $0x460] sm:$0xff]
    %v2830 = vld [vmem:[%s2688 + $0x468] sm:$0xff]
    %v2831 = vld [vmem:[%s2688 + $0x470] sm:$0xff]
    %v2832 = vld [vmem:[%s2688 + $0x478] sm:$0xff]
    %v2833 = vld [vmem:[%s2688 + $0x480] sm:$0xff]
    %v2834 = vld [vmem:[%s2688 + $0x488] sm:$0xff]
    %v2835 = vld [vmem:[%s2688 + $0x490] sm:$0xff]
    %v2836 = vld [vmem:[%s2688 + $0x498] sm:$0xff]
    %v2837 = vld [vmem:[%s2688 + $0x4a0] sm:$0xff]
    %v2838 = vld [vmem:[%s2688 + $0x4a8] sm:$0xff]
    %v2839 = vld [vmem:[%s2688 + $0x4b0] sm:$0xff]
    %v2840 = vld [vmem:[%s2688 + $0x4b8] sm:$0xff]
    %v2841 = vld [vmem:[%s2688 + $0x4c0] sm:$0xff]
    %v2842 = vld [vmem:[%s2688 + $0x4c8] sm:$0xff]
    %v2843 = vld [vmem:[%s2688 + $0x4d0] sm:$0xff]
    %v2844 = vld [vmem:[%s2688 + $0x4d8] sm:$0xff]
    %v2845 = vld [vmem:[%s2688 + $0x4e0] sm:$0xff]
    %v2846 = vld [vmem:[%s2688 + $0x4e8] sm:$0xff]
    %v2847 = vld [vmem:[%s2688 + $0x4f0] sm:$0xff]
    %v2848 = vld [vmem:[%s2688 + $0x4f8] sm:$0xff]
    %v2849 = vld [vmem:[%s2688 + $0x500] sm:$0xff]
    %v2850 = vld [vmem:[%s2688 + $0x508] sm:$0xff]
    %v2851 = vld [vmem:[%s2688 + $0x510] sm:$0xff]
    %v2852 = vld [vmem:[%s2688 + $0x518] sm:$0xff]
    %v2853 = vld [vmem:[%s2688 + $0x520] sm:$0xff]
    %v2854 = vld [vmem:[%s2688 + $0x528] sm:$0xff]
    %v2855 = vld [vmem:[%s2688 + $0x530] sm:$0xff]
    %v2856 = vld [vmem:[%s2688 + $0x538] sm:$0xff]
    %v2857 = vld [vmem:[%s2688 + $0x540] sm:$0xff]
    %v2858 = vld [vmem:[%s2688 + $0x548] sm:$0xff]
    %v2859 = vld [vmem:[%s2688 + $0x550] sm:$0xff]
    %v2860 = vld [vmem:[%s2688 + $0x558] sm:$0xff]
    %v2861 = vld [vmem:[%s2688 + $0x560] sm:$0xff]
    %v2862 = vld [vmem:[%s2688 + $0x568] sm:$0xff]
    %v2863 = vld [vmem:[%s2688 + $0x570] sm:$0xff]
    %v2864 = vld [vmem:[%s2688 + $0x578] sm:$0xff]
    %v2865 = vld [vmem:[%s2688 + $0x580] sm:$0xff]
    %v2866 = vld [vmem:[%s2688 + $0x588] sm:$0xff]
    %v2867 = vld [vmem:[%s2688 + $0x590] sm:$0xff]
    %v2868 = vld [vmem:[%s2688 + $0x598] sm:$0xff]
    %v2869 = vld [vmem:[%s2688 + $0x5a0] sm:$0xff]
    %v2870 = vld [vmem:[%s2688 + $0x5a8] sm:$0xff]
    %v2871 = vld [vmem:[%s2688 + $0x5b0] sm:$0xff]
    %v2872 = vld [vmem:[%s2688 + $0x5b8] sm:$0xff]
    %v2873 = vld [vmem:[%s2688 + $0x5c0] sm:$0xff]
    %v2874 = vld [vmem:[%s2688 + $0x5c8] sm:$0xff]
    %v2875 = vld [vmem:[%s2688 + $0x5d0] sm:$0xff]
    %v2876 = vld [vmem:[%s2688 + $0x5d8] sm:$0xff]
    %v2877 = vld [vmem:[%s2688 + $0x5e0] sm:$0xff]
    %v2878 = vld [vmem:[%s2688 + $0x5e8] sm:$0xff]
    %v2879 = vld [vmem:[%s2688 + $0x5f0] sm:$0xff]
    %v2880 = vld [vmem:[%s2688 + $0x5f8] sm:$0xff]
    %v2881 = vld [vmem:[%s2688 + $0x600] sm:$0xff]
    %v2882 = vld [vmem:[%s2688 + $0x608] sm:$0xff]
    %v2883 = vld [vmem:[%s2688 + $0x610] sm:$0xff]
    %v2884 = vld [vmem:[%s2688 + $0x618] sm:$0xff]
    %v2885 = vld [vmem:[%s2688 + $0x620] sm:$0xff]
    %v2886 = vld [vmem:[%s2688 + $0x628] sm:$0xff]
    %v2887 = vld [vmem:[%s2688 + $0x630] sm:$0xff]
    %v2888 = vld [vmem:[%s2688 + $0x638] sm:$0xff]
    %v2889 = vld [vmem:[%s2688 + $0x640] sm:$0xff]
    %v2890 = vld [vmem:[%s2688 + $0x648] sm:$0xff]
    %v2891 = vld [vmem:[%s2688 + $0x650] sm:$0xff]
    %v2892 = vld [vmem:[%s2688 + $0x658] sm:$0xff]
    %v2893 = vld [vmem:[%s2688 + $0x660] sm:$0xff]
    %v2894 = vld [vmem:[%s2688 + $0x668] sm:$0xff]
    %v2895 = vld [vmem:[%s2688 + $0x670] sm:$0xff]
    %v2896 = vld [vmem:[%s2688 + $0x678] sm:$0xff]
    %v2897 = vld [vmem:[%s2688 + $0x680] sm:$0xff]
    %v2898 = vld [vmem:[%s2688 + $0x688] sm:$0xff]
    %v2899 = vld [vmem:[%s2688 + $0x690] sm:$0xff]
    %v2900 = vld [vmem:[%s2688 + $0x698] sm:$0xff]
    %v2901 = vld [vmem:[%s2688 + $0x6a0] sm:$0xff]
    %v2902 = vld [vmem:[%s2688 + $0x6a8] sm:$0xff]
    %v2903 = vld [vmem:[%s2688 + $0x6b0] sm:$0xff]
    %v2904 = vld [vmem:[%s2688 + $0x6b8] sm:$0xff]
    %v2905 = vld [vmem:[%s2688 + $0x6c0] sm:$0xff]
    %v2906 = vld [vmem:[%s2688 + $0x6c8] sm:$0xff]
    %v2907 = vld [vmem:[%s2688 + $0x6d0] sm:$0xff]
    %v2908 = vld [vmem:[%s2688 + $0x6d8] sm:$0xff]
    %v2909 = vld [vmem:[%s2688 + $0x6e0] sm:$0xff]
    %v2910 = vld [vmem:[%s2688 + $0x6e8] sm:$0xff]
    %v2911 = vld [vmem:[%s2688 + $0x6f0] sm:$0xff]
    %v2912 = vld [vmem:[%s2688 + $0x6f8] sm:$0xff]
    %v2913 = vld [vmem:[%s2688 + $0x700] sm:$0xff]
    %v2914 = vld [vmem:[%s2688 + $0x708] sm:$0xff]
    %v2915 = vld [vmem:[%s2688 + $0x710] sm:$0xff]
    %v2916 = vld [vmem:[%s2688 + $0x718] sm:$0xff]
    %v2917 = vld [vmem:[%s2688 + $0x720] sm:$0xff]
    %v2918 = vld [vmem:[%s2688 + $0x728] sm:$0xff]
    %v2919 = vld [vmem:[%s2688 + $0x730] sm:$0xff]
    %v2920 = vld [vmem:[%s2688 + $0x738] sm:$0xff]
    %v2921 = vld [vmem:[%s2688 + $0x740] sm:$0xff]
    %v2922 = vld [vmem:[%s2688 + $0x748] sm:$0xff]
    %v2923 = vld [vmem:[%s2688 + $0x750] sm:$0xff]
    %v2924 = vld [vmem:[%s2688 + $0x758] sm:$0xff]
    %v2925 = vld [vmem:[%s2688 + $0x760] sm:$0xff]
    %v2926 = vld [vmem:[%s2688 + $0x768] sm:$0xff]
    %v2927 = vld [vmem:[%s2688 + $0x770] sm:$0xff]
    %v2928 = vld [vmem:[%s2688 + $0x778] sm:$0xff]
    %v2929 = vld [vmem:[%s2688 + $0x780] sm:$0xff]
    %v2930 = vld [vmem:[%s2688 + $0x788] sm:$0xff]
    %v2931 = vld [vmem:[%s2688 + $0x790] sm:$0xff]
    %v2932 = vld [vmem:[%s2688 + $0x798] sm:$0xff]
    %v2933 = vld [vmem:[%s2688 + $0x7a0] sm:$0xff]
    %v2934 = vld [vmem:[%s2688 + $0x7a8] sm:$0xff]
    %v2935 = vld [vmem:[%s2688 + $0x7b0] sm:$0xff]
    %v2936 = vld [vmem:[%s2688 + $0x7b8] sm:$0xff]
    %v2937 = vld [vmem:[%s2688 + $0x7c0] sm:$0xff]
    %v2938 = vld [vmem:[%s2688 + $0x7c8] sm:$0xff]
    %v2939 = vld [vmem:[%s2688 + $0x7d0] sm:$0xff]
    %v2940 = vld [vmem:[%s2688 + $0x7d8] sm:$0xff]
    %v2941 = vld [vmem:[%s2688 + $0x7e0] sm:$0xff]
    %v2942 = vld [vmem:[%s2688 + $0x7e8] sm:$0xff]
    %v2943 = vld [vmem:[%s2688 + $0x7f0] sm:$0xff]
    %v2944 = vld [vmem:[%s2688 + $0x7f8] sm:$0xff]
    %v2945 = vld [vmem:[%s2688 + $0x800] sm:$0xff]
    %v2946 = vld [vmem:[%s2688 + $0x808] sm:$0xff]
    %v2947 = vld [vmem:[%s2688 + $0x810] sm:$0xff]
    %v2948 = vld [vmem:[%s2688 + $0x818] sm:$0xff]
    %v2949 = vld [vmem:[%s2688 + $0x820] sm:$0xff]
    %v2950 = vld [vmem:[%s2688 + $0x828] sm:$0xff]
    %v2951 = vld [vmem:[%s2688 + $0x830] sm:$0xff]
    %v2952 = vld [vmem:[%s2688 + $0x838] sm:$0xff]
    %v2953 = vld [vmem:[%s2688 + $0x840] sm:$0xff]
    %v2954 = vld [vmem:[%s2688 + $0x848] sm:$0xff]
    %v2955 = vld [vmem:[%s2688 + $0x850] sm:$0xff]
    %v2956 = vld [vmem:[%s2688 + $0x858] sm:$0xff]
    %v2957 = vld [vmem:[%s2688 + $0x860] sm:$0xff]
    %v2958 = vld [vmem:[%s2688 + $0x868] sm:$0xff]
    %v2959 = vld [vmem:[%s2688 + $0x870] sm:$0xff]
    %v2960 = vld [vmem:[%s2688 + $0x878] sm:$0xff]
    %v2961 = vld [vmem:[%s2688 + $0x880] sm:$0xff]
    %v2962 = vld [vmem:[%s2688 + $0x888] sm:$0xff]
    %v2963 = vld [vmem:[%s2688 + $0x890] sm:$0xff]
    %v2964 = vld [vmem:[%s2688 + $0x898] sm:$0xff]
    %v2965 = vld [vmem:[%s2688 + $0x8a0] sm:$0xff]
    %v2966 = vld [vmem:[%s2688 + $0x8a8] sm:$0xff]
    %v2967 = vld [vmem:[%s2688 + $0x8b0] sm:$0xff]
    %v2968 = vld [vmem:[%s2688 + $0x8b8] sm:$0xff]
    %v2969 = vld [vmem:[%s2688 + $0x8c0] sm:$0xff]
    %v2970 = vld [vmem:[%s2688 + $0x8c8] sm:$0xff]
    %v2971 = vld [vmem:[%s2688 + $0x8d0] sm:$0xff]
    %v2972 = vld [vmem:[%s2688 + $0x8d8] sm:$0xff]
    %v2973 = vld [vmem:[%s2688 + $0x8e0] sm:$0xff]
    %v2974 = vld [vmem:[%s2688 + $0x8e8] sm:$0xff]
    %v2975 = vld [vmem:[%s2688 + $0x8f0] sm:$0xff]
    %v2976 = vld [vmem:[%s2688 + $0x8f8] sm:$0xff]
    %v2977 = vld [vmem:[%s2688 + $0x900] sm:$0xff]
    %v2978 = vld [vmem:[%s2688 + $0x908] sm:$0xff]
    %v2979 = vld [vmem:[%s2688 + $0x910] sm:$0xff]
    %v2980 = vld [vmem:[%s2688 + $0x918] sm:$0xff]
    %v2981 = vld [vmem:[%s2688 + $0x920] sm:$0xff]
    %v2982 = vld [vmem:[%s2688 + $0x928] sm:$0xff]
    %v2983 = vld [vmem:[%s2688 + $0x930] sm:$0xff]
    %v2984 = vld [vmem:[%s2688 + $0x938] sm:$0xff]
    %v2985 = vld [vmem:[%s2688 + $0x940] sm:$0xff]
    %v2986 = vld [vmem:[%s2688 + $0x948] sm:$0xff]
    %v2987 = vld [vmem:[%s2688 + $0x950] sm:$0xff]
    %v2988 = vld [vmem:[%s2688 + $0x958] sm:$0xff]
    %v2989 = vld [vmem:[%s2688 + $0x960] sm:$0xff]
    %v2990 = vld [vmem:[%s2688 + $0x968] sm:$0xff]
    %v2991 = vld [vmem:[%s2688 + $0x970] sm:$0xff]
    %v2992 = vld [vmem:[%s2688 + $0x978] sm:$0xff]
    %v2993 = vld [vmem:[%s2688 + $0x980] sm:$0xff]
    %v2994 = vld [vmem:[%s2688 + $0x988] sm:$0xff]
    %v2995 = vld [vmem:[%s2688 + $0x990] sm:$0xff]
    %v2996 = vld [vmem:[%s2688 + $0x998] sm:$0xff]
    %v2997 = vld [vmem:[%s2688 + $0x9a0] sm:$0xff]
    %v2998 = vld [vmem:[%s2688 + $0x9a8] sm:$0xff]
    %v2999 = vld [vmem:[%s2688 + $0x9b0] sm:$0xff]
    %v3000 = vld [vmem:[%s2688 + $0x9b8] sm:$0xff]
    %v3001 = vld [vmem:[%s2688 + $0x9c0] sm:$0xff]
    %v3002 = vld [vmem:[%s2688 + $0x9c8] sm:$0xff]
    %v3003 = vld [vmem:[%s2688 + $0x9d0] sm:$0xff]
    %v3004 = vld [vmem:[%s2688 + $0x9d8] sm:$0xff]
    %v3005 = vld [vmem:[%s2688 + $0x9e0] sm:$0xff]
    %v3006 = vld [vmem:[%s2688 + $0x9e8] sm:$0xff]
    %v3007 = vld [vmem:[%s2688 + $0x9f0] sm:$0xff]
    %v3008 = vld [vmem:[%s2688 + $0x9f8] sm:$0xff]
    %v3009 = vld [vmem:[%s2688 + $0xa00] sm:$0xff]
    %v3010 = vld [vmem:[%s2688 + $0xa08] sm:$0xff]
    %v3011 = vld [vmem:[%s2688 + $0xa10] sm:$0xff]
    %v3012 = vld [vmem:[%s2688 + $0xa18] sm:$0xff]
    %v3013 = vld [vmem:[%s2688 + $0xa20] sm:$0xff]
    %v3014 = vld [vmem:[%s2688 + $0xa28] sm:$0xff]
    %v3015 = vld [vmem:[%s2688 + $0xa30] sm:$0xff]
    %v3016 = vld [vmem:[%s2688 + $0xa38] sm:$0xff]
    %v3017 = vld [vmem:[%s2688 + $0xa40] sm:$0xff]
    %v3018 = vld [vmem:[%s2688 + $0xa48] sm:$0xff]
    %v3019 = vld [vmem:[%s2688 + $0xa50] sm:$0xff]
    %v3020 = vld [vmem:[%s2688 + $0xa58] sm:$0xff]
    %v3021 = vld [vmem:[%s2688 + $0xa60] sm:$0xff]
    %v3022 = vld [vmem:[%s2688 + $0xa68] sm:$0xff]
    %v3023 = vld [vmem:[%s2688 + $0xa70] sm:$0xff]
    %v3024 = vld [vmem:[%s2688 + $0xa78] sm:$0xff]
    %v3025 = vld [vmem:[%s2688 + $0xa80] sm:$0xff]
    %v3026 = vld [vmem:[%s2688 + $0xa88] sm:$0xff]
    %v3027 = vld [vmem:[%s2688 + $0xa90] sm:$0xff]
    %v3028 = vld [vmem:[%s2688 + $0xa98] sm:$0xff]
    %v3029 = vld [vmem:[%s2688 + $0xaa0] sm:$0xff]
    %v3030 = vld [vmem:[%s2688 + $0xaa8] sm:$0xff]
    %v3031 = vld [vmem:[%s2688 + $0xab0] sm:$0xff]
    %v3032 = vld [vmem:[%s2688 + $0xab8] sm:$0xff]
    %v3033 = vld [vmem:[%s2688 + $0xac0] sm:$0xff]
    %v3034 = vld [vmem:[%s2688 + $0xac8] sm:$0xff]
    %v3035 = vld [vmem:[%s2688 + $0xad0] sm:$0xff]
    %v3036 = vld [vmem:[%s2688 + $0xad8] sm:$0xff]
    %v3037 = vld [vmem:[%s2688 + $0xae0] sm:$0xff]
    %v3038 = vld [vmem:[%s2688 + $0xae8] sm:$0xff]
    %v3039 = vld [vmem:[%s2688 + $0xaf0] sm:$0xff]
    %v3040 = vld [vmem:[%s2688 + $0xaf8] sm:$0xff]
    %v3041 = vld [vmem:[%s2688 + $0xb00] sm:$0xff]
    %v3042 = vld [vmem:[%s2688 + $0xb08] sm:$0xff]
    %v3043 = vld [vmem:[%s2688 + $0xb10] sm:$0xff]
    %v3044 = vld [vmem:[%s2688 + $0xb18] sm:$0xff]
    %v3045 = vld [vmem:[%s2688 + $0xb20] sm:$0xff]
    %v3046 = vld [vmem:[%s2688 + $0xb28] sm:$0xff]
    %v3047 = vld [vmem:[%s2688 + $0xb30] sm:$0xff]
    %v3048 = vld [vmem:[%s2688 + $0xb38] sm:$0xff]
    %v3049 = vld [vmem:[%s2688 + $0xb40] sm:$0xff]
    %v3050 = vld [vmem:[%s2688 + $0xb48] sm:$0xff]
    %v3051 = vld [vmem:[%s2688 + $0xb50] sm:$0xff]
    %v3052 = vld [vmem:[%s2688 + $0xb58] sm:$0xff]
    %v3053 = vld [vmem:[%s2688 + $0xb60] sm:$0xff]
    %v3054 = vld [vmem:[%s2688 + $0xb68] sm:$0xff]
    %v3055 = vld [vmem:[%s2688 + $0xb70] sm:$0xff]
    %v3056 = vld [vmem:[%s2688 + $0xb78] sm:$0xff]
    %v3057 = vld [vmem:[%s2688 + $0xb80] sm:$0xff]
    %v3058 = vld [vmem:[%s2688 + $0xb88] sm:$0xff]
    %v3059 = vld [vmem:[%s2688 + $0xb90] sm:$0xff]
    %v3060 = vld [vmem:[%s2688 + $0xb98] sm:$0xff]
    %v3061 = vld [vmem:[%s2688 + $0xba0] sm:$0xff]
    %v3062 = vld [vmem:[%s2688 + $0xba8] sm:$0xff]
    %v3063 = vld [vmem:[%s2688 + $0xbb0] sm:$0xff]
    %v3064 = vld [vmem:[%s2688 + $0xbb8] sm:$0xff]
    %v3065 = vld [vmem:[%s2688 + $0xbc0] sm:$0xff]
    %v3066 = vld [vmem:[%s2688 + $0xbc8] sm:$0xff]
    %v3067 = vld [vmem:[%s2688 + $0xbd0] sm:$0xff]
    %v3068 = vld [vmem:[%s2688 + $0xbd8] sm:$0xff]
    %v3069 = vld [vmem:[%s2688 + $0xbe0] sm:$0xff]
    %v3070 = vld [vmem:[%s2688 + $0xbe8] sm:$0xff]
    %v3071 = vld [vmem:[%s2688 + $0xbf0] sm:$0xff]
    %v3072 = vld [vmem:[%s2688 + $0xbf8] sm:$0xff]
    %v3073 = vld [vmem:[%s2688 + $0xc00] sm:$0xff]
    %v3074 = vld [vmem:[%s2688 + $0xc08] sm:$0xff]
    %v3075 = vld [vmem:[%s2688 + $0xc10] sm:$0xff]
    %v3076 = vld [vmem:[%s2688 + $0xc18] sm:$0xff]
    %v3077 = vld [vmem:[%s2688 + $0xc20] sm:$0xff]
    %v3078 = vld [vmem:[%s2688 + $0xc28] sm:$0xff]
    %v3079 = vld [vmem:[%s2688 + $0xc30] sm:$0xff]
    %v3080 = vld [vmem:[%s2688 + $0xc38] sm:$0xff]
    %v3081 = vld [vmem:[%s2688 + $0xc40] sm:$0xff]
    %v3082 = vld [vmem:[%s2688 + $0xc48] sm:$0xff]
    %v3083 = vld [vmem:[%s2688 + $0xc50] sm:$0xff]
    %v3084 = vld [vmem:[%s2688 + $0xc58] sm:$0xff]
    %v3085 = vld [vmem:[%s2688 + $0xc60] sm:$0xff]
    %v3086 = vld [vmem:[%s2688 + $0xc68] sm:$0xff]
    %v3087 = vld [vmem:[%s2688 + $0xc70] sm:$0xff]
    %v3088 = vld [vmem:[%s2688 + $0xc78] sm:$0xff]
    %v3089 = vld [vmem:[%s2688 + $0xc80] sm:$0xff]
    %v3090 = vld [vmem:[%s2688 + $0xc88] sm:$0xff]
    %v3091 = vld [vmem:[%s2688 + $0xc90] sm:$0xff]
    %v3092 = vld [vmem:[%s2688 + $0xc98] sm:$0xff]
    %v3093 = vld [vmem:[%s2688 + $0xca0] sm:$0xff]
    %v3094 = vld [vmem:[%s2688 + $0xca8] sm:$0xff]
    %v3095 = vld [vmem:[%s2688 + $0xcb0] sm:$0xff]
    %v3096 = vld [vmem:[%s2688 + $0xcb8] sm:$0xff]
    %v3097 = vld [vmem:[%s2688 + $0xcc0] sm:$0xff]
    %v3098 = vld [vmem:[%s2688 + $0xcc8] sm:$0xff]
    %v3099 = vld [vmem:[%s2688 + $0xcd0] sm:$0xff]
    %v3100 = vld [vmem:[%s2688 + $0xcd8] sm:$0xff]
    %v3101 = vld [vmem:[%s2688 + $0xce0] sm:$0xff]
    %v3102 = vld [vmem:[%s2688 + $0xce8] sm:$0xff]
    %v3103 = vld [vmem:[%s2688 + $0xcf0] sm:$0xff]
    %v3104 = vld [vmem:[%s2688 + $0xcf8] sm:$0xff]
    %v3105 = vld [vmem:[%s2688 + $0xd00] sm:$0xff]
    %v3106 = vld [vmem:[%s2688 + $0xd08] sm:$0xff]
    %v3107 = vld [vmem:[%s2688 + $0xd10] sm:$0xff]
    %v3108 = vld [vmem:[%s2688 + $0xd18] sm:$0xff]
    %v3109 = vld [vmem:[%s2688 + $0xd20] sm:$0xff]
    %v3110 = vld [vmem:[%s2688 + $0xd28] sm:$0xff]
    %v3111 = vld [vmem:[%s2688 + $0xd30] sm:$0xff]
    %v3112 = vld [vmem:[%s2688 + $0xd38] sm:$0xff]
    %v3113 = vld [vmem:[%s2688 + $0xd40] sm:$0xff]
    %v3114 = vld [vmem:[%s2688 + $0xd48] sm:$0xff]
    %v3115 = vld [vmem:[%s2688 + $0xd50] sm:$0xff]
    %v3116 = vld [vmem:[%s2688 + $0xd58] sm:$0xff]
    %v3117 = vld [vmem:[%s2688 + $0xd60] sm:$0xff]
    %v3118 = vld [vmem:[%s2688 + $0xd68] sm:$0xff]
    %v3119 = vld [vmem:[%s2688 + $0xd70] sm:$0xff]
    %v3120 = vld [vmem:[%s2688 + $0xd78] sm:$0xff]
    %v3121 = vld [vmem:[%s2688 + $0xd80] sm:$0xff]
    %v3122 = vld [vmem:[%s2688 + $0xd88] sm:$0xff]
    %v3123 = vld [vmem:[%s2688 + $0xd90] sm:$0xff]
    %v3124 = vld [vmem:[%s2688 + $0xd98] sm:$0xff]
    %v3125 = vld [vmem:[%s2688 + $0xda0] sm:$0xff]
    %v3126 = vld [vmem:[%s2688 + $0xda8] sm:$0xff]
    %v3127 = vld [vmem:[%s2688 + $0xdb0] sm:$0xff]
    %v3128 = vld [vmem:[%s2688 + $0xdb8] sm:$0xff]
    %v3129 = vld [vmem:[%s2688 + $0xdc0] sm:$0xff]
    %v3130 = vld [vmem:[%s2688 + $0xdc8] sm:$0xff]
    %v3131 = vld [vmem:[%s2688 + $0xdd0] sm:$0xff]
    %v3132 = vld [vmem:[%s2688 + $0xdd8] sm:$0xff]
    %v3133 = vld [vmem:[%s2688 + $0xde0] sm:$0xff]
    %v3134 = vld [vmem:[%s2688 + $0xde8] sm:$0xff]
    %v3135 = vld [vmem:[%s2688 + $0xdf0] sm:$0xff]
    %v3136 = vld [vmem:[%s2688 + $0xdf8] sm:$0xff]
    %v3137 = vld [vmem:[%s2688 + $0xe00] sm:$0xff]
    %v3138 = vld [vmem:[%s2688 + $0xe08] sm:$0xff]
    %v3139 = vld [vmem:[%s2688 + $0xe10] sm:$0xff]
    %v3140 = vld [vmem:[%s2688 + $0xe18] sm:$0xff]
    %v3141 = vld [vmem:[%s2688 + $0xe20] sm:$0xff]
    %v3142 = vld [vmem:[%s2688 + $0xe28] sm:$0xff]
    %v3143 = vld [vmem:[%s2688 + $0xe30] sm:$0xff]
    %v3144 = vld [vmem:[%s2688 + $0xe38] sm:$0xff]
    %v3145 = vld [vmem:[%s2688 + $0xe40] sm:$0xff]
    %v3146 = vld [vmem:[%s2688 + $0xe48] sm:$0xff]
    %v3147 = vld [vmem:[%s2688 + $0xe50] sm:$0xff]
    %v3148 = vld [vmem:[%s2688 + $0xe58] sm:$0xff]
    %v3149 = vld [vmem:[%s2688 + $0xe60] sm:$0xff]
    %v3150 = vld [vmem:[%s2688 + $0xe68] sm:$0xff]
    %v3151 = vld [vmem:[%s2688 + $0xe70] sm:$0xff]
    %v3152 = vld [vmem:[%s2688 + $0xe78] sm:$0xff]
    %v3153 = vld [vmem:[%s2688 + $0xe80] sm:$0xff]
    %v3154 = vld [vmem:[%s2688 + $0xe88] sm:$0xff]
    %v3155 = vld [vmem:[%s2688 + $0xe90] sm:$0xff]
    %v3156 = vld [vmem:[%s2688 + $0xe98] sm:$0xff]
    %v3157 = vld [vmem:[%s2688 + $0xea0] sm:$0xff]
    %v3158 = vld [vmem:[%s2688 + $0xea8] sm:$0xff]
    %v3159 = vld [vmem:[%s2688 + $0xeb0] sm:$0xff]
    %v3160 = vld [vmem:[%s2688 + $0xeb8] sm:$0xff]
    %v3161 = vld [vmem:[%s2688 + $0xec0] sm:$0xff]
    %v3162 = vld [vmem:[%s2688 + $0xec8] sm:$0xff]
    %v3163 = vld [vmem:[%s2688 + $0xed0] sm:$0xff]
    %v3164 = vld [vmem:[%s2688 + $0xed8] sm:$0xff]
    %v3165 = vld [vmem:[%s2688 + $0xee0] sm:$0xff]
    %v3166 = vld [vmem:[%s2688 + $0xee8] sm:$0xff]
    %v3167 = vld [vmem:[%s2688 + $0xef0] sm:$0xff]
    %v3168 = vld [vmem:[%s2688 + $0xef8] sm:$0xff]
    %v3169 = vld [vmem:[%s2688 + $0xf00] sm:$0xff]
    %v3170 = vld [vmem:[%s2688 + $0xf08] sm:$0xff]
    %v3171 = vld [vmem:[%s2688 + $0xf10] sm:$0xff]
    %v3172 = vld [vmem:[%s2688 + $0xf18] sm:$0xff]
    %v3173 = vld [vmem:[%s2688 + $0xf20] sm:$0xff]
    %v3174 = vld [vmem:[%s2688 + $0xf28] sm:$0xff]
    %v3175 = vld [vmem:[%s2688 + $0xf30] sm:$0xff]
    %v3176 = vld [vmem:[%s2688 + $0xf38] sm:$0xff]
    %v3177 = vld [vmem:[%s2688 + $0xf40] sm:$0xff]
    %v3178 = vld [vmem:[%s2688 + $0xf48] sm:$0xff]
    %v3179 = vld [vmem:[%s2688 + $0xf50] sm:$0xff]
    %v3180 = vld [vmem:[%s2688 + $0xf58] sm:$0xff]
    %v3181 = vld [vmem:[%s2688 + $0xf60] sm:$0xff]
    %v3182 = vld [vmem:[%s2688 + $0xf68] sm:$0xff]
    %v3183 = vld [vmem:[%s2688 + $0xf70] sm:$0xff]
    %v3184 = vld [vmem:[%s2688 + $0xf78] sm:$0xff]
    %v3185 = vld [vmem:[%s2688 + $0xf80] sm:$0xff]
    %v3186 = vld [vmem:[%s2688 + $0xf88] sm:$0xff]
    %v3187 = vld [vmem:[%s2688 + $0xf90] sm:$0xff]
    %v3188 = vld [vmem:[%s2688 + $0xf98] sm:$0xff]
    %v3189 = vld [vmem:[%s2688 + $0xfa0] sm:$0xff]
    %v3190 = vld [vmem:[%s2688 + $0xfa8] sm:$0xff]
    %v3191 = vld [vmem:[%s2688 + $0xfb0] sm:$0xff]
    %v3192 = vld [vmem:[%s2688 + $0xfb8] sm:$0xff]
    %v3193 = vld [vmem:[%s2688 + $0xfc0] sm:$0xff]
    %v3194 = vld [vmem:[%s2688 + $0xfc8] sm:$0xff]
    %v3195 = vld [vmem:[%s2688 + $0xfd0] sm:$0xff]
    %v3196 = vld [vmem:[%s2688 + $0xfd8] sm:$0xff]
    %v3197 = vld [vmem:[%s2688 + $0xfe0] sm:$0xff]
    %v3198 = vld [vmem:[%s2688 + $0xfe8] sm:$0xff]
    %v3199 = vld [vmem:[%s2688 + $0xff0] sm:$0xff]
    %v3200 = vld [vmem:[%s2688 + $0xff8] sm:$0xff]
    %v3201 = vld [vmem:[%s2688 + $0x1000] sm:$0xff]
    %v3202 = vld [vmem:[%s2688 + $0x1008] sm:$0xff]
    %v3203 = vld [vmem:[%s2688 + $0x1010] sm:$0xff]
    %v3204 = vld [vmem:[%s2688 + $0x1018] sm:$0xff]
    %v3205 = vld [vmem:[%s2688 + $0x1020] sm:$0xff]
    %v3206 = vld [vmem:[%s2688 + $0x1028] sm:$0xff]
    %v3207 = vld [vmem:[%s2688 + $0x1030] sm:$0xff]
    %v3208 = vld [vmem:[%s2688 + $0x1038] sm:$0xff]
    %v3209 = vld [vmem:[%s2688 + $0x1040] sm:$0xff]
    %v3210 = vld [vmem:[%s2688 + $0x1048] sm:$0xff]
    %v3211 = vld [vmem:[%s2688 + $0x1050] sm:$0xff]
    %v3212 = vld [vmem:[%s2688 + $0x1058] sm:$0xff]
    %v3213 = vld [vmem:[%s2688 + $0x1060] sm:$0xff]
    %v3214 = vld [vmem:[%s2688 + $0x1068] sm:$0xff]
    %v3215 = vld [vmem:[%s2688 + $0x1070] sm:$0xff]
    %v3216 = vld [vmem:[%s2688 + $0x1078] sm:$0xff]
    %v3217 = vld [vmem:[%s2688 + $0x1080] sm:$0xff]
    %v3218 = vld [vmem:[%s2688 + $0x1088] sm:$0xff]
    %v3219 = vld [vmem:[%s2688 + $0x1090] sm:$0xff]
    %v3220 = vld [vmem:[%s2688 + $0x1098] sm:$0xff]
    %v3221 = vld [vmem:[%s2688 + $0x10a0] sm:$0xff]
    %v3222 = vld [vmem:[%s2688 + $0x10a8] sm:$0xff]
    %v3223 = vld [vmem:[%s2688 + $0x10b0] sm:$0xff]
    %v3224 = vld [vmem:[%s2688 + $0x10b8] sm:$0xff]
    %v3225 = vld [vmem:[%s2688 + $0x10c0] sm:$0xff]
    %v3226 = vld [vmem:[%s2688 + $0x10c8] sm:$0xff]
    %v3227 = vld [vmem:[%s2688 + $0x10d0] sm:$0xff]
    %v3228 = vld [vmem:[%s2688 + $0x10d8] sm:$0xff]
    %v3229 = vld [vmem:[%s2688 + $0x10e0] sm:$0xff]
    %v3230 = vld [vmem:[%s2688 + $0x10e8] sm:$0xff]
    %v3231 = vld [vmem:[%s2688 + $0x10f0] sm:$0xff]
    %v3232 = vld [vmem:[%s2688 + $0x10f8] sm:$0xff]
    %v3233 = vld [vmem:[%s2688 + $0x1100] sm:$0xff]
    %v3234 = vld [vmem:[%s2688 + $0x1108] sm:$0xff]
    %v3235 = vld [vmem:[%s2688 + $0x1110] sm:$0xff]
    %v3236 = vld [vmem:[%s2688 + $0x1118] sm:$0xff]
    %v3237 = vld [vmem:[%s2688 + $0x1120] sm:$0xff]
    %v3238 = vld [vmem:[%s2688 + $0x1128] sm:$0xff]
    %v3239 = vld [vmem:[%s2688 + $0x1130] sm:$0xff]
    %v3240 = vld [vmem:[%s2688 + $0x1138] sm:$0xff]
    %v3241 = vld [vmem:[%s2688 + $0x1140] sm:$0xff]
    %v3242 = vld [vmem:[%s2688 + $0x1148] sm:$0xff]
    %v3243 = vld [vmem:[%s2688 + $0x1150] sm:$0xff]
    %v3244 = vld [vmem:[%s2688 + $0x1158] sm:$0xff]
    %v3245 = vld [vmem:[%s2688 + $0x1160] sm:$0xff]
    %v3246 = vld [vmem:[%s2688 + $0x1168] sm:$0xff]
    %v3247 = vld [vmem:[%s2688 + $0x1170] sm:$0xff]
    %v3248 = vld [vmem:[%s2688 + $0x1178] sm:$0xff]
    %v3249 = vld [vmem:[%s2688 + $0x1180] sm:$0xff]
    %v3250 = vld [vmem:[%s2688 + $0x1188] sm:$0xff]
    %v3251 = vld [vmem:[%s2688 + $0x1190] sm:$0xff]
    %v3252 = vld [vmem:[%s2688 + $0x1198] sm:$0xff]
    %v3253 = vld [vmem:[%s2688 + $0x11a0] sm:$0xff]
    %v3254 = vld [vmem:[%s2688 + $0x11a8] sm:$0xff]
    %v3255 = vld [vmem:[%s2688 + $0x11b0] sm:$0xff]
    %v3256 = vld [vmem:[%s2688 + $0x11b8] sm:$0xff]
    %v3257 = vld [vmem:[%s2688 + $0x11c0] sm:$0xff]
    %v3258 = vld [vmem:[%s2688 + $0x11c8] sm:$0xff]
    %v3259 = vld [vmem:[%s2688 + $0x11d0] sm:$0xff]
    %v3260 = vld [vmem:[%s2688 + $0x11d8] sm:$0xff]
    %v3261 = vld [vmem:[%s2688 + $0x11e0] sm:$0xff]
    %v3262 = vld [vmem:[%s2688 + $0x11e8] sm:$0xff]
    %v3263 = vld [vmem:[%s2688 + $0x11f0] sm:$0xff]
    %v3264 = vld [vmem:[%s2688 + $0x11f8] sm:$0xff]
    %v3265 = vld [vmem:[%s2688 + $0x1200] sm:$0xff]
    %v3266 = vld [vmem:[%s2688 + $0x1208] sm:$0xff]
    %v3267 = vld [vmem:[%s2688 + $0x1210] sm:$0xff]
    %v3268 = vld [vmem:[%s2688 + $0x1218] sm:$0xff]
    %v3269 = vld [vmem:[%s2688 + $0x1220] sm:$0xff]
    %v3270 = vld [vmem:[%s2688 + $0x1228] sm:$0xff]
    %v3271 = vld [vmem:[%s2688 + $0x1230] sm:$0xff]
    %v3272 = vld [vmem:[%s2688 + $0x1238] sm:$0xff]
    %v3273 = vld [vmem:[%s2688 + $0x1240] sm:$0xff]
    %v3274 = vld [vmem:[%s2688 + $0x1248] sm:$0xff]
    %v3275 = vld [vmem:[%s2688 + $0x1250] sm:$0xff]
    %v3276 = vld [vmem:[%s2688 + $0x1258] sm:$0xff]
    %3277 = vmatprep.subr.mxu0 %v2690
    %3278 = vmatpush1.msra.mxu0 %v2689
    %3279 = vmatprep.subr.mxu0 %v2694
    %3280 = vmatpush1.msra.mxu0 %v2693
    %3281 = vmatprep.subr.mxu0 %v2698
    %3282 = vmatpush1.msra.mxu0 %v2697
    %3283 = vmatprep.subr.mxu0 %v2702
    %3284 = vmatpush1.msra.mxu0 %v2701
    %3285 = vmatprep.subr.mxu0 %v2706
    %3286 = vmatpush1.msra.mxu0 %v2705
    %3287 = vmatprep.subr.mxu0 %v2710
    %3288 = vmatpush1.msra.mxu0 %v2709
    %3289 = vmatprep.subr.mxu0 %v2714
    %3290 = vmatpush1.msra.mxu0 %v2713
    %3291 = vmatprep.subr.mxu0 %v2718
    %3292 = vmatpush1.msra.mxu0 %v2717
    %3293 = vmatprep.subr.mxu0 %v2722
    %3294 = vmatpush1.msra.mxu0 %v2721
    %3295 = vmatprep.subr.mxu0 %v2726
    %3296 = vmatpush1.msra.mxu0 %v2725
    %3297 = vmatprep.subr.mxu0 %v2730
    %3298 = vmatpush1.msra.mxu0 %v2729
    %3299 = vmatprep.subr.mxu0 %v2734
    %3300 = vmatpush1.msra.mxu0 %v2733
    %3301 = vmatprep.subr.mxu0 %v2738
    %3302 = vmatpush1.msra.mxu0 %v2737
    %3303 = vmatprep.subr.mxu0 %v2742
    %3304 = vmatpush1.msra.mxu0 %v2741
    %3305 = vmatprep.subr.mxu0 %v2746
    %3306 = vmatpush1.msra.mxu0 %v2745
    %3307 = vmatprep.subr.mxu0 %v2750
    %3308 = vmatpush1.msra.mxu0 %v2749
    %3309 = vmatprep.subr.mxu0 %v2754
    %3310 = vmatpush1.msra.mxu0 %v2753
    %3311 = vmatprep.subr.mxu0 %v2758
    %3312 = vmatpush1.msra.mxu0 %v2757
    %3313 = vmatprep.subr.mxu0 %v2762
    %3314 = vmatpush1.msra.mxu0 %v2761
    %3315 = vmatprep.subr.mxu0 %v2766
    %3316 = vmatpush1.msra.mxu0 %v2765
    %3317 = vmatprep.subr.mxu0 %v2770
    %3318 = vmatpush1.msra.mxu0 %v2769
    %3319 = vmatprep.subr.mxu0 %v2774
    %3320 = vmatpush1.msra.mxu0 %v2773
    %3321 = vmatprep.subr.mxu0 %v2778
    %3322 = vmatpush1.msra.mxu0 %v2777
    %3323 = vmatprep.subr.mxu0 %v2782
    %3324 = vmatpush1.msra.mxu0 %v2781
    %3325 = vmatprep.subr.mxu0 %v2786
    %3326 = vmatpush1.msra.mxu0 %v2785
    %3327 = vmatprep.subr.mxu0 %v2790
    %3328 = vmatpush1.msra.mxu0 %v2789
    %3329 = vmatprep.subr.mxu0 %v2794
    %3330 = vmatpush1.msra.mxu0 %v2793
    %3331 = vmatprep.subr.mxu0 %v2798
    %3332 = vmatpush1.msra.mxu0 %v2797
    %3333 = vmatprep.subr.mxu0 %v2802
    %3334 = vmatpush1.msra.mxu0 %v2801
    %3335 = vmatprep.subr.mxu0 %v2806
    %3336 = vmatpush1.msra.mxu0 %v2805
    %3337 = vmatprep.subr.mxu0 %v2810
    %3338 = vmatpush1.msra.mxu0 %v2809
    %3339 = vmatprep.subr.mxu0 %v2814
    %3340 = vmatpush1.msra.mxu0 %v2813
    %3341 = vmatprep.mubr.f32.mxu0 %v636
    %3342 = vmatmul.mubr.f32.gmra.mrb[0].mxu0 %v628
    %v3343 = vpop.f32.mrb[0].mxu0
    %v3344 = vadd.f32 0.0, %v3343
    %v3345 = vpop.f32.mrb[0].mxu0
    %v3346 = vadd.f32 0.0, %v3345
    %3347 = vdwg.mxu0
    %3348 = vmatprep.subr.mxu0 %v2818
    %3349 = vmatpush1.msra.mxu0 %v2817
    %3350 = vmatprep.subr.mxu0 %v2822
    %3351 = vmatpush1.msra.mxu0 %v2821
    %3352 = vmatprep.subr.mxu0 %v2826
    %3353 = vmatpush1.msra.mxu0 %v2825
    %3354 = vmatprep.subr.mxu0 %v2830
    %3355 = vmatpush1.msra.mxu0 %v2829
    %3356 = vmatprep.subr.mxu0 %v2834
    %3357 = vmatpush1.msra.mxu0 %v2833
    %3358 = vmatprep.subr.mxu0 %v2838
    %3359 = vmatpush1.msra.mxu0 %v2837
    %3360 = vmatprep.subr.mxu0 %v2842
    %3361 = vmatpush1.msra.mxu0 %v2841
    %3362 = vmatprep.subr.mxu0 %v2846
    %3363 = vmatpush1.msra.mxu0 %v2845
    %3364 = vmatprep.subr.mxu0 %v2850
    %3365 = vmatpush1.msra.mxu0 %v2849
    %3366 = vmatprep.subr.mxu0 %v2854
    %3367 = vmatpush1.msra.mxu0 %v2853
    %3368 = vmatprep.subr.mxu0 %v2858
    %3369 = vmatpush1.msra.mxu0 %v2857
    %3370 = vmatprep.subr.mxu0 %v2862
    %3371 = vmatpush1.msra.mxu0 %v2861
    %3372 = vmatprep.subr.mxu0 %v2866
    %3373 = vmatpush1.msra.mxu0 %v2865
    %3374 = vmatprep.subr.mxu0 %v2870
    %3375 = vmatpush1.msra.mxu0 %v2869
    %3376 = vmatprep.subr.mxu0 %v2874
    %3377 = vmatpush1.msra.mxu0 %v2873
    %3378 = vmatprep.subr.mxu0 %v2878
    %3379 = vmatpush1.msra.mxu0 %v2877
    %3380 = vmatprep.subr.mxu0 %v2882
    %3381 = vmatpush1.msra.mxu0 %v2881
    %3382 = vmatprep.subr.mxu0 %v2886
    %3383 = vmatpush1.msra.mxu0 %v2885
    %3384 = vmatprep.subr.mxu0 %v2890
    %3385 = vmatpush1.msra.mxu0 %v2889
    %3386 = vmatprep.subr.mxu0 %v2894
    %3387 = vmatpush1.msra.mxu0 %v2893
    %3388 = vmatprep.subr.mxu0 %v2898
    %3389 = vmatpush1.msra.mxu0 %v2897
    %3390 = vmatprep.subr.mxu0 %v2902
    %3391 = vmatpush1.msra.mxu0 %v2901
    %3392 = vmatprep.subr.mxu0 %v2906
    %3393 = vmatpush1.msra.mxu0 %v2905
    %3394 = vmatprep.subr.mxu0 %v2910
    %3395 = vmatpush1.msra.mxu0 %v2909
    %3396 = vmatprep.subr.mxu0 %v2914
    %3397 = vmatpush1.msra.mxu0 %v2913
    %3398 = vmatprep.subr.mxu0 %v2918
    %3399 = vmatpush1.msra.mxu0 %v2917
    %3400 = vmatprep.subr.mxu0 %v2922
    %3401 = vmatpush1.msra.mxu0 %v2921
    %3402 = vmatprep.subr.mxu0 %v2926
    %3403 = vmatpush1.msra.mxu0 %v2925
    %3404 = vmatprep.subr.mxu0 %v2930
    %3405 = vmatpush1.msra.mxu0 %v2929
    %3406 = vmatprep.subr.mxu0 %v2934
    %3407 = vmatpush1.msra.mxu0 %v2933
    %3408 = vmatprep.subr.mxu0 %v2938
    %3409 = vmatpush1.msra.mxu0 %v2937
    %3410 = vmatprep.subr.mxu0 %v2942
    %3411 = vmatpush1.msra.mxu0 %v2941
    %3412 = vmatprep.mubr.f32.mxu0 %v637
    %3413 = vmatmul.mubr.f32.gmra.mrb[0].mxu0 %v635
    %v3414 = vpop.f32.mrb[0].mxu0
    %v3415 = vadd.f32 %v3344, %v3414
    %v3416 = vpop.f32.mrb[0].mxu0
    %v3417 = vadd.f32 %v3346, %v3416
    %3418 = vdwg.mxu0
    %3419 = vmatprep.subr.mxu0 %v2946
    %3420 = vmatpush1.msra.mxu0 %v2945
    %3421 = vmatprep.subr.mxu0 %v2950
    %3422 = vmatpush1.msra.mxu0 %v2949
    %3423 = vmatprep.subr.mxu0 %v2954
    %3424 = vmatpush1.msra.mxu0 %v2953
    %3425 = vmatprep.subr.mxu0 %v2958
    %3426 = vmatpush1.msra.mxu0 %v2957
    %3427 = vmatprep.subr.mxu0 %v2962
    %3428 = vmatpush1.msra.mxu0 %v2961
    %3429 = vmatprep.subr.mxu0 %v2966
    %3430 = vmatpush1.msra.mxu0 %v2965
    %3431 = vmatprep.subr.mxu0 %v2970
    %3432 = vmatpush1.msra.mxu0 %v2969
    %3433 = vmatprep.subr.mxu0 %v2974
    %3434 = vmatpush1.msra.mxu0 %v2973
    %3435 = vmatprep.subr.mxu0 %v2978
    %3436 = vmatpush1.msra.mxu0 %v2977
    %3437 = vmatprep.subr.mxu0 %v2982
    %3438 = vmatpush1.msra.mxu0 %v2981
    %3439 = vmatprep.subr.mxu0 %v2986
    %3440 = vmatpush1.msra.mxu0 %v2985
    %3441 = vmatprep.subr.mxu0 %v2990
    %3442 = vmatpush1.msra.mxu0 %v2989
    %3443 = vmatprep.subr.mxu0 %v2994
    %3444 = vmatpush1.msra.mxu0 %v2993
    %3445 = vmatprep.subr.mxu0 %v2998
    %3446 = vmatpush1.msra.mxu0 %v2997
    %3447 = vmatprep.subr.mxu0 %v3002
    %3448 = vmatpush1.msra.mxu0 %v3001
    %3449 = vmatprep.subr.mxu0 %v3006
    %3450 = vmatpush1.msra.mxu0 %v3005
    %3451 = vmatprep.subr.mxu0 %v3010
    %3452 = vmatpush1.msra.mxu0 %v3009
    %3453 = vmatprep.subr.mxu0 %v3014
    %3454 = vmatpush1.msra.mxu0 %v3013
    %3455 = vmatprep.subr.mxu0 %v3018
    %3456 = vmatpush1.msra.mxu0 %v3017
    %3457 = vmatprep.subr.mxu0 %v3022
    %3458 = vmatpush1.msra.mxu0 %v3021
    %3459 = vmatprep.subr.mxu0 %v3026
    %3460 = vmatpush1.msra.mxu0 %v3025
    %3461 = vmatprep.subr.mxu0 %v3030
    %3462 = vmatpush1.msra.mxu0 %v3029
    %3463 = vmatprep.subr.mxu0 %v3034
    %3464 = vmatpush1.msra.mxu0 %v3033
    %3465 = vmatprep.subr.mxu0 %v3038
    %3466 = vmatpush1.msra.mxu0 %v3037
    %3467 = vmatprep.subr.mxu0 %v3042
    %3468 = vmatpush1.msra.mxu0 %v3041
    %3469 = vmatprep.subr.mxu0 %v3046
    %3470 = vmatpush1.msra.mxu0 %v3045
    %3471 = vmatprep.subr.mxu0 %v3050
    %3472 = vmatpush1.msra.mxu0 %v3049
    %3473 = vmatprep.subr.mxu0 %v3054
    %3474 = vmatpush1.msra.mxu0 %v3053
    %3475 = vmatprep.subr.mxu0 %v3058
    %3476 = vmatpush1.msra.mxu0 %v3057
    %3477 = vmatprep.subr.mxu0 %v3062
    %3478 = vmatpush1.msra.mxu0 %v3061
    %3479 = vmatprep.subr.mxu0 %v3066
    %3480 = vmatpush1.msra.mxu0 %v3065
    %3481 = vmatprep.subr.mxu0 %v3070
    %3482 = vmatpush1.msra.mxu0 %v3069
    %3483 = vmatprep.mubr.f32.mxu0 %v653
    %3484 = vmatmul.mubr.f32.gmra.mrb[0].mxu0 %v645
    %v3485 = vpop.f32.mrb[0].mxu0
    %v3486 = vadd.f32 %v3415, %v3485
    %v3487 = vpop.f32.mrb[0].mxu0
    %v3488 = vadd.f32 %v3417, %v3487
    %3489 = vdwg.mxu0
    %3490 = vmatprep.subr.mxu0 %v3074
    %3491 = vmatpush1.msra.mxu0 %v3073
    %3492 = vmatprep.subr.mxu0 %v3078
    %3493 = vmatpush1.msra.mxu0 %v3077
    %3494 = vmatprep.subr.mxu0 %v3082
    %3495 = vmatpush1.msra.mxu0 %v3081
    %3496 = vmatprep.subr.mxu0 %v3086
    %3497 = vmatpush1.msra.mxu0 %v3085
    %3498 = vmatprep.subr.mxu0 %v3090
    %3499 = vmatpush1.msra.mxu0 %v3089
    %3500 = vmatprep.subr.mxu0 %v3094
    %3501 = vmatpush1.msra.mxu0 %v3093
    %3502 = vmatprep.subr.mxu0 %v3098
    %3503 = vmatpush1.msra.mxu0 %v3097
    %3504 = vmatprep.subr.mxu0 %v3102
    %3505 = vmatpush1.msra.mxu0 %v3101
    %3506 = vmatprep.subr.mxu0 %v3106
    %3507 = vmatpush1.msra.mxu0 %v3105
    %3508 = vmatprep.subr.mxu0 %v3110
    %3509 = vmatpush1.msra.mxu0 %v3109
    %3510 = vmatprep.subr.mxu0 %v3114
    %3511 = vmatpush1.msra.mxu0 %v3113
    %3512 = vmatprep.subr.mxu0 %v3118
    %3513 = vmatpush1.msra.mxu0 %v3117
    %3514 = vmatprep.subr.mxu0 %v3122
    %3515 = vmatpush1.msra.mxu0 %v3121
    %3516 = vmatprep.subr.mxu0 %v3126
    %3517 = vmatpush1.msra.mxu0 %v3125
    %3518 = vmatprep.subr.mxu0 %v3130
    %3519 = vmatpush1.msra.mxu0 %v3129
    %3520 = vmatprep.subr.mxu0 %v3134
    %3521 = vmatpush1.msra.mxu0 %v3133
    %3522 = vmatprep.subr.mxu0 %v3138
    %3523 = vmatpush1.msra.mxu0 %v3137
    %3524 = vmatprep.subr.mxu0 %v3142
    %3525 = vmatpush1.msra.mxu0 %v3141
    %3526 = vmatprep.subr.mxu0 %v3146
    %3527 = vmatpush1.msra.mxu0 %v3145
    %3528 = vmatprep.subr.mxu0 %v3150
    %3529 = vmatpush1.msra.mxu0 %v3149
    %3530 = vmatprep.subr.mxu0 %v3154
    %3531 = vmatpush1.msra.mxu0 %v3153
    %3532 = vmatprep.subr.mxu0 %v3158
    %3533 = vmatpush1.msra.mxu0 %v3157
    %3534 = vmatprep.subr.mxu0 %v3162
    %3535 = vmatpush1.msra.mxu0 %v3161
    %3536 = vmatprep.subr.mxu0 %v3166
    %3537 = vmatpush1.msra.mxu0 %v3165
    %3538 = vmatprep.subr.mxu0 %v3170
    %3539 = vmatpush1.msra.mxu0 %v3169
    %3540 = vmatprep.subr.mxu0 %v3174
    %3541 = vmatpush1.msra.mxu0 %v3173
    %3542 = vmatprep.subr.mxu0 %v3178
    %3543 = vmatpush1.msra.mxu0 %v3177
    %3544 = vmatprep.subr.mxu0 %v3182
    %3545 = vmatpush1.msra.mxu0 %v3181
    %3546 = vmatprep.subr.mxu0 %v3186
    %3547 = vmatpush1.msra.mxu0 %v3185
    %3548 = vmatprep.subr.mxu0 %v3190
    %3549 = vmatpush1.msra.mxu0 %v3189
    %3550 = vmatprep.subr.mxu0 %v3194
    %3551 = vmatpush1.msra.mxu0 %v3193
    %3552 = vmatprep.subr.mxu0 %v3198
    %3553 = vmatpush1.msra.mxu0 %v3197
    %3554 = vmatprep.mubr.f32.mxu0 %v654
    %3555 = vmatmul.mubr.f32.gmra.mrb[0].mxu0 %v652
    %v3556 = vpop.f32.mrb[0].mxu0
    %v3557 = vadd.f32 %v3486, %v3556
    %v3558 = vpop.f32.mrb[0].mxu0
    %v3559 = vadd.f32 %v3488, %v3558
    %3560 = vdwg.mxu0
    %3561 = vmatprep.subr.mxu0 %v3202
    %3562 = vmatpush1.msra.mxu0 %v3201
    %3563 = vmatprep.subr.mxu0 %v3206
    %3564 = vmatpush1.msra.mxu0 %v3205
    %3565 = vmatprep.subr.mxu0 %v3210
    %3566 = vmatpush1.msra.mxu0 %v3209
    %3567 = vmatprep.subr.mxu0 %v3214
    %3568 = vmatpush1.msra.mxu0 %v3213
    %3569 = vmatprep.subr.mxu0 %v3218
    %3570 = vmatpush1.msra.mxu0 %v3217
    %3571 = vmatprep.subr.mxu0 %v3222
    %3572 = vmatpush1.msra.mxu0 %v3221
    %3573 = vmatprep.subr.mxu0 %v3226
    %3574 = vmatpush1.msra.mxu0 %v3225
    %3575 = vmatprep.subr.mxu0 %v3230
    %3576 = vmatpush1.msra.mxu0 %v3229
    %3577 = vmatprep.subr.mxu0 %v3234
    %3578 = vmatpush1.msra.mxu0 %v3233
    %3579 = vmatprep.subr.mxu0 %v3238
    %3580 = vmatpush1.msra.mxu0 %v3237
    %3581 = vmatprep.subr.mxu0 %v3242
    %3582 = vmatpush1.msra.mxu0 %v3241
    %3583 = vmatprep.subr.mxu0 %v3246
    %3584 = vmatpush1.msra.mxu0 %v3245
    %3585 = vmatprep.subr.mxu0 %v3250
    %3586 = vmatpush1.msra.mxu0 %v3249
    %3587 = vmatprep.subr.mxu0 %v3254
    %3588 = vmatpush1.msra.mxu0 %v3253
    %3589 = vmatprep.subr.mxu0 %v3258
    %3590 = vmatpush1.msra.mxu0 %v3257
    %3591 = vmatprep.subr.mxu0 %v3262
    %3592 = vmatpush1.msra.mxu0 %v3261
    %3593 = vmatprep.subr.mxu0 %v3266
    %3594 = vmatpush1.msra.mxu0 %v3265
    %3595 = vmatprep.subr.mxu0 %v3270
    %3596 = vmatpush1.msra.mxu0 %v3269
    %3597 = vmatprep.subr.mxu0 %v3274
    %3598 = vmatpush1.msra.mxu0 %v3273
    %3599 = vmatprep.subr.mxu0 0.0
    %3600 = vmatpush1.msra.mxu0 0.0
    %3601 = vmatprep.subr.mxu0 0.0
    %3602 = vmatpush1.msra.mxu0 0.0
    %3603 = vmatprep.subr.mxu0 0.0
    %3604 = vmatpush1.msra.mxu0 0.0
    %3605 = vmatprep.subr.mxu0 0.0
    %3606 = vmatpush1.msra.mxu0 0.0
    %3607 = vmatprep.subr.mxu0 0.0
    %3608 = vmatpush1.msra.mxu0 0.0
    %3609 = vmatprep.subr.mxu0 0.0
    %3610 = vmatpush1.msra.mxu0 0.0
    %3611 = vmatprep.subr.mxu0 0.0
    %3612 = vmatpush1.msra.mxu0 0.0
    %3613 = vmatprep.subr.mxu0 0.0
    %3614 = vmatpush1.msra.mxu0 0.0
    %3615 = vmatprep.subr.mxu0 0.0
    %3616 = vmatpush1.msra.mxu0 0.0
    %3617 = vmatprep.subr.mxu0 0.0
    %3618 = vmatpush1.msra.mxu0 0.0
    %3619 = vmatprep.subr.mxu0 0.0
    %3620 = vmatpush1.msra.mxu0 0.0
    %3621 = vmatprep.subr.mxu0 0.0
    %3622 = vmatpush1.msra.mxu0 0.0
    %3623 = vmatprep.subr.mxu0 0.0
    %3624 = vmatpush1.msra.mxu0 0.0
    %3625 = vmatprep.mubr.f32.mxu0 %v673
    %3626 = vmatmul.mubr.f32.gmra.mrb[0].mxu0 %v661
    %v3627 = vpop.f32.mrb[0].mxu0
    %v3628 = vadd.f32 %v3557, %v3627
    %v3629 = vpop.f32.mrb[0].mxu0
    %v3630 = vadd.f32 %v3559, %v3629
    %3631 = vdwg.mxu0
    %3632 = vmatprep.subr.mxu0 %v2692
    %3633 = vmatpush1.msra.mxu0 %v2691
    %3634 = vmatprep.subr.mxu0 %v2696
    %3635 = vmatpush1.msra.mxu0 %v2695
    %3636 = vmatprep.subr.mxu0 %v2700
    %3637 = vmatpush1.msra.mxu0 %v2699
    %3638 = vmatprep.subr.mxu0 %v2704
    %3639 = vmatpush1.msra.mxu0 %v2703
    %3640 = vmatprep.subr.mxu0 %v2708
    %3641 = vmatpush1.msra.mxu0 %v2707
    %3642 = vmatprep.subr.mxu0 %v2712
    %3643 = vmatpush1.msra.mxu0 %v2711
    %3644 = vmatprep.subr.mxu0 %v2716
    %3645 = vmatpush1.msra.mxu0 %v2715
    %3646 = vmatprep.subr.mxu0 %v2720
    %3647 = vmatpush1.msra.mxu0 %v2719
    %3648 = vmatprep.subr.mxu0 %v2724
    %3649 = vmatpush1.msra.mxu0 %v2723
    %3650 = vmatprep.subr.mxu0 %v2728
    %3651 = vmatpush1.msra.mxu0 %v2727
    %3652 = vmatprep.subr.mxu0 %v2732
    %3653 = vmatpush1.msra.mxu0 %v2731
    %3654 = vmatprep.subr.mxu0 %v2736
    %3655 = vmatpush1.msra.mxu0 %v2735
    %3656 = vmatprep.subr.mxu0 %v2740
    %3657 = vmatpush1.msra.mxu0 %v2739
    %3658 = vmatprep.subr.mxu0 %v2744
    %3659 = vmatpush1.msra.mxu0 %v2743
    %3660 = vmatprep.subr.mxu0 %v2748
    %3661 = vmatpush1.msra.mxu0 %v2747
    %3662 = vmatprep.subr.mxu0 %v2752
    %3663 = vmatpush1.msra.mxu0 %v2751
    %3664 = vmatprep.subr.mxu0 %v2756
    %3665 = vmatpush1.msra.mxu0 %v2755
    %3666 = vmatprep.subr.mxu0 %v2760
    %3667 = vmatpush1.msra.mxu0 %v2759
    %3668 = vmatprep.subr.mxu0 %v2764
    %3669 = vmatpush1.msra.mxu0 %v2763
    %3670 = vmatprep.subr.mxu0 %v2768
    %3671 = vmatpush1.msra.mxu0 %v2767
    %3672 = vmatprep.subr.mxu0 %v2772
    %3673 = vmatpush1.msra.mxu0 %v2771
    %3674 = vmatprep.subr.mxu0 %v2776
    %3675 = vmatpush1.msra.mxu0 %v2775
    %3676 = vmatprep.subr.mxu0 %v2780
    %3677 = vmatpush1.msra.mxu0 %v2779
    %3678 = vmatprep.subr.mxu0 %v2784
    %3679 = vmatpush1.msra.mxu0 %v2783
    %3680 = vmatprep.subr.mxu0 %v2788
    %3681 = vmatpush1.msra.mxu0 %v2787
    %3682 = vmatprep.subr.mxu0 %v2792
    %3683 = vmatpush1.msra.mxu0 %v2791
    %3684 = vmatprep.subr.mxu0 %v2796
    %3685 = vmatpush1.msra.mxu0 %v2795
    %3686 = vmatprep.subr.mxu0 %v2800
    %3687 = vmatpush1.msra.mxu0 %v2799
    %3688 = vmatprep.subr.mxu0 %v2804
    %3689 = vmatpush1.msra.mxu0 %v2803
    %3690 = vmatprep.subr.mxu0 %v2808
    %3691 = vmatpush1.msra.mxu0 %v2807
    %3692 = vmatprep.subr.mxu0 %v2812
    %3693 = vmatpush1.msra.mxu0 %v2811
    %3694 = vmatprep.subr.mxu0 %v2816
    %3695 = vmatpush1.msra.mxu0 %v2815
    %3696 = vmatprep.mubr.f32.mxu0 %v636
    %3697 = vmatmul.mubr.f32.gmra.mrb[0].mxu0 %v628
    %v3698 = vpop.f32.mrb[0].mxu0
    %v3699 = vadd.f32 0.0, %v3698
    %v3700 = vpop.f32.mrb[0].mxu0
    %v3701 = vadd.f32 0.0, %v3700
    %3702 = vdwg.mxu0
    %3703 = vmatprep.subr.mxu0 %v2820
    %3704 = vmatpush1.msra.mxu0 %v2819
    %3705 = vmatprep.subr.mxu0 %v2824
    %3706 = vmatpush1.msra.mxu0 %v2823
    %3707 = vmatprep.subr.mxu0 %v2828
    %3708 = vmatpush1.msra.mxu0 %v2827
    %3709 = vmatprep.subr.mxu0 %v2832
    %3710 = vmatpush1.msra.mxu0 %v2831
    %3711 = vmatprep.subr.mxu0 %v2836
    %3712 = vmatpush1.msra.mxu0 %v2835
    %3713 = vmatprep.subr.mxu0 %v2840
    %3714 = vmatpush1.msra.mxu0 %v2839
    %3715 = vmatprep.subr.mxu0 %v2844
    %3716 = vmatpush1.msra.mxu0 %v2843
    %3717 = vmatprep.subr.mxu0 %v2848
    %3718 = vmatpush1.msra.mxu0 %v2847
    %3719 = vmatprep.subr.mxu0 %v2852
    %3720 = vmatpush1.msra.mxu0 %v2851
    %3721 = vmatprep.subr.mxu0 %v2856
    %3722 = vmatpush1.msra.mxu0 %v2855
    %3723 = vmatprep.subr.mxu0 %v2860
    %3724 = vmatpush1.msra.mxu0 %v2859
    %3725 = vmatprep.subr.mxu0 %v2864
    %3726 = vmatpush1.msra.mxu0 %v2863
    %3727 = vmatprep.subr.mxu0 %v2868
    %3728 = vmatpush1.msra.mxu0 %v2867
    %3729 = vmatprep.subr.mxu0 %v2872
    %3730 = vmatpush1.msra.mxu0 %v2871
    %3731 = vmatprep.subr.mxu0 %v2876
    %3732 = vmatpush1.msra.mxu0 %v2875
    %3733 = vmatprep.subr.mxu0 %v2880
    %3734 = vmatpush1.msra.mxu0 %v2879
    %3735 = vmatprep.subr.mxu0 %v2884
    %3736 = vmatpush1.msra.mxu0 %v2883
    %3737 = vmatprep.subr.mxu0 %v2888
    %3738 = vmatpush1.msra.mxu0 %v2887
    %3739 = vmatprep.subr.mxu0 %v2892
    %3740 = vmatpush1.msra.mxu0 %v2891
    %3741 = vmatprep.subr.mxu0 %v2896
    %3742 = vmatpush1.msra.mxu0 %v2895
    %3743 = vmatprep.subr.mxu0 %v2900
    %3744 = vmatpush1.msra.mxu0 %v2899
    %3745 = vmatprep.subr.mxu0 %v2904
    %3746 = vmatpush1.msra.mxu0 %v2903
    %3747 = vmatprep.subr.mxu0 %v2908
    %3748 = vmatpush1.msra.mxu0 %v2907
    %3749 = vmatprep.subr.mxu0 %v2912
    %3750 = vmatpush1.msra.mxu0 %v2911
    %3751 = vmatprep.subr.mxu0 %v2916
    %3752 = vmatpush1.msra.mxu0 %v2915
    %3753 = vmatprep.subr.mxu0 %v2920
    %3754 = vmatpush1.msra.mxu0 %v2919
    %3755 = vmatprep.subr.mxu0 %v2924
    %3756 = vmatpush1.msra.mxu0 %v2923
    %3757 = vmatprep.subr.mxu0 %v2928
    %3758 = vmatpush1.msra.mxu0 %v2927
    %3759 = vmatprep.subr.mxu0 %v2932
    %3760 = vmatpush1.msra.mxu0 %v2931
    %3761 = vmatprep.subr.mxu0 %v2936
    %3762 = vmatpush1.msra.mxu0 %v2935
    %3763 = vmatprep.subr.mxu0 %v2940
    %3764 = vmatpush1.msra.mxu0 %v2939
    %3765 = vmatprep.subr.mxu0 %v2944
    %3766 = vmatpush1.msra.mxu0 %v2943
    %3767 = vmatprep.mubr.f32.mxu0 %v637
    %3768 = vmatmul.mubr.f32.gmra.mrb[0].mxu0 %v635
    %v3769 = vpop.f32.mrb[0].mxu0
    %v3770 = vadd.f32 %v3699, %v3769
    %v3771 = vpop.f32.mrb[0].mxu0
    %v3772 = vadd.f32 %v3701, %v3771
    %3773 = vdwg.mxu0
    %3774 = vmatprep.subr.mxu0 %v2948
    %3775 = vmatpush1.msra.mxu0 %v2947
    %3776 = vmatprep.subr.mxu0 %v2952
    %3777 = vmatpush1.msra.mxu0 %v2951
    %3778 = vmatprep.subr.mxu0 %v2956
    %3779 = vmatpush1.msra.mxu0 %v2955
    %3780 = vmatprep.subr.mxu0 %v2960
    %3781 = vmatpush1.msra.mxu0 %v2959
    %3782 = vmatprep.subr.mxu0 %v2964
    %3783 = vmatpush1.msra.mxu0 %v2963
    %3784 = vmatprep.subr.mxu0 %v2968
    %3785 = vmatpush1.msra.mxu0 %v2967
    %3786 = vmatprep.subr.mxu0 %v2972
    %3787 = vmatpush1.msra.mxu0 %v2971
    %3788 = vmatprep.subr.mxu0 %v2976
    %3789 = vmatpush1.msra.mxu0 %v2975
    %3790 = vmatprep.subr.mxu0 %v2980
    %3791 = vmatpush1.msra.mxu0 %v2979
    %3792 = vmatprep.subr.mxu0 %v2984
    %3793 = vmatpush1.msra.mxu0 %v2983
    %3794 = vmatprep.subr.mxu0 %v2988
    %3795 = vmatpush1.msra.mxu0 %v2987
    %3796 = vmatprep.subr.mxu0 %v2992
    %3797 = vmatpush1.msra.mxu0 %v2991
    %3798 = vmatprep.subr.mxu0 %v2996
    %3799 = vmatpush1.msra.mxu0 %v2995
    %3800 = vmatprep.subr.mxu0 %v3000
    %3801 = vmatpush1.msra.mxu0 %v2999
    %3802 = vmatprep.subr.mxu0 %v3004
    %3803 = vmatpush1.msra.mxu0 %v3003
    %3804 = vmatprep.subr.mxu0 %v3008
    %3805 = vmatpush1.msra.mxu0 %v3007
    %3806 = vmatprep.subr.mxu0 %v3012
    %3807 = vmatpush1.msra.mxu0 %v3011
    %3808 = vmatprep.subr.mxu0 %v3016
    %3809 = vmatpush1.msra.mxu0 %v3015
    %3810 = vmatprep.subr.mxu0 %v3020
    %3811 = vmatpush1.msra.mxu0 %v3019
    %3812 = vmatprep.subr.mxu0 %v3024
    %3813 = vmatpush1.msra.mxu0 %v3023
    %3814 = vmatprep.subr.mxu0 %v3028
    %3815 = vmatpush1.msra.mxu0 %v3027
    %3816 = vmatprep.subr.mxu0 %v3032
    %3817 = vmatpush1.msra.mxu0 %v3031
    %3818 = vmatprep.subr.mxu0 %v3036
    %3819 = vmatpush1.msra.mxu0 %v3035
    %3820 = vmatprep.subr.mxu0 %v3040
    %3821 = vmatpush1.msra.mxu0 %v3039
    %3822 = vmatprep.subr.mxu0 %v3044
    %3823 = vmatpush1.msra.mxu0 %v3043
    %3824 = vmatprep.subr.mxu0 %v3048
    %3825 = vmatpush1.msra.mxu0 %v3047
    %3826 = vmatprep.subr.mxu0 %v3052
    %3827 = vmatpush1.msra.mxu0 %v3051
    %3828 = vmatprep.subr.mxu0 %v3056
    %3829 = vmatpush1.msra.mxu0 %v3055
    %3830 = vmatprep.subr.mxu0 %v3060
    %3831 = vmatpush1.msra.mxu0 %v3059
    %3832 = vmatprep.subr.mxu0 %v3064
    %3833 = vmatpush1.msra.mxu0 %v3063
    %3834 = vmatprep.subr.mxu0 %v3068
    %3835 = vmatpush1.msra.mxu0 %v3067
    %3836 = vmatprep.subr.mxu0 %v3072
    %3837 = vmatpush1.msra.mxu0 %v3071
    %3838 = vmatprep.mubr.f32.mxu0 %v653
    %3839 = vmatmul.mubr.f32.gmra.mrb[0].mxu0 %v645
    %v3840 = vpop.f32.mrb[0].mxu0
    %v3841 = vadd.f32 %v3770, %v3840
    %v3842 = vpop.f32.mrb[0].mxu0
    %v3843 = vadd.f32 %v3772, %v3842
    %3844 = vdwg.mxu0
    %3845 = vmatprep.subr.mxu0 %v3076
    %3846 = vmatpush1.msra.mxu0 %v3075
    %3847 = vmatprep.subr.mxu0 %v3080
    %3848 = vmatpush1.msra.mxu0 %v3079
    %3849 = vmatprep.subr.mxu0 %v3084
    %3850 = vmatpush1.msra.mxu0 %v3083
    %3851 = vmatprep.subr.mxu0 %v3088
    %3852 = vmatpush1.msra.mxu0 %v3087
    %3853 = vmatprep.subr.mxu0 %v3092
    %3854 = vmatpush1.msra.mxu0 %v3091
    %3855 = vmatprep.subr.mxu0 %v3096
    %3856 = vmatpush1.msra.mxu0 %v3095
    %3857 = vmatprep.subr.mxu0 %v3100
    %3858 = vmatpush1.msra.mxu0 %v3099
    %3859 = vmatprep.subr.mxu0 %v3104
    %3860 = vmatpush1.msra.mxu0 %v3103
    %3861 = vmatprep.subr.mxu0 %v3108
    %3862 = vmatpush1.msra.mxu0 %v3107
    %3863 = vmatprep.subr.mxu0 %v3112
    %3864 = vmatpush1.msra.mxu0 %v3111
    %3865 = vmatprep.subr.mxu0 %v3116
    %3866 = vmatpush1.msra.mxu0 %v3115
    %3867 = vmatprep.subr.mxu0 %v3120
    %3868 = vmatpush1.msra.mxu0 %v3119
    %3869 = vmatprep.subr.mxu0 %v3124
    %3870 = vmatpush1.msra.mxu0 %v3123
    %3871 = vmatprep.subr.mxu0 %v3128
    %3872 = vmatpush1.msra.mxu0 %v3127
    %3873 = vmatprep.subr.mxu0 %v3132
    %3874 = vmatpush1.msra.mxu0 %v3131
    %3875 = vmatprep.subr.mxu0 %v3136
    %3876 = vmatpush1.msra.mxu0 %v3135
    %3877 = vmatprep.subr.mxu0 %v3140
    %3878 = vmatpush1.msra.mxu0 %v3139
    %3879 = vmatprep.subr.mxu0 %v3144
    %3880 = vmatpush1.msra.mxu0 %v3143
    %3881 = vmatprep.subr.mxu0 %v3148
    %3882 = vmatpush1.msra.mxu0 %v3147
    %3883 = vmatprep.subr.mxu0 %v3152
    %3884 = vmatpush1.msra.mxu0 %v3151
    %3885 = vmatprep.subr.mxu0 %v3156
    %3886 = vmatpush1.msra.mxu0 %v3155
    %3887 = vmatprep.subr.mxu0 %v3160
    %3888 = vmatpush1.msra.mxu0 %v3159
    %3889 = vmatprep.subr.mxu0 %v3164
    %3890 = vmatpush1.msra.mxu0 %v3163
    %3891 = vmatprep.subr.mxu0 %v3168
    %3892 = vmatpush1.msra.mxu0 %v3167
    %3893 = vmatprep.subr.mxu0 %v3172
    %3894 = vmatpush1.msra.mxu0 %v3171
    %3895 = vmatprep.subr.mxu0 %v3176
    %3896 = vmatpush1.msra.mxu0 %v3175
    %3897 = vmatprep.subr.mxu0 %v3180
    %3898 = vmatpush1.msra.mxu0 %v3179
    %3899 = vmatprep.subr.mxu0 %v3184
    %3900 = vmatpush1.msra.mxu0 %v3183
    %3901 = vmatprep.subr.mxu0 %v3188
    %3902 = vmatpush1.msra.mxu0 %v3187
    %3903 = vmatprep.subr.mxu0 %v3192
    %3904 = vmatpush1.msra.mxu0 %v3191
    %3905 = vmatprep.subr.mxu0 %v3196
    %3906 = vmatpush1.msra.mxu0 %v3195
    %3907 = vmatprep.subr.mxu0 %v3200
    %3908 = vmatpush1.msra.mxu0 %v3199
    %3909 = vmatprep.mubr.f32.mxu0 %v654
    %3910 = vmatmul.mubr.f32.gmra.mrb[0].mxu0 %v652
    %v3911 = vpop.f32.mrb[0].mxu0
    %v3912 = vadd.f32 %v3841, %v3911
    %v3913 = vpop.f32.mrb[0].mxu0
    %v3914 = vadd.f32 %v3843, %v3913
    %3915 = vdwg.mxu0
    %3916 = vmatprep.subr.mxu0 %v3204
    %3917 = vmatpush1.msra.mxu0 %v3203
    %3918 = vmatprep.subr.mxu0 %v3208
    %3919 = vmatpush1.msra.mxu0 %v3207
    %3920 = vmatprep.subr.mxu0 %v3212
    %3921 = vmatpush1.msra.mxu0 %v3211
    %3922 = vmatprep.subr.mxu0 %v3216
    %3923 = vmatpush1.msra.mxu0 %v3215
    %3924 = vmatprep.subr.mxu0 %v3220
    %3925 = vmatpush1.msra.mxu0 %v3219
    %3926 = vmatprep.subr.mxu0 %v3224
    %3927 = vmatpush1.msra.mxu0 %v3223
    %3928 = vmatprep.subr.mxu0 %v3228
    %3929 = vmatpush1.msra.mxu0 %v3227
    %3930 = vmatprep.subr.mxu0 %v3232
    %3931 = vmatpush1.msra.mxu0 %v3231
    %3932 = vmatprep.subr.mxu0 %v3236
    %3933 = vmatpush1.msra.mxu0 %v3235
    %3934 = vmatprep.subr.mxu0 %v3240
    %3935 = vmatpush1.msra.mxu0 %v3239
    %3936 = vmatprep.subr.mxu0 %v3244
    %3937 = vmatpush1.msra.mxu0 %v3243
    %3938 = vmatprep.subr.mxu0 %v3248
    %3939 = vmatpush1.msra.mxu0 %v3247
    %3940 = vmatprep.subr.mxu0 %v3252
    %3941 = vmatpush1.msra.mxu0 %v3251
    %3942 = vmatprep.subr.mxu0 %v3256
    %3943 = vmatpush1.msra.mxu0 %v3255
    %3944 = vmatprep.subr.mxu0 %v3260
    %3945 = vmatpush1.msra.mxu0 %v3259
    %3946 = vmatprep.subr.mxu0 %v3264
    %3947 = vmatpush1.msra.mxu0 %v3263
    %3948 = vmatprep.subr.mxu0 %v3268
    %3949 = vmatpush1.msra.mxu0 %v3267
    %3950 = vmatprep.subr.mxu0 %v3272
    %3951 = vmatpush1.msra.mxu0 %v3271
    %3952 = vmatprep.subr.mxu0 %v3276
    %3953 = vmatpush1.msra.mxu0 %v3275
    %3954 = vmatprep.subr.mxu0 0.0
    %3955 = vmatpush1.msra.mxu0 0.0
    %3956 = vmatprep.subr.mxu0 0.0
    %3957 = vmatpush1.msra.mxu0 0.0
    %3958 = vmatprep.subr.mxu0 0.0
    %3959 = vmatpush1.msra.mxu0 0.0
    %3960 = vmatprep.subr.mxu0 0.0
    %3961 = vmatpush1.msra.mxu0 0.0
    %3962 = vmatprep.subr.mxu0 0.0
    %3963 = vmatpush1.msra.mxu0 0.0
    %3964 = vmatprep.subr.mxu0 0.0
    %3965 = vmatpush1.msra.mxu0 0.0
    %3966 = vmatprep.subr.mxu0 0.0
    %3967 = vmatpush1.msra.mxu0 0.0
    %3968 = vmatprep.subr.mxu0 0.0
    %3969 = vmatpush1.msra.mxu0 0.0
    %3970 = vmatprep.subr.mxu0 0.0
    %3971 = vmatpush1.msra.mxu0 0.0
    %3972 = vmatprep.subr.mxu0 0.0
    %3973 = vmatpush1.msra.mxu0 0.0
    %3974 = vmatprep.subr.mxu0 0.0
    %3975 = vmatpush1.msra.mxu0 0.0
    %3976 = vmatprep.subr.mxu0 0.0
    %3977 = vmatpush1.msra.mxu0 0.0
    %3978 = vmatprep.subr.mxu0 0.0
    %3979 = vmatpush1.msra.mxu0 0.0
    %3980 = vmatprep.mubr.f32.mxu0 %v673
    %3981 = vmatmul.mubr.f32.gmra.mrb[0].mxu0 %v661
    %v3982 = vpop.f32.mrb[0].mxu0
    %v3983 = vadd.f32 %v3912, %v3982
    %v3984 = vpop.f32.mrb[0].mxu0
    %v3985 = vadd.f32 %v3914, %v3984
    %3986 = vdwg.mxu0
    %v3987 = vmax.f32 %v2684, %v3628
    %v3988 = vmax.f32 %v2685, %v3630
    %v3989 = vmax.f32 %v2686, %v3983
    %v3990 = vmax.f32 %v2687, %v3985
    %s3991 = scalar_lea.vmem %s1, 14112
    %v3992 = vld [vmem:[%s3991] sm:$0xff]
    %v3993 = vld [vmem:[%s3991 + $0x8] sm:$0xff]
    %v3994 = vld [vmem:[%s3991 + $0x10] sm:$0xff]
    %v3995 = vld [vmem:[%s3991 + $0x18] sm:$0xff]
    %v3996 = vld [vmem:[%s3991 + $0x20] sm:$0xff]
    %v3997 = vld [vmem:[%s3991 + $0x28] sm:$0xff]
    %v3998 = vld [vmem:[%s3991 + $0x30] sm:$0xff]
    %v3999 = vld [vmem:[%s3991 + $0x38] sm:$0xff]
    %v4000 = vld [vmem:[%s3991 + $0x40] sm:$0xff]
    %v4001 = vld [vmem:[%s3991 + $0x48] sm:$0xff]
    %v4002 = vld [vmem:[%s3991 + $0x50] sm:$0xff]
    %v4003 = vld [vmem:[%s3991 + $0x58] sm:$0xff]
    %v4004 = vld [vmem:[%s3991 + $0x60] sm:$0xff]
    %v4005 = vld [vmem:[%s3991 + $0x68] sm:$0xff]
    %v4006 = vld [vmem:[%s3991 + $0x70] sm:$0xff]
    %v4007 = vld [vmem:[%s3991 + $0x78] sm:$0xff]
    %v4008 = vld [vmem:[%s3991 + $0x80] sm:$0xff]
    %v4009 = vld [vmem:[%s3991 + $0x88] sm:$0xff]
    %v4010 = vld [vmem:[%s3991 + $0x90] sm:$0xff]
    %v4011 = vld [vmem:[%s3991 + $0x98] sm:$0xff]
    %v4012 = vld [vmem:[%s3991 + $0xa0] sm:$0xff]
    %v4013 = vld [vmem:[%s3991 + $0xa8] sm:$0xff]
    %v4014 = vld [vmem:[%s3991 + $0xb0] sm:$0xff]
    %v4015 = vld [vmem:[%s3991 + $0xb8] sm:$0xff]
    %v4016 = vld [vmem:[%s3991 + $0xc0] sm:$0xff]
    %v4017 = vld [vmem:[%s3991 + $0xc8] sm:$0xff]
    %v4018 = vld [vmem:[%s3991 + $0xd0] sm:$0xff]
    %v4019 = vld [vmem:[%s3991 + $0xd8] sm:$0xff]
    %v4020 = vld [vmem:[%s3991 + $0xe0] sm:$0xff]
    %v4021 = vld [vmem:[%s3991 + $0xe8] sm:$0xff]
    %v4022 = vld [vmem:[%s3991 + $0xf0] sm:$0xff]
    %v4023 = vld [vmem:[%s3991 + $0xf8] sm:$0xff]
    %v4024 = vld [vmem:[%s3991 + $0x100] sm:$0xff]
    %v4025 = vld [vmem:[%s3991 + $0x108] sm:$0xff]
    %v4026 = vld [vmem:[%s3991 + $0x110] sm:$0xff]
    %v4027 = vld [vmem:[%s3991 + $0x118] sm:$0xff]
    %v4028 = vld [vmem:[%s3991 + $0x120] sm:$0xff]
    %v4029 = vld [vmem:[%s3991 + $0x128] sm:$0xff]
    %v4030 = vld [vmem:[%s3991 + $0x130] sm:$0xff]
    %v4031 = vld [vmem:[%s3991 + $0x138] sm:$0xff]
    %v4032 = vld [vmem:[%s3991 + $0x140] sm:$0xff]
    %v4033 = vld [vmem:[%s3991 + $0x148] sm:$0xff]
    %v4034 = vld [vmem:[%s3991 + $0x150] sm:$0xff]
    %v4035 = vld [vmem:[%s3991 + $0x158] sm:$0xff]
    %v4036 = vld [vmem:[%s3991 + $0x160] sm:$0xff]
    %v4037 = vld [vmem:[%s3991 + $0x168] sm:$0xff]
    %v4038 = vld [vmem:[%s3991 + $0x170] sm:$0xff]
    %v4039 = vld [vmem:[%s3991 + $0x178] sm:$0xff]
    %v4040 = vld [vmem:[%s3991 + $0x180] sm:$0xff]
    %v4041 = vld [vmem:[%s3991 + $0x188] sm:$0xff]
    %v4042 = vld [vmem:[%s3991 + $0x190] sm:$0xff]
    %v4043 = vld [vmem:[%s3991 + $0x198] sm:$0xff]
    %v4044 = vld [vmem:[%s3991 + $0x1a0] sm:$0xff]
    %v4045 = vld [vmem:[%s3991 + $0x1a8] sm:$0xff]
    %v4046 = vld [vmem:[%s3991 + $0x1b0] sm:$0xff]
    %v4047 = vld [vmem:[%s3991 + $0x1b8] sm:$0xff]
    %v4048 = vld [vmem:[%s3991 + $0x1c0] sm:$0xff]
    %v4049 = vld [vmem:[%s3991 + $0x1c8] sm:$0xff]
    %v4050 = vld [vmem:[%s3991 + $0x1d0] sm:$0xff]
    %v4051 = vld [vmem:[%s3991 + $0x1d8] sm:$0xff]
    %v4052 = vld [vmem:[%s3991 + $0x1e0] sm:$0xff]
    %v4053 = vld [vmem:[%s3991 + $0x1e8] sm:$0xff]
    %v4054 = vld [vmem:[%s3991 + $0x1f0] sm:$0xff]
    %v4055 = vld [vmem:[%s3991 + $0x1f8] sm:$0xff]
    %v4056 = vld [vmem:[%s3991 + $0x200] sm:$0xff]
    %v4057 = vld [vmem:[%s3991 + $0x208] sm:$0xff]
    %v4058 = vld [vmem:[%s3991 + $0x210] sm:$0xff]
    %v4059 = vld [vmem:[%s3991 + $0x218] sm:$0xff]
    %v4060 = vld [vmem:[%s3991 + $0x220] sm:$0xff]
    %v4061 = vld [vmem:[%s3991 + $0x228] sm:$0xff]
    %v4062 = vld [vmem:[%s3991 + $0x230] sm:$0xff]
    %v4063 = vld [vmem:[%s3991 + $0x238] sm:$0xff]
    %v4064 = vld [vmem:[%s3991 + $0x240] sm:$0xff]
    %v4065 = vld [vmem:[%s3991 + $0x248] sm:$0xff]
    %v4066 = vld [vmem:[%s3991 + $0x250] sm:$0xff]
    %v4067 = vld [vmem:[%s3991 + $0x258] sm:$0xff]
    %v4068 = vld [vmem:[%s3991 + $0x260] sm:$0xff]
    %v4069 = vld [vmem:[%s3991 + $0x268] sm:$0xff]
    %v4070 = vld [vmem:[%s3991 + $0x270] sm:$0xff]
    %v4071 = vld [vmem:[%s3991 + $0x278] sm:$0xff]
    %v4072 = vld [vmem:[%s3991 + $0x280] sm:$0xff]
    %v4073 = vld [vmem:[%s3991 + $0x288] sm:$0xff]
    %v4074 = vld [vmem:[%s3991 + $0x290] sm:$0xff]
    %v4075 = vld [vmem:[%s3991 + $0x298] sm:$0xff]
    %v4076 = vld [vmem:[%s3991 + $0x2a0] sm:$0xff]
    %v4077 = vld [vmem:[%s3991 + $0x2a8] sm:$0xff]
    %v4078 = vld [vmem:[%s3991 + $0x2b0] sm:$0xff]
    %v4079 = vld [vmem:[%s3991 + $0x2b8] sm:$0xff]
    %v4080 = vld [vmem:[%s3991 + $0x2c0] sm:$0xff]
    %v4081 = vld [vmem:[%s3991 + $0x2c8] sm:$0xff]
    %v4082 = vld [vmem:[%s3991 + $0x2d0] sm:$0xff]
    %v4083 = vld [vmem:[%s3991 + $0x2d8] sm:$0xff]
    %v4084 = vld [vmem:[%s3991 + $0x2e0] sm:$0xff]
    %v4085 = vld [vmem:[%s3991 + $0x2e8] sm:$0xff]
    %v4086 = vld [vmem:[%s3991 + $0x2f0] sm:$0xff]
    %v4087 = vld [vmem:[%s3991 + $0x2f8] sm:$0xff]
    %v4088 = vld [vmem:[%s3991 + $0x300] sm:$0xff]
    %v4089 = vld [vmem:[%s3991 + $0x308] sm:$0xff]
    %v4090 = vld [vmem:[%s3991 + $0x310] sm:$0xff]
    %v4091 = vld [vmem:[%s3991 + $0x318] sm:$0xff]
    %v4092 = vld [vmem:[%s3991 + $0x320] sm:$0xff]
    %v4093 = vld [vmem:[%s3991 + $0x328] sm:$0xff]
    %v4094 = vld [vmem:[%s3991 + $0x330] sm:$0xff]
    %v4095 = vld [vmem:[%s3991 + $0x338] sm:$0xff]
    %v4096 = vld [vmem:[%s3991 + $0x340] sm:$0xff]
    %v4097 = vld [vmem:[%s3991 + $0x348] sm:$0xff]
    %v4098 = vld [vmem:[%s3991 + $0x350] sm:$0xff]
    %v4099 = vld [vmem:[%s3991 + $0x358] sm:$0xff]
    %v4100 = vld [vmem:[%s3991 + $0x360] sm:$0xff]
    %v4101 = vld [vmem:[%s3991 + $0x368] sm:$0xff]
    %v4102 = vld [vmem:[%s3991 + $0x370] sm:$0xff]
    %v4103 = vld [vmem:[%s3991 + $0x378] sm:$0xff]
    %v4104 = vld [vmem:[%s3991 + $0x380] sm:$0xff]
    %v4105 = vld [vmem:[%s3991 + $0x388] sm:$0xff]
    %v4106 = vld [vmem:[%s3991 + $0x390] sm:$0xff]
    %v4107 = vld [vmem:[%s3991 + $0x398] sm:$0xff]
    %v4108 = vld [vmem:[%s3991 + $0x3a0] sm:$0xff]
    %v4109 = vld [vmem:[%s3991 + $0x3a8] sm:$0xff]
    %v4110 = vld [vmem:[%s3991 + $0x3b0] sm:$0xff]
    %v4111 = vld [vmem:[%s3991 + $0x3b8] sm:$0xff]
    %v4112 = vld [vmem:[%s3991 + $0x3c0] sm:$0xff]
    %v4113 = vld [vmem:[%s3991 + $0x3c8] sm:$0xff]
    %v4114 = vld [vmem:[%s3991 + $0x3d0] sm:$0xff]
    %v4115 = vld [vmem:[%s3991 + $0x3d8] sm:$0xff]
    %v4116 = vld [vmem:[%s3991 + $0x3e0] sm:$0xff]
    %v4117 = vld [vmem:[%s3991 + $0x3e8] sm:$0xff]
    %v4118 = vld [vmem:[%s3991 + $0x3f0] sm:$0xff]
    %v4119 = vld [vmem:[%s3991 + $0x3f8] sm:$0xff]
    %v4120 = vld [vmem:[%s3991 + $0x400] sm:$0xff]
    %v4121 = vld [vmem:[%s3991 + $0x408] sm:$0xff]
    %v4122 = vld [vmem:[%s3991 + $0x410] sm:$0xff]
    %v4123 = vld [vmem:[%s3991 + $0x418] sm:$0xff]
    %v4124 = vld [vmem:[%s3991 + $0x420] sm:$0xff]
    %v4125 = vld [vmem:[%s3991 + $0x428] sm:$0xff]
    %v4126 = vld [vmem:[%s3991 + $0x430] sm:$0xff]
    %v4127 = vld [vmem:[%s3991 + $0x438] sm:$0xff]
    %v4128 = vld [vmem:[%s3991 + $0x440] sm:$0xff]
    %v4129 = vld [vmem:[%s3991 + $0x448] sm:$0xff]
    %v4130 = vld [vmem:[%s3991 + $0x450] sm:$0xff]
    %v4131 = vld [vmem:[%s3991 + $0x458] sm:$0xff]
    %v4132 = vld [vmem:[%s3991 + $0x460] sm:$0xff]
    %v4133 = vld [vmem:[%s3991 + $0x468] sm:$0xff]
    %v4134 = vld [vmem:[%s3991 + $0x470] sm:$0xff]
    %v4135 = vld [vmem:[%s3991 + $0x478] sm:$0xff]
    %v4136 = vld [vmem:[%s3991 + $0x480] sm:$0xff]
    %v4137 = vld [vmem:[%s3991 + $0x488] sm:$0xff]
    %v4138 = vld [vmem:[%s3991 + $0x490] sm:$0xff]
    %v4139 = vld [vmem:[%s3991 + $0x498] sm:$0xff]
    %v4140 = vld [vmem:[%s3991 + $0x4a0] sm:$0xff]
    %v4141 = vld [vmem:[%s3991 + $0x4a8] sm:$0xff]
    %v4142 = vld [vmem:[%s3991 + $0x4b0] sm:$0xff]
    %v4143 = vld [vmem:[%s3991 + $0x4b8] sm:$0xff]
    %v4144 = vld [vmem:[%s3991 + $0x4c0] sm:$0xff]
    %v4145 = vld [vmem:[%s3991 + $0x4c8] sm:$0xff]
    %v4146 = vld [vmem:[%s3991 + $0x4d0] sm:$0xff]
    %v4147 = vld [vmem:[%s3991 + $0x4d8] sm:$0xff]
    %v4148 = vld [vmem:[%s3991 + $0x4e0] sm:$0xff]
    %v4149 = vld [vmem:[%s3991 + $0x4e8] sm:$0xff]
    %v4150 = vld [vmem:[%s3991 + $0x4f0] sm:$0xff]
    %v4151 = vld [vmem:[%s3991 + $0x4f8] sm:$0xff]
    %v4152 = vld [vmem:[%s3991 + $0x500] sm:$0xff]
    %v4153 = vld [vmem:[%s3991 + $0x508] sm:$0xff]
    %v4154 = vld [vmem:[%s3991 + $0x510] sm:$0xff]
    %v4155 = vld [vmem:[%s3991 + $0x518] sm:$0xff]
    %v4156 = vld [vmem:[%s3991 + $0x520] sm:$0xff]
    %v4157 = vld [vmem:[%s3991 + $0x528] sm:$0xff]
    %v4158 = vld [vmem:[%s3991 + $0x530] sm:$0xff]
    %v4159 = vld [vmem:[%s3991 + $0x538] sm:$0xff]
    %v4160 = vld [vmem:[%s3991 + $0x540] sm:$0xff]
    %v4161 = vld [vmem:[%s3991 + $0x548] sm:$0xff]
    %v4162 = vld [vmem:[%s3991 + $0x550] sm:$0xff]
    %v4163 = vld [vmem:[%s3991 + $0x558] sm:$0xff]
    %v4164 = vld [vmem:[%s3991 + $0x560] sm:$0xff]
    %v4165 = vld [vmem:[%s3991 + $0x568] sm:$0xff]
    %v4166 = vld [vmem:[%s3991 + $0x570] sm:$0xff]
    %v4167 = vld [vmem:[%s3991 + $0x578] sm:$0xff]
    %v4168 = vld [vmem:[%s3991 + $0x580] sm:$0xff]
    %v4169 = vld [vmem:[%s3991 + $0x588] sm:$0xff]
    %v4170 = vld [vmem:[%s3991 + $0x590] sm:$0xff]
    %v4171 = vld [vmem:[%s3991 + $0x598] sm:$0xff]
    %v4172 = vld [vmem:[%s3991 + $0x5a0] sm:$0xff]
    %v4173 = vld [vmem:[%s3991 + $0x5a8] sm:$0xff]
    %v4174 = vld [vmem:[%s3991 + $0x5b0] sm:$0xff]
    %v4175 = vld [vmem:[%s3991 + $0x5b8] sm:$0xff]
    %v4176 = vld [vmem:[%s3991 + $0x5c0] sm:$0xff]
    %v4177 = vld [vmem:[%s3991 + $0x5c8] sm:$0xff]
    %v4178 = vld [vmem:[%s3991 + $0x5d0] sm:$0xff]
    %v4179 = vld [vmem:[%s3991 + $0x5d8] sm:$0xff]
    %v4180 = vld [vmem:[%s3991 + $0x5e0] sm:$0xff]
    %v4181 = vld [vmem:[%s3991 + $0x5e8] sm:$0xff]
    %v4182 = vld [vmem:[%s3991 + $0x5f0] sm:$0xff]
    %v4183 = vld [vmem:[%s3991 + $0x5f8] sm:$0xff]
    %v4184 = vld [vmem:[%s3991 + $0x600] sm:$0xff]
    %v4185 = vld [vmem:[%s3991 + $0x608] sm:$0xff]
    %v4186 = vld [vmem:[%s3991 + $0x610] sm:$0xff]
    %v4187 = vld [vmem:[%s3991 + $0x618] sm:$0xff]
    %v4188 = vld [vmem:[%s3991 + $0x620] sm:$0xff]
    %v4189 = vld [vmem:[%s3991 + $0x628] sm:$0xff]
    %v4190 = vld [vmem:[%s3991 + $0x630] sm:$0xff]
    %v4191 = vld [vmem:[%s3991 + $0x638] sm:$0xff]
    %v4192 = vld [vmem:[%s3991 + $0x640] sm:$0xff]
    %v4193 = vld [vmem:[%s3991 + $0x648] sm:$0xff]
    %v4194 = vld [vmem:[%s3991 + $0x650] sm:$0xff]
    %v4195 = vld [vmem:[%s3991 + $0x658] sm:$0xff]
    %v4196 = vld [vmem:[%s3991 + $0x660] sm:$0xff]
    %v4197 = vld [vmem:[%s3991 + $0x668] sm:$0xff]
    %v4198 = vld [vmem:[%s3991 + $0x670] sm:$0xff]
    %v4199 = vld [vmem:[%s3991 + $0x678] sm:$0xff]
    %v4200 = vld [vmem:[%s3991 + $0x680] sm:$0xff]
    %v4201 = vld [vmem:[%s3991 + $0x688] sm:$0xff]
    %v4202 = vld [vmem:[%s3991 + $0x690] sm:$0xff]
    %v4203 = vld [vmem:[%s3991 + $0x698] sm:$0xff]
    %v4204 = vld [vmem:[%s3991 + $0x6a0] sm:$0xff]
    %v4205 = vld [vmem:[%s3991 + $0x6a8] sm:$0xff]
    %v4206 = vld [vmem:[%s3991 + $0x6b0] sm:$0xff]
    %v4207 = vld [vmem:[%s3991 + $0x6b8] sm:$0xff]
    %v4208 = vld [vmem:[%s3991 + $0x6c0] sm:$0xff]
    %v4209 = vld [vmem:[%s3991 + $0x6c8] sm:$0xff]
    %v4210 = vld [vmem:[%s3991 + $0x6d0] sm:$0xff]
    %v4211 = vld [vmem:[%s3991 + $0x6d8] sm:$0xff]
    %v4212 = vld [vmem:[%s3991 + $0x6e0] sm:$0xff]
    %v4213 = vld [vmem:[%s3991 + $0x6e8] sm:$0xff]
    %v4214 = vld [vmem:[%s3991 + $0x6f0] sm:$0xff]
    %v4215 = vld [vmem:[%s3991 + $0x6f8] sm:$0xff]
    %v4216 = vld [vmem:[%s3991 + $0x700] sm:$0xff]
    %v4217 = vld [vmem:[%s3991 + $0x708] sm:$0xff]
    %v4218 = vld [vmem:[%s3991 + $0x710] sm:$0xff]
    %v4219 = vld [vmem:[%s3991 + $0x718] sm:$0xff]
    %v4220 = vld [vmem:[%s3991 + $0x720] sm:$0xff]
    %v4221 = vld [vmem:[%s3991 + $0x728] sm:$0xff]
    %v4222 = vld [vmem:[%s3991 + $0x730] sm:$0xff]
    %v4223 = vld [vmem:[%s3991 + $0x738] sm:$0xff]
    %v4224 = vld [vmem:[%s3991 + $0x740] sm:$0xff]
    %v4225 = vld [vmem:[%s3991 + $0x748] sm:$0xff]
    %v4226 = vld [vmem:[%s3991 + $0x750] sm:$0xff]
    %v4227 = vld [vmem:[%s3991 + $0x758] sm:$0xff]
    %v4228 = vld [vmem:[%s3991 + $0x760] sm:$0xff]
    %v4229 = vld [vmem:[%s3991 + $0x768] sm:$0xff]
    %v4230 = vld [vmem:[%s3991 + $0x770] sm:$0xff]
    %v4231 = vld [vmem:[%s3991 + $0x778] sm:$0xff]
    %v4232 = vld [vmem:[%s3991 + $0x780] sm:$0xff]
    %v4233 = vld [vmem:[%s3991 + $0x788] sm:$0xff]
    %v4234 = vld [vmem:[%s3991 + $0x790] sm:$0xff]
    %v4235 = vld [vmem:[%s3991 + $0x798] sm:$0xff]
    %v4236 = vld [vmem:[%s3991 + $0x7a0] sm:$0xff]
    %v4237 = vld [vmem:[%s3991 + $0x7a8] sm:$0xff]
    %v4238 = vld [vmem:[%s3991 + $0x7b0] sm:$0xff]
    %v4239 = vld [vmem:[%s3991 + $0x7b8] sm:$0xff]
    %v4240 = vld [vmem:[%s3991 + $0x7c0] sm:$0xff]
    %v4241 = vld [vmem:[%s3991 + $0x7c8] sm:$0xff]
    %v4242 = vld [vmem:[%s3991 + $0x7d0] sm:$0xff]
    %v4243 = vld [vmem:[%s3991 + $0x7d8] sm:$0xff]
    %v4244 = vld [vmem:[%s3991 + $0x7e0] sm:$0xff]
    %v4245 = vld [vmem:[%s3991 + $0x7e8] sm:$0xff]
    %v4246 = vld [vmem:[%s3991 + $0x7f0] sm:$0xff]
    %v4247 = vld [vmem:[%s3991 + $0x7f8] sm:$0xff]
    %v4248 = vld [vmem:[%s3991 + $0x800] sm:$0xff]
    %v4249 = vld [vmem:[%s3991 + $0x808] sm:$0xff]
    %v4250 = vld [vmem:[%s3991 + $0x810] sm:$0xff]
    %v4251 = vld [vmem:[%s3991 + $0x818] sm:$0xff]
    %v4252 = vld [vmem:[%s3991 + $0x820] sm:$0xff]
    %v4253 = vld [vmem:[%s3991 + $0x828] sm:$0xff]
    %v4254 = vld [vmem:[%s3991 + $0x830] sm:$0xff]
    %v4255 = vld [vmem:[%s3991 + $0x838] sm:$0xff]
    %v4256 = vld [vmem:[%s3991 + $0x840] sm:$0xff]
    %v4257 = vld [vmem:[%s3991 + $0x848] sm:$0xff]
    %v4258 = vld [vmem:[%s3991 + $0x850] sm:$0xff]
    %v4259 = vld [vmem:[%s3991 + $0x858] sm:$0xff]
    %v4260 = vld [vmem:[%s3991 + $0x860] sm:$0xff]
    %v4261 = vld [vmem:[%s3991 + $0x868] sm:$0xff]
    %v4262 = vld [vmem:[%s3991 + $0x870] sm:$0xff]
    %v4263 = vld [vmem:[%s3991 + $0x878] sm:$0xff]
    %v4264 = vld [vmem:[%s3991 + $0x880] sm:$0xff]
    %v4265 = vld [vmem:[%s3991 + $0x888] sm:$0xff]
    %v4266 = vld [vmem:[%s3991 + $0x890] sm:$0xff]
    %v4267 = vld [vmem:[%s3991 + $0x898] sm:$0xff]
    %v4268 = vld [vmem:[%s3991 + $0x8a0] sm:$0xff]
    %v4269 = vld [vmem:[%s3991 + $0x8a8] sm:$0xff]
    %v4270 = vld [vmem:[%s3991 + $0x8b0] sm:$0xff]
    %v4271 = vld [vmem:[%s3991 + $0x8b8] sm:$0xff]
    %v4272 = vld [vmem:[%s3991 + $0x8c0] sm:$0xff]
    %v4273 = vld [vmem:[%s3991 + $0x8c8] sm:$0xff]
    %v4274 = vld [vmem:[%s3991 + $0x8d0] sm:$0xff]
    %v4275 = vld [vmem:[%s3991 + $0x8d8] sm:$0xff]
    %v4276 = vld [vmem:[%s3991 + $0x8e0] sm:$0xff]
    %v4277 = vld [vmem:[%s3991 + $0x8e8] sm:$0xff]
    %v4278 = vld [vmem:[%s3991 + $0x8f0] sm:$0xff]
    %v4279 = vld [vmem:[%s3991 + $0x8f8] sm:$0xff]
    %v4280 = vld [vmem:[%s3991 + $0x900] sm:$0xff]
    %v4281 = vld [vmem:[%s3991 + $0x908] sm:$0xff]
    %v4282 = vld [vmem:[%s3991 + $0x910] sm:$0xff]
    %v4283 = vld [vmem:[%s3991 + $0x918] sm:$0xff]
    %v4284 = vld [vmem:[%s3991 + $0x920] sm:$0xff]
    %v4285 = vld [vmem:[%s3991 + $0x928] sm:$0xff]
    %v4286 = vld [vmem:[%s3991 + $0x930] sm:$0xff]
    %v4287 = vld [vmem:[%s3991 + $0x938] sm:$0xff]
    %v4288 = vld [vmem:[%s3991 + $0x940] sm:$0xff]
    %v4289 = vld [vmem:[%s3991 + $0x948] sm:$0xff]
    %v4290 = vld [vmem:[%s3991 + $0x950] sm:$0xff]
    %v4291 = vld [vmem:[%s3991 + $0x958] sm:$0xff]
    %v4292 = vld [vmem:[%s3991 + $0x960] sm:$0xff]
    %v4293 = vld [vmem:[%s3991 + $0x968] sm:$0xff]
    %v4294 = vld [vmem:[%s3991 + $0x970] sm:$0xff]
    %v4295 = vld [vmem:[%s3991 + $0x978] sm:$0xff]
    %v4296 = vld [vmem:[%s3991 + $0x980] sm:$0xff]
    %v4297 = vld [vmem:[%s3991 + $0x988] sm:$0xff]
    %v4298 = vld [vmem:[%s3991 + $0x990] sm:$0xff]
    %v4299 = vld [vmem:[%s3991 + $0x998] sm:$0xff]
    %v4300 = vld [vmem:[%s3991 + $0x9a0] sm:$0xff]
    %v4301 = vld [vmem:[%s3991 + $0x9a8] sm:$0xff]
    %v4302 = vld [vmem:[%s3991 + $0x9b0] sm:$0xff]
    %v4303 = vld [vmem:[%s3991 + $0x9b8] sm:$0xff]
    %v4304 = vld [vmem:[%s3991 + $0x9c0] sm:$0xff]
    %v4305 = vld [vmem:[%s3991 + $0x9c8] sm:$0xff]
    %v4306 = vld [vmem:[%s3991 + $0x9d0] sm:$0xff]
    %v4307 = vld [vmem:[%s3991 + $0x9d8] sm:$0xff]
    %v4308 = vld [vmem:[%s3991 + $0x9e0] sm:$0xff]
    %v4309 = vld [vmem:[%s3991 + $0x9e8] sm:$0xff]
    %v4310 = vld [vmem:[%s3991 + $0x9f0] sm:$0xff]
    %v4311 = vld [vmem:[%s3991 + $0x9f8] sm:$0xff]
    %v4312 = vld [vmem:[%s3991 + $0xa00] sm:$0xff]
    %v4313 = vld [vmem:[%s3991 + $0xa08] sm:$0xff]
    %v4314 = vld [vmem:[%s3991 + $0xa10] sm:$0xff]
    %v4315 = vld [vmem:[%s3991 + $0xa18] sm:$0xff]
    %v4316 = vld [vmem:[%s3991 + $0xa20] sm:$0xff]
    %v4317 = vld [vmem:[%s3991 + $0xa28] sm:$0xff]
    %v4318 = vld [vmem:[%s3991 + $0xa30] sm:$0xff]
    %v4319 = vld [vmem:[%s3991 + $0xa38] sm:$0xff]
    %v4320 = vld [vmem:[%s3991 + $0xa40] sm:$0xff]
    %v4321 = vld [vmem:[%s3991 + $0xa48] sm:$0xff]
    %v4322 = vld [vmem:[%s3991 + $0xa50] sm:$0xff]
    %v4323 = vld [vmem:[%s3991 + $0xa58] sm:$0xff]
    %v4324 = vld [vmem:[%s3991 + $0xa60] sm:$0xff]
    %v4325 = vld [vmem:[%s3991 + $0xa68] sm:$0xff]
    %v4326 = vld [vmem:[%s3991 + $0xa70] sm:$0xff]
    %v4327 = vld [vmem:[%s3991 + $0xa78] sm:$0xff]
    %v4328 = vld [vmem:[%s3991 + $0xa80] sm:$0xff]
    %v4329 = vld [vmem:[%s3991 + $0xa88] sm:$0xff]
    %v4330 = vld [vmem:[%s3991 + $0xa90] sm:$0xff]
    %v4331 = vld [vmem:[%s3991 + $0xa98] sm:$0xff]
    %v4332 = vld [vmem:[%s3991 + $0xaa0] sm:$0xff]
    %v4333 = vld [vmem:[%s3991 + $0xaa8] sm:$0xff]
    %v4334 = vld [vmem:[%s3991 + $0xab0] sm:$0xff]
    %v4335 = vld [vmem:[%s3991 + $0xab8] sm:$0xff]
    %v4336 = vld [vmem:[%s3991 + $0xac0] sm:$0xff]
    %v4337 = vld [vmem:[%s3991 + $0xac8] sm:$0xff]
    %v4338 = vld [vmem:[%s3991 + $0xad0] sm:$0xff]
    %v4339 = vld [vmem:[%s3991 + $0xad8] sm:$0xff]
    %v4340 = vld [vmem:[%s3991 + $0xae0] sm:$0xff]
    %v4341 = vld [vmem:[%s3991 + $0xae8] sm:$0xff]
    %v4342 = vld [vmem:[%s3991 + $0xaf0] sm:$0xff]
    %v4343 = vld [vmem:[%s3991 + $0xaf8] sm:$0xff]
    %v4344 = vld [vmem:[%s3991 + $0xb00] sm:$0xff]
    %v4345 = vld [vmem:[%s3991 + $0xb08] sm:$0xff]
    %v4346 = vld [vmem:[%s3991 + $0xb10] sm:$0xff]
    %v4347 = vld [vmem:[%s3991 + $0xb18] sm:$0xff]
    %v4348 = vld [vmem:[%s3991 + $0xb20] sm:$0xff]
    %v4349 = vld [vmem:[%s3991 + $0xb28] sm:$0xff]
    %v4350 = vld [vmem:[%s3991 + $0xb30] sm:$0xff]
    %v4351 = vld [vmem:[%s3991 + $0xb38] sm:$0xff]
    %v4352 = vld [vmem:[%s3991 + $0xb40] sm:$0xff]
    %v4353 = vld [vmem:[%s3991 + $0xb48] sm:$0xff]
    %v4354 = vld [vmem:[%s3991 + $0xb50] sm:$0xff]
    %v4355 = vld [vmem:[%s3991 + $0xb58] sm:$0xff]
    %v4356 = vld [vmem:[%s3991 + $0xb60] sm:$0xff]
    %v4357 = vld [vmem:[%s3991 + $0xb68] sm:$0xff]
    %v4358 = vld [vmem:[%s3991 + $0xb70] sm:$0xff]
    %v4359 = vld [vmem:[%s3991 + $0xb78] sm:$0xff]
    %v4360 = vld [vmem:[%s3991 + $0xb80] sm:$0xff]
    %v4361 = vld [vmem:[%s3991 + $0xb88] sm:$0xff]
    %v4362 = vld [vmem:[%s3991 + $0xb90] sm:$0xff]
    %v4363 = vld [vmem:[%s3991 + $0xb98] sm:$0xff]
    %v4364 = vld [vmem:[%s3991 + $0xba0] sm:$0xff]
    %v4365 = vld [vmem:[%s3991 + $0xba8] sm:$0xff]
    %v4366 = vld [vmem:[%s3991 + $0xbb0] sm:$0xff]
    %v4367 = vld [vmem:[%s3991 + $0xbb8] sm:$0xff]
    %v4368 = vld [vmem:[%s3991 + $0xbc0] sm:$0xff]
    %v4369 = vld [vmem:[%s3991 + $0xbc8] sm:$0xff]
    %v4370 = vld [vmem:[%s3991 + $0xbd0] sm:$0xff]
    %v4371 = vld [vmem:[%s3991 + $0xbd8] sm:$0xff]
    %v4372 = vld [vmem:[%s3991 + $0xbe0] sm:$0xff]
    %v4373 = vld [vmem:[%s3991 + $0xbe8] sm:$0xff]
    %v4374 = vld [vmem:[%s3991 + $0xbf0] sm:$0xff]
    %v4375 = vld [vmem:[%s3991 + $0xbf8] sm:$0xff]
    %v4376 = vld [vmem:[%s3991 + $0xc00] sm:$0xff]
    %v4377 = vld [vmem:[%s3991 + $0xc08] sm:$0xff]
    %v4378 = vld [vmem:[%s3991 + $0xc10] sm:$0xff]
    %v4379 = vld [vmem:[%s3991 + $0xc18] sm:$0xff]
    %v4380 = vld [vmem:[%s3991 + $0xc20] sm:$0xff]
    %v4381 = vld [vmem:[%s3991 + $0xc28] sm:$0xff]
    %v4382 = vld [vmem:[%s3991 + $0xc30] sm:$0xff]
    %v4383 = vld [vmem:[%s3991 + $0xc38] sm:$0xff]
    %v4384 = vld [vmem:[%s3991 + $0xc40] sm:$0xff]
    %v4385 = vld [vmem:[%s3991 + $0xc48] sm:$0xff]
    %v4386 = vld [vmem:[%s3991 + $0xc50] sm:$0xff]
    %v4387 = vld [vmem:[%s3991 + $0xc58] sm:$0xff]
    %v4388 = vld [vmem:[%s3991 + $0xc60] sm:$0xff]
    %v4389 = vld [vmem:[%s3991 + $0xc68] sm:$0xff]
    %v4390 = vld [vmem:[%s3991 + $0xc70] sm:$0xff]
    %v4391 = vld [vmem:[%s3991 + $0xc78] sm:$0xff]
    %v4392 = vld [vmem:[%s3991 + $0xc80] sm:$0xff]
    %v4393 = vld [vmem:[%s3991 + $0xc88] sm:$0xff]
    %v4394 = vld [vmem:[%s3991 + $0xc90] sm:$0xff]
    %v4395 = vld [vmem:[%s3991 + $0xc98] sm:$0xff]
    %v4396 = vld [vmem:[%s3991 + $0xca0] sm:$0xff]
    %v4397 = vld [vmem:[%s3991 + $0xca8] sm:$0xff]
    %v4398 = vld [vmem:[%s3991 + $0xcb0] sm:$0xff]
    %v4399 = vld [vmem:[%s3991 + $0xcb8] sm:$0xff]
    %v4400 = vld [vmem:[%s3991 + $0xcc0] sm:$0xff]
    %v4401 = vld [vmem:[%s3991 + $0xcc8] sm:$0xff]
    %v4402 = vld [vmem:[%s3991 + $0xcd0] sm:$0xff]
    %v4403 = vld [vmem:[%s3991 + $0xcd8] sm:$0xff]
    %v4404 = vld [vmem:[%s3991 + $0xce0] sm:$0xff]
    %v4405 = vld [vmem:[%s3991 + $0xce8] sm:$0xff]
    %v4406 = vld [vmem:[%s3991 + $0xcf0] sm:$0xff]
    %v4407 = vld [vmem:[%s3991 + $0xcf8] sm:$0xff]
    %v4408 = vld [vmem:[%s3991 + $0xd00] sm:$0xff]
    %v4409 = vld [vmem:[%s3991 + $0xd08] sm:$0xff]
    %v4410 = vld [vmem:[%s3991 + $0xd10] sm:$0xff]
    %v4411 = vld [vmem:[%s3991 + $0xd18] sm:$0xff]
    %v4412 = vld [vmem:[%s3991 + $0xd20] sm:$0xff]
    %v4413 = vld [vmem:[%s3991 + $0xd28] sm:$0xff]
    %v4414 = vld [vmem:[%s3991 + $0xd30] sm:$0xff]
    %v4415 = vld [vmem:[%s3991 + $0xd38] sm:$0xff]
    %v4416 = vld [vmem:[%s3991 + $0xd40] sm:$0xff]
    %v4417 = vld [vmem:[%s3991 + $0xd48] sm:$0xff]
    %v4418 = vld [vmem:[%s3991 + $0xd50] sm:$0xff]
    %v4419 = vld [vmem:[%s3991 + $0xd58] sm:$0xff]
    %v4420 = vld [vmem:[%s3991 + $0xd60] sm:$0xff]
    %v4421 = vld [vmem:[%s3991 + $0xd68] sm:$0xff]
    %v4422 = vld [vmem:[%s3991 + $0xd70] sm:$0xff]
    %v4423 = vld [vmem:[%s3991 + $0xd78] sm:$0xff]
    %v4424 = vld [vmem:[%s3991 + $0xd80] sm:$0xff]
    %v4425 = vld [vmem:[%s3991 + $0xd88] sm:$0xff]
    %v4426 = vld [vmem:[%s3991 + $0xd90] sm:$0xff]
    %v4427 = vld [vmem:[%s3991 + $0xd98] sm:$0xff]
    %v4428 = vld [vmem:[%s3991 + $0xda0] sm:$0xff]
    %v4429 = vld [vmem:[%s3991 + $0xda8] sm:$0xff]
    %v4430 = vld [vmem:[%s3991 + $0xdb0] sm:$0xff]
    %v4431 = vld [vmem:[%s3991 + $0xdb8] sm:$0xff]
    %v4432 = vld [vmem:[%s3991 + $0xdc0] sm:$0xff]
    %v4433 = vld [vmem:[%s3991 + $0xdc8] sm:$0xff]
    %v4434 = vld [vmem:[%s3991 + $0xdd0] sm:$0xff]
    %v4435 = vld [vmem:[%s3991 + $0xdd8] sm:$0xff]
    %v4436 = vld [vmem:[%s3991 + $0xde0] sm:$0xff]
    %v4437 = vld [vmem:[%s3991 + $0xde8] sm:$0xff]
    %v4438 = vld [vmem:[%s3991 + $0xdf0] sm:$0xff]
    %v4439 = vld [vmem:[%s3991 + $0xdf8] sm:$0xff]
    %v4440 = vld [vmem:[%s3991 + $0xe00] sm:$0xff]
    %v4441 = vld [vmem:[%s3991 + $0xe08] sm:$0xff]
    %v4442 = vld [vmem:[%s3991 + $0xe10] sm:$0xff]
    %v4443 = vld [vmem:[%s3991 + $0xe18] sm:$0xff]
    %v4444 = vld [vmem:[%s3991 + $0xe20] sm:$0xff]
    %v4445 = vld [vmem:[%s3991 + $0xe28] sm:$0xff]
    %v4446 = vld [vmem:[%s3991 + $0xe30] sm:$0xff]
    %v4447 = vld [vmem:[%s3991 + $0xe38] sm:$0xff]
    %v4448 = vld [vmem:[%s3991 + $0xe40] sm:$0xff]
    %v4449 = vld [vmem:[%s3991 + $0xe48] sm:$0xff]
    %v4450 = vld [vmem:[%s3991 + $0xe50] sm:$0xff]
    %v4451 = vld [vmem:[%s3991 + $0xe58] sm:$0xff]
    %v4452 = vld [vmem:[%s3991 + $0xe60] sm:$0xff]
    %v4453 = vld [vmem:[%s3991 + $0xe68] sm:$0xff]
    %v4454 = vld [vmem:[%s3991 + $0xe70] sm:$0xff]
    %v4455 = vld [vmem:[%s3991 + $0xe78] sm:$0xff]
    %v4456 = vld [vmem:[%s3991 + $0xe80] sm:$0xff]
    %v4457 = vld [vmem:[%s3991 + $0xe88] sm:$0xff]
    %v4458 = vld [vmem:[%s3991 + $0xe90] sm:$0xff]
    %v4459 = vld [vmem:[%s3991 + $0xe98] sm:$0xff]
    %v4460 = vld [vmem:[%s3991 + $0xea0] sm:$0xff]
    %v4461 = vld [vmem:[%s3991 + $0xea8] sm:$0xff]
    %v4462 = vld [vmem:[%s3991 + $0xeb0] sm:$0xff]
    %v4463 = vld [vmem:[%s3991 + $0xeb8] sm:$0xff]
    %v4464 = vld [vmem:[%s3991 + $0xec0] sm:$0xff]
    %v4465 = vld [vmem:[%s3991 + $0xec8] sm:$0xff]
    %v4466 = vld [vmem:[%s3991 + $0xed0] sm:$0xff]
    %v4467 = vld [vmem:[%s3991 + $0xed8] sm:$0xff]
    %v4468 = vld [vmem:[%s3991 + $0xee0] sm:$0xff]
    %v4469 = vld [vmem:[%s3991 + $0xee8] sm:$0xff]
    %v4470 = vld [vmem:[%s3991 + $0xef0] sm:$0xff]
    %v4471 = vld [vmem:[%s3991 + $0xef8] sm:$0xff]
    %v4472 = vld [vmem:[%s3991 + $0xf00] sm:$0xff]
    %v4473 = vld [vmem:[%s3991 + $0xf08] sm:$0xff]
    %v4474 = vld [vmem:[%s3991 + $0xf10] sm:$0xff]
    %v4475 = vld [vmem:[%s3991 + $0xf18] sm:$0xff]
    %v4476 = vld [vmem:[%s3991 + $0xf20] sm:$0xff]
    %v4477 = vld [vmem:[%s3991 + $0xf28] sm:$0xff]
    %v4478 = vld [vmem:[%s3991 + $0xf30] sm:$0xff]
    %v4479 = vld [vmem:[%s3991 + $0xf38] sm:$0xff]
    %v4480 = vld [vmem:[%s3991 + $0xf40] sm:$0xff]
    %v4481 = vld [vmem:[%s3991 + $0xf48] sm:$0xff]
    %v4482 = vld [vmem:[%s3991 + $0xf50] sm:$0xff]
    %v4483 = vld [vmem:[%s3991 + $0xf58] sm:$0xff]
    %v4484 = vld [vmem:[%s3991 + $0xf60] sm:$0xff]
    %v4485 = vld [vmem:[%s3991 + $0xf68] sm:$0xff]
    %v4486 = vld [vmem:[%s3991 + $0xf70] sm:$0xff]
    %v4487 = vld [vmem:[%s3991 + $0xf78] sm:$0xff]
    %v4488 = vld [vmem:[%s3991 + $0xf80] sm:$0xff]
    %v4489 = vld [vmem:[%s3991 + $0xf88] sm:$0xff]
    %v4490 = vld [vmem:[%s3991 + $0xf90] sm:$0xff]
    %v4491 = vld [vmem:[%s3991 + $0xf98] sm:$0xff]
    %v4492 = vld [vmem:[%s3991 + $0xfa0] sm:$0xff]
    %v4493 = vld [vmem:[%s3991 + $0xfa8] sm:$0xff]
    %v4494 = vld [vmem:[%s3991 + $0xfb0] sm:$0xff]
    %v4495 = vld [vmem:[%s3991 + $0xfb8] sm:$0xff]
    %v4496 = vld [vmem:[%s3991 + $0xfc0] sm:$0xff]
    %v4497 = vld [vmem:[%s3991 + $0xfc8] sm:$0xff]
    %v4498 = vld [vmem:[%s3991 + $0xfd0] sm:$0xff]
    %v4499 = vld [vmem:[%s3991 + $0xfd8] sm:$0xff]
    %v4500 = vld [vmem:[%s3991 + $0xfe0] sm:$0xff]
    %v4501 = vld [vmem:[%s3991 + $0xfe8] sm:$0xff]
    %v4502 = vld [vmem:[%s3991 + $0xff0] sm:$0xff]
    %v4503 = vld [vmem:[%s3991 + $0xff8] sm:$0xff]
    %v4504 = vld [vmem:[%s3991 + $0x1000] sm:$0xff]
    %v4505 = vld [vmem:[%s3991 + $0x1008] sm:$0xff]
    %v4506 = vld [vmem:[%s3991 + $0x1010] sm:$0xff]
    %v4507 = vld [vmem:[%s3991 + $0x1018] sm:$0xff]
    %v4508 = vld [vmem:[%s3991 + $0x1020] sm:$0xff]
    %v4509 = vld [vmem:[%s3991 + $0x1028] sm:$0xff]
    %v4510 = vld [vmem:[%s3991 + $0x1030] sm:$0xff]
    %v4511 = vld [vmem:[%s3991 + $0x1038] sm:$0xff]
    %v4512 = vld [vmem:[%s3991 + $0x1040] sm:$0xff]
    %v4513 = vld [vmem:[%s3991 + $0x1048] sm:$0xff]
    %v4514 = vld [vmem:[%s3991 + $0x1050] sm:$0xff]
    %v4515 = vld [vmem:[%s3991 + $0x1058] sm:$0xff]
    %v4516 = vld [vmem:[%s3991 + $0x1060] sm:$0xff]
    %v4517 = vld [vmem:[%s3991 + $0x1068] sm:$0xff]
    %v4518 = vld [vmem:[%s3991 + $0x1070] sm:$0xff]
    %v4519 = vld [vmem:[%s3991 + $0x1078] sm:$0xff]
    %v4520 = vld [vmem:[%s3991 + $0x1080] sm:$0xff]
    %v4521 = vld [vmem:[%s3991 + $0x1088] sm:$0xff]
    %v4522 = vld [vmem:[%s3991 + $0x1090] sm:$0xff]
    %v4523 = vld [vmem:[%s3991 + $0x1098] sm:$0xff]
    %v4524 = vld [vmem:[%s3991 + $0x10a0] sm:$0xff]
    %v4525 = vld [vmem:[%s3991 + $0x10a8] sm:$0xff]
    %v4526 = vld [vmem:[%s3991 + $0x10b0] sm:$0xff]
    %v4527 = vld [vmem:[%s3991 + $0x10b8] sm:$0xff]
    %v4528 = vld [vmem:[%s3991 + $0x10c0] sm:$0xff]
    %v4529 = vld [vmem:[%s3991 + $0x10c8] sm:$0xff]
    %v4530 = vld [vmem:[%s3991 + $0x10d0] sm:$0xff]
    %v4531 = vld [vmem:[%s3991 + $0x10d8] sm:$0xff]
    %v4532 = vld [vmem:[%s3991 + $0x10e0] sm:$0xff]
    %v4533 = vld [vmem:[%s3991 + $0x10e8] sm:$0xff]
    %v4534 = vld [vmem:[%s3991 + $0x10f0] sm:$0xff]
    %v4535 = vld [vmem:[%s3991 + $0x10f8] sm:$0xff]
    %v4536 = vld [vmem:[%s3991 + $0x1100] sm:$0xff]
    %v4537 = vld [vmem:[%s3991 + $0x1108] sm:$0xff]
    %v4538 = vld [vmem:[%s3991 + $0x1110] sm:$0xff]
    %v4539 = vld [vmem:[%s3991 + $0x1118] sm:$0xff]
    %v4540 = vld [vmem:[%s3991 + $0x1120] sm:$0xff]
    %v4541 = vld [vmem:[%s3991 + $0x1128] sm:$0xff]
    %v4542 = vld [vmem:[%s3991 + $0x1130] sm:$0xff]
    %v4543 = vld [vmem:[%s3991 + $0x1138] sm:$0xff]
    %v4544 = vld [vmem:[%s3991 + $0x1140] sm:$0xff]
    %v4545 = vld [vmem:[%s3991 + $0x1148] sm:$0xff]
    %v4546 = vld [vmem:[%s3991 + $0x1150] sm:$0xff]
    %v4547 = vld [vmem:[%s3991 + $0x1158] sm:$0xff]
    %v4548 = vld [vmem:[%s3991 + $0x1160] sm:$0xff]
    %v4549 = vld [vmem:[%s3991 + $0x1168] sm:$0xff]
    %v4550 = vld [vmem:[%s3991 + $0x1170] sm:$0xff]
    %v4551 = vld [vmem:[%s3991 + $0x1178] sm:$0xff]
    %v4552 = vld [vmem:[%s3991 + $0x1180] sm:$0xff]
    %v4553 = vld [vmem:[%s3991 + $0x1188] sm:$0xff]
    %v4554 = vld [vmem:[%s3991 + $0x1190] sm:$0xff]
    %v4555 = vld [vmem:[%s3991 + $0x1198] sm:$0xff]
    %v4556 = vld [vmem:[%s3991 + $0x11a0] sm:$0xff]
    %v4557 = vld [vmem:[%s3991 + $0x11a8] sm:$0xff]
    %v4558 = vld [vmem:[%s3991 + $0x11b0] sm:$0xff]
    %v4559 = vld [vmem:[%s3991 + $0x11b8] sm:$0xff]
    %v4560 = vld [vmem:[%s3991 + $0x11c0] sm:$0xff]
    %v4561 = vld [vmem:[%s3991 + $0x11c8] sm:$0xff]
    %v4562 = vld [vmem:[%s3991 + $0x11d0] sm:$0xff]
    %v4563 = vld [vmem:[%s3991 + $0x11d8] sm:$0xff]
    %v4564 = vld [vmem:[%s3991 + $0x11e0] sm:$0xff]
    %v4565 = vld [vmem:[%s3991 + $0x11e8] sm:$0xff]
    %v4566 = vld [vmem:[%s3991 + $0x11f0] sm:$0xff]
    %v4567 = vld [vmem:[%s3991 + $0x11f8] sm:$0xff]
    %v4568 = vld [vmem:[%s3991 + $0x1200] sm:$0xff]
    %v4569 = vld [vmem:[%s3991 + $0x1208] sm:$0xff]
    %v4570 = vld [vmem:[%s3991 + $0x1210] sm:$0xff]
    %v4571 = vld [vmem:[%s3991 + $0x1218] sm:$0xff]
    %v4572 = vld [vmem:[%s3991 + $0x1220] sm:$0xff]
    %v4573 = vld [vmem:[%s3991 + $0x1228] sm:$0xff]
    %v4574 = vld [vmem:[%s3991 + $0x1230] sm:$0xff]
    %v4575 = vld [vmem:[%s3991 + $0x1238] sm:$0xff]
    %v4576 = vld [vmem:[%s3991 + $0x1240] sm:$0xff]
    %v4577 = vld [vmem:[%s3991 + $0x1248] sm:$0xff]
    %v4578 = vld [vmem:[%s3991 + $0x1250] sm:$0xff]
    %v4579 = vld [vmem:[%s3991 + $0x1258] sm:$0xff]
    %4580 = vmatprep.subr.mxu0 %v3993
    %4581 = vmatpush1.msra.mxu0 %v3992
    %4582 = vmatprep.subr.mxu0 %v3997
    %4583 = vmatpush1.msra.mxu0 %v3996
    %4584 = vmatprep.subr.mxu0 %v4001
    %4585 = vmatpush1.msra.mxu0 %v4000
    %4586 = vmatprep.subr.mxu0 %v4005
    %4587 = vmatpush1.msra.mxu0 %v4004
    %4588 = vmatprep.subr.mxu0 %v4009
    %4589 = vmatpush1.msra.mxu0 %v4008
    %4590 = vmatprep.subr.mxu0 %v4013
    %4591 = vmatpush1.msra.mxu0 %v4012
    %4592 = vmatprep.subr.mxu0 %v4017
    %4593 = vmatpush1.msra.mxu0 %v4016
    %4594 = vmatprep.subr.mxu0 %v4021
    %4595 = vmatpush1.msra.mxu0 %v4020
    %4596 = vmatprep.subr.mxu0 %v4025
    %4597 = vmatpush1.msra.mxu0 %v4024
    %4598 = vmatprep.subr.mxu0 %v4029
    %4599 = vmatpush1.msra.mxu0 %v4028
    %4600 = vmatprep.subr.mxu0 %v4033
    %4601 = vmatpush1.msra.mxu0 %v4032
    %4602 = vmatprep.subr.mxu0 %v4037
    %4603 = vmatpush1.msra.mxu0 %v4036
    %4604 = vmatprep.subr.mxu0 %v4041
    %4605 = vmatpush1.msra.mxu0 %v4040
    %4606 = vmatprep.subr.mxu0 %v4045
    %4607 = vmatpush1.msra.mxu0 %v4044
    %4608 = vmatprep.subr.mxu0 %v4049
    %4609 = vmatpush1.msra.mxu0 %v4048
    %4610 = vmatprep.subr.mxu0 %v4053
    %4611 = vmatpush1.msra.mxu0 %v4052
    %4612 = vmatprep.subr.mxu0 %v4057
    %4613 = vmatpush1.msra.mxu0 %v4056
    %4614 = vmatprep.subr.mxu0 %v4061
    %4615 = vmatpush1.msra.mxu0 %v4060
    %4616 = vmatprep.subr.mxu0 %v4065
    %4617 = vmatpush1.msra.mxu0 %v4064
    %4618 = vmatprep.subr.mxu0 %v4069
    %4619 = vmatpush1.msra.mxu0 %v4068
    %4620 = vmatprep.subr.mxu0 %v4073
    %4621 = vmatpush1.msra.mxu0 %v4072
    %4622 = vmatprep.subr.mxu0 %v4077
    %4623 = vmatpush1.msra.mxu0 %v4076
    %4624 = vmatprep.subr.mxu0 %v4081
    %4625 = vmatpush1.msra.mxu0 %v4080
    %4626 = vmatprep.subr.mxu0 %v4085
    %4627 = vmatpush1.msra.mxu0 %v4084
    %4628 = vmatprep.subr.mxu0 %v4089
    %4629 = vmatpush1.msra.mxu0 %v4088
    %4630 = vmatprep.subr.mxu0 %v4093
    %4631 = vmatpush1.msra.mxu0 %v4092
    %4632 = vmatprep.subr.mxu0 %v4097
    %4633 = vmatpush1.msra.mxu0 %v4096
    %4634 = vmatprep.subr.mxu0 %v4101
    %4635 = vmatpush1.msra.mxu0 %v4100
    %4636 = vmatprep.subr.mxu0 %v4105
    %4637 = vmatpush1.msra.mxu0 %v4104
    %4638 = vmatprep.subr.mxu0 %v4109
    %4639 = vmatpush1.msra.mxu0 %v4108
    %4640 = vmatprep.subr.mxu0 %v4113
    %4641 = vmatpush1.msra.mxu0 %v4112
    %4642 = vmatprep.subr.mxu0 %v4117
    %4643 = vmatpush1.msra.mxu0 %v4116
    %4644 = vmatprep.mubr.f32.mxu0 %v636
    %4645 = vmatmul.mubr.f32.gmra.mrb[0].mxu0 %v628
    %v4646 = vpop.f32.mrb[0].mxu0
    %v4647 = vadd.f32 0.0, %v4646
    %v4648 = vpop.f32.mrb[0].mxu0
    %v4649 = vadd.f32 0.0, %v4648
    %4650 = vdwg.mxu0
    %4651 = vmatprep.subr.mxu0 %v4121
    %4652 = vmatpush1.msra.mxu0 %v4120
    %4653 = vmatprep.subr.mxu0 %v4125
    %4654 = vmatpush1.msra.mxu0 %v4124
    %4655 = vmatprep.subr.mxu0 %v4129
    %4656 = vmatpush1.msra.mxu0 %v4128
    %4657 = vmatprep.subr.mxu0 %v4133
    %4658 = vmatpush1.msra.mxu0 %v4132
    %4659 = vmatprep.subr.mxu0 %v4137
    %4660 = vmatpush1.msra.mxu0 %v4136
    %4661 = vmatprep.subr.mxu0 %v4141
    %4662 = vmatpush1.msra.mxu0 %v4140
    %4663 = vmatprep.subr.mxu0 %v4145
    %4664 = vmatpush1.msra.mxu0 %v4144
    %4665 = vmatprep.subr.mxu0 %v4149
    %4666 = vmatpush1.msra.mxu0 %v4148
    %4667 = vmatprep.subr.mxu0 %v4153
    %4668 = vmatpush1.msra.mxu0 %v4152
    %4669 = vmatprep.subr.mxu0 %v4157
    %4670 = vmatpush1.msra.mxu0 %v4156
    %4671 = vmatprep.subr.mxu0 %v4161
    %4672 = vmatpush1.msra.mxu0 %v4160
    %4673 = vmatprep.subr.mxu0 %v4165
    %4674 = vmatpush1.msra.mxu0 %v4164
    %4675 = vmatprep.subr.mxu0 %v4169
    %4676 = vmatpush1.msra.mxu0 %v4168
    %4677 = vmatprep.subr.mxu0 %v4173
    %4678 = vmatpush1.msra.mxu0 %v4172
    %4679 = vmatprep.subr.mxu0 %v4177
    %4680 = vmatpush1.msra.mxu0 %v4176
    %4681 = vmatprep.subr.mxu0 %v4181
    %4682 = vmatpush1.msra.mxu0 %v4180
    %4683 = vmatprep.subr.mxu0 %v4185
    %4684 = vmatpush1.msra.mxu0 %v4184
    %4685 = vmatprep.subr.mxu0 %v4189
    %4686 = vmatpush1.msra.mxu0 %v4188
    %4687 = vmatprep.subr.mxu0 %v4193
    %4688 = vmatpush1.msra.mxu0 %v4192
    %4689 = vmatprep.subr.mxu0 %v4197
    %4690 = vmatpush1.msra.mxu0 %v4196
    %4691 = vmatprep.subr.mxu0 %v4201
    %4692 = vmatpush1.msra.mxu0 %v4200
    %4693 = vmatprep.subr.mxu0 %v4205
    %4694 = vmatpush1.msra.mxu0 %v4204
    %4695 = vmatprep.subr.mxu0 %v4209
    %4696 = vmatpush1.msra.mxu0 %v4208
    %4697 = vmatprep.subr.mxu0 %v4213
    %4698 = vmatpush1.msra.mxu0 %v4212
    %4699 = vmatprep.subr.mxu0 %v4217
    %4700 = vmatpush1.msra.mxu0 %v4216
    %4701 = vmatprep.subr.mxu0 %v4221
    %4702 = vmatpush1.msra.mxu0 %v4220
    %4703 = vmatprep.subr.mxu0 %v4225
    %4704 = vmatpush1.msra.mxu0 %v4224
    %4705 = vmatprep.subr.mxu0 %v4229
    %4706 = vmatpush1.msra.mxu0 %v4228
    %4707 = vmatprep.subr.mxu0 %v4233
    %4708 = vmatpush1.msra.mxu0 %v4232
    %4709 = vmatprep.subr.mxu0 %v4237
    %4710 = vmatpush1.msra.mxu0 %v4236
    %4711 = vmatprep.subr.mxu0 %v4241
    %4712 = vmatpush1.msra.mxu0 %v4240
    %4713 = vmatprep.subr.mxu0 %v4245
    %4714 = vmatpush1.msra.mxu0 %v4244
    %4715 = vmatprep.mubr.f32.mxu0 %v637
    %4716 = vmatmul.mubr.f32.gmra.mrb[0].mxu0 %v635
    %v4717 = vpop.f32.mrb[0].mxu0
    %v4718 = vadd.f32 %v4647, %v4717
    %v4719 = vpop.f32.mrb[0].mxu0
    %v4720 = vadd.f32 %v4649, %v4719
    %4721 = vdwg.mxu0
    %4722 = vmatprep.subr.mxu0 %v4249
    %4723 = vmatpush1.msra.mxu0 %v4248
    %4724 = vmatprep.subr.mxu0 %v4253
    %4725 = vmatpush1.msra.mxu0 %v4252
    %4726 = vmatprep.subr.mxu0 %v4257
    %4727 = vmatpush1.msra.mxu0 %v4256
    %4728 = vmatprep.subr.mxu0 %v4261
    %4729 = vmatpush1.msra.mxu0 %v4260
    %4730 = vmatprep.subr.mxu0 %v4265
    %4731 = vmatpush1.msra.mxu0 %v4264
    %4732 = vmatprep.subr.mxu0 %v4269
    %4733 = vmatpush1.msra.mxu0 %v4268
    %4734 = vmatprep.subr.mxu0 %v4273
    %4735 = vmatpush1.msra.mxu0 %v4272
    %4736 = vmatprep.subr.mxu0 %v4277
    %4737 = vmatpush1.msra.mxu0 %v4276
    %4738 = vmatprep.subr.mxu0 %v4281
    %4739 = vmatpush1.msra.mxu0 %v4280
    %4740 = vmatprep.subr.mxu0 %v4285
    %4741 = vmatpush1.msra.mxu0 %v4284
    %4742 = vmatprep.subr.mxu0 %v4289
    %4743 = vmatpush1.msra.mxu0 %v4288
    %4744 = vmatprep.subr.mxu0 %v4293
    %4745 = vmatpush1.msra.mxu0 %v4292
    %4746 = vmatprep.subr.mxu0 %v4297
    %4747 = vmatpush1.msra.mxu0 %v4296
    %4748 = vmatprep.subr.mxu0 %v4301
    %4749 = vmatpush1.msra.mxu0 %v4300
    %4750 = vmatprep.subr.mxu0 %v4305
    %4751 = vmatpush1.msra.mxu0 %v4304
    %4752 = vmatprep.subr.mxu0 %v4309
    %4753 = vmatpush1.msra.mxu0 %v4308
    %4754 = vmatprep.subr.mxu0 %v4313
    %4755 = vmatpush1.msra.mxu0 %v4312
    %4756 = vmatprep.subr.mxu0 %v4317
    %4757 = vmatpush1.msra.mxu0 %v4316
    %4758 = vmatprep.subr.mxu0 %v4321
    %4759 = vmatpush1.msra.mxu0 %v4320
    %4760 = vmatprep.subr.mxu0 %v4325
    %4761 = vmatpush1.msra.mxu0 %v4324
    %4762 = vmatprep.subr.mxu0 %v4329
    %4763 = vmatpush1.msra.mxu0 %v4328
    %4764 = vmatprep.subr.mxu0 %v4333
    %4765 = vmatpush1.msra.mxu0 %v4332
    %4766 = vmatprep.subr.mxu0 %v4337
    %4767 = vmatpush1.msra.mxu0 %v4336
    %4768 = vmatprep.subr.mxu0 %v4341
    %4769 = vmatpush1.msra.mxu0 %v4340
    %4770 = vmatprep.subr.mxu0 %v4345
    %4771 = vmatpush1.msra.mxu0 %v4344
    %4772 = vmatprep.subr.mxu0 %v4349
    %4773 = vmatpush1.msra.mxu0 %v4348
    %4774 = vmatprep.subr.mxu0 %v4353
    %4775 = vmatpush1.msra.mxu0 %v4352
    %4776 = vmatprep.subr.mxu0 %v4357
    %4777 = vmatpush1.msra.mxu0 %v4356
    %4778 = vmatprep.subr.mxu0 %v4361
    %4779 = vmatpush1.msra.mxu0 %v4360
    %4780 = vmatprep.subr.mxu0 %v4365
    %4781 = vmatpush1.msra.mxu0 %v4364
    %4782 = vmatprep.subr.mxu0 %v4369
    %4783 = vmatpush1.msra.mxu0 %v4368
    %4784 = vmatprep.subr.mxu0 %v4373
    %4785 = vmatpush1.msra.mxu0 %v4372
    %4786 = vmatprep.mubr.f32.mxu0 %v653
    %4787 = vmatmul.mubr.f32.gmra.mrb[0].mxu0 %v645
    %v4788 = vpop.f32.mrb[0].mxu0
    %v4789 = vadd.f32 %v4718, %v4788
    %v4790 = vpop.f32.mrb[0].mxu0
    %v4791 = vadd.f32 %v4720, %v4790
    %4792 = vdwg.mxu0
    %4793 = vmatprep.subr.mxu0 %v4377
    %4794 = vmatpush1.msra.mxu0 %v4376
    %4795 = vmatprep.subr.mxu0 %v4381
    %4796 = vmatpush1.msra.mxu0 %v4380
    %4797 = vmatprep.subr.mxu0 %v4385
    %4798 = vmatpush1.msra.mxu0 %v4384
    %4799 = vmatprep.subr.mxu0 %v4389
    %4800 = vmatpush1.msra.mxu0 %v4388
    %4801 = vmatprep.subr.mxu0 %v4393
    %4802 = vmatpush1.msra.mxu0 %v4392
    %4803 = vmatprep.subr.mxu0 %v4397
    %4804 = vmatpush1.msra.mxu0 %v4396
    %4805 = vmatprep.subr.mxu0 %v4401
    %4806 = vmatpush1.msra.mxu0 %v4400
    %4807 = vmatprep.subr.mxu0 %v4405
    %4808 = vmatpush1.msra.mxu0 %v4404
    %4809 = vmatprep.subr.mxu0 %v4409
    %4810 = vmatpush1.msra.mxu0 %v4408
    %4811 = vmatprep.subr.mxu0 %v4413
    %4812 = vmatpush1.msra.mxu0 %v4412
    %4813 = vmatprep.subr.mxu0 %v4417
    %4814 = vmatpush1.msra.mxu0 %v4416
    %4815 = vmatprep.subr.mxu0 %v4421
    %4816 = vmatpush1.msra.mxu0 %v4420
    %4817 = vmatprep.subr.mxu0 %v4425
    %4818 = vmatpush1.msra.mxu0 %v4424
    %4819 = vmatprep.subr.mxu0 %v4429
    %4820 = vmatpush1.msra.mxu0 %v4428
    %4821 = vmatprep.subr.mxu0 %v4433
    %4822 = vmatpush1.msra.mxu0 %v4432
    %4823 = vmatprep.subr.mxu0 %v4437
    %4824 = vmatpush1.msra.mxu0 %v4436
    %4825 = vmatprep.subr.mxu0 %v4441
    %4826 = vmatpush1.msra.mxu0 %v4440
    %4827 = vmatprep.subr.mxu0 %v4445
    %4828 = vmatpush1.msra.mxu0 %v4444
    %4829 = vmatprep.subr.mxu0 %v4449
    %4830 = vmatpush1.msra.mxu0 %v4448
    %4831 = vmatprep.subr.mxu0 %v4453
    %4832 = vmatpush1.msra.mxu0 %v4452
    %4833 = vmatprep.subr.mxu0 %v4457
    %4834 = vmatpush1.msra.mxu0 %v4456
    %4835 = vmatprep.subr.mxu0 %v4461
    %4836 = vmatpush1.msra.mxu0 %v4460
    %4837 = vmatprep.subr.mxu0 %v4465
    %4838 = vmatpush1.msra.mxu0 %v4464
    %4839 = vmatprep.subr.mxu0 %v4469
    %4840 = vmatpush1.msra.mxu0 %v4468
    %4841 = vmatprep.subr.mxu0 %v4473
    %4842 = vmatpush1.msra.mxu0 %v4472
    %4843 = vmatprep.subr.mxu0 %v4477
    %4844 = vmatpush1.msra.mxu0 %v4476
    %4845 = vmatprep.subr.mxu0 %v4481
    %4846 = vmatpush1.msra.mxu0 %v4480
    %4847 = vmatprep.subr.mxu0 %v4485
    %4848 = vmatpush1.msra.mxu0 %v4484
    %4849 = vmatprep.subr.mxu0 %v4489
    %4850 = vmatpush1.msra.mxu0 %v4488
    %4851 = vmatprep.subr.mxu0 %v4493
    %4852 = vmatpush1.msra.mxu0 %v4492
    %4853 = vmatprep.subr.mxu0 %v4497
    %4854 = vmatpush1.msra.mxu0 %v4496
    %4855 = vmatprep.subr.mxu0 %v4501
    %4856 = vmatpush1.msra.mxu0 %v4500
    %4857 = vmatprep.mubr.f32.mxu0 %v654
    %4858 = vmatmul.mubr.f32.gmra.mrb[0].mxu0 %v652
    %v4859 = vpop.f32.mrb[0].mxu0
    %v4860 = vadd.f32 %v4789, %v4859
    %v4861 = vpop.f32.mrb[0].mxu0
    %v4862 = vadd.f32 %v4791, %v4861
    %4863 = vdwg.mxu0
    %4864 = vmatprep.subr.mxu0 %v4505
    %4865 = vmatpush1.msra.mxu0 %v4504
    %4866 = vmatprep.subr.mxu0 %v4509
    %4867 = vmatpush1.msra.mxu0 %v4508
    %4868 = vmatprep.subr.mxu0 %v4513
    %4869 = vmatpush1.msra.mxu0 %v4512
    %4870 = vmatprep.subr.mxu0 %v4517
    %4871 = vmatpush1.msra.mxu0 %v4516
    %4872 = vmatprep.subr.mxu0 %v4521
    %4873 = vmatpush1.msra.mxu0 %v4520
    %4874 = vmatprep.subr.mxu0 %v4525
    %4875 = vmatpush1.msra.mxu0 %v4524
    %4876 = vmatprep.subr.mxu0 %v4529
    %4877 = vmatpush1.msra.mxu0 %v4528
    %4878 = vmatprep.subr.mxu0 %v4533
    %4879 = vmatpush1.msra.mxu0 %v4532
    %4880 = vmatprep.subr.mxu0 %v4537
    %4881 = vmatpush1.msra.mxu0 %v4536
    %4882 = vmatprep.subr.mxu0 %v4541
    %4883 = vmatpush1.msra.mxu0 %v4540
    %4884 = vmatprep.subr.mxu0 %v4545
    %4885 = vmatpush1.msra.mxu0 %v4544
    %4886 = vmatprep.subr.mxu0 %v4549
    %4887 = vmatpush1.msra.mxu0 %v4548
    %4888 = vmatprep.subr.mxu0 %v4553
    %4889 = vmatpush1.msra.mxu0 %v4552
    %4890 = vmatprep.subr.mxu0 %v4557
    %4891 = vmatpush1.msra.mxu0 %v4556
    %4892 = vmatprep.subr.mxu0 %v4561
    %4893 = vmatpush1.msra.mxu0 %v4560
    %4894 = vmatprep.subr.mxu0 %v4565
    %4895 = vmatpush1.msra.mxu0 %v4564
    %4896 = vmatprep.subr.mxu0 %v4569
    %4897 = vmatpush1.msra.mxu0 %v4568
    %4898 = vmatprep.subr.mxu0 %v4573
    %4899 = vmatpush1.msra.mxu0 %v4572
    %4900 = vmatprep.subr.mxu0 %v4577
    %4901 = vmatpush1.msra.mxu0 %v4576
    %4902 = vmatprep.subr.mxu0 0.0
    %4903 = vmatpush1.msra.mxu0 0.0
    %4904 = vmatprep.subr.mxu0 0.0
    %4905 = vmatpush1.msra.mxu0 0.0
    %4906 = vmatprep.subr.mxu0 0.0
    %4907 = vmatpush1.msra.mxu0 0.0
    %4908 = vmatprep.subr.mxu0 0.0
    %4909 = vmatpush1.msra.mxu0 0.0
    %4910 = vmatprep.subr.mxu0 0.0
    %4911 = vmatpush1.msra.mxu0 0.0
    %4912 = vmatprep.subr.mxu0 0.0
    %4913 = vmatpush1.msra.mxu0 0.0
    %4914 = vmatprep.subr.mxu0 0.0
    %4915 = vmatpush1.msra.mxu0 0.0
    %4916 = vmatprep.subr.mxu0 0.0
    %4917 = vmatpush1.msra.mxu0 0.0
    %4918 = vmatprep.subr.mxu0 0.0
    %4919 = vmatpush1.msra.mxu0 0.0
    %4920 = vmatprep.subr.mxu0 0.0
    %4921 = vmatpush1.msra.mxu0 0.0
    %4922 = vmatprep.subr.mxu0 0.0
    %4923 = vmatpush1.msra.mxu0 0.0
    %4924 = vmatprep.subr.mxu0 0.0
    %4925 = vmatpush1.msra.mxu0 0.0
    %4926 = vmatprep.subr.mxu0 0.0
    %4927 = vmatpush1.msra.mxu0 0.0
    %4928 = vmatprep.mubr.f32.mxu0 %v673
    %4929 = vmatmul.mubr.f32.gmra.mrb[0].mxu0 %v661
    %v4930 = vpop.f32.mrb[0].mxu0
    %v4931 = vadd.f32 %v4860, %v4930
    %v4932 = vpop.f32.mrb[0].mxu0
    %v4933 = vadd.f32 %v4862, %v4932
    %4934 = vdwg.mxu0
    %4935 = vmatprep.subr.mxu0 %v3995
    %4936 = vmatpush1.msra.mxu0 %v3994
    %4937 = vmatprep.subr.mxu0 %v3999
    %4938 = vmatpush1.msra.mxu0 %v3998
    %4939 = vmatprep.subr.mxu0 %v4003
    %4940 = vmatpush1.msra.mxu0 %v4002
    %4941 = vmatprep.subr.mxu0 %v4007
    %4942 = vmatpush1.msra.mxu0 %v4006
    %4943 = vmatprep.subr.mxu0 %v4011
    %4944 = vmatpush1.msra.mxu0 %v4010
    %4945 = vmatprep.subr.mxu0 %v4015
    %4946 = vmatpush1.msra.mxu0 %v4014
    %4947 = vmatprep.subr.mxu0 %v4019
    %4948 = vmatpush1.msra.mxu0 %v4018
    %4949 = vmatprep.subr.mxu0 %v4023
    %4950 = vmatpush1.msra.mxu0 %v4022
    %4951 = vmatprep.subr.mxu0 %v4027
    %4952 = vmatpush1.msra.mxu0 %v4026
    %4953 = vmatprep.subr.mxu0 %v4031
    %4954 = vmatpush1.msra.mxu0 %v4030
    %4955 = vmatprep.subr.mxu0 %v4035
    %4956 = vmatpush1.msra.mxu0 %v4034
    %4957 = vmatprep.subr.mxu0 %v4039
    %4958 = vmatpush1.msra.mxu0 %v4038
    %4959 = vmatprep.subr.mxu0 %v4043
    %4960 = vmatpush1.msra.mxu0 %v4042
    %4961 = vmatprep.subr.mxu0 %v4047
    %4962 = vmatpush1.msra.mxu0 %v4046
    %4963 = vmatprep.subr.mxu0 %v4051
    %4964 = vmatpush1.msra.mxu0 %v4050
    %4965 = vmatprep.subr.mxu0 %v4055
    %4966 = vmatpush1.msra.mxu0 %v4054
    %4967 = vmatprep.subr.mxu0 %v4059
    %4968 = vmatpush1.msra.mxu0 %v4058
    %4969 = vmatprep.subr.mxu0 %v4063
    %4970 = vmatpush1.msra.mxu0 %v4062
    %4971 = vmatprep.subr.mxu0 %v4067
    %4972 = vmatpush1.msra.mxu0 %v4066
    %4973 = vmatprep.subr.mxu0 %v4071
    %4974 = vmatpush1.msra.mxu0 %v4070
    %4975 = vmatprep.subr.mxu0 %v4075
    %4976 = vmatpush1.msra.mxu0 %v4074
    %4977 = vmatprep.subr.mxu0 %v4079
    %4978 = vmatpush1.msra.mxu0 %v4078
    %4979 = vmatprep.subr.mxu0 %v4083
    %4980 = vmatpush1.msra.mxu0 %v4082
    %4981 = vmatprep.subr.mxu0 %v4087
    %4982 = vmatpush1.msra.mxu0 %v4086
    %4983 = vmatprep.subr.mxu0 %v4091
    %4984 = vmatpush1.msra.mxu0 %v4090
    %4985 = vmatprep.subr.mxu0 %v4095
    %4986 = vmatpush1.msra.mxu0 %v4094
    %4987 = vmatprep.subr.mxu0 %v4099
    %4988 = vmatpush1.msra.mxu0 %v4098
    %4989 = vmatprep.subr.mxu0 %v4103
    %4990 = vmatpush1.msra.mxu0 %v4102
    %4991 = vmatprep.subr.mxu0 %v4107
    %4992 = vmatpush1.msra.mxu0 %v4106
    %4993 = vmatprep.subr.mxu0 %v4111
    %4994 = vmatpush1.msra.mxu0 %v4110
    %4995 = vmatprep.subr.mxu0 %v4115
    %4996 = vmatpush1.msra.mxu0 %v4114
    %4997 = vmatprep.subr.mxu0 %v4119
    %4998 = vmatpush1.msra.mxu0 %v4118
    %4999 = vmatprep.mubr.f32.mxu0 %v636
    %5000 = vmatmul.mubr.f32.gmra.mrb[0].mxu0 %v628
    %v5001 = vpop.f32.mrb[0].mxu0
    %v5002 = vadd.f32 0.0, %v5001
    %v5003 = vpop.f32.mrb[0].mxu0
    %v5004 = vadd.f32 0.0, %v5003
    %5005 = vdwg.mxu0
    %5006 = vmatprep.subr.mxu0 %v4123
    %5007 = vmatpush1.msra.mxu0 %v4122
    %5008 = vmatprep.subr.mxu0 %v4127
    %5009 = vmatpush1.msra.mxu0 %v4126
    %5010 = vmatprep.subr.mxu0 %v4131
    %5011 = vmatpush1.msra.mxu0 %v4130
    %5012 = vmatprep.subr.mxu0 %v4135
    %5013 = vmatpush1.msra.mxu0 %v4134
    %5014 = vmatprep.subr.mxu0 %v4139
    %5015 = vmatpush1.msra.mxu0 %v4138
    %5016 = vmatprep.subr.mxu0 %v4143
    %5017 = vmatpush1.msra.mxu0 %v4142
    %5018 = vmatprep.subr.mxu0 %v4147
    %5019 = vmatpush1.msra.mxu0 %v4146
    %5020 = vmatprep.subr.mxu0 %v4151
    %5021 = vmatpush1.msra.mxu0 %v4150
    %5022 = vmatprep.subr.mxu0 %v4155
    %5023 = vmatpush1.msra.mxu0 %v4154
    %5024 = vmatprep.subr.mxu0 %v4159
    %5025 = vmatpush1.msra.mxu0 %v4158
    %5026 = vmatprep.subr.mxu0 %v4163
    %5027 = vmatpush1.msra.mxu0 %v4162
    %5028 = vmatprep.subr.mxu0 %v4167
    %5029 = vmatpush1.msra.mxu0 %v4166
    %5030 = vmatprep.subr.mxu0 %v4171
    %5031 = vmatpush1.msra.mxu0 %v4170
    %5032 = vmatprep.subr.mxu0 %v4175
    %5033 = vmatpush1.msra.mxu0 %v4174
    %5034 = vmatprep.subr.mxu0 %v4179
    %5035 = vmatpush1.msra.mxu0 %v4178
    %5036 = vmatprep.subr.mxu0 %v4183
    %5037 = vmatpush1.msra.mxu0 %v4182
    %5038 = vmatprep.subr.mxu0 %v4187
    %5039 = vmatpush1.msra.mxu0 %v4186
    %5040 = vmatprep.subr.mxu0 %v4191
    %5041 = vmatpush1.msra.mxu0 %v4190
    %5042 = vmatprep.subr.mxu0 %v4195
    %5043 = vmatpush1.msra.mxu0 %v4194
    %5044 = vmatprep.subr.mxu0 %v4199
    %5045 = vmatpush1.msra.mxu0 %v4198
    %5046 = vmatprep.subr.mxu0 %v4203
    %5047 = vmatpush1.msra.mxu0 %v4202
    %5048 = vmatprep.subr.mxu0 %v4207
    %5049 = vmatpush1.msra.mxu0 %v4206
    %5050 = vmatprep.subr.mxu0 %v4211
    %5051 = vmatpush1.msra.mxu0 %v4210
    %5052 = vmatprep.subr.mxu0 %v4215
    %5053 = vmatpush1.msra.mxu0 %v4214
    %5054 = vmatprep.subr.mxu0 %v4219
    %5055 = vmatpush1.msra.mxu0 %v4218
    %5056 = vmatprep.subr.mxu0 %v4223
    %5057 = vmatpush1.msra.mxu0 %v4222
    %5058 = vmatprep.subr.mxu0 %v4227
    %5059 = vmatpush1.msra.mxu0 %v4226
    %5060 = vmatprep.subr.mxu0 %v4231
    %5061 = vmatpush1.msra.mxu0 %v4230
    %5062 = vmatprep.subr.mxu0 %v4235
    %5063 = vmatpush1.msra.mxu0 %v4234
    %5064 = vmatprep.subr.mxu0 %v4239
    %5065 = vmatpush1.msra.mxu0 %v4238
    %5066 = vmatprep.subr.mxu0 %v4243
    %5067 = vmatpush1.msra.mxu0 %v4242
    %5068 = vmatprep.subr.mxu0 %v4247
    %5069 = vmatpush1.msra.mxu0 %v4246
    %5070 = vmatprep.mubr.f32.mxu0 %v637
    %5071 = vmatmul.mubr.f32.gmra.mrb[0].mxu0 %v635
    %v5072 = vpop.f32.mrb[0].mxu0
    %v5073 = vadd.f32 %v5002, %v5072
    %v5074 = vpop.f32.mrb[0].mxu0
    %v5075 = vadd.f32 %v5004, %v5074
    %5076 = vdwg.mxu0
    %5077 = vmatprep.subr.mxu0 %v4251
    %5078 = vmatpush1.msra.mxu0 %v4250
    %5079 = vmatprep.subr.mxu0 %v4255
    %5080 = vmatpush1.msra.mxu0 %v4254
    %5081 = vmatprep.subr.mxu0 %v4259
    %5082 = vmatpush1.msra.mxu0 %v4258
    %5083 = vmatprep.subr.mxu0 %v4263
    %5084 = vmatpush1.msra.mxu0 %v4262
    %5085 = vmatprep.subr.mxu0 %v4267
    %5086 = vmatpush1.msra.mxu0 %v4266
    %5087 = vmatprep.subr.mxu0 %v4271
    %5088 = vmatpush1.msra.mxu0 %v4270
    %5089 = vmatprep.subr.mxu0 %v4275
    %5090 = vmatpush1.msra.mxu0 %v4274
    %5091 = vmatprep.subr.mxu0 %v4279
    %5092 = vmatpush1.msra.mxu0 %v4278
    %5093 = vmatprep.subr.mxu0 %v4283
    %5094 = vmatpush1.msra.mxu0 %v4282
    %5095 = vmatprep.subr.mxu0 %v4287
    %5096 = vmatpush1.msra.mxu0 %v4286
    %5097 = vmatprep.subr.mxu0 %v4291
    %5098 = vmatpush1.msra.mxu0 %v4290
    %5099 = vmatprep.subr.mxu0 %v4295
    %5100 = vmatpush1.msra.mxu0 %v4294
    %5101 = vmatprep.subr.mxu0 %v4299
    %5102 = vmatpush1.msra.mxu0 %v4298
    %5103 = vmatprep.subr.mxu0 %v4303
    %5104 = vmatpush1.msra.mxu0 %v4302
    %5105 = vmatprep.subr.mxu0 %v4307
    %5106 = vmatpush1.msra.mxu0 %v4306
    %5107 = vmatprep.subr.mxu0 %v4311
    %5108 = vmatpush1.msra.mxu0 %v4310
    %5109 = vmatprep.subr.mxu0 %v4315
    %5110 = vmatpush1.msra.mxu0 %v4314
    %5111 = vmatprep.subr.mxu0 %v4319
    %5112 = vmatpush1.msra.mxu0 %v4318
    %5113 = vmatprep.subr.mxu0 %v4323
    %5114 = vmatpush1.msra.mxu0 %v4322
    %5115 = vmatprep.subr.mxu0 %v4327
    %5116 = vmatpush1.msra.mxu0 %v4326
    %5117 = vmatprep.subr.mxu0 %v4331
    %5118 = vmatpush1.msra.mxu0 %v4330
    %5119 = vmatprep.subr.mxu0 %v4335
    %5120 = vmatpush1.msra.mxu0 %v4334
    %5121 = vmatprep.subr.mxu0 %v4339
    %5122 = vmatpush1.msra.mxu0 %v4338
    %5123 = vmatprep.subr.mxu0 %v4343
    %5124 = vmatpush1.msra.mxu0 %v4342
    %5125 = vmatprep.subr.mxu0 %v4347
    %5126 = vmatpush1.msra.mxu0 %v4346
    %5127 = vmatprep.subr.mxu0 %v4351
    %5128 = vmatpush1.msra.mxu0 %v4350
    %5129 = vmatprep.subr.mxu0 %v4355
    %5130 = vmatpush1.msra.mxu0 %v4354
    %5131 = vmatprep.subr.mxu0 %v4359
    %5132 = vmatpush1.msra.mxu0 %v4358
    %5133 = vmatprep.subr.mxu0 %v4363
    %5134 = vmatpush1.msra.mxu0 %v4362
    %5135 = vmatprep.subr.mxu0 %v4367
    %5136 = vmatpush1.msra.mxu0 %v4366
    %5137 = vmatprep.subr.mxu0 %v4371
    %5138 = vmatpush1.msra.mxu0 %v4370
    %5139 = vmatprep.subr.mxu0 %v4375
    %5140 = vmatpush1.msra.mxu0 %v4374
    %5141 = vmatprep.mubr.f32.mxu0 %v653
    %5142 = vmatmul.mubr.f32.gmra.mrb[0].mxu0 %v645
    %v5143 = vpop.f32.mrb[0].mxu0
    %v5144 = vadd.f32 %v5073, %v5143
    %v5145 = vpop.f32.mrb[0].mxu0
    %v5146 = vadd.f32 %v5075, %v5145
    %5147 = vdwg.mxu0
    %5148 = vmatprep.subr.mxu0 %v4379
    %5149 = vmatpush1.msra.mxu0 %v4378
    %5150 = vmatprep.subr.mxu0 %v4383
    %5151 = vmatpush1.msra.mxu0 %v4382
    %5152 = vmatprep.subr.mxu0 %v4387
    %5153 = vmatpush1.msra.mxu0 %v4386
    %5154 = vmatprep.subr.mxu0 %v4391
    %5155 = vmatpush1.msra.mxu0 %v4390
    %5156 = vmatprep.subr.mxu0 %v4395
    %5157 = vmatpush1.msra.mxu0 %v4394
    %5158 = vmatprep.subr.mxu0 %v4399
    %5159 = vmatpush1.msra.mxu0 %v4398
    %5160 = vmatprep.subr.mxu0 %v4403
    %5161 = vmatpush1.msra.mxu0 %v4402
    %5162 = vmatprep.subr.mxu0 %v4407
    %5163 = vmatpush1.msra.mxu0 %v4406
    %5164 = vmatprep.subr.mxu0 %v4411
    %5165 = vmatpush1.msra.mxu0 %v4410
    %5166 = vmatprep.subr.mxu0 %v4415
    %5167 = vmatpush1.msra.mxu0 %v4414
    %5168 = vmatprep.subr.mxu0 %v4419
    %5169 = vmatpush1.msra.mxu0 %v4418
    %5170 = vmatprep.subr.mxu0 %v4423
    %5171 = vmatpush1.msra.mxu0 %v4422
    %5172 = vmatprep.subr.mxu0 %v4427
    %5173 = vmatpush1.msra.mxu0 %v4426
    %5174 = vmatprep.subr.mxu0 %v4431
    %5175 = vmatpush1.msra.mxu0 %v4430
    %5176 = vmatprep.subr.mxu0 %v4435
    %5177 = vmatpush1.msra.mxu0 %v4434
    %5178 = vmatprep.subr.mxu0 %v4439
    %5179 = vmatpush1.msra.mxu0 %v4438
    %5180 = vmatprep.subr.mxu0 %v4443
    %5181 = vmatpush1.msra.mxu0 %v4442
    %5182 = vmatprep.subr.mxu0 %v4447
    %5183 = vmatpush1.msra.mxu0 %v4446
    %5184 = vmatprep.subr.mxu0 %v4451
    %5185 = vmatpush1.msra.mxu0 %v4450
    %5186 = vmatprep.subr.mxu0 %v4455
    %5187 = vmatpush1.msra.mxu0 %v4454
    %5188 = vmatprep.subr.mxu0 %v4459
    %5189 = vmatpush1.msra.mxu0 %v4458
    %5190 = vmatprep.subr.mxu0 %v4463
    %5191 = vmatpush1.msra.mxu0 %v4462
    %5192 = vmatprep.subr.mxu0 %v4467
    %5193 = vmatpush1.msra.mxu0 %v4466
    %5194 = vmatprep.subr.mxu0 %v4471
    %5195 = vmatpush1.msra.mxu0 %v4470
    %5196 = vmatprep.subr.mxu0 %v4475
    %5197 = vmatpush1.msra.mxu0 %v4474
    %5198 = vmatprep.subr.mxu0 %v4479
    %5199 = vmatpush1.msra.mxu0 %v4478
    %5200 = vmatprep.subr.mxu0 %v4483
    %5201 = vmatpush1.msra.mxu0 %v4482
    %5202 = vmatprep.subr.mxu0 %v4487
    %5203 = vmatpush1.msra.mxu0 %v4486
    %5204 = vmatprep.subr.mxu0 %v4491
    %5205 = vmatpush1.msra.mxu0 %v4490
    %5206 = vmatprep.subr.mxu0 %v4495
    %5207 = vmatpush1.msra.mxu0 %v4494
    %5208 = vmatprep.subr.mxu0 %v4499
    %5209 = vmatpush1.msra.mxu0 %v4498
    %5210 = vmatprep.subr.mxu0 %v4503
    %5211 = vmatpush1.msra.mxu0 %v4502
    %5212 = vmatprep.mubr.f32.mxu0 %v654
    %5213 = vmatmul.mubr.f32.gmra.mrb[0].mxu0 %v652
    %v5214 = vpop.f32.mrb[0].mxu0
    %v5215 = vadd.f32 %v5144, %v5214
    %v5216 = vpop.f32.mrb[0].mxu0
    %v5217 = vadd.f32 %v5146, %v5216
    %5218 = vdwg.mxu0
    %5219 = vmatprep.subr.mxu0 %v4507
    %5220 = vmatpush1.msra.mxu0 %v4506
    %5221 = vmatprep.subr.mxu0 %v4511
    %5222 = vmatpush1.msra.mxu0 %v4510
    %5223 = vmatprep.subr.mxu0 %v4515
    %5224 = vmatpush1.msra.mxu0 %v4514
    %5225 = vmatprep.subr.mxu0 %v4519
    %5226 = vmatpush1.msra.mxu0 %v4518
    %5227 = vmatprep.subr.mxu0 %v4523
    %5228 = vmatpush1.msra.mxu0 %v4522
    %5229 = vmatprep.subr.mxu0 %v4527
    %5230 = vmatpush1.msra.mxu0 %v4526
    %5231 = vmatprep.subr.mxu0 %v4531
    %5232 = vmatpush1.msra.mxu0 %v4530
    %5233 = vmatprep.subr.mxu0 %v4535
    %5234 = vmatpush1.msra.mxu0 %v4534
    %5235 = vmatprep.subr.mxu0 %v4539
    %5236 = vmatpush1.msra.mxu0 %v4538
    %5237 = vmatprep.subr.mxu0 %v4543
    %5238 = vmatpush1.msra.mxu0 %v4542
    %5239 = vmatprep.subr.mxu0 %v4547
    %5240 = vmatpush1.msra.mxu0 %v4546
    %5241 = vmatprep.subr.mxu0 %v4551
    %5242 = vmatpush1.msra.mxu0 %v4550
    %5243 = vmatprep.subr.mxu0 %v4555
    %5244 = vmatpush1.msra.mxu0 %v4554
    %5245 = vmatprep.subr.mxu0 %v4559
    %5246 = vmatpush1.msra.mxu0 %v4558
    %5247 = vmatprep.subr.mxu0 %v4563
    %5248 = vmatpush1.msra.mxu0 %v4562
    %5249 = vmatprep.subr.mxu0 %v4567
    %5250 = vmatpush1.msra.mxu0 %v4566
    %5251 = vmatprep.subr.mxu0 %v4571
    %5252 = vmatpush1.msra.mxu0 %v4570
    %5253 = vmatprep.subr.mxu0 %v4575
    %5254 = vmatpush1.msra.mxu0 %v4574
    %5255 = vmatprep.subr.mxu0 %v4579
    %5256 = vmatpush1.msra.mxu0 %v4578
    %5257 = vmatprep.subr.mxu0 0.0
    %5258 = vmatpush1.msra.mxu0 0.0
    %5259 = vmatprep.subr.mxu0 0.0
    %5260 = vmatpush1.msra.mxu0 0.0
    %5261 = vmatprep.subr.mxu0 0.0
    %5262 = vmatpush1.msra.mxu0 0.0
    %5263 = vmatprep.subr.mxu0 0.0
    %5264 = vmatpush1.msra.mxu0 0.0
    %5265 = vmatprep.subr.mxu0 0.0
    %5266 = vmatpush1.msra.mxu0 0.0
    %5267 = vmatprep.subr.mxu0 0.0
    %5268 = vmatpush1.msra.mxu0 0.0
    %5269 = vmatprep.subr.mxu0 0.0
    %5270 = vmatpush1.msra.mxu0 0.0
    %5271 = vmatprep.subr.mxu0 0.0
    %5272 = vmatpush1.msra.mxu0 0.0
    %5273 = vmatprep.subr.mxu0 0.0
    %5274 = vmatpush1.msra.mxu0 0.0
    %5275 = vmatprep.subr.mxu0 0.0
    %5276 = vmatpush1.msra.mxu0 0.0
    %5277 = vmatprep.subr.mxu0 0.0
    %5278 = vmatpush1.msra.mxu0 0.0
    %5279 = vmatprep.subr.mxu0 0.0
    %5280 = vmatpush1.msra.mxu0 0.0
    %5281 = vmatprep.subr.mxu0 0.0
    %5282 = vmatpush1.msra.mxu0 0.0
    %5283 = vmatprep.mubr.f32.mxu0 %v673
    %5284 = vmatmul.mubr.f32.gmra.mrb[0].mxu0 %v661
    %v5285 = vpop.f32.mrb[0].mxu0
    %v5286 = vadd.f32 %v5215, %v5285
    %v5287 = vpop.f32.mrb[0].mxu0
    %v5288 = vadd.f32 %v5217, %v5287
    %5289 = vdwg.mxu0
    %v5290 = vmax.f32 %v3987, %v4931
    %v5291 = vmax.f32 %v3988, %v4933
    %v5292 = vmax.f32 %v3989, %v5286
    %v5293 = vmax.f32 %v3990, %v5288
    %v5294 = vld [vmem:[%s2] sm:$0xf]
    %v5296 = vlaneseq
    %v5297 = vshrl.u32 %v5296, 7
    %v5298 = vsub.s32 0, %v5297
    %v5299 = vrot.slane %v5294, %v5298
    %v5300 = vlaneseq
    %v5301 = vshrl.u32 %v5300, 7
    %v5302 = vsub.s32 1, %v5301
    %v5303 = vrot.slane %v5294, %v5302
    %v5304 = vlaneseq
    %v5305 = vshrl.u32 %v5304, 7
    %v5306 = vsub.s32 2, %v5305
    %v5307 = vrot.slane %v5294, %v5306
    %v5308 = vlaneseq
    %v5309 = vshrl.u32 %v5308, 7
    %v5310 = vsub.s32 3, %v5309
    %v5311 = vrot.slane %v5294, %v5310
    %v5316 = vadd.f32 %v5290, %v5299
    %v5317 = vadd.f32 %v5291, %v5303
    %v5318 = vadd.f32 %v5292, %v5307
    %v5319 = vadd.f32 %v5293, %v5311
    %vm5320 = vcmp.gt.f32.partialorder %v5316, 0.0
    %vm5321 = vcmp.gt.f32.partialorder %v5317, 0.0
    %vm5322 = vcmp.gt.f32.partialorder %v5318, 0.0
    %vm5323 = vcmp.gt.f32.partialorder %v5319, 0.0
    %v5324 = vmul.f32 %v5316, 0.01
    %v5325 = vmul.f32 %v5317, 0.01
    %v5326 = vmul.f32 %v5318, 0.01
    %v5327 = vmul.f32 %v5319, 0.01
    %v5328 = vsel %vm5320, %v5316, %v5324
    %v5329 = vsel %vm5321, %v5317, %v5325
    %v5330 = vsel %vm5322, %v5318, %v5326
    %v5331 = vsel %vm5323, %v5319, %v5327
    %v5332 = vld [vmem:[%s3] sm:$0xff]
    %v5333 = vld [vmem:[%s3 + $0x8] sm:$0xff]
    %v5334 = vld [vmem:[%s3 + $0x10] sm:$0xff]
    %v5335 = vld [vmem:[%s3 + $0x18] sm:$0xff]
    %v5336 = vld [vmem:[%s3 + $0x20] sm:$0xff]
    %v5337 = vld [vmem:[%s3 + $0x28] sm:$0xff]
    %v5338 = vld [vmem:[%s3 + $0x30] sm:$0xff]
    %v5339 = vld [vmem:[%s3 + $0x38] sm:$0xff]
    %v5340 = vld [vmem:[%s3 + $0x40] sm:$0xff]
    %v5341 = vld [vmem:[%s3 + $0x48] sm:$0xff]
    %v5342 = vld [vmem:[%s3 + $0x50] sm:$0xff]
    %v5343 = vld [vmem:[%s3 + $0x58] sm:$0xff]
    %v5344 = vld [vmem:[%s3 + $0x60] sm:$0xff]
    %v5345 = vld [vmem:[%s3 + $0x68] sm:$0xff]
    %v5346 = vld [vmem:[%s3 + $0x70] sm:$0xff]
    %v5347 = vld [vmem:[%s3 + $0x78] sm:$0xff]
    %v5348 = vld [vmem:[%s3 + $0x80] sm:$0xff]
    %v5349 = vld [vmem:[%s3 + $0x88] sm:$0xff]
    %v5350 = vld [vmem:[%s3 + $0x90] sm:$0xff]
    %v5351 = vld [vmem:[%s3 + $0x98] sm:$0xff]
    %v5352 = vld [vmem:[%s3 + $0xa0] sm:$0xff]
    %v5353 = vld [vmem:[%s3 + $0xa8] sm:$0xff]
    %v5354 = vld [vmem:[%s3 + $0xb0] sm:$0xff]
    %v5355 = vld [vmem:[%s3 + $0xb8] sm:$0xff]
    %v5356 = vld [vmem:[%s3 + $0xc0] sm:$0xff]
    %v5357 = vld [vmem:[%s3 + $0xc8] sm:$0xff]
    %v5358 = vld [vmem:[%s3 + $0xd0] sm:$0xff]
    %v5359 = vld [vmem:[%s3 + $0xd8] sm:$0xff]
    %v5360 = vld [vmem:[%s3 + $0xe0] sm:$0xff]
    %v5361 = vld [vmem:[%s3 + $0xe8] sm:$0xff]
    %v5362 = vld [vmem:[%s3 + $0xf0] sm:$0xff]
    %v5363 = vld [vmem:[%s3 + $0xf8] sm:$0xff]
    %v5364 = vld [vmem:[%s3 + $0x100] sm:$0xff]
    %v5365 = vld [vmem:[%s3 + $0x108] sm:$0xff]
    %v5366 = vld [vmem:[%s3 + $0x110] sm:$0xff]
    %v5367 = vld [vmem:[%s3 + $0x118] sm:$0xff]
    %v5368 = vld [vmem:[%s3 + $0x120] sm:$0xff]
    %v5369 = vld [vmem:[%s3 + $0x128] sm:$0xff]
    %v5370 = vld [vmem:[%s3 + $0x130] sm:$0xff]
    %v5371 = vld [vmem:[%s3 + $0x138] sm:$0xff]
    %v5372 = vld [vmem:[%s3 + $0x140] sm:$0xff]
    %v5373 = vld [vmem:[%s3 + $0x148] sm:$0xff]
    %v5374 = vld [vmem:[%s3 + $0x150] sm:$0xff]
    %v5375 = vld [vmem:[%s3 + $0x158] sm:$0xff]
    %v5376 = vld [vmem:[%s3 + $0x160] sm:$0xff]
    %v5377 = vld [vmem:[%s3 + $0x168] sm:$0xff]
    %v5378 = vld [vmem:[%s3 + $0x170] sm:$0xff]
    %v5379 = vld [vmem:[%s3 + $0x178] sm:$0xff]
    %v5380 = vld [vmem:[%s3 + $0x180] sm:$0xff]
    %v5381 = vld [vmem:[%s3 + $0x188] sm:$0xff]
    %v5382 = vld [vmem:[%s4] sm:$0x1]
    %v5384 = vlaneseq
    %v5385 = vshrl.u32 %v5384, 7
    %v5386 = vsub.s32 0, %v5385
    %v5387 = vrot.slane %v5382, %v5386
    %vm5389 = vcmask 130048
    %v5391 = vsel %vm5389, %v5331, 0
    %5393 = vmatprep.subr.mxu0 0.0
    %5394 = vmatpush1.msra.mxu0 %v5332
    %5395 = vmatprep.subr.mxu0 0.0
    %5396 = vmatpush1.msra.mxu0 %v5333
    %5397 = vmatprep.subr.mxu0 0.0
    %5398 = vmatpush1.msra.mxu0 %v5334
    %5399 = vmatprep.subr.mxu0 0.0
    %5400 = vmatpush1.msra.mxu0 %v5335
    %5401 = vmatprep.subr.mxu0 0.0
    %5402 = vmatpush1.msra.mxu0 %v5336
    %5403 = vmatprep.subr.mxu0 0.0
    %5404 = vmatpush1.msra.mxu0 %v5337
    %5405 = vmatprep.subr.mxu0 0.0
    %5406 = vmatpush1.msra.mxu0 %v5338
    %5407 = vmatprep.subr.mxu0 0.0
    %5408 = vmatpush1.msra.mxu0 %v5339
    %5409 = vmatprep.subr.mxu0 0.0
    %5410 = vmatpush1.msra.mxu0 %v5340
    %5411 = vmatprep.subr.mxu0 0.0
    %5412 = vmatpush1.msra.mxu0 %v5341
    %5413 = vmatprep.subr.mxu0 0.0
    %5414 = vmatpush1.msra.mxu0 %v5342
    %5415 = vmatprep.subr.mxu0 0.0
    %5416 = vmatpush1.msra.mxu0 %v5343
    %5417 = vmatprep.subr.mxu0 0.0
    %5418 = vmatpush1.msra.mxu0 %v5344
    %5419 = vmatprep.subr.mxu0 0.0
    %5420 = vmatpush1.msra.mxu0 %v5345
    %5421 = vmatprep.subr.mxu0 0.0
    %5422 = vmatpush1.msra.mxu0 %v5346
    %5423 = vmatprep.subr.mxu0 0.0
    %5424 = vmatpush1.msra.mxu0 %v5347
    %5425 = vmatprep.subr.mxu0 0.0
    %5426 = vmatpush1.msra.mxu0 %v5348
    %5427 = vmatprep.subr.mxu0 0.0
    %5428 = vmatpush1.msra.mxu0 %v5349
    %5429 = vmatprep.subr.mxu0 0.0
    %5430 = vmatpush1.msra.mxu0 %v5350
    %5431 = vmatprep.subr.mxu0 0.0
    %5432 = vmatpush1.msra.mxu0 %v5351
    %5433 = vmatprep.subr.mxu0 0.0
    %5434 = vmatpush1.msra.mxu0 %v5352
    %5435 = vmatprep.subr.mxu0 0.0
    %5436 = vmatpush1.msra.mxu0 %v5353
    %5437 = vmatprep.subr.mxu0 0.0
    %5438 = vmatpush1.msra.mxu0 %v5354
    %5439 = vmatprep.subr.mxu0 0.0
    %5440 = vmatpush1.msra.mxu0 %v5355
    %5441 = vmatprep.subr.mxu0 0.0
    %5442 = vmatpush1.msra.mxu0 %v5356
    %5443 = vmatprep.subr.mxu0 0.0
    %5444 = vmatpush1.msra.mxu0 %v5357
    %5445 = vmatprep.subr.mxu0 0.0
    %5446 = vmatpush1.msra.mxu0 %v5358
    %5447 = vmatprep.subr.mxu0 0.0
    %5448 = vmatpush1.msra.mxu0 %v5359
    %5449 = vmatprep.subr.mxu0 0.0
    %5450 = vmatpush1.msra.mxu0 %v5360
    %5451 = vmatprep.subr.mxu0 0.0
    %5452 = vmatpush1.msra.mxu0 %v5361
    %5453 = vmatprep.subr.mxu0 0.0
    %5454 = vmatpush1.msra.mxu0 %v5362
    %5455 = vmatprep.subr.mxu0 0.0
    %5456 = vmatpush1.msra.mxu0 %v5363
    %5457 = vmatprep.mubr.f32.mxu0 %v5329
    %5458 = vmatmul.mubr.f32.gmra.mrb[0].mxu0 %v5328
    %v5459 = vpop.f32.mrb[0].mxu0
    %v5460 = vadd.f32 %v5387, %v5459
    %v5461 = vpop.f32.mrb[0].mxu0
    %5462 = vdwg.mxu0
    %5463 = vmatprep.subr.mxu0 0.0
    %5464 = vmatpush1.msra.mxu0 %v5364
    %5465 = vmatprep.subr.mxu0 0.0
    %5466 = vmatpush1.msra.mxu0 %v5365
    %5467 = vmatprep.subr.mxu0 0.0
    %5468 = vmatpush1.msra.mxu0 %v5366
    %5469 = vmatprep.subr.mxu0 0.0
    %5470 = vmatpush1.msra.mxu0 %v5367
    %5471 = vmatprep.subr.mxu0 0.0
    %5472 = vmatpush1.msra.mxu0 %v5368
    %5473 = vmatprep.subr.mxu0 0.0
    %5474 = vmatpush1.msra.mxu0 %v5369
    %5475 = vmatprep.subr.mxu0 0.0
    %5476 = vmatpush1.msra.mxu0 %v5370
    %5477 = vmatprep.subr.mxu0 0.0
    %5478 = vmatpush1.msra.mxu0 %v5371
    %5479 = vmatprep.subr.mxu0 0.0
    %5480 = vmatpush1.msra.mxu0 %v5372
    %5481 = vmatprep.subr.mxu0 0.0
    %5482 = vmatpush1.msra.mxu0 %v5373
    %5483 = vmatprep.subr.mxu0 0.0
    %5484 = vmatpush1.msra.mxu0 %v5374
    %5485 = vmatprep.subr.mxu0 0.0
    %5486 = vmatpush1.msra.mxu0 %v5375
    %5487 = vmatprep.subr.mxu0 0.0
    %5488 = vmatpush1.msra.mxu0 %v5376
    %5489 = vmatprep.subr.mxu0 0.0
    %5490 = vmatpush1.msra.mxu0 %v5377
    %5491 = vmatprep.subr.mxu0 0.0
    %5492 = vmatpush1.msra.mxu0 %v5378
    %5493 = vmatprep.subr.mxu0 0.0
    %5494 = vmatpush1.msra.mxu0 %v5379
    %5495 = vmatprep.subr.mxu0 0.0
    %5496 = vmatpush1.msra.mxu0 %v5380
    %5497 = vmatprep.subr.mxu0 0.0
    %5498 = vmatpush1.msra.mxu0 %v5381
    %5499 = vmatprep.subr.mxu0 0.0
    %5500 = vmatpush1.msra.mxu0 0.0
    %5501 = vmatprep.subr.mxu0 0.0
    %5502 = vmatpush1.msra.mxu0 0.0
    %5503 = vmatprep.subr.mxu0 0.0
    %5504 = vmatpush1.msra.mxu0 0.0
    %5505 = vmatprep.subr.mxu0 0.0
    %5506 = vmatpush1.msra.mxu0 0.0
    %5507 = vmatprep.subr.mxu0 0.0
    %5508 = vmatpush1.msra.mxu0 0.0
    %5509 = vmatprep.subr.mxu0 0.0
    %5510 = vmatpush1.msra.mxu0 0.0
    %5511 = vmatprep.subr.mxu0 0.0
    %5512 = vmatpush1.msra.mxu0 0.0
    %5513 = vmatprep.subr.mxu0 0.0
    %5514 = vmatpush1.msra.mxu0 0.0
    %5515 = vmatprep.subr.mxu0 0.0
    %5516 = vmatpush1.msra.mxu0 0.0
    %5517 = vmatprep.subr.mxu0 0.0
    %5518 = vmatpush1.msra.mxu0 0.0
    %5519 = vmatprep.subr.mxu0 0.0
    %5520 = vmatpush1.msra.mxu0 0.0
    %5521 = vmatprep.subr.mxu0 0.0
    %5522 = vmatpush1.msra.mxu0 0.0
    %5523 = vmatprep.subr.mxu0 0.0
    %5524 = vmatpush1.msra.mxu0 0.0
    %5525 = vmatprep.subr.mxu0 0.0
    %5526 = vmatpush1.msra.mxu0 0.0
    %5527 = vmatprep.mubr.f32.mxu0 %v5391
    %5528 = vmatmul.mubr.f32.gmra.mrb[0].mxu0 %v5330
    %v5529 = vpop.f32.mrb[0].mxu0
    %v5530 = vadd.f32 %v5460, %v5529
    %v5531 = vpop.f32.mrb[0].mxu0
    %5532 = vdwg.mxu0
    %v5533 = vmax.f32 %v5530, 0.0
    %v5534 = vld [vmem:[%s5] sm:$0xff]
    %v5535 = vld [vmem:[%s5 + $0x8] sm:$0xff]
    %v5536 = vld [vmem:[%s5 + $0x10] sm:$0xff]
    %v5537 = vld [vmem:[%s5 + $0x18] sm:$0xff]
    %v5538 = vld [vmem:[%s5 + $0x20] sm:$0xff]
    %v5539 = vld [vmem:[%s5 + $0x28] sm:$0xff]
    %v5540 = vld [vmem:[%s5 + $0x30] sm:$0xff]
    %v5541 = vld [vmem:[%s5 + $0x38] sm:$0xff]
    %v5542 = vld [vmem:[%s5 + $0x40] sm:$0xff]
    %v5543 = vld [vmem:[%s5 + $0x48] sm:$0xff]
    %v5544 = vld [vmem:[%s5 + $0x50] sm:$0xff]
    %v5545 = vld [vmem:[%s5 + $0x58] sm:$0xff]
    %v5546 = vld [vmem:[%s5 + $0x60] sm:$0xff]
    %v5547 = vld [vmem:[%s5 + $0x68] sm:$0xff]
    %v5548 = vld [vmem:[%s5 + $0x70] sm:$0xff]
    %v5549 = vld [vmem:[%s5 + $0x78] sm:$0xff]
    %v5550 = vld [vmem:[%s6] sm:$0x1]
    %v5552 = vlaneseq
    %v5553 = vshrl.u32 %v5552, 7
    %v5554 = vsub.s32 0, %v5553
    %v5555 = vrot.slane %v5550, %v5554
    %5557 = vmatprep.subr.mxu0 0.0
    %5558 = vmatpush1.msra.mxu0 %v5534
    %5559 = vmatprep.subr.mxu0 0.0
    %5560 = vmatpush1.msra.mxu0 %v5535
    %5561 = vmatprep.subr.mxu0 0.0
    %5562 = vmatpush1.msra.mxu0 %v5536
    %5563 = vmatprep.subr.mxu0 0.0
    %5564 = vmatpush1.msra.mxu0 %v5537
    %5565 = vmatprep.subr.mxu0 0.0
    %5566 = vmatpush1.msra.mxu0 %v5538
    %5567 = vmatprep.subr.mxu0 0.0
    %5568 = vmatpush1.msra.mxu0 %v5539
    %5569 = vmatprep.subr.mxu0 0.0
    %5570 = vmatpush1.msra.mxu0 %v5540
    %5571 = vmatprep.subr.mxu0 0.0
    %5572 = vmatpush1.msra.mxu0 %v5541
    %5573 = vmatprep.subr.mxu0 0.0
    %5574 = vmatpush1.msra.mxu0 %v5542
    %5575 = vmatprep.subr.mxu0 0.0
    %5576 = vmatpush1.msra.mxu0 %v5543
    %5577 = vmatprep.subr.mxu0 0.0
    %5578 = vmatpush1.msra.mxu0 %v5544
    %5579 = vmatprep.subr.mxu0 0.0
    %5580 = vmatpush1.msra.mxu0 %v5545
    %5581 = vmatprep.subr.mxu0 0.0
    %5582 = vmatpush1.msra.mxu0 %v5546
    %5583 = vmatprep.subr.mxu0 0.0
    %5584 = vmatpush1.msra.mxu0 %v5547
    %5585 = vmatprep.subr.mxu0 0.0
    %5586 = vmatpush1.msra.mxu0 %v5548
    %5587 = vmatprep.subr.mxu0 0.0
    %5588 = vmatpush1.msra.mxu0 %v5549
    %5589 = vmatprep.subr.mxu0 0.0
    %5590 = vmatpush1.msra.mxu0 0.0
    %5591 = vmatprep.subr.mxu0 0.0
    %5592 = vmatpush1.msra.mxu0 0.0
    %5593 = vmatprep.subr.mxu0 0.0
    %5594 = vmatpush1.msra.mxu0 0.0
    %5595 = vmatprep.subr.mxu0 0.0
    %5596 = vmatpush1.msra.mxu0 0.0
    %5597 = vmatprep.subr.mxu0 0.0
    %5598 = vmatpush1.msra.mxu0 0.0
    %5599 = vmatprep.subr.mxu0 0.0
    %5600 = vmatpush1.msra.mxu0 0.0
    %5601 = vmatprep.subr.mxu0 0.0
    %5602 = vmatpush1.msra.mxu0 0.0
    %5603 = vmatprep.subr.mxu0 0.0
    %5604 = vmatpush1.msra.mxu0 0.0
    %5605 = vmatprep.subr.mxu0 0.0
    %5606 = vmatpush1.msra.mxu0 0.0
    %5607 = vmatprep.subr.mxu0 0.0
    %5608 = vmatpush1.msra.mxu0 0.0
    %5609 = vmatprep.subr.mxu0 0.0
    %5610 = vmatpush1.msra.mxu0 0.0
    %5611 = vmatprep.subr.mxu0 0.0
    %5612 = vmatpush1.msra.mxu0 0.0
    %5613 = vmatprep.subr.mxu0 0.0
    %5614 = vmatpush1.msra.mxu0 0.0
    %5615 = vmatprep.subr.mxu0 0.0
    %5616 = vmatpush1.msra.mxu0 0.0
    %5617 = vmatprep.subr.mxu0 0.0
    %5618 = vmatpush1.msra.mxu0 0.0
    %5619 = vmatprep.subr.mxu0 0.0
    %5620 = vmatpush1.msra.mxu0 0.0
    %5621 = vmatprep.mubr.f32.mxu0 0.0
    %5622 = vmatmul.mubr.f32.gmra.mrb[0].mxu0 %v5533
    %v5623 = vpop.f32.mrb[0].mxu0
    %v5624 = vadd.f32 %v5555, %v5623
    %v5625 = vpop.f32.mrb[0].mxu0
    %5626 = vdwg.mxu0
    %v5627 = vmax.f32 %v5624, 0.0
    %v5628 = vlaneseq
    %v5629 = vand.u32 %v5628, 127
    %vm5630 = vcmp.lt.s32.totalorder %v5629, 10
    %v5631 = vsel %vm5630, %v5627, -1e+30
    %vm5632 = vcmask 1041408
    %v5633 = vsel %vm5632, %v5631, -inf
    %5634 = vmax.xlane.f32.xlu0 %v5633
    %v5635 = vpop.xlane.xlu0 %5634
    %v5636 = vsub.f32 %v5627, %v5635
    %v5637 = vmul.f32 %v5636, 1.442695
    %v5638 = vpow.pop %v5637
    %v5639 = vsel %vm5630, %v5638, 0.0
    %v5640 = vsel %vm5632, %v5639, 0.0
    %5641 = vadd.xlane.f32.xlu0 %v5640
    %v5642 = vpop.xlane.xlu0 %5641
    %v5643 = vlog2.pop %v5642
    %v5644 = vmul.f32 %v5643, 0.6931472
    %v5645 = vsub.f32 %v5636, %v5644
    %v5646 = vsel %vm5630, %v5645, 0.0
    %5647 = vst [vmem:[#allocation2] sm:$0x3] %v5646
    // Predicated region
    $region30: #{neuralnet_forward.3} parent=1 // pred_check
      _
    $region31: #{neuralnet_forward.3} parent=1 // pred_check_branch
      %5649 = sbr.rel (0) target = $region33
    $region32: #{neuralnet_forward.3} parent=1 // pred_region
      %s5651 = ssub.s32 32, 32
      %5652 = vsyncadd [#allocation3], %s5651
      %s5654 = sshll.u32 [#allocation2], 4
      %s5655 = int_to_ptr.vmem [resolvable:$true] %s5654
      %5657 = dma.vmem_to_hbm [thread:$0]  %s5655, 32, %s7, [#allocation3]
    $region33: #{neuralnet_forward.3} parent=1 // pred_fallthru
      _
    // Predicated region
    $region34: #{neuralnet_forward.3} parent=1 // pred_check
      _
    $region35: #{neuralnet_forward.3} parent=1 // pred_check_branch
      %5659 = sbr.rel (0) target = $region37
    $region36: #{neuralnet_forward.3} parent=1 // pred_region
      %5660 = dma.done [#allocation3], 32
    $region37: #{neuralnet_forward.3} parent=1 // pred_fallthru
      _
    %5661 = vsyncpa [#allocation3], 1

</llo_original>
